<compile_context>
chip_gen: v5e
topology: v5e:2x2
jax: 0.10.0
libtpu: 0.0.40
codegen_flags: <defaults>
</compile_context>

<pallas_src>
import jax
import jax.numpy as jnp
from jax.experimental import pallas as pl
from jax.experimental.pallas import tpu as pltpu

EPS = 1e-5
LANE = 128
_TILE_ROWS_TARGET = 1024          # mem-bound row-tiled passes: ~85% of HBM roofline
_VMEM_LIMIT = 32 * 1024 * 1024    # safe scoped limit on v5e/v6e/v7x


def _round_up(x, m):
    return (x + m - 1) // m * m


def _pick_tile(p_rows, target=_TILE_ROWS_TARGET):
    """Largest multiple of 8 <= target (grid uses cdiv; ragged last tile is masked)."""
    if p_rows <= 8:
        return p_rows
    t = min(target, p_rows)
    return t - (t % 8)


# ---------------- Pallas kernels ----------------

def _conv1x1_kernel(x_ref, w_ref, b_ref, o_ref):
    # (TILE_P, Cin_p) bf16 @ (Cin_p, C) bf16 -> f32 accumulate, + f32 bias, store bf16.
    acc = jnp.dot(x_ref[...], w_ref[...], preferred_element_type=jnp.float32) + b_ref[...]
    o_ref[...] = acc.astype(o_ref.dtype)


def _make_conv3x3_kernel(h, w, c, apply_bn):
    """3x3 conv (pad=1, stride=1) over one image + per-image BN partial stats.

    * Optional fused BN+ReLU prologue (scale/shift computed in the wrapper from the
      previous conv's stats) applied right after the DMA'd bf16 block is loaded.
    * The 1-pixel halo and the dx-concatenated im2col buffer are built in VMEM, so
      the conv is 3 MXU matmuls with K = 3c (fills the 256-deep MXU on v6e/v7x).
    * No conv bias (cancelled exactly by the following BatchNorm).
    """
    hw = h * w

    def kernel(*refs):
        if apply_bn:
            (x_ref, scale_ref, shift_ref, w_ref,
             h_ref, s_ref, q_ref, b_ref) = refs
        else:
            x_ref, w_ref, h_ref, s_ref, q_ref, b_ref = refs

        xv = x_ref[0]                                             # (h, w, c) bf16
        if apply_bn:
            xf = xv.astype(jnp.float32) * scale_ref[0] + shift_ref[0]
            xv = jnp.maximum(xf, 0.0).astype(jnp.bfloat16)

        # Build b[r, x, dx*c:(dx+1)*c] = xpad[r, x+dx, :] in VMEM (halo built here,
        # no HBM-side jnp.pad).  Rows 0 and h+1 of b are the zero vertical halo.
        zc = jnp.zeros((h, 1, c), jnp.bfloat16)
        zrow = jnp.zeros((w, 3 * c), jnp.bfloat16)
        xvp = jnp.concatenate([zc, xv, zc], axis=1)               # (h, w+2, c)
        b_ref[0] = zrow
        b_ref[h + 1] = zrow
        for dx in range(3):
            b_ref[1:h + 1, :, dx * c:(dx + 1) * c] = xvp[:, dx:dx + w, :]

        # 3 matmuls with K = 3c, accumulated in a single local f32 value.
        acc = None
        for dy in range(3):
            lhs = b_ref[dy:dy + h].reshape(hw, 3 * c)             # free when w % 8 == 0
            part = jnp.dot(lhs, w_ref[dy], preferred_element_type=jnp.float32)
            acc = part if acc is None else acc + part

        # Per-image BN partial statistics in f32 (before the bf16 writeback).
        s_ref[0] = jnp.sum(acc, axis=0, keepdims=True)
        q_ref[0] = jnp.sum(acc * acc, axis=0, keepdims=True)
        h_ref[0] = acc.reshape(h, w, c).astype(h_ref.dtype)

    return kernel


def _bn_add_relu_kernel(h_ref, skip_ref, scale_ref, shift_ref, o_ref):
    # Final epilogue: BN2 (precomputed scale/shift) + residual add + ReLU, f32 math.
    hv = h_ref[...].astype(jnp.float32)
    sv = skip_ref[...].astype(jnp.float32)
    o_ref[...] = jnp.maximum(hv * scale_ref[...] + shift_ref[...] + sv, 0.0)


# ---------------- pallas_call wrappers ----------------

def _conv1x1(x2d, w, b, tile_p):
    p_rows, cin_p = x2d.shape
    c = w.shape[1]
    return pl.pallas_call(
        _conv1x1_kernel,
        grid=(pl.cdiv(p_rows, tile_p),),
        in_specs=[
            pl.BlockSpec((tile_p, cin_p), lambda i: (i, 0)),
            pl.BlockSpec((cin_p, c), lambda i: (0, 0)),          # weight resident
            pl.BlockSpec((1, c), lambda i: (0, 0)),
        ],
        out_specs=pl.BlockSpec((tile_p, c), lambda i: (i, 0)),
        out_shape=jax.ShapeDtypeStruct((p_rows, c), jnp.bfloat16),
        compiler_params=pltpu.CompilerParams(
            dimension_semantics=("parallel",), vmem_limit_bytes=_VMEM_LIMIT),
    )(x2d, w, b)


def _conv3x3_stats(x_nhwc, w3, scale=None, shift=None):
    n, h, w, c = x_nhwc.shape
    apply_bn = scale is not None
    kernel = _make_conv3x3_kernel(h, w, c, apply_bn)

    img_spec = pl.BlockSpec((1, h, w, c), lambda i: (i, 0, 0, 0))
    chan_spec = pl.BlockSpec((1, 1, c), lambda i: (0, 0, 0))      # resident
    w_spec = pl.BlockSpec((3, 3 * c, c), lambda i: (0, 0, 0))     # weights resident

    in_specs = [img_spec]
    args = [x_nhwc]
    if apply_bn:
        in_specs += [chan_spec, chan_spec]
        args += [scale, shift]
    in_specs += [w_spec]
    args += [w3]

    return pl.pallas_call(
        kernel,
        grid=(n,),
        in_specs=in_specs,
        out_specs=[
            img_spec,
            pl.BlockSpec((1, 1, c), lambda i: (i, 0, 0)),         # per-image sum
            pl.BlockSpec((1, 1, c), lambda i: (i, 0, 0)),         # per-image sum of squares
        ],
        out_shape=(
            jax.ShapeDtypeStruct((n, h, w, c), jnp.bfloat16),
            jax.ShapeDtypeStruct((n, 1, c), jnp.float32),
            jax.ShapeDtypeStruct((n, 1, c), jnp.float32),
        ),
        scratch_shapes=[pltpu.VMEM((h + 2, w, 3 * c), jnp.bfloat16)],
        compiler_params=pltpu.CompilerParams(
            dimension_semantics=("parallel",), vmem_limit_bytes=_VMEM_LIMIT),
        cost_estimate=pl.CostEstimate(
            flops=2 * n * h * w * 9 * c * c,
            transcendentals=0,
            bytes_accessed=2 * (2 * n * h * w * c) + 2 * (3 * 3 * c * c)),
    )(*args)


def _bn_add_relu(h2d, skip2d, scale, shift, tile_p):
    p_rows, c = h2d.shape
    row_spec = pl.BlockSpec((tile_p, c), lambda i: (i, 0))
    chan_spec = pl.BlockSpec((1, c), lambda i: (0, 0))
    return pl.pallas_call(
        _bn_add_relu_kernel,
        grid=(pl.cdiv(p_rows, tile_p),),
        in_specs=[row_spec, row_spec, chan_spec, chan_spec],
        out_specs=pl.BlockSpec((tile_p, c), lambda i: (i, 0)),
        out_shape=jax.ShapeDtypeStruct((p_rows, c), jnp.float32),
        compiler_params=pltpu.CompilerParams(
            dimension_semantics=("parallel",), vmem_limit_bytes=_VMEM_LIMIT),
    )(h2d, skip2d, scale, shift)


# ---------------- parameters (logical, PyTorch-like layout) ----------------

def init_params(key, in_features, out_features):
    ks = jax.random.split(key, 8)

    def nrm(k, shape, scale):
        return scale * jax.random.normal(k, shape, dtype=jnp.float32)

    return dict(
        w1=nrm(ks[0], (in_features, out_features), 0.5),          # 1x1 conv (cin, cout)
        b1=nrm(ks[1], (out_features,), 0.1),
        w3a=nrm(ks[2], (3, 3, out_features, out_features), 0.2),  # (dy, dx, cin, cout)
        b3a=nrm(ks[3], (out_features,), 0.1),   # cancelled by BN; reference-only
        ga=1.0 + 0.1 * jax.random.normal(ks[4], (out_features,), dtype=jnp.float32),
        bta=0.1 * jax.random.normal(ks[5], (out_features,), dtype=jnp.float32),
        w3b=nrm(ks[6], (3, 3, out_features, out_features), 0.2),
        b3b=nrm(ks[7], (out_features,), 0.1),   # cancelled by BN; reference-only
        gb=jnp.ones((out_features,), jnp.float32),                # fresh BatchNorm2d defaults
        btb=jnp.zeros((out_features,), jnp.float32),
    )


def _pack_params(p, cin_p, c):
    """Zero-pad params to lane-dense channel counts; matmul weights -> bf16.

    3x3 weights are repacked as (3, 3c, c): for each dy, the dx taps are stacked along
    the contraction dim so the conv is 3 matmuls with K = 3c.
    """
    cin, cout = p["w1"].shape

    def pad2(m, rows, cols):
        return jnp.zeros((rows, cols), jnp.float32).at[:m.shape[0], :m.shape[1]].set(m)

    def padv(v):
        return jnp.zeros((1, c), jnp.float32).at[0, :v.shape[0]].set(v)

    def pack3x3(m):  # (3, 3, cout, cout) -> (3, 3c, c) bf16
        out = jnp.zeros((3, 3 * c, c), jnp.float32)
        for dy in range(3):
            for dx in range(3):
                out = out.at[dy, dx * c:dx * c + cout, :cout].set(m[dy, dx])
        return out.astype(jnp.bfloat16)

    return dict(
        w1=pad2(p["w1"], cin_p, c).astype(jnp.bfloat16),
        b1=padv(p["b1"]),
        w3a=pack3x3(p["w3a"]), ga=padv(p["ga"]), bta=padv(p["bta"]),
        w3b=pack3x3(p["w3b"]), gb=padv(p["gb"]), btb=padv(p["btb"]),
    )


def _bn_coeffs(s, q, gamma, beta, count):
    """Fold per-image partial sums into BN scale/shift (training-mode batch stats)."""
    mean = jnp.sum(s, axis=0) / count                              # (1, C)
    var = jnp.maximum(jnp.sum(q, axis=0) / count - mean * mean, 0.0)   # biased var
    scale = gamma * jax.lax.rsqrt(var + EPS)
    shift = beta - mean * scale
    return scale.reshape(1, 1, -1), shift.reshape(1, 1, -1)


# ---------------- forward ----------------

def resblock_forward(x_nchw, p):
    n, cin, h, w = x_nchw.shape
    cout = p["w1"].shape[1]
    cin_p = _round_up(cin, LANE)
    c = _round_up(cout, LANE)              # padded (lane-dense) channel count
    p_rows = n * h * w
    tile_p = _pick_tile(p_rows)
    count = float(p_rows)

    pk = _pack_params(p, cin_p, c)

    # NCHW -> NHWC rows + channel pad, done in bf16 (half the wrapper-side HBM bytes).
    x_nhwc = jnp.transpose(x_nchw.astype(jnp.bfloat16), (0, 2, 3, 1))
    x2d = jnp.pad(x_nhwc.reshape(p_rows, cin), ((0, 0), (0, cin_p - cin)))

    # skip = in_conv (1x1), bf16 output reused (free reshapes) as conv#1 input and
    # as the residual in the final fused pass.
    skip2d = _conv1x1(x2d, pk["w1"], pk["b1"], tile_p)                       # (P, C) bf16

    # core conv #1: 3x3 conv + per-image BN1 partial stats (halo built in VMEM).
    h1_raw, s1, q1 = _conv3x3_stats(skip2d.reshape(n, h, w, c), pk["w3a"])
    scale1, shift1 = _bn_coeffs(s1, q1, pk["ga"], pk["bta"], count)

    # core conv #2: fused BN1+ReLU prologue + 3x3 conv + per-image BN2 partial stats.
    h2_raw, s2, q2 = _conv3x3_stats(h1_raw, pk["w3b"], scale1, shift1)
    scale2, shift2 = _bn_coeffs(s2, q2, pk["gb"], pk["btb"], count)

    # final: BN2 + residual add + ReLU (row-tiled, lane-dense f32 output).
    out2d = _bn_add_relu(h2_raw.reshape(p_rows, c), skip2d,
                         scale2.reshape(1, c), shift2.reshape(1, c), tile_p)

    out = out2d[:, :cout].reshape(n, h, w, cout)
    return jnp.transpose(out, (0, 3, 1, 2))                                  # back to NCHW


# ---------------- pure-JAX reference (module-faithful, f32) ----------------

def _im2col_3x3(x_nhwc):
    n, h, w, cc = x_nhwc.shape
    xp = jnp.pad(x_nhwc, ((0, 0), (1, 1), (1, 1), (0, 0)))
    cols = [xp[:, dy:dy + h, dx:dx + w, :] for dy in range(3) for dx in range(3)]
    return jnp.concatenate(cols, axis=-1).reshape(n * h * w, 9 * cc)


def resblock_reference(x_nchw, p):
    # Keeps the pre-BN conv biases (PyTorch module has them); BN cancels them exactly.
    n, cin, h, w = x_nchw.shape
    cout = p["w1"].shape[1]
    p_rows = n * h * w
    x2d = jnp.transpose(x_nchw, (0, 2, 3, 1)).reshape(p_rows, cin)
    skip = x2d @ p["w1"] + p["b1"][None, :]

    def bn(hh, g, b):
        m = hh.mean(axis=0, keepdims=True)
        v = ((hh - m) ** 2).mean(axis=0, keepdims=True)            # biased var
        return (hh - m) / jnp.sqrt(v + EPS) * g[None, :] + b[None, :]

    w3a = p["w3a"].reshape(9 * cout, cout)
    w3b = p["w3b"].reshape(9 * cout, cout)
    h1 = _im2col_3x3(skip.reshape(n, h, w, cout)) @ w3a + p["b3a"][None, :]
    h1 = jnp.maximum(bn(h1, p["ga"], p["bta"]), 0.0)
    h2 = _im2col_3x3(h1.reshape(n, h, w, cout)) @ w3b + p["b3b"][None, :]
    out = jnp.maximum(bn(h2, p["gb"], p["btb"]) + skip, 0.0)
    return jnp.transpose(out.reshape(n, h, w, cout), (0, 3, 1, 2))


if __name__ == "__main__":
    key = jax.random.PRNGKey(0)
    kx, kp = jax.random.split(key)
    N, C_IN, C_OUT, H, W = 2, 4, 8, 16, 16

    x = jax.random.normal(kx, (N, C_IN, H, W), dtype=jnp.float32)
    params = init_params(kp, C_IN, C_OUT)

    fwd = jax.jit(resblock_forward)
    out = jax.block_until_ready(fwd(x, params))
    ref = jax.block_until_ready(resblock_reference(x, params))

    assert out.shape == (N, C_OUT, H, W)
    max_err = float(jnp.max(jnp.abs(out - ref)))
    # bf16 MXU operands + bf16 inter-stage activations vs f32 reference.
    assert bool(jnp.allclose(out, ref, atol=7.5e-2, rtol=5e-2)), (
        "max abs diff: %f" % max_err)
    print("KERNEL_OK")
</pallas_src>

<mosaic_0001>
module attributes {stable_mosaic.version = 11 : i64} {
  func.func @kernel(%arg0: i32, %arg1: memref<1x16x16x128xbf16, #tpu.memory_space<vmem>>, %arg2: memref<3x384x128xbf16, #tpu.memory_space<vmem>>, %arg3: memref<1x16x16x128xbf16, #tpu.memory_space<vmem>>, %arg4: memref<1x1x128xf32, #tpu.memory_space<vmem>>, %arg5: memref<1x1x128xf32, #tpu.memory_space<vmem>>, %arg6: memref<18x16x384xbf16, #tpu.memory_space<vmem>>) attributes {dimension_semantics = [#tpu.dimension_semantics<parallel>], iteration_bounds = array<i64: 2>, scalar_prefetch = 0 : i64, scratch_operands = 1 : i64, tpu.core_type = #tpu.core_type<tc>, window_params = [{transform_indices = @transform_0, window_bounds = array<i64: 1, 16, 16, 128>}, {pipeline_mode = #tpu.pipeline_mode<synchronous>, transform_indices = @transform_1, window_bounds = array<i64: 3, 384, 128>}, {transform_indices = @transform_2, window_bounds = array<i64: 1, 16, 16, 128>}, {transform_indices = @transform_3, window_bounds = array<i64: 1, 1, 128>}, {transform_indices = @transform_4, window_bounds = array<i64: 1, 1, 128>}]} {
    %c0 = arith.constant 0 : index
    %c0_0 = arith.constant 0 : index
    %c0_1 = arith.constant 0 : index
    %c0_2 = arith.constant 0 : index
    %0 = vector.load %arg1[%c0, %c0_0, %c0_1, %c0_2] : memref<1x16x16x128xbf16, #tpu.memory_space<vmem>>, vector<1x16x16x128xbf16>
    %1 = vector.shape_cast %0 : vector<1x16x16x128xbf16> to vector<16x16x128xbf16>
    %cst = arith.constant 0.000000e+00 : bf16
    %2 = vector.broadcast %cst : bf16 to vector<16x1x128xbf16>
    %cst_3 = arith.constant 0.000000e+00 : bf16
    %3 = vector.broadcast %cst_3 : bf16 to vector<16x384xbf16>
    %4 = tpu.concatenate %2, %1, %2 in 1 : vector<16x1x128xbf16>, vector<16x16x128xbf16>, vector<16x1x128xbf16> -> vector<16x18x128xbf16>
    %c0_4 = arith.constant 0 : index
    %c0_5 = arith.constant 0 : index
    %c0_6 = arith.constant 0 : index
    %5 = vector.load %arg6[%c0_4, %c0_5, %c0_6] : memref<18x16x384xbf16, #tpu.memory_space<vmem>>, vector<1x16x384xbf16>
    %6 = vector.shape_cast %5 : vector<1x16x384xbf16> to vector<16x384xbf16>
    %7 = vector.shape_cast %3 : vector<16x384xbf16> to vector<1x16x384xbf16>
    tpu.vector_store %arg6[%c0_4, %c0_5, %c0_6], %7 {strides = array<i32>} : memref<18x16x384xbf16, #tpu.memory_space<vmem>>, vector<1x16x384xbf16>,
    %c17 = arith.constant 17 : index
    %c0_7 = arith.constant 0 : index
    %c0_8 = arith.constant 0 : index
    %8 = vector.load %arg6[%c17, %c0_7, %c0_8] : memref<18x16x384xbf16, #tpu.memory_space<vmem>>, vector<1x16x384xbf16>
    %9 = vector.shape_cast %8 : vector<1x16x384xbf16> to vector<16x384xbf16>
    %10 = vector.shape_cast %3 : vector<16x384xbf16> to vector<1x16x384xbf16>
    tpu.vector_store %arg6[%c17, %c0_7, %c0_8], %10 {strides = array<i32>} : memref<18x16x384xbf16, #tpu.memory_space<vmem>>, vector<1x16x384xbf16>,
    %11 = vector.extract_strided_slice %4 {offsets = [0, 0, 0], sizes = [16, 16, 128], strides = [1, 1, 1]} : vector<16x18x128xbf16> to vector<16x16x128xbf16>
    %c1 = arith.constant 1 : index
    %c0_9 = arith.constant 0 : index
    %c0_10 = arith.constant 0 : index
    %12 = vector.load %arg6[%c1, %c0_9, %c0_10] : memref<18x16x384xbf16, #tpu.memory_space<vmem>>, vector<16x16x128xbf16>
    tpu.vector_store %arg6[%c1, %c0_9, %c0_10], %11 {strides = array<i32>} : memref<18x16x384xbf16, #tpu.memory_space<vmem>>, vector<16x16x128xbf16>,
    %13 = vector.extract_strided_slice %4 {offsets = [0, 1, 0], sizes = [16, 16, 128], strides = [1, 1, 1]} : vector<16x18x128xbf16> to vector<16x16x128xbf16>
    %c1_11 = arith.constant 1 : index
    %c0_12 = arith.constant 0 : index
    %c128 = arith.constant 128 : index
    %14 = vector.load %arg6[%c1_11, %c0_12, %c128] : memref<18x16x384xbf16, #tpu.memory_space<vmem>>, vector<16x16x128xbf16>
    tpu.vector_store %arg6[%c1_11, %c0_12, %c128], %13 {strides = array<i32>} : memref<18x16x384xbf16, #tpu.memory_space<vmem>>, vector<16x16x128xbf16>,
    %15 = vector.extract_strided_slice %4 {offsets = [0, 2, 0], sizes = [16, 16, 128], strides = [1, 1, 1]} : vector<16x18x128xbf16> to vector<16x16x128xbf16>
    %c1_13 = arith.constant 1 : index
    %c0_14 = arith.constant 0 : index
    %c256 = arith.constant 256 : index
    %16 = vector.load %arg6[%c1_13, %c0_14, %c256] : memref<18x16x384xbf16, #tpu.memory_space<vmem>>, vector<16x16x128xbf16>
    tpu.vector_store %arg6[%c1_13, %c0_14, %c256], %15 {strides = array<i32>} : memref<18x16x384xbf16, #tpu.memory_space<vmem>>, vector<16x16x128xbf16>,
    %c0_15 = arith.constant 0 : index
    %c0_16 = arith.constant 0 : index
    %c0_17 = arith.constant 0 : index
    %17 = vector.load %arg6[%c0_15, %c0_16, %c0_17] : memref<18x16x384xbf16, #tpu.memory_space<vmem>>, vector<16x16x384xbf16>
    %18 = vector.shape_cast %17 : vector<16x16x384xbf16> to vector<256x384xbf16>
    %c0_18 = arith.constant 0 : index
    %c0_19 = arith.constant 0 : index
    %c0_20 = arith.constant 0 : index
    %19 = vector.load %arg2[%c0_18, %c0_19, %c0_20] : memref<3x384x128xbf16, #tpu.memory_space<vmem>>, vector<1x384x128xbf16>
    %20 = vector.shape_cast %19 : vector<1x384x128xbf16> to vector<384x128xbf16>
    %cst_21 = arith.constant dense<0.000000e+00> : vector<256x128xf32>
    %21 = tpu.matmul %18, %20, %cst_21 {dimension_numbers = #tpu.dot_dimension_numbers<[1], [0], [0], [1], [0, 0, 1, 1], [], []>} : vector<256x384xbf16>, vector<384x128xbf16>, vector<256x128xf32> -> vector<256x128xf32>
    %c1_22 = arith.constant 1 : index
    %c0_23 = arith.constant 0 : index
    %c0_24 = arith.constant 0 : index
    %22 = vector.load %arg6[%c1_22, %c0_23, %c0_24] : memref<18x16x384xbf16, #tpu.memory_space<vmem>>, vector<16x16x384xbf16>
    %23 = vector.shape_cast %22 : vector<16x16x384xbf16> to vector<256x384xbf16>
    %c1_25 = arith.constant 1 : index
    %c0_26 = arith.constant 0 : index
    %c0_27 = arith.constant 0 : index
    %24 = vector.load %arg2[%c1_25, %c0_26, %c0_27] : memref<3x384x128xbf16, #tpu.memory_space<vmem>>, vector<1x384x128xbf16>
    %25 = vector.shape_cast %24 : vector<1x384x128xbf16> to vector<384x128xbf16>
    %cst_28 = arith.constant dense<0.000000e+00> : vector<256x128xf32>
    %26 = tpu.matmul %23, %25, %cst_28 {dimension_numbers = #tpu.dot_dimension_numbers<[1], [0], [0], [1], [0, 0, 1, 1], [], []>} : vector<256x384xbf16>, vector<384x128xbf16>, vector<256x128xf32> -> vector<256x128xf32>
    %27 = arith.addf %21, %26 : vector<256x128xf32>
    %c2 = arith.constant 2 : index
    %c0_29 = arith.constant 0 : index
    %c0_30 = arith.constant 0 : index
    %28 = vector.load %arg6[%c2, %c0_29, %c0_30] : memref<18x16x384xbf16, #tpu.memory_space<vmem>>, vector<16x16x384xbf16>
    %29 = vector.shape_cast %28 : vector<16x16x384xbf16> to vector<256x384xbf16>
    %c2_31 = arith.constant 2 : index
    %c0_32 = arith.constant 0 : index
    %c0_33 = arith.constant 0 : index
    %30 = vector.load %arg2[%c2_31, %c0_32, %c0_33] : memref<3x384x128xbf16, #tpu.memory_space<vmem>>, vector<1x384x128xbf16>
    %31 = vector.shape_cast %30 : vector<1x384x128xbf16> to vector<384x128xbf16>
    %cst_34 = arith.constant dense<0.000000e+00> : vector<256x128xf32>
    %32 = tpu.matmul %29, %31, %cst_34 {dimension_numbers = #tpu.dot_dimension_numbers<[1], [0], [0], [1], [0, 0, 1, 1], [], []>} : vector<256x384xbf16>, vector<384x128xbf16>, vector<256x128xf32> -> vector<256x128xf32>
    %33 = arith.addf %27, %32 : vector<256x128xf32>
    %cst_35 = arith.constant dense<0.000000e+00> : vector<128xf32>
    %34 = vector.multi_reduction <add>, %33, %cst_35 [0] : vector<256x128xf32> to vector<128xf32>
    %35 = vector.shape_cast %34 : vector<128xf32> to vector<1x128xf32>
    %c0_36 = arith.constant 0 : index
    %c0_37 = arith.constant 0 : index
    %c0_38 = arith.constant 0 : index
    %36 = vector.load %arg4[%c0_36, %c0_37, %c0_38] : memref<1x1x128xf32, #tpu.memory_space<vmem>>, vector<1x1x128xf32>
    %37 = vector.shape_cast %36 : vector<1x1x128xf32> to vector<1x128xf32>
    %38 = vector.shape_cast %35 : vector<1x128xf32> to vector<1x1x128xf32>
    tpu.vector_store %arg4[%c0_36, %c0_37, %c0_38], %38 {strides = array<i32>} : memref<1x1x128xf32, #tpu.memory_space<vmem>>, vector<1x1x128xf32>,
    %39 = arith.mulf %33, %33 : vector<256x128xf32>
    %cst_39 = arith.constant dense<0.000000e+00> : vector<128xf32>
    %40 = vector.multi_reduction <add>, %39, %cst_39 [0] : vector<256x128xf32> to vector<128xf32>
    %41 = vector.shape_cast %40 : vector<128xf32> to vector<1x128xf32>
    %c0_40 = arith.constant 0 : index
    %c0_41 = arith.constant 0 : index
    %c0_42 = arith.constant 0 : index
    %42 = vector.load %arg5[%c0_40, %c0_41, %c0_42] : memref<1x1x128xf32, #tpu.memory_space<vmem>>, vector<1x1x128xf32>
    %43 = vector.shape_cast %42 : vector<1x1x128xf32> to vector<1x128xf32>
    %44 = vector.shape_cast %41 : vector<1x128xf32> to vector<1x1x128xf32>
    tpu.vector_store %arg5[%c0_40, %c0_41, %c0_42], %44 {strides = array<i32>} : memref<1x1x128xf32, #tpu.memory_space<vmem>>, vector<1x1x128xf32>,
    %45 = vector.shape_cast %33 : vector<256x128xf32> to vector<16x16x128xf32>
    %46 = arith.truncf %45 : vector<16x16x128xf32> to vector<16x16x128xbf16>
    %c0_43 = arith.constant 0 : index
    %c0_44 = arith.constant 0 : index
    %c0_45 = arith.constant 0 : index
    %c0_46 = arith.constant 0 : index
    %47 = vector.load %arg3[%c0_43, %c0_44, %c0_45, %c0_46] : memref<1x16x16x128xbf16, #tpu.memory_space<vmem>>, vector<1x16x16x128xbf16>
    %48 = vector.shape_cast %47 : vector<1x16x16x128xbf16> to vector<16x16x128xbf16>
    %49 = vector.shape_cast %46 : vector<16x16x128xbf16> to vector<1x16x16x128xbf16>
    tpu.vector_store %arg3[%c0_43, %c0_44, %c0_45, %c0_46], %49 {strides = array<i32>} : memref<1x16x16x128xbf16, #tpu.memory_space<vmem>>, vector<1x16x16x128xbf16>,
    return
  }
  func.func @transform_0(%arg0: i32) -> (i32, i32, i32, i32) {
    %c0_i32 = arith.constant 0 : i32
    %c0_i32_0 = arith.constant 0 : i32
    %c0_i32_1 = arith.constant 0 : i32
    %c0_i32_2 = arith.constant 0 : i32
    return %arg0, %c0_i32, %c0_i32_0, %c0_i32_1 : i32, i32, i32, i32
  }
  func.func @transform_1(%arg0: i32) -> (i32, i32, i32) {
    %c0_i32 = arith.constant 0 : i32
    %c0_i32_0 = arith.constant 0 : i32
    %c0_i32_1 = arith.constant 0 : i32
    %c0_i32_2 = arith.constant 0 : i32
    return %c0_i32, %c0_i32_0, %c0_i32_1 : i32, i32, i32
  }
  func.func @transform_2(%arg0: i32) -> (i32, i32, i32, i32) {
    %c0_i32 = arith.constant 0 : i32
    %c0_i32_0 = arith.constant 0 : i32
    %c0_i32_1 = arith.constant 0 : i32
    %c0_i32_2 = arith.constant 0 : i32
    return %arg0, %c0_i32, %c0_i32_0, %c0_i32_1 : i32, i32, i32, i32
  }
  func.func @transform_3(%arg0: i32) -> (i32, i32, i32) {
    %c0_i32 = arith.constant 0 : i32
    %c0_i32_0 = arith.constant 0 : i32
    %c0_i32_1 = arith.constant 0 : i32
    return %arg0, %c0_i32, %c0_i32_0 : i32, i32, i32
  }
  func.func @transform_4(%arg0: i32) -> (i32, i32, i32) {
    %c0_i32 = arith.constant 0 : i32
    %c0_i32_0 = arith.constant 0 : i32
    %c0_i32_1 = arith.constant 0 : i32
    return %arg0, %c0_i32, %c0_i32_0 : i32, i32, i32
  }
}

module attributes {stable_mosaic.version = 11 : i64} {
  func.func @_conv1x1_kernel(%arg0: i32, %arg1: memref<512x128xbf16, #tpu.memory_space<vmem>>, %arg2: memref<128x128xbf16, #tpu.memory_space<vmem>>, %arg3: memref<1x128xf32, #tpu.memory_space<vmem>>, %arg4: memref<512x128xbf16, #tpu.memory_space<vmem>>) attributes {dimension_semantics = [#tpu.dimension_semantics<parallel>], iteration_bounds = array<i64: 1>, scalar_prefetch = 0 : i64, scratch_operands = 0 : i64, tpu.core_type = #tpu.core_type<tc>, window_params = [{transform_indices = @transform_0, window_bounds = array<i64: 512, 128>}, {pipeline_mode = #tpu.pipeline_mode<synchronous>, transform_indices = @transform_1, window_bounds = array<i64: 128, 128>}, {pipeline_mode = #tpu.pipeline_mode<synchronous>, transform_indices = @transform_2, window_bounds = array<i64: 1, 128>}, {transform_indices = @transform_3, window_bounds = array<i64: 512, 128>}]} {
    %c0 = arith.constant 0 : index
    %c0_0 = arith.constant 0 : index
    %0 = vector.load %arg1[%c0, %c0_0] : memref<512x128xbf16, #tpu.memory_space<vmem>>, vector<512x128xbf16>
    %c0_1 = arith.constant 0 : index
    %c0_2 = arith.constant 0 : index
    %1 = vector.load %arg2[%c0_1, %c0_2] : memref<128x128xbf16, #tpu.memory_space<vmem>>, vector<128x128xbf16>
    %cst = arith.constant dense<0.000000e+00> : vector<512x128xf32>
    %2 = tpu.matmul %0, %1, %cst {dimension_numbers = #tpu.dot_dimension_numbers<[1], [0], [0], [1], [0, 0, 1, 1], [], []>} : vector<512x128xbf16>, vector<128x128xbf16>, vector<512x128xf32> -> vector<512x128xf32>
    %c0_3 = arith.constant 0 : index
    %c0_4 = arith.constant 0 : index
    %3 = vector.load %arg3[%c0_3, %c0_4] : memref<1x128xf32, #tpu.memory_space<vmem>>, vector<1x128xf32>
    %4 = vector.broadcast %3 : vector<1x128xf32> to vector<512x128xf32>
    %5 = arith.addf %2, %4 : vector<512x128xf32>
    %6 = arith.truncf %5 : vector<512x128xf32> to vector<512x128xbf16>
    %c0_5 = arith.constant 0 : index
    %c0_6 = arith.constant 0 : index
    %7 = vector.load %arg4[%c0_5, %c0_6] : memref<512x128xbf16, #tpu.memory_space<vmem>>, vector<512x128xbf16>
    tpu.vector_store %arg4[%c0_5, %c0_6], %6 {strides = array<i32>} : memref<512x128xbf16, #tpu.memory_space<vmem>>, vector<512x128xbf16>,
    return
  }
  func.func @transform_0(%arg0: i32) -> (i32, i32) {
    %c0_i32 = arith.constant 0 : i32
    %c0_i32_0 = arith.constant 0 : i32
    return %arg0, %c0_i32 : i32, i32
  }
  func.func @transform_1(%arg0: i32) -> (i32, i32) {
    %c0_i32 = arith.constant 0 : i32
    %c0_i32_0 = arith.constant 0 : i32
    %c0_i32_1 = arith.constant 0 : i32
    return %c0_i32, %c0_i32_0 : i32, i32
  }
  func.func @transform_2(%arg0: i32) -> (i32, i32) {
    %c0_i32 = arith.constant 0 : i32
    %c0_i32_0 = arith.constant 0 : i32
    %c0_i32_1 = arith.constant 0 : i32
    return %c0_i32, %c0_i32_0 : i32, i32
  }
  func.func @transform_3(%arg0: i32) -> (i32, i32) {
    %c0_i32 = arith.constant 0 : i32
    %c0_i32_0 = arith.constant 0 : i32
    return %arg0, %c0_i32 : i32, i32
  }
}

module attributes {stable_mosaic.version = 11 : i64} {
  func.func @kernel(%arg0: i32, %arg1: memref<1x16x16x128xbf16, #tpu.memory_space<vmem>>, %arg2: memref<1x1x128xf32, #tpu.memory_space<vmem>>, %arg3: memref<1x1x128xf32, #tpu.memory_space<vmem>>, %arg4: memref<3x384x128xbf16, #tpu.memory_space<vmem>>, %arg5: memref<1x16x16x128xbf16, #tpu.memory_space<vmem>>, %arg6: memref<1x1x128xf32, #tpu.memory_space<vmem>>, %arg7: memref<1x1x128xf32, #tpu.memory_space<vmem>>, %arg8: memref<18x16x384xbf16, #tpu.memory_space<vmem>>) attributes {dimension_semantics = [#tpu.dimension_semantics<parallel>], iteration_bounds = array<i64: 2>, scalar_prefetch = 0 : i64, scratch_operands = 1 : i64, tpu.core_type = #tpu.core_type<tc>, window_params = [{transform_indices = @transform_0, window_bounds = array<i64: 1, 16, 16, 128>}, {pipeline_mode = #tpu.pipeline_mode<synchronous>, transform_indices = @transform_1, window_bounds = array<i64: 1, 1, 128>}, {pipeline_mode = #tpu.pipeline_mode<synchronous>, transform_indices = @transform_2, window_bounds = array<i64: 1, 1, 128>}, {pipeline_mode = #tpu.pipeline_mode<synchronous>, transform_indices = @transform_3, window_bounds = array<i64: 3, 384, 128>}, {transform_indices = @transform_4, window_bounds = array<i64: 1, 16, 16, 128>}, {transform_indices = @transform_5, window_bounds = array<i64: 1, 1, 128>}, {transform_indices = @transform_6, window_bounds = array<i64: 1, 1, 128>}]} {
    %c0 = arith.constant 0 : index
    %c0_0 = arith.constant 0 : index
    %c0_1 = arith.constant 0 : index
    %c0_2 = arith.constant 0 : index
    %0 = vector.load %arg1[%c0, %c0_0, %c0_1, %c0_2] : memref<1x16x16x128xbf16, #tpu.memory_space<vmem>>, vector<1x16x16x128xbf16>
    %1 = vector.shape_cast %0 : vector<1x16x16x128xbf16> to vector<16x16x128xbf16>
    %2 = arith.extf %1 : vector<16x16x128xbf16> to vector<16x16x128xf32>
    %c0_3 = arith.constant 0 : index
    %c0_4 = arith.constant 0 : index
    %c0_5 = arith.constant 0 : index
    %3 = vector.load %arg2[%c0_3, %c0_4, %c0_5] : memref<1x1x128xf32, #tpu.memory_space<vmem>>, vector<1x1x128xf32>
    %4 = vector.shape_cast %3 : vector<1x1x128xf32> to vector<1x128xf32>
    %5 = vector.shape_cast %4 : vector<1x128xf32> to vector<1x1x128xf32>
    %6 = vector.broadcast %5 : vector<1x1x128xf32> to vector<16x16x128xf32>
    %7 = arith.mulf %2, %6 : vector<16x16x128xf32>
    %c0_6 = arith.constant 0 : index
    %c0_7 = arith.constant 0 : index
    %c0_8 = arith.constant 0 : index
    %8 = vector.load %arg3[%c0_6, %c0_7, %c0_8] : memref<1x1x128xf32, #tpu.memory_space<vmem>>, vector<1x1x128xf32>
    %9 = vector.shape_cast %8 : vector<1x1x128xf32> to vector<1x128xf32>
    %10 = vector.shape_cast %9 : vector<1x128xf32> to vector<1x1x128xf32>
    %11 = vector.broadcast %10 : vector<1x1x128xf32> to vector<16x16x128xf32>
    %12 = arith.addf %7, %11 : vector<16x16x128xf32>
    %cst = arith.constant 0.000000e+00 : f32
    %13 = vector.broadcast %cst : f32 to vector<16x16x128xf32>
    %14 = arith.maximumf %12, %13 : vector<16x16x128xf32>
    %15 = arith.truncf %14 : vector<16x16x128xf32> to vector<16x16x128xbf16>
    %cst_9 = arith.constant 0.000000e+00 : bf16
    %16 = vector.broadcast %cst_9 : bf16 to vector<16x1x128xbf16>
    %cst_10 = arith.constant 0.000000e+00 : bf16
    %17 = vector.broadcast %cst_10 : bf16 to vector<16x384xbf16>
    %18 = tpu.concatenate %16, %15, %16 in 1 : vector<16x1x128xbf16>, vector<16x16x128xbf16>, vector<16x1x128xbf16> -> vector<16x18x128xbf16>
    %c0_11 = arith.constant 0 : index
    %c0_12 = arith.constant 0 : index
    %c0_13 = arith.constant 0 : index
    %19 = vector.load %arg8[%c0_11, %c0_12, %c0_13] : memref<18x16x384xbf16, #tpu.memory_space<vmem>>, vector<1x16x384xbf16>
    %20 = vector.shape_cast %19 : vector<1x16x384xbf16> to vector<16x384xbf16>
    %21 = vector.shape_cast %17 : vector<16x384xbf16> to vector<1x16x384xbf16>
    tpu.vector_store %arg8[%c0_11, %c0_12, %c0_13], %21 {strides = array<i32>} : memref<18x16x384xbf16, #tpu.memory_space<vmem>>, vector<1x16x384xbf16>,
    %c17 = arith.constant 17 : index
    %c0_14 = arith.constant 0 : index
    %c0_15 = arith.constant 0 : index
    %22 = vector.load %arg8[%c17, %c0_14, %c0_15] : memref<18x16x384xbf16, #tpu.memory_space<vmem>>, vector<1x16x384xbf16>
    %23 = vector.shape_cast %22 : vector<1x16x384xbf16> to vector<16x384xbf16>
    %24 = vector.shape_cast %17 : vector<16x384xbf16> to vector<1x16x384xbf16>
    tpu.vector_store %arg8[%c17, %c0_14, %c0_15], %24 {strides = array<i32>} : memref<18x16x384xbf16, #tpu.memory_space<vmem>>, vector<1x16x384xbf16>,
    %25 = vector.extract_strided_slice %18 {offsets = [0, 0, 0], sizes = [16, 16, 128], strides = [1, 1, 1]} : vector<16x18x128xbf16> to vector<16x16x128xbf16>
    %c1 = arith.constant 1 : index
    %c0_16 = arith.constant 0 : index
    %c0_17 = arith.constant 0 : index
    %26 = vector.load %arg8[%c1, %c0_16, %c0_17] : memref<18x16x384xbf16, #tpu.memory_space<vmem>>, vector<16x16x128xbf16>
    tpu.vector_store %arg8[%c1, %c0_16, %c0_17], %25 {strides = array<i32>} : memref<18x16x384xbf16, #tpu.memory_space<vmem>>, vector<16x16x128xbf16>,
    %27 = vector.extract_strided_slice %18 {offsets = [0, 1, 0], sizes = [16, 16, 128], strides = [1, 1, 1]} : vector<16x18x128xbf16> to vector<16x16x128xbf16>
    %c1_18 = arith.constant 1 : index
    %c0_19 = arith.constant 0 : index
    %c128 = arith.constant 128 : index
    %28 = vector.load %arg8[%c1_18, %c0_19, %c128] : memref<18x16x384xbf16, #tpu.memory_space<vmem>>, vector<16x16x128xbf16>
    tpu.vector_store %arg8[%c1_18, %c0_19, %c128], %27 {strides = array<i32>} : memref<18x16x384xbf16, #tpu.memory_space<vmem>>, vector<16x16x128xbf16>,
    %29 = vector.extract_strided_slice %18 {offsets = [0, 2, 0], sizes = [16, 16, 128], strides = [1, 1, 1]} : vector<16x18x128xbf16> to vector<16x16x128xbf16>
    %c1_20 = arith.constant 1 : index
    %c0_21 = arith.constant 0 : index
    %c256 = arith.constant 256 : index
    %30 = vector.load %arg8[%c1_20, %c0_21, %c256] : memref<18x16x384xbf16, #tpu.memory_space<vmem>>, vector<16x16x128xbf16>
    tpu.vector_store %arg8[%c1_20, %c0_21, %c256], %29 {strides = array<i32>} : memref<18x16x384xbf16, #tpu.memory_space<vmem>>, vector<16x16x128xbf16>,
    %c0_22 = arith.constant 0 : index
    %c0_23 = arith.constant 0 : index
    %c0_24 = arith.constant 0 : index
    %31 = vector.load %arg8[%c0_22, %c0_23, %c0_24] : memref<18x16x384xbf16, #tpu.memory_space<vmem>>, vector<16x16x384xbf16>
    %32 = vector.shape_cast %31 : vector<16x16x384xbf16> to vector<256x384xbf16>
    %c0_25 = arith.constant 0 : index
    %c0_26 = arith.constant 0 : index
    %c0_27 = arith.constant 0 : index
    %33 = vector.load %arg4[%c0_25, %c0_26, %c0_27] : memref<3x384x128xbf16, #tpu.memory_space<vmem>>, vector<1x384x128xbf16>
    %34 = vector.shape_cast %33 : vector<1x384x128xbf16> to vector<384x128xbf16>
    %cst_28 = arith.constant dense<0.000000e+00> : vector<256x128xf32>
    %35 = tpu.matmul %32, %34, %cst_28 {dimension_numbers = #tpu.dot_dimension_numbers<[1], [0], [0], [1], [0, 0, 1, 1], [], []>} : vector<256x384xbf16>, vector<384x128xbf16>, vector<256x128xf32> -> vector<256x128xf32>
    %c1_29 = arith.constant 1 : index
    %c0_30 = arith.constant 0 : index
    %c0_31 = arith.constant 0 : index
    %36 = vector.load %arg8[%c1_29, %c0_30, %c0_31] : memref<18x16x384xbf16, #tpu.memory_space<vmem>>, vector<16x16x384xbf16>
    %37 = vector.shape_cast %36 : vector<16x16x384xbf16> to vector<256x384xbf16>
    %c1_32 = arith.constant 1 : index
    %c0_33 = arith.constant 0 : index
    %c0_34 = arith.constant 0 : index
    %38 = vector.load %arg4[%c1_32, %c0_33, %c0_34] : memref<3x384x128xbf16, #tpu.memory_space<vmem>>, vector<1x384x128xbf16>
    %39 = vector.shape_cast %38 : vector<1x384x128xbf16> to vector<384x128xbf16>
    %cst_35 = arith.constant dense<0.000000e+00> : vector<256x128xf32>
    %40 = tpu.matmul %37, %39, %cst_35 {dimension_numbers = #tpu.dot_dimension_numbers<[1], [0], [0], [1], [0, 0, 1, 1], [], []>} : vector<256x384xbf16>, vector<384x128xbf16>, vector<256x128xf32> -> vector<256x128xf32>
    %41 = arith.addf %35, %40 : vector<256x128xf32>
    %c2 = arith.constant 2 : index
    %c0_36 = arith.constant 0 : index
    %c0_37 = arith.constant 0 : index
    %42 = vector.load %arg8[%c2, %c0_36, %c0_37] : memref<18x16x384xbf16, #tpu.memory_space<vmem>>, vector<16x16x384xbf16>
    %43 = vector.shape_cast %42 : vector<16x16x384xbf16> to vector<256x384xbf16>
    %c2_38 = arith.constant 2 : index
    %c0_39 = arith.constant 0 : index
    %c0_40 = arith.constant 0 : index
    %44 = vector.load %arg4[%c2_38, %c0_39, %c0_40] : memref<3x384x128xbf16, #tpu.memory_space<vmem>>, vector<1x384x128xbf16>
    %45 = vector.shape_cast %44 : vector<1x384x128xbf16> to vector<384x128xbf16>
    %cst_41 = arith.constant dense<0.000000e+00> : vector<256x128xf32>
    %46 = tpu.matmul %43, %45, %cst_41 {dimension_numbers = #tpu.dot_dimension_numbers<[1], [0], [0], [1], [0, 0, 1, 1], [], []>} : vector<256x384xbf16>, vector<384x128xbf16>, vector<256x128xf32> -> vector<256x128xf32>
    %47 = arith.addf %41, %46 : vector<256x128xf32>
    %cst_42 = arith.constant dense<0.000000e+00> : vector<128xf32>
    %48 = vector.multi_reduction <add>, %47, %cst_42 [0] : vector<256x128xf32> to vector<128xf32>
    %49 = vector.shape_cast %48 : vector<128xf32> to vector<1x128xf32>
    %c0_43 = arith.constant 0 : index
    %c0_44 = arith.constant 0 : index
    %c0_45 = arith.constant 0 : index
    %50 = vector.load %arg6[%c0_43, %c0_44, %c0_45] : memref<1x1x128xf32, #tpu.memory_space<vmem>>, vector<1x1x128xf32>
    %51 = vector.shape_cast %50 : vector<1x1x128xf32> to vector<1x128xf32>
    %52 = vector.shape_cast %49 : vector<1x128xf32> to vector<1x1x128xf32>
    tpu.vector_store %arg6[%c0_43, %c0_44, %c0_45], %52 {strides = array<i32>} : memref<1x1x128xf32, #tpu.memory_space<vmem>>, vector<1x1x128xf32>,
    %53 = arith.mulf %47, %47 : vector<256x128xf32>
    %cst_46 = arith.constant dense<0.000000e+00> : vector<128xf32>
    %54 = vector.multi_reduction <add>, %53, %cst_46 [0] : vector<256x128xf32> to vector<128xf32>
    %55 = vector.shape_cast %54 : vector<128xf32> to vector<1x128xf32>
    %c0_47 = arith.constant 0 : index
    %c0_48 = arith.constant 0 : index
    %c0_49 = arith.constant 0 : index
    %56 = vector.load %arg7[%c0_47, %c0_48, %c0_49] : memref<1x1x128xf32, #tpu.memory_space<vmem>>, vector<1x1x128xf32>
    %57 = vector.shape_cast %56 : vector<1x1x128xf32> to vector<1x128xf32>
    %58 = vector.shape_cast %55 : vector<1x128xf32> to vector<1x1x128xf32>
    tpu.vector_store %arg7[%c0_47, %c0_48, %c0_49], %58 {strides = array<i32>} : memref<1x1x128xf32, #tpu.memory_space<vmem>>, vector<1x1x128xf32>,
    %59 = vector.shape_cast %47 : vector<256x128xf32> to vector<16x16x128xf32>
    %60 = arith.truncf %59 : vector<16x16x128xf32> to vector<16x16x128xbf16>
    %c0_50 = arith.constant 0 : index
    %c0_51 = arith.constant 0 : index
    %c0_52 = arith.constant 0 : index
    %c0_53 = arith.constant 0 : index
    %61 = vector.load %arg5[%c0_50, %c0_51, %c0_52, %c0_53] : memref<1x16x16x128xbf16, #tpu.memory_space<vmem>>, vector<1x16x16x128xbf16>
    %62 = vector.shape_cast %61 : vector<1x16x16x128xbf16> to vector<16x16x128xbf16>
    %63 = vector.shape_cast %60 : vector<16x16x128xbf16> to vector<1x16x16x128xbf16>
    tpu.vector_store %arg5[%c0_50, %c0_51, %c0_52, %c0_53], %63 {strides = array<i32>} : memref<1x16x16x128xbf16, #tpu.memory_space<vmem>>, vector<1x16x16x128xbf16>,
    return
  }
  func.func @transform_0(%arg0: i32) -> (i32, i32, i32, i32) {
    %c0_i32 = arith.constant 0 : i32
    %c0_i32_0 = arith.constant 0 : i32
    %c0_i32_1 = arith.constant 0 : i32
    %c0_i32_2 = arith.constant 0 : i32
    return %arg0, %c0_i32, %c0_i32_0, %c0_i32_1 : i32, i32, i32, i32
  }
  func.func @transform_1(%arg0: i32) -> (i32, i32, i32) {
    %c0_i32 = arith.constant 0 : i32
    %c0_i32_0 = arith.constant 0 : i32
    %c0_i32_1 = arith.constant 0 : i32
    %c0_i32_2 = arith.constant 0 : i32
    return %c0_i32, %c0_i32_0, %c0_i32_1 : i32, i32, i32
  }
  func.func @transform_2(%arg0: i32) -> (i32, i32, i32) {
    %c0_i32 = arith.constant 0 : i32
    %c0_i32_0 = arith.constant 0 : i32
    %c0_i32_1 = arith.constant 0 : i32
    %c0_i32_2 = arith.constant 0 : i32
    return %c0_i32, %c0_i32_0, %c0_i32_1 : i32, i32, i32
  }
  func.func @transform_3(%arg0: i32) -> (i32, i32, i32) {
    %c0_i32 = arith.constant 0 : i32
    %c0_i32_0 = arith.constant 0 : i32
    %c0_i32_1 = arith.constant 0 : i32
    %c0_i32_2 = arith.constant 0 : i32
    return %c0_i32, %c0_i32_0, %c0_i32_1 : i32, i32, i32
  }
  func.func @transform_4(%arg0: i32) -> (i32, i32, i32, i32) {
    %c0_i32 = arith.constant 0 : i32
    %c0_i32_0 = arith.constant 0 : i32
    %c0_i32_1 = arith.constant 0 : i32
    %c0_i32_2 = arith.constant 0 : i32
    return %arg0, %c0_i32, %c0_i32_0, %c0_i32_1 : i32, i32, i32, i32
  }
  func.func @transform_5(%arg0: i32) -> (i32, i32, i32) {
    %c0_i32 = arith.constant 0 : i32
    %c0_i32_0 = arith.constant 0 : i32
    %c0_i32_1 = arith.constant 0 : i32
    return %arg0, %c0_i32, %c0_i32_0 : i32, i32, i32
  }
  func.func @transform_6(%arg0: i32) -> (i32, i32, i32) {
    %c0_i32 = arith.constant 0 : i32
    %c0_i32_0 = arith.constant 0 : i32
    %c0_i32_1 = arith.constant 0 : i32
    return %arg0, %c0_i32, %c0_i32_0 : i32, i32, i32
  }
}

module attributes {stable_mosaic.version = 11 : i64} {
  func.func @_bn_add_relu_kernel(%arg0: i32, %arg1: memref<512x128xbf16, #tpu.memory_space<vmem>>, %arg2: memref<512x128xbf16, #tpu.memory_space<vmem>>, %arg3: memref<1x128xf32, #tpu.memory_space<vmem>>, %arg4: memref<1x128xf32, #tpu.memory_space<vmem>>, %arg5: memref<512x128xf32, #tpu.memory_space<vmem>>) attributes {dimension_semantics = [#tpu.dimension_semantics<parallel>], iteration_bounds = array<i64: 1>, scalar_prefetch = 0 : i64, scratch_operands = 0 : i64, tpu.core_type = #tpu.core_type<tc>, window_params = [{transform_indices = @transform_0, window_bounds = array<i64: 512, 128>}, {transform_indices = @transform_1, window_bounds = array<i64: 512, 128>}, {pipeline_mode = #tpu.pipeline_mode<synchronous>, transform_indices = @transform_2, window_bounds = array<i64: 1, 128>}, {pipeline_mode = #tpu.pipeline_mode<synchronous>, transform_indices = @transform_3, window_bounds = array<i64: 1, 128>}, {transform_indices = @transform_4, window_bounds = array<i64: 512, 128>}]} {
    %c0 = arith.constant 0 : index
    %c0_0 = arith.constant 0 : index
    %0 = vector.load %arg1[%c0, %c0_0] : memref<512x128xbf16, #tpu.memory_space<vmem>>, vector<512x128xbf16>
    %1 = arith.extf %0 : vector<512x128xbf16> to vector<512x128xf32>
    %c0_1 = arith.constant 0 : index
    %c0_2 = arith.constant 0 : index
    %2 = vector.load %arg2[%c0_1, %c0_2] : memref<512x128xbf16, #tpu.memory_space<vmem>>, vector<512x128xbf16>
    %3 = arith.extf %2 : vector<512x128xbf16> to vector<512x128xf32>
    %c0_3 = arith.constant 0 : index
    %c0_4 = arith.constant 0 : index
    %4 = vector.load %arg3[%c0_3, %c0_4] : memref<1x128xf32, #tpu.memory_space<vmem>>, vector<1x128xf32>
    %5 = vector.broadcast %4 : vector<1x128xf32> to vector<512x128xf32>
    %6 = arith.mulf %1, %5 : vector<512x128xf32>
    %c0_5 = arith.constant 0 : index
    %c0_6 = arith.constant 0 : index
    %7 = vector.load %arg4[%c0_5, %c0_6] : memref<1x128xf32, #tpu.memory_space<vmem>>, vector<1x128xf32>
    %8 = vector.broadcast %7 : vector<1x128xf32> to vector<512x128xf32>
    %9 = arith.addf %6, %8 : vector<512x128xf32>
    %10 = arith.addf %9, %3 : vector<512x128xf32>
    %cst = arith.constant 0.000000e+00 : f32
    %11 = vector.broadcast %cst : f32 to vector<512x128xf32>
    %12 = arith.maximumf %10, %11 : vector<512x128xf32>
    %c0_7 = arith.constant 0 : index
    %c0_8 = arith.constant 0 : index
    %13 = vector.load %arg5[%c0_7, %c0_8] : memref<512x128xf32, #tpu.memory_space<vmem>>, vector<512x128xf32>
    tpu.vector_store %arg5[%c0_7, %c0_8], %12 {strides = array<i32>} : memref<512x128xf32, #tpu.memory_space<vmem>>, vector<512x128xf32>,
    return
  }
  func.func @transform_0(%arg0: i32) -> (i32, i32) {
    %c0_i32 = arith.constant 0 : i32
    %c0_i32_0 = arith.constant 0 : i32
    return %arg0, %c0_i32 : i32, i32
  }
  func.func @transform_1(%arg0: i32) -> (i32, i32) {
    %c0_i32 = arith.constant 0 : i32
    %c0_i32_0 = arith.constant 0 : i32
    return %arg0, %c0_i32 : i32, i32
  }
  func.func @transform_2(%arg0: i32) -> (i32, i32) {
    %c0_i32 = arith.constant 0 : i32
    %c0_i32_0 = arith.constant 0 : i32
    %c0_i32_1 = arith.constant 0 : i32
    return %c0_i32, %c0_i32_0 : i32, i32
  }
  func.func @transform_3(%arg0: i32) -> (i32, i32) {
    %c0_i32 = arith.constant 0 : i32
    %c0_i32_0 = arith.constant 0 : i32
    %c0_i32_1 = arith.constant 0 : i32
    return %c0_i32, %c0_i32_0 : i32, i32
  }
  func.func @transform_4(%arg0: i32) -> (i32, i32) {
    %c0_i32 = arith.constant 0 : i32
    %c0_i32_0 = arith.constant 0 : i32
    return %arg0, %c0_i32 : i32, i32
  }
}

</mosaic_0001>

<llo_original>
// kernel: resblock_forward.4
$region0: #{resblock_forward.4}
  #allocation0 [shape = 'u32[]', space=smem, size = 0x4, offset = 0x4, fixed_abs, tag = 'smem constant byte address 0x4 - core index']
  #allocation1 [shape = 'u32[72,128]{1,0:T(1,128)}', space=vmem, size = 0x9000, scoped, tag = 'internal scratch']
  %s0 = inlined_call_operand.vmem [shape: bf16[512,128], index: 0, kind: input, shape index: {}]
  %s1 = inlined_call_operand.vmem [shape: bf16[128,128], index: 1, kind: input, shape index: {}]
  %s2 = inlined_call_operand.vmem [shape: f32[1,128], index: 2, kind: input, shape index: {}]
  %s3 = inlined_call_operand.vmem [shape: bf16[512,128], index: 3, kind: output, shape index: {}]
  %s4 = sld [smem:[#allocation0]]
  $region22: #{resblock_forward.4} parent=0
    _
  %s6 = ssub.s32 1, %s4
  %s7 = scalar_select 0, %s6, %s4
  // Predicated region
  $region2: #{resblock_forward.4} parent=0 // pred_check
    _
  $region3: #{resblock_forward.4} parent=0 // pred_check_branch
    %9 = sbr.rel (0) target = $region5
  $region4: #{resblock_forward.4} parent=0 // pred_region
    _
  $region5: #{resblock_forward.4} parent=0 // pred_fallthru
    _
  // Predicated region
  $region6: #{resblock_forward.4} parent=0 // pred_check
    _
  $region7: #{resblock_forward.4} parent=0 // pred_check_branch
    %11 = sbr.rel (0) target = $region9
  $region8: #{resblock_forward.4} parent=0 // pred_region
    _
  $region9: #{resblock_forward.4} parent=0 // pred_fallthru
    _
  // Predicated region
  $region10: #{resblock_forward.4} parent=0 // pred_check
    _
  $region11: #{resblock_forward.4} parent=0 // pred_check_branch
    %13 = sbr.rel (0) target = $region13
  $region12: #{resblock_forward.4} parent=0 // pred_region
    _
  $region13: #{resblock_forward.4} parent=0 // pred_fallthru
    _
  %v14 = vld [vmem:[%s0] sm:$0xf]
  %v15 = vld [vmem:[%s0 + $0x4] sm:$0xf]
  %v16 = vld [vmem:[%s0 + $0x8] sm:$0xf]
  %v17 = vld [vmem:[%s0 + $0xc] sm:$0xf]
  %v18 = vld [vmem:[%s0 + $0x10] sm:$0xf]
  %v19 = vld [vmem:[%s0 + $0x14] sm:$0xf]
  %v20 = vld [vmem:[%s0 + $0x18] sm:$0xf]
  %v21 = vld [vmem:[%s0 + $0x1c] sm:$0xf]
  %v22 = vld [vmem:[%s0 + $0x20] sm:$0xf]
  %v23 = vld [vmem:[%s0 + $0x24] sm:$0xf]
  %v24 = vld [vmem:[%s0 + $0x28] sm:$0xf]
  %v25 = vld [vmem:[%s0 + $0x2c] sm:$0xf]
  %v26 = vld [vmem:[%s0 + $0x30] sm:$0xf]
  %v27 = vld [vmem:[%s0 + $0x34] sm:$0xf]
  %v28 = vld [vmem:[%s0 + $0x38] sm:$0xf]
  %v29 = vld [vmem:[%s0 + $0x3c] sm:$0xf]
  %v30 = vld [vmem:[%s0 + $0x40] sm:$0xf]
  %v31 = vld [vmem:[%s0 + $0x44] sm:$0xf]
  %v32 = vld [vmem:[%s0 + $0x48] sm:$0xf]
  %v33 = vld [vmem:[%s0 + $0x4c] sm:$0xf]
  %v34 = vld [vmem:[%s0 + $0x50] sm:$0xf]
  %v35 = vld [vmem:[%s0 + $0x54] sm:$0xf]
  %v36 = vld [vmem:[%s0 + $0x58] sm:$0xf]
  %v37 = vld [vmem:[%s0 + $0x5c] sm:$0xf]
  %v38 = vld [vmem:[%s0 + $0x60] sm:$0xf]
  %v39 = vld [vmem:[%s0 + $0x64] sm:$0xf]
  %v40 = vld [vmem:[%s0 + $0x68] sm:$0xf]
  %v41 = vld [vmem:[%s0 + $0x6c] sm:$0xf]
  %v42 = vld [vmem:[%s0 + $0x70] sm:$0xf]
  %v43 = vld [vmem:[%s0 + $0x74] sm:$0xf]
  %v44 = vld [vmem:[%s0 + $0x78] sm:$0xf]
  %v45 = vld [vmem:[%s0 + $0x7c] sm:$0xf]
  %v46 = vld [vmem:[%s0 + $0x80] sm:$0xf]
  %v47 = vld [vmem:[%s0 + $0x84] sm:$0xf]
  %v48 = vld [vmem:[%s0 + $0x88] sm:$0xf]
  %v49 = vld [vmem:[%s0 + $0x8c] sm:$0xf]
  %v50 = vld [vmem:[%s0 + $0x90] sm:$0xf]
  %v51 = vld [vmem:[%s0 + $0x94] sm:$0xf]
  %v52 = vld [vmem:[%s0 + $0x98] sm:$0xf]
  %v53 = vld [vmem:[%s0 + $0x9c] sm:$0xf]
  %v54 = vld [vmem:[%s0 + $0xa0] sm:$0xf]
  %v55 = vld [vmem:[%s0 + $0xa4] sm:$0xf]
  %v56 = vld [vmem:[%s0 + $0xa8] sm:$0xf]
  %v57 = vld [vmem:[%s0 + $0xac] sm:$0xf]
  %v58 = vld [vmem:[%s0 + $0xb0] sm:$0xf]
  %v59 = vld [vmem:[%s0 + $0xb4] sm:$0xf]
  %v60 = vld [vmem:[%s0 + $0xb8] sm:$0xf]
  %v61 = vld [vmem:[%s0 + $0xbc] sm:$0xf]
  %v62 = vld [vmem:[%s0 + $0xc0] sm:$0xf]
  %v63 = vld [vmem:[%s0 + $0xc4] sm:$0xf]
  %v64 = vld [vmem:[%s0 + $0xc8] sm:$0xf]
  %v65 = vld [vmem:[%s0 + $0xcc] sm:$0xf]
  %v66 = vld [vmem:[%s0 + $0xd0] sm:$0xf]
  %v67 = vld [vmem:[%s0 + $0xd4] sm:$0xf]
  %v68 = vld [vmem:[%s0 + $0xd8] sm:$0xf]
  %v69 = vld [vmem:[%s0 + $0xdc] sm:$0xf]
  %v70 = vld [vmem:[%s0 + $0xe0] sm:$0xf]
  %v71 = vld [vmem:[%s0 + $0xe4] sm:$0xf]
  %v72 = vld [vmem:[%s0 + $0xe8] sm:$0xf]
  %v73 = vld [vmem:[%s0 + $0xec] sm:$0xf]
  %v74 = vld [vmem:[%s0 + $0xf0] sm:$0xf]
  %v75 = vld [vmem:[%s0 + $0xf4] sm:$0xf]
  %v76 = vld [vmem:[%s0 + $0xf8] sm:$0xf]
  %v77 = vld [vmem:[%s0 + $0xfc] sm:$0xf]
  %v78 = vld [vmem:[%s1] sm:$0xf]
  %v79 = vld [vmem:[%s1 + $0x4] sm:$0xf]
  %v80 = vld [vmem:[%s1 + $0x8] sm:$0xf]
  %v81 = vld [vmem:[%s1 + $0xc] sm:$0xf]
  %v82 = vld [vmem:[%s1 + $0x10] sm:$0xf]
  %v83 = vld [vmem:[%s1 + $0x14] sm:$0xf]
  %v84 = vld [vmem:[%s1 + $0x18] sm:$0xf]
  %v85 = vld [vmem:[%s1 + $0x1c] sm:$0xf]
  %v86 = vld [vmem:[%s1 + $0x20] sm:$0xf]
  %v87 = vld [vmem:[%s1 + $0x24] sm:$0xf]
  %v88 = vld [vmem:[%s1 + $0x28] sm:$0xf]
  %v89 = vld [vmem:[%s1 + $0x2c] sm:$0xf]
  %v90 = vld [vmem:[%s1 + $0x30] sm:$0xf]
  %v91 = vld [vmem:[%s1 + $0x34] sm:$0xf]
  %v92 = vld [vmem:[%s1 + $0x38] sm:$0xf]
  %v93 = vld [vmem:[%s1 + $0x3c] sm:$0xf]
  %v94 = vld [vmem:[%s2] sm:$0x1]
  %v96 = vperm.slane %v94, 0
  %v162 = vunpack.c.l.b16 %v14
  %v163 = vunpack.c.l.b16 %v15
  %v164 = vunpack.c.l.b16 %v16
  %v165 = vunpack.c.l.b16 %v17
  %v166 = vunpack.c.l.b16 %v18
  %v167 = vunpack.c.l.b16 %v19
  %v168 = vunpack.c.l.b16 %v20
  %v169 = vunpack.c.l.b16 %v21
  %v170 = vunpack.c.l.b16 %v22
  %v171 = vunpack.c.l.b16 %v23
  %v172 = vunpack.c.l.b16 %v24
  %v173 = vunpack.c.l.b16 %v25
  %v174 = vunpack.c.l.b16 %v26
  %v175 = vunpack.c.l.b16 %v27
  %v176 = vunpack.c.l.b16 %v28
  %v177 = vunpack.c.l.b16 %v29
  %v178 = vunpack.c.l.b16 %v30
  %v179 = vunpack.c.l.b16 %v31
  %v180 = vunpack.c.l.b16 %v32
  %v181 = vunpack.c.l.b16 %v33
  %v182 = vunpack.c.l.b16 %v34
  %v183 = vunpack.c.l.b16 %v35
  %v184 = vunpack.c.l.b16 %v36
  %v185 = vunpack.c.l.b16 %v37
  %v186 = vunpack.c.l.b16 %v38
  %v187 = vunpack.c.l.b16 %v39
  %v188 = vunpack.c.l.b16 %v40
  %v189 = vunpack.c.l.b16 %v41
  %v190 = vunpack.c.l.b16 %v42
  %v191 = vunpack.c.l.b16 %v43
  %v192 = vunpack.c.l.b16 %v44
  %v193 = vunpack.c.l.b16 %v45
  %v194 = vunpack.c.l.b16 %v46
  %v195 = vunpack.c.l.b16 %v47
  %v196 = vunpack.c.l.b16 %v48
  %v197 = vunpack.c.l.b16 %v49
  %v198 = vunpack.c.l.b16 %v50
  %v199 = vunpack.c.l.b16 %v51
  %v200 = vunpack.c.l.b16 %v52
  %v201 = vunpack.c.l.b16 %v53
  %v202 = vunpack.c.l.b16 %v54
  %v203 = vunpack.c.l.b16 %v55
  %v204 = vunpack.c.l.b16 %v56
  %v205 = vunpack.c.l.b16 %v57
  %v206 = vunpack.c.l.b16 %v58
  %v207 = vunpack.c.l.b16 %v59
  %v208 = vunpack.c.l.b16 %v60
  %v209 = vunpack.c.l.b16 %v61
  %v210 = vunpack.c.l.b16 %v62
  %v211 = vunpack.c.l.b16 %v63
  %v212 = vunpack.c.l.b16 %v64
  %v213 = vunpack.c.l.b16 %v65
  %v214 = vunpack.c.l.b16 %v66
  %v215 = vunpack.c.l.b16 %v67
  %v216 = vunpack.c.l.b16 %v68
  %v217 = vunpack.c.l.b16 %v69
  %v218 = vunpack.c.l.b16 %v70
  %v219 = vunpack.c.l.b16 %v71
  %v220 = vunpack.c.l.b16 %v72
  %v221 = vunpack.c.l.b16 %v73
  %v222 = vunpack.c.l.b16 %v74
  %v223 = vunpack.c.l.b16 %v75
  %v224 = vunpack.c.l.b16 %v76
  %v225 = vunpack.c.l.b16 %v77
  %v226 = vpack.c.b16 %v163, %v162
  %v227 = vpack.c.b16 %v165, %v164
  %v228 = vpack.c.b16 %v167, %v166
  %v229 = vpack.c.b16 %v169, %v168
  %v230 = vpack.c.b16 %v171, %v170
  %v231 = vpack.c.b16 %v173, %v172
  %v232 = vpack.c.b16 %v175, %v174
  %v233 = vpack.c.b16 %v177, %v176
  %v234 = vpack.c.b16 %v179, %v178
  %v235 = vpack.c.b16 %v181, %v180
  %v236 = vpack.c.b16 %v183, %v182
  %v237 = vpack.c.b16 %v185, %v184
  %v238 = vpack.c.b16 %v187, %v186
  %v239 = vpack.c.b16 %v189, %v188
  %v240 = vpack.c.b16 %v191, %v190
  %v241 = vpack.c.b16 %v193, %v192
  %v242 = vpack.c.b16 %v195, %v194
  %v243 = vpack.c.b16 %v197, %v196
  %v244 = vpack.c.b16 %v199, %v198
  %v245 = vpack.c.b16 %v201, %v200
  %v246 = vpack.c.b16 %v203, %v202
  %v247 = vpack.c.b16 %v205, %v204
  %v248 = vpack.c.b16 %v207, %v206
  %v249 = vpack.c.b16 %v209, %v208
  %v250 = vpack.c.b16 %v211, %v210
  %v251 = vpack.c.b16 %v213, %v212
  %v252 = vpack.c.b16 %v215, %v214
  %v253 = vpack.c.b16 %v217, %v216
  %v254 = vpack.c.b16 %v219, %v218
  %v255 = vpack.c.b16 %v221, %v220
  %v256 = vpack.c.b16 %v223, %v222
  %v257 = vpack.c.b16 %v225, %v224
  %v306 = vunpack.c.l.b16 %v78
  %v307 = vunpack.c.l.b16 %v79
  %v308 = vunpack.c.l.b16 %v80
  %v309 = vunpack.c.l.b16 %v81
  %v310 = vunpack.c.l.b16 %v82
  %v311 = vunpack.c.l.b16 %v83
  %v312 = vunpack.c.l.b16 %v84
  %v313 = vunpack.c.l.b16 %v85
  %v314 = vunpack.c.l.b16 %v86
  %v315 = vunpack.c.l.b16 %v87
  %v316 = vunpack.c.l.b16 %v88
  %v317 = vunpack.c.l.b16 %v89
  %v318 = vunpack.c.l.b16 %v90
  %v319 = vunpack.c.l.b16 %v91
  %v320 = vunpack.c.l.b16 %v92
  %v321 = vunpack.c.l.b16 %v93
  %v322 = vpack.c.b16 %v307, %v306
  %v323 = vpack.c.b16 %v309, %v308
  %v324 = vpack.c.b16 %v311, %v310
  %v325 = vpack.c.b16 %v313, %v312
  %v326 = vpack.c.b16 %v315, %v314
  %v327 = vpack.c.b16 %v317, %v316
  %v328 = vpack.c.b16 %v319, %v318
  %v329 = vpack.c.b16 %v321, %v320
  %338 = vmatpush.bf16.msra.mxu0 %v329
  %339 = vmatpush.bf16.msra.mxu0 %v328
  %340 = vmatpush.bf16.msra.mxu0 %v327
  %341 = vmatpush.bf16.msra.mxu0 %v326
  %342 = vmatpush.bf16.msra.mxu0 %v325
  %343 = vmatpush.bf16.msra.mxu0 %v324
  %344 = vmatpush.bf16.msra.mxu0 %v323
  %345 = vmatpush.bf16.msra.mxu0 %v322
  %346 = vmatmul.bf16.gmra.mxu0 %v226
  %v347 = vpop.f32.mrf.mxu0
  %v348 = vadd.f32 %v96, %v347
  %v349 = vpop.f32.mrf.mxu0
  %v350 = vadd.f32 %v96, %v349
  %351 = vmatmul.bf16.gmra.mxu0 %v227
  %v352 = vpop.f32.mrf.mxu0
  %v353 = vadd.f32 %v96, %v352
  %v354 = vpop.f32.mrf.mxu0
  %v355 = vadd.f32 %v96, %v354
  %356 = vmatmul.bf16.gmra.mxu0 %v228
  %v357 = vpop.f32.mrf.mxu0
  %v358 = vadd.f32 %v96, %v357
  %v359 = vpop.f32.mrf.mxu0
  %v360 = vadd.f32 %v96, %v359
  %361 = vmatmul.bf16.gmra.mxu0 %v229
  %v362 = vpop.f32.mrf.mxu0
  %v363 = vadd.f32 %v96, %v362
  %v364 = vpop.f32.mrf.mxu0
  %v365 = vadd.f32 %v96, %v364
  %366 = vmatmul.bf16.gmra.mxu0 %v230
  %v367 = vpop.f32.mrf.mxu0
  %v368 = vadd.f32 %v96, %v367
  %v369 = vpop.f32.mrf.mxu0
  %v370 = vadd.f32 %v96, %v369
  %371 = vmatmul.bf16.gmra.mxu0 %v231
  %v372 = vpop.f32.mrf.mxu0
  %v373 = vadd.f32 %v96, %v372
  %v374 = vpop.f32.mrf.mxu0
  %v375 = vadd.f32 %v96, %v374
  %376 = vmatmul.bf16.gmra.mxu0 %v232
  %v377 = vpop.f32.mrf.mxu0
  %v378 = vadd.f32 %v96, %v377
  %v379 = vpop.f32.mrf.mxu0
  %v380 = vadd.f32 %v96, %v379
  %381 = vmatmul.bf16.gmra.mxu0 %v233
  %v382 = vpop.f32.mrf.mxu0
  %v383 = vadd.f32 %v96, %v382
  %v384 = vpop.f32.mrf.mxu0
  %v385 = vadd.f32 %v96, %v384
  %386 = vmatmul.bf16.gmra.mxu0 %v234
  %v387 = vpop.f32.mrf.mxu0
  %v388 = vadd.f32 %v96, %v387
  %v389 = vpop.f32.mrf.mxu0
  %v390 = vadd.f32 %v96, %v389
  %391 = vmatmul.bf16.gmra.mxu0 %v235
  %v392 = vpop.f32.mrf.mxu0
  %v393 = vadd.f32 %v96, %v392
  %v394 = vpop.f32.mrf.mxu0
  %v395 = vadd.f32 %v96, %v394
  %396 = vmatmul.bf16.gmra.mxu0 %v236
  %v397 = vpop.f32.mrf.mxu0
  %v398 = vadd.f32 %v96, %v397
  %v399 = vpop.f32.mrf.mxu0
  %v400 = vadd.f32 %v96, %v399
  %401 = vmatmul.bf16.gmra.mxu0 %v237
  %v402 = vpop.f32.mrf.mxu0
  %v403 = vadd.f32 %v96, %v402
  %v404 = vpop.f32.mrf.mxu0
  %v405 = vadd.f32 %v96, %v404
  %406 = vmatmul.bf16.gmra.mxu0 %v238
  %v407 = vpop.f32.mrf.mxu0
  %v408 = vadd.f32 %v96, %v407
  %v409 = vpop.f32.mrf.mxu0
  %v410 = vadd.f32 %v96, %v409
  %411 = vmatmul.bf16.gmra.mxu0 %v239
  %v412 = vpop.f32.mrf.mxu0
  %v413 = vadd.f32 %v96, %v412
  %v414 = vpop.f32.mrf.mxu0
  %v415 = vadd.f32 %v96, %v414
  %416 = vmatmul.bf16.gmra.mxu0 %v240
  %v417 = vpop.f32.mrf.mxu0
  %v418 = vadd.f32 %v96, %v417
  %v419 = vpop.f32.mrf.mxu0
  %v420 = vadd.f32 %v96, %v419
  %421 = vmatmul.bf16.gmra.mxu0 %v241
  %v422 = vpop.f32.mrf.mxu0
  %v423 = vadd.f32 %v96, %v422
  %v424 = vpop.f32.mrf.mxu0
  %v425 = vadd.f32 %v96, %v424
  %426 = vmatmul.bf16.gmra.mxu0 %v242
  %v427 = vpop.f32.mrf.mxu0
  %v428 = vadd.f32 %v96, %v427
  %v429 = vpop.f32.mrf.mxu0
  %v430 = vadd.f32 %v96, %v429
  %431 = vmatmul.bf16.gmra.mxu0 %v243
  %v432 = vpop.f32.mrf.mxu0
  %v433 = vadd.f32 %v96, %v432
  %v434 = vpop.f32.mrf.mxu0
  %v435 = vadd.f32 %v96, %v434
  %436 = vmatmul.bf16.gmra.mxu0 %v244
  %v437 = vpop.f32.mrf.mxu0
  %v438 = vadd.f32 %v96, %v437
  %v439 = vpop.f32.mrf.mxu0
  %v440 = vadd.f32 %v96, %v439
  %441 = vmatmul.bf16.gmra.mxu0 %v245
  %v442 = vpop.f32.mrf.mxu0
  %v443 = vadd.f32 %v96, %v442
  %v444 = vpop.f32.mrf.mxu0
  %v445 = vadd.f32 %v96, %v444
  %446 = vmatmul.bf16.gmra.mxu0 %v246
  %v447 = vpop.f32.mrf.mxu0
  %v448 = vadd.f32 %v96, %v447
  %v449 = vpop.f32.mrf.mxu0
  %v450 = vadd.f32 %v96, %v449
  %451 = vmatmul.bf16.gmra.mxu0 %v247
  %v452 = vpop.f32.mrf.mxu0
  %v453 = vadd.f32 %v96, %v452
  %v454 = vpop.f32.mrf.mxu0
  %v455 = vadd.f32 %v96, %v454
  %456 = vmatmul.bf16.gmra.mxu0 %v248
  %v457 = vpop.f32.mrf.mxu0
  %v458 = vadd.f32 %v96, %v457
  %v459 = vpop.f32.mrf.mxu0
  %v460 = vadd.f32 %v96, %v459
  %461 = vmatmul.bf16.gmra.mxu0 %v249
  %v462 = vpop.f32.mrf.mxu0
  %v463 = vadd.f32 %v96, %v462
  %v464 = vpop.f32.mrf.mxu0
  %v465 = vadd.f32 %v96, %v464
  %466 = vmatmul.bf16.gmra.mxu0 %v250
  %v467 = vpop.f32.mrf.mxu0
  %v468 = vadd.f32 %v96, %v467
  %v469 = vpop.f32.mrf.mxu0
  %v470 = vadd.f32 %v96, %v469
  %471 = vmatmul.bf16.gmra.mxu0 %v251
  %v472 = vpop.f32.mrf.mxu0
  %v473 = vadd.f32 %v96, %v472
  %v474 = vpop.f32.mrf.mxu0
  %v475 = vadd.f32 %v96, %v474
  %476 = vmatmul.bf16.gmra.mxu0 %v252
  %v477 = vpop.f32.mrf.mxu0
  %v478 = vadd.f32 %v96, %v477
  %v479 = vpop.f32.mrf.mxu0
  %v480 = vadd.f32 %v96, %v479
  %481 = vmatmul.bf16.gmra.mxu0 %v253
  %v482 = vpop.f32.mrf.mxu0
  %v483 = vadd.f32 %v96, %v482
  %v484 = vpop.f32.mrf.mxu0
  %v485 = vadd.f32 %v96, %v484
  %486 = vmatmul.bf16.gmra.mxu0 %v254
  %v487 = vpop.f32.mrf.mxu0
  %v488 = vadd.f32 %v96, %v487
  %v489 = vpop.f32.mrf.mxu0
  %v490 = vadd.f32 %v96, %v489
  %491 = vmatmul.bf16.gmra.mxu0 %v255
  %v492 = vpop.f32.mrf.mxu0
  %v493 = vadd.f32 %v96, %v492
  %v494 = vpop.f32.mrf.mxu0
  %v495 = vadd.f32 %v96, %v494
  %496 = vmatmul.bf16.gmra.mxu0 %v256
  %v497 = vpop.f32.mrf.mxu0
  %v498 = vadd.f32 %v96, %v497
  %v499 = vpop.f32.mrf.mxu0
  %v500 = vadd.f32 %v96, %v499
  %501 = vmatmul.bf16.gmra.mxu0 %v257
  %v502 = vpop.f32.mrf.mxu0
  %v503 = vadd.f32 %v96, %v502
  %v504 = vpop.f32.mrf.mxu0
  %v505 = vadd.f32 %v96, %v504
  %506 = vdwg.mxu0
  %v507 = vpack.c.bf16 %v348, %v348
  %v508 = vpack.c.bf16 %v350, %v350
  %v509 = vpack.c.bf16 %v353, %v353
  %v510 = vpack.c.bf16 %v355, %v355
  %v511 = vpack.c.bf16 %v358, %v358
  %v512 = vpack.c.bf16 %v360, %v360
  %v513 = vpack.c.bf16 %v363, %v363
  %v514 = vpack.c.bf16 %v365, %v365
  %v515 = vpack.c.bf16 %v368, %v368
  %v516 = vpack.c.bf16 %v370, %v370
  %v517 = vpack.c.bf16 %v373, %v373
  %v518 = vpack.c.bf16 %v375, %v375
  %v519 = vpack.c.bf16 %v378, %v378
  %v520 = vpack.c.bf16 %v380, %v380
  %v521 = vpack.c.bf16 %v383, %v383
  %v522 = vpack.c.bf16 %v385, %v385
  %v523 = vpack.c.bf16 %v388, %v388
  %v524 = vpack.c.bf16 %v390, %v390
  %v525 = vpack.c.bf16 %v393, %v393
  %v526 = vpack.c.bf16 %v395, %v395
  %v527 = vpack.c.bf16 %v398, %v398
  %v528 = vpack.c.bf16 %v400, %v400
  %v529 = vpack.c.bf16 %v403, %v403
  %v530 = vpack.c.bf16 %v405, %v405
  %v531 = vpack.c.bf16 %v408, %v408
  %v532 = vpack.c.bf16 %v410, %v410
  %v533 = vpack.c.bf16 %v413, %v413
  %v534 = vpack.c.bf16 %v415, %v415
  %v535 = vpack.c.bf16 %v418, %v418
  %v536 = vpack.c.bf16 %v420, %v420
  %v537 = vpack.c.bf16 %v423, %v423
  %v538 = vpack.c.bf16 %v425, %v425
  %v539 = vpack.c.bf16 %v428, %v428
  %v540 = vpack.c.bf16 %v430, %v430
  %v541 = vpack.c.bf16 %v433, %v433
  %v542 = vpack.c.bf16 %v435, %v435
  %v543 = vpack.c.bf16 %v438, %v438
  %v544 = vpack.c.bf16 %v440, %v440
  %v545 = vpack.c.bf16 %v443, %v443
  %v546 = vpack.c.bf16 %v445, %v445
  %v547 = vpack.c.bf16 %v448, %v448
  %v548 = vpack.c.bf16 %v450, %v450
  %v549 = vpack.c.bf16 %v453, %v453
  %v550 = vpack.c.bf16 %v455, %v455
  %v551 = vpack.c.bf16 %v458, %v458
  %v552 = vpack.c.bf16 %v460, %v460
  %v553 = vpack.c.bf16 %v463, %v463
  %v554 = vpack.c.bf16 %v465, %v465
  %v555 = vpack.c.bf16 %v468, %v468
  %v556 = vpack.c.bf16 %v470, %v470
  %v557 = vpack.c.bf16 %v473, %v473
  %v558 = vpack.c.bf16 %v475, %v475
  %v559 = vpack.c.bf16 %v478, %v478
  %v560 = vpack.c.bf16 %v480, %v480
  %v561 = vpack.c.bf16 %v483, %v483
  %v562 = vpack.c.bf16 %v485, %v485
  %v563 = vpack.c.bf16 %v488, %v488
  %v564 = vpack.c.bf16 %v490, %v490
  %v565 = vpack.c.bf16 %v493, %v493
  %v566 = vpack.c.bf16 %v495, %v495
  %v567 = vpack.c.bf16 %v498, %v498
  %v568 = vpack.c.bf16 %v500, %v500
  %v569 = vpack.c.bf16 %v503, %v503
  %v570 = vpack.c.bf16 %v505, %v505
  %571 = vst [vmem:[%s3] sm:$0xf] %v507
  %572 = vst [vmem:[%s3 + $0x4] sm:$0xf] %v508
  %573 = vst [vmem:[%s3 + $0x8] sm:$0xf] %v509
  %574 = vst [vmem:[%s3 + $0xc] sm:$0xf] %v510
  %575 = vst [vmem:[%s3 + $0x10] sm:$0xf] %v511
  %576 = vst [vmem:[%s3 + $0x14] sm:$0xf] %v512
  %577 = vst [vmem:[%s3 + $0x18] sm:$0xf] %v513
  %578 = vst [vmem:[%s3 + $0x1c] sm:$0xf] %v514
  %579 = vst [vmem:[%s3 + $0x20] sm:$0xf] %v515
  %580 = vst [vmem:[%s3 + $0x24] sm:$0xf] %v516
  %581 = vst [vmem:[%s3 + $0x28] sm:$0xf] %v517
  %582 = vst [vmem:[%s3 + $0x2c] sm:$0xf] %v518
  %583 = vst [vmem:[%s3 + $0x30] sm:$0xf] %v519
  %584 = vst [vmem:[%s3 + $0x34] sm:$0xf] %v520
  %585 = vst [vmem:[%s3 + $0x38] sm:$0xf] %v521
  %586 = vst [vmem:[%s3 + $0x3c] sm:$0xf] %v522
  %587 = vst [vmem:[%s3 + $0x40] sm:$0xf] %v523
  %588 = vst [vmem:[%s3 + $0x44] sm:$0xf] %v524
  %589 = vst [vmem:[%s3 + $0x48] sm:$0xf] %v525
  %590 = vst [vmem:[%s3 + $0x4c] sm:$0xf] %v526
  %591 = vst [vmem:[%s3 + $0x50] sm:$0xf] %v527
  %592 = vst [vmem:[%s3 + $0x54] sm:$0xf] %v528
  %593 = vst [vmem:[%s3 + $0x58] sm:$0xf] %v529
  %594 = vst [vmem:[%s3 + $0x5c] sm:$0xf] %v530
  %595 = vst [vmem:[%s3 + $0x60] sm:$0xf] %v531
  %596 = vst [vmem:[%s3 + $0x64] sm:$0xf] %v532
  %597 = vst [vmem:[%s3 + $0x68] sm:$0xf] %v533
  %598 = vst [vmem:[%s3 + $0x6c] sm:$0xf] %v534
  %599 = vst [vmem:[%s3 + $0x70] sm:$0xf] %v535
  %600 = vst [vmem:[%s3 + $0x74] sm:$0xf] %v536
  %601 = vst [vmem:[%s3 + $0x78] sm:$0xf] %v537
  %602 = vst [vmem:[%s3 + $0x7c] sm:$0xf] %v538
  %603 = vst [vmem:[%s3 + $0x80] sm:$0xf] %v539
  %604 = vst [vmem:[%s3 + $0x84] sm:$0xf] %v540
  %605 = vst [vmem:[%s3 + $0x88] sm:$0xf] %v541
  %606 = vst [vmem:[%s3 + $0x8c] sm:$0xf] %v542
  %607 = vst [vmem:[%s3 + $0x90] sm:$0xf] %v543
  %608 = vst [vmem:[%s3 + $0x94] sm:$0xf] %v544
  %609 = vst [vmem:[%s3 + $0x98] sm:$0xf] %v545
  %610 = vst [vmem:[%s3 + $0x9c] sm:$0xf] %v546
  %611 = vst [vmem:[%s3 + $0xa0] sm:$0xf] %v547
  %612 = vst [vmem:[%s3 + $0xa4] sm:$0xf] %v548
  %613 = vst [vmem:[%s3 + $0xa8] sm:$0xf] %v549
  %614 = vst [vmem:[%s3 + $0xac] sm:$0xf] %v550
  %615 = vst [vmem:[%s3 + $0xb0] sm:$0xf] %v551
  %616 = vst [vmem:[%s3 + $0xb4] sm:$0xf] %v552
  %617 = vst [vmem:[%s3 + $0xb8] sm:$0xf] %v553
  %618 = vst [vmem:[%s3 + $0xbc] sm:$0xf] %v554
  %619 = vst [vmem:[%s3 + $0xc0] sm:$0xf] %v555
  %620 = vst [vmem:[%s3 + $0xc4] sm:$0xf] %v556
  %621 = vst [vmem:[%s3 + $0xc8] sm:$0xf] %v557
  %622 = vst [vmem:[%s3 + $0xcc] sm:$0xf] %v558
  %623 = vst [vmem:[%s3 + $0xd0] sm:$0xf] %v559
  %624 = vst [vmem:[%s3 + $0xd4] sm:$0xf] %v560
  %625 = vst [vmem:[%s3 + $0xd8] sm:$0xf] %v561
  %626 = vst [vmem:[%s3 + $0xdc] sm:$0xf] %v562
  %627 = vst [vmem:[%s3 + $0xe0] sm:$0xf] %v563
  %628 = vst [vmem:[%s3 + $0xe4] sm:$0xf] %v564
  %629 = vst [vmem:[%s3 + $0xe8] sm:$0xf] %v565
  %630 = vst [vmem:[%s3 + $0xec] sm:$0xf] %v566
  %631 = vst [vmem:[%s3 + $0xf0] sm:$0xf] %v567
  %632 = vst [vmem:[%s3 + $0xf4] sm:$0xf] %v568
  %633 = vst [vmem:[%s3 + $0xf8] sm:$0xf] %v569
  %634 = vst [vmem:[%s3 + $0xfc] sm:$0xf] %v570
  // Predicated region
  $region14: #{resblock_forward.4} parent=0 // pred_check
    _
  $region15: #{resblock_forward.4} parent=0 // pred_check_branch
    %636 = sbr.rel (0) target = $region17
  $region16: #{resblock_forward.4} parent=0 // pred_region
    _
  $region17: #{resblock_forward.4} parent=0 // pred_fallthru
    _
  // Predicated region
  $region18: #{resblock_forward.4} parent=0 // pred_check
    _
  $region19: #{resblock_forward.4} parent=0 // pred_check_branch
    %638 = sbr.rel (0) target = $region21
  $region20: #{resblock_forward.4} parent=0 // pred_region
    _
  $region21: #{resblock_forward.4} parent=0 // pred_fallthru
    _

// kernel: resblock_forward.7
$region0: #{resblock_forward.7}
  #allocation0 [shape = 'u32[]', space=smem, size = 0x4, offset = 0x4, fixed_abs, tag = 'smem constant byte address 0x4 - core index']
  #allocation1 [shape = 'u32[72,128]{1,0:T(1,128)}', space=vmem, size = 0x9000, scoped, tag = 'internal scratch']
  %s0 = inlined_call_operand.vmem [shape: bf16[512,128], index: 0, kind: input, shape index: {}]
  %s1 = inlined_call_operand.vmem [shape: bf16[512,128], index: 1, kind: input, shape index: {}]
  %s2 = inlined_call_operand.vmem [shape: f32[1,128], index: 2, kind: input, shape index: {}]
  %s3 = inlined_call_operand.vmem [shape: f32[1,128], index: 3, kind: input, shape index: {}]
  %s4 = inlined_call_operand.vmem [shape: f32[512,128], index: 4, kind: output, shape index: {}]
  %s5 = sld [smem:[#allocation0]]
  $region26: #{resblock_forward.7} parent=0
    _
  %s7 = ssub.s32 1, %s5
  %s8 = scalar_select 0, %s7, %s5
  // Predicated region
  $region2: #{resblock_forward.7} parent=0 // pred_check
    _
  $region3: #{resblock_forward.7} parent=0 // pred_check_branch
    %10 = sbr.rel (0) target = $region5
  $region4: #{resblock_forward.7} parent=0 // pred_region
    _
  $region5: #{resblock_forward.7} parent=0 // pred_fallthru
    _
  // Predicated region
  $region6: #{resblock_forward.7} parent=0 // pred_check
    _
  $region7: #{resblock_forward.7} parent=0 // pred_check_branch
    %12 = sbr.rel (0) target = $region9
  $region8: #{resblock_forward.7} parent=0 // pred_region
    _
  $region9: #{resblock_forward.7} parent=0 // pred_fallthru
    _
  // Predicated region
  $region10: #{resblock_forward.7} parent=0 // pred_check
    _
  $region11: #{resblock_forward.7} parent=0 // pred_check_branch
    %14 = sbr.rel (0) target = $region13
  $region12: #{resblock_forward.7} parent=0 // pred_region
    _
  $region13: #{resblock_forward.7} parent=0 // pred_fallthru
    _
  // Predicated region
  $region14: #{resblock_forward.7} parent=0 // pred_check
    _
  $region15: #{resblock_forward.7} parent=0 // pred_check_branch
    %16 = sbr.rel (0) target = $region17
  $region16: #{resblock_forward.7} parent=0 // pred_region
    _
  $region17: #{resblock_forward.7} parent=0 // pred_fallthru
    _
  %v17 = vld [vmem:[%s0] sm:$0xf]
  %v18 = vld [vmem:[%s0 + $0x4] sm:$0xf]
  %v19 = vld [vmem:[%s0 + $0x8] sm:$0xf]
  %v20 = vld [vmem:[%s0 + $0xc] sm:$0xf]
  %v21 = vld [vmem:[%s0 + $0x10] sm:$0xf]
  %v22 = vld [vmem:[%s0 + $0x14] sm:$0xf]
  %v23 = vld [vmem:[%s0 + $0x18] sm:$0xf]
  %v24 = vld [vmem:[%s0 + $0x1c] sm:$0xf]
  %v25 = vld [vmem:[%s0 + $0x20] sm:$0xf]
  %v26 = vld [vmem:[%s0 + $0x24] sm:$0xf]
  %v27 = vld [vmem:[%s0 + $0x28] sm:$0xf]
  %v28 = vld [vmem:[%s0 + $0x2c] sm:$0xf]
  %v29 = vld [vmem:[%s0 + $0x30] sm:$0xf]
  %v30 = vld [vmem:[%s0 + $0x34] sm:$0xf]
  %v31 = vld [vmem:[%s0 + $0x38] sm:$0xf]
  %v32 = vld [vmem:[%s0 + $0x3c] sm:$0xf]
  %v33 = vld [vmem:[%s0 + $0x40] sm:$0xf]
  %v34 = vld [vmem:[%s0 + $0x44] sm:$0xf]
  %v35 = vld [vmem:[%s0 + $0x48] sm:$0xf]
  %v36 = vld [vmem:[%s0 + $0x4c] sm:$0xf]
  %v37 = vld [vmem:[%s0 + $0x50] sm:$0xf]
  %v38 = vld [vmem:[%s0 + $0x54] sm:$0xf]
  %v39 = vld [vmem:[%s0 + $0x58] sm:$0xf]
  %v40 = vld [vmem:[%s0 + $0x5c] sm:$0xf]
  %v41 = vld [vmem:[%s0 + $0x60] sm:$0xf]
  %v42 = vld [vmem:[%s0 + $0x64] sm:$0xf]
  %v43 = vld [vmem:[%s0 + $0x68] sm:$0xf]
  %v44 = vld [vmem:[%s0 + $0x6c] sm:$0xf]
  %v45 = vld [vmem:[%s0 + $0x70] sm:$0xf]
  %v46 = vld [vmem:[%s0 + $0x74] sm:$0xf]
  %v47 = vld [vmem:[%s0 + $0x78] sm:$0xf]
  %v48 = vld [vmem:[%s0 + $0x7c] sm:$0xf]
  %v49 = vld [vmem:[%s0 + $0x80] sm:$0xf]
  %v50 = vld [vmem:[%s0 + $0x84] sm:$0xf]
  %v51 = vld [vmem:[%s0 + $0x88] sm:$0xf]
  %v52 = vld [vmem:[%s0 + $0x8c] sm:$0xf]
  %v53 = vld [vmem:[%s0 + $0x90] sm:$0xf]
  %v54 = vld [vmem:[%s0 + $0x94] sm:$0xf]
  %v55 = vld [vmem:[%s0 + $0x98] sm:$0xf]
  %v56 = vld [vmem:[%s0 + $0x9c] sm:$0xf]
  %v57 = vld [vmem:[%s0 + $0xa0] sm:$0xf]
  %v58 = vld [vmem:[%s0 + $0xa4] sm:$0xf]
  %v59 = vld [vmem:[%s0 + $0xa8] sm:$0xf]
  %v60 = vld [vmem:[%s0 + $0xac] sm:$0xf]
  %v61 = vld [vmem:[%s0 + $0xb0] sm:$0xf]
  %v62 = vld [vmem:[%s0 + $0xb4] sm:$0xf]
  %v63 = vld [vmem:[%s0 + $0xb8] sm:$0xf]
  %v64 = vld [vmem:[%s0 + $0xbc] sm:$0xf]
  %v65 = vld [vmem:[%s0 + $0xc0] sm:$0xf]
  %v66 = vld [vmem:[%s0 + $0xc4] sm:$0xf]
  %v67 = vld [vmem:[%s0 + $0xc8] sm:$0xf]
  %v68 = vld [vmem:[%s0 + $0xcc] sm:$0xf]
  %v69 = vld [vmem:[%s0 + $0xd0] sm:$0xf]
  %v70 = vld [vmem:[%s0 + $0xd4] sm:$0xf]
  %v71 = vld [vmem:[%s0 + $0xd8] sm:$0xf]
  %v72 = vld [vmem:[%s0 + $0xdc] sm:$0xf]
  %v73 = vld [vmem:[%s0 + $0xe0] sm:$0xf]
  %v74 = vld [vmem:[%s0 + $0xe4] sm:$0xf]
  %v75 = vld [vmem:[%s0 + $0xe8] sm:$0xf]
  %v76 = vld [vmem:[%s0 + $0xec] sm:$0xf]
  %v77 = vld [vmem:[%s0 + $0xf0] sm:$0xf]
  %v78 = vld [vmem:[%s0 + $0xf4] sm:$0xf]
  %v79 = vld [vmem:[%s0 + $0xf8] sm:$0xf]
  %v80 = vld [vmem:[%s0 + $0xfc] sm:$0xf]
  %v81 = vunpack.c.l.bf16 %v17
  %v82 = vunpack.c.l.bf16 %v18
  %v83 = vunpack.c.l.bf16 %v19
  %v84 = vunpack.c.l.bf16 %v20
  %v85 = vunpack.c.l.bf16 %v21
  %v86 = vunpack.c.l.bf16 %v22
  %v87 = vunpack.c.l.bf16 %v23
  %v88 = vunpack.c.l.bf16 %v24
  %v89 = vunpack.c.l.bf16 %v25
  %v90 = vunpack.c.l.bf16 %v26
  %v91 = vunpack.c.l.bf16 %v27
  %v92 = vunpack.c.l.bf16 %v28
  %v93 = vunpack.c.l.bf16 %v29
  %v94 = vunpack.c.l.bf16 %v30
  %v95 = vunpack.c.l.bf16 %v31
  %v96 = vunpack.c.l.bf16 %v32
  %v97 = vunpack.c.l.bf16 %v33
  %v98 = vunpack.c.l.bf16 %v34
  %v99 = vunpack.c.l.bf16 %v35
  %v100 = vunpack.c.l.bf16 %v36
  %v101 = vunpack.c.l.bf16 %v37
  %v102 = vunpack.c.l.bf16 %v38
  %v103 = vunpack.c.l.bf16 %v39
  %v104 = vunpack.c.l.bf16 %v40
  %v105 = vunpack.c.l.bf16 %v41
  %v106 = vunpack.c.l.bf16 %v42
  %v107 = vunpack.c.l.bf16 %v43
  %v108 = vunpack.c.l.bf16 %v44
  %v109 = vunpack.c.l.bf16 %v45
  %v110 = vunpack.c.l.bf16 %v46
  %v111 = vunpack.c.l.bf16 %v47
  %v112 = vunpack.c.l.bf16 %v48
  %v113 = vunpack.c.l.bf16 %v49
  %v114 = vunpack.c.l.bf16 %v50
  %v115 = vunpack.c.l.bf16 %v51
  %v116 = vunpack.c.l.bf16 %v52
  %v117 = vunpack.c.l.bf16 %v53
  %v118 = vunpack.c.l.bf16 %v54
  %v119 = vunpack.c.l.bf16 %v55
  %v120 = vunpack.c.l.bf16 %v56
  %v121 = vunpack.c.l.bf16 %v57
  %v122 = vunpack.c.l.bf16 %v58
  %v123 = vunpack.c.l.bf16 %v59
  %v124 = vunpack.c.l.bf16 %v60
  %v125 = vunpack.c.l.bf16 %v61
  %v126 = vunpack.c.l.bf16 %v62
  %v127 = vunpack.c.l.bf16 %v63
  %v128 = vunpack.c.l.bf16 %v64
  %v129 = vunpack.c.l.bf16 %v65
  %v130 = vunpack.c.l.bf16 %v66
  %v131 = vunpack.c.l.bf16 %v67
  %v132 = vunpack.c.l.bf16 %v68
  %v133 = vunpack.c.l.bf16 %v69
  %v134 = vunpack.c.l.bf16 %v70
  %v135 = vunpack.c.l.bf16 %v71
  %v136 = vunpack.c.l.bf16 %v72
  %v137 = vunpack.c.l.bf16 %v73
  %v138 = vunpack.c.l.bf16 %v74
  %v139 = vunpack.c.l.bf16 %v75
  %v140 = vunpack.c.l.bf16 %v76
  %v141 = vunpack.c.l.bf16 %v77
  %v142 = vunpack.c.l.bf16 %v78
  %v143 = vunpack.c.l.bf16 %v79
  %v144 = vunpack.c.l.bf16 %v80
  %v145 = vld [vmem:[%s1] sm:$0xf]
  %v146 = vld [vmem:[%s1 + $0x4] sm:$0xf]
  %v147 = vld [vmem:[%s1 + $0x8] sm:$0xf]
  %v148 = vld [vmem:[%s1 + $0xc] sm:$0xf]
  %v149 = vld [vmem:[%s1 + $0x10] sm:$0xf]
  %v150 = vld [vmem:[%s1 + $0x14] sm:$0xf]
  %v151 = vld [vmem:[%s1 + $0x18] sm:$0xf]
  %v152 = vld [vmem:[%s1 + $0x1c] sm:$0xf]
  %v153 = vld [vmem:[%s1 + $0x20] sm:$0xf]
  %v154 = vld [vmem:[%s1 + $0x24] sm:$0xf]
  %v155 = vld [vmem:[%s1 + $0x28] sm:$0xf]
  %v156 = vld [vmem:[%s1 + $0x2c] sm:$0xf]
  %v157 = vld [vmem:[%s1 + $0x30] sm:$0xf]
  %v158 = vld [vmem:[%s1 + $0x34] sm:$0xf]
  %v159 = vld [vmem:[%s1 + $0x38] sm:$0xf]
  %v160 = vld [vmem:[%s1 + $0x3c] sm:$0xf]
  %v161 = vld [vmem:[%s1 + $0x40] sm:$0xf]
  %v162 = vld [vmem:[%s1 + $0x44] sm:$0xf]
  %v163 = vld [vmem:[%s1 + $0x48] sm:$0xf]
  %v164 = vld [vmem:[%s1 + $0x4c] sm:$0xf]
  %v165 = vld [vmem:[%s1 + $0x50] sm:$0xf]
  %v166 = vld [vmem:[%s1 + $0x54] sm:$0xf]
  %v167 = vld [vmem:[%s1 + $0x58] sm:$0xf]
  %v168 = vld [vmem:[%s1 + $0x5c] sm:$0xf]
  %v169 = vld [vmem:[%s1 + $0x60] sm:$0xf]
  %v170 = vld [vmem:[%s1 + $0x64] sm:$0xf]
  %v171 = vld [vmem:[%s1 + $0x68] sm:$0xf]
  %v172 = vld [vmem:[%s1 + $0x6c] sm:$0xf]
  %v173 = vld [vmem:[%s1 + $0x70] sm:$0xf]
  %v174 = vld [vmem:[%s1 + $0x74] sm:$0xf]
  %v175 = vld [vmem:[%s1 + $0x78] sm:$0xf]
  %v176 = vld [vmem:[%s1 + $0x7c] sm:$0xf]
  %v177 = vld [vmem:[%s1 + $0x80] sm:$0xf]
  %v178 = vld [vmem:[%s1 + $0x84] sm:$0xf]
  %v179 = vld [vmem:[%s1 + $0x88] sm:$0xf]
  %v180 = vld [vmem:[%s1 + $0x8c] sm:$0xf]
  %v181 = vld [vmem:[%s1 + $0x90] sm:$0xf]
  %v182 = vld [vmem:[%s1 + $0x94] sm:$0xf]
  %v183 = vld [vmem:[%s1 + $0x98] sm:$0xf]
  %v184 = vld [vmem:[%s1 + $0x9c] sm:$0xf]
  %v185 = vld [vmem:[%s1 + $0xa0] sm:$0xf]
  %v186 = vld [vmem:[%s1 + $0xa4] sm:$0xf]
  %v187 = vld [vmem:[%s1 + $0xa8] sm:$0xf]
  %v188 = vld [vmem:[%s1 + $0xac] sm:$0xf]
  %v189 = vld [vmem:[%s1 + $0xb0] sm:$0xf]
  %v190 = vld [vmem:[%s1 + $0xb4] sm:$0xf]
  %v191 = vld [vmem:[%s1 + $0xb8] sm:$0xf]
  %v192 = vld [vmem:[%s1 + $0xbc] sm:$0xf]
  %v193 = vld [vmem:[%s1 + $0xc0] sm:$0xf]
  %v194 = vld [vmem:[%s1 + $0xc4] sm:$0xf]
  %v195 = vld [vmem:[%s1 + $0xc8] sm:$0xf]
  %v196 = vld [vmem:[%s1 + $0xcc] sm:$0xf]
  %v197 = vld [vmem:[%s1 + $0xd0] sm:$0xf]
  %v198 = vld [vmem:[%s1 + $0xd4] sm:$0xf]
  %v199 = vld [vmem:[%s1 + $0xd8] sm:$0xf]
  %v200 = vld [vmem:[%s1 + $0xdc] sm:$0xf]
  %v201 = vld [vmem:[%s1 + $0xe0] sm:$0xf]
  %v202 = vld [vmem:[%s1 + $0xe4] sm:$0xf]
  %v203 = vld [vmem:[%s1 + $0xe8] sm:$0xf]
  %v204 = vld [vmem:[%s1 + $0xec] sm:$0xf]
  %v205 = vld [vmem:[%s1 + $0xf0] sm:$0xf]
  %v206 = vld [vmem:[%s1 + $0xf4] sm:$0xf]
  %v207 = vld [vmem:[%s1 + $0xf8] sm:$0xf]
  %v208 = vld [vmem:[%s1 + $0xfc] sm:$0xf]
  %v209 = vunpack.c.l.bf16 %v145
  %v210 = vunpack.c.l.bf16 %v146
  %v211 = vunpack.c.l.bf16 %v147
  %v212 = vunpack.c.l.bf16 %v148
  %v213 = vunpack.c.l.bf16 %v149
  %v214 = vunpack.c.l.bf16 %v150
  %v215 = vunpack.c.l.bf16 %v151
  %v216 = vunpack.c.l.bf16 %v152
  %v217 = vunpack.c.l.bf16 %v153
  %v218 = vunpack.c.l.bf16 %v154
  %v219 = vunpack.c.l.bf16 %v155
  %v220 = vunpack.c.l.bf16 %v156
  %v221 = vunpack.c.l.bf16 %v157
  %v222 = vunpack.c.l.bf16 %v158
  %v223 = vunpack.c.l.bf16 %v159
  %v224 = vunpack.c.l.bf16 %v160
  %v225 = vunpack.c.l.bf16 %v161
  %v226 = vunpack.c.l.bf16 %v162
  %v227 = vunpack.c.l.bf16 %v163
  %v228 = vunpack.c.l.bf16 %v164
  %v229 = vunpack.c.l.bf16 %v165
  %v230 = vunpack.c.l.bf16 %v166
  %v231 = vunpack.c.l.bf16 %v167
  %v232 = vunpack.c.l.bf16 %v168
  %v233 = vunpack.c.l.bf16 %v169
  %v234 = vunpack.c.l.bf16 %v170
  %v235 = vunpack.c.l.bf16 %v171
  %v236 = vunpack.c.l.bf16 %v172
  %v237 = vunpack.c.l.bf16 %v173
  %v238 = vunpack.c.l.bf16 %v174
  %v239 = vunpack.c.l.bf16 %v175
  %v240 = vunpack.c.l.bf16 %v176
  %v241 = vunpack.c.l.bf16 %v177
  %v242 = vunpack.c.l.bf16 %v178
  %v243 = vunpack.c.l.bf16 %v179
  %v244 = vunpack.c.l.bf16 %v180
  %v245 = vunpack.c.l.bf16 %v181
  %v246 = vunpack.c.l.bf16 %v182
  %v247 = vunpack.c.l.bf16 %v183
  %v248 = vunpack.c.l.bf16 %v184
  %v249 = vunpack.c.l.bf16 %v185
  %v250 = vunpack.c.l.bf16 %v186
  %v251 = vunpack.c.l.bf16 %v187
  %v252 = vunpack.c.l.bf16 %v188
  %v253 = vunpack.c.l.bf16 %v189
  %v254 = vunpack.c.l.bf16 %v190
  %v255 = vunpack.c.l.bf16 %v191
  %v256 = vunpack.c.l.bf16 %v192
  %v257 = vunpack.c.l.bf16 %v193
  %v258 = vunpack.c.l.bf16 %v194
  %v259 = vunpack.c.l.bf16 %v195
  %v260 = vunpack.c.l.bf16 %v196
  %v261 = vunpack.c.l.bf16 %v197
  %v262 = vunpack.c.l.bf16 %v198
  %v263 = vunpack.c.l.bf16 %v199
  %v264 = vunpack.c.l.bf16 %v200
  %v265 = vunpack.c.l.bf16 %v201
  %v266 = vunpack.c.l.bf16 %v202
  %v267 = vunpack.c.l.bf16 %v203
  %v268 = vunpack.c.l.bf16 %v204
  %v269 = vunpack.c.l.bf16 %v205
  %v270 = vunpack.c.l.bf16 %v206
  %v271 = vunpack.c.l.bf16 %v207
  %v272 = vunpack.c.l.bf16 %v208
  %v273 = vld [vmem:[%s2] sm:$0x1]
  %v275 = vperm.slane %v273, 0
  %v277 = vmul.f32 %v81, %v275
  %v278 = vmul.f32 %v82, %v275
  %v279 = vmul.f32 %v83, %v275
  %v280 = vmul.f32 %v84, %v275
  %v281 = vmul.f32 %v85, %v275
  %v282 = vmul.f32 %v86, %v275
  %v283 = vmul.f32 %v87, %v275
  %v284 = vmul.f32 %v88, %v275
  %v285 = vmul.f32 %v89, %v275
  %v286 = vmul.f32 %v90, %v275
  %v287 = vmul.f32 %v91, %v275
  %v288 = vmul.f32 %v92, %v275
  %v289 = vmul.f32 %v93, %v275
  %v290 = vmul.f32 %v94, %v275
  %v291 = vmul.f32 %v95, %v275
  %v292 = vmul.f32 %v96, %v275
  %v293 = vmul.f32 %v97, %v275
  %v294 = vmul.f32 %v98, %v275
  %v295 = vmul.f32 %v99, %v275
  %v296 = vmul.f32 %v100, %v275
  %v297 = vmul.f32 %v101, %v275
  %v298 = vmul.f32 %v102, %v275
  %v299 = vmul.f32 %v103, %v275
  %v300 = vmul.f32 %v104, %v275
  %v301 = vmul.f32 %v105, %v275
  %v302 = vmul.f32 %v106, %v275
  %v303 = vmul.f32 %v107, %v275
  %v304 = vmul.f32 %v108, %v275
  %v305 = vmul.f32 %v109, %v275
  %v306 = vmul.f32 %v110, %v275
  %v307 = vmul.f32 %v111, %v275
  %v308 = vmul.f32 %v112, %v275
  %v309 = vmul.f32 %v113, %v275
  %v310 = vmul.f32 %v114, %v275
  %v311 = vmul.f32 %v115, %v275
  %v312 = vmul.f32 %v116, %v275
  %v313 = vmul.f32 %v117, %v275
  %v314 = vmul.f32 %v118, %v275
  %v315 = vmul.f32 %v119, %v275
  %v316 = vmul.f32 %v120, %v275
  %v317 = vmul.f32 %v121, %v275
  %v318 = vmul.f32 %v122, %v275
  %v319 = vmul.f32 %v123, %v275
  %v320 = vmul.f32 %v124, %v275
  %v321 = vmul.f32 %v125, %v275
  %v322 = vmul.f32 %v126, %v275
  %v323 = vmul.f32 %v127, %v275
  %v324 = vmul.f32 %v128, %v275
  %v325 = vmul.f32 %v129, %v275
  %v326 = vmul.f32 %v130, %v275
  %v327 = vmul.f32 %v131, %v275
  %v328 = vmul.f32 %v132, %v275
  %v329 = vmul.f32 %v133, %v275
  %v330 = vmul.f32 %v134, %v275
  %v331 = vmul.f32 %v135, %v275
  %v332 = vmul.f32 %v136, %v275
  %v333 = vmul.f32 %v137, %v275
  %v334 = vmul.f32 %v138, %v275
  %v335 = vmul.f32 %v139, %v275
  %v336 = vmul.f32 %v140, %v275
  %v337 = vmul.f32 %v141, %v275
  %v338 = vmul.f32 %v142, %v275
  %v339 = vmul.f32 %v143, %v275
  %v340 = vmul.f32 %v144, %v275
  %v341 = vld [vmem:[%s3] sm:$0x1]
  %v343 = vperm.slane %v341, 0
  %v345 = vadd.f32 %v277, %v343
  %v346 = vadd.f32 %v278, %v343
  %v347 = vadd.f32 %v279, %v343
  %v348 = vadd.f32 %v280, %v343
  %v349 = vadd.f32 %v281, %v343
  %v350 = vadd.f32 %v282, %v343
  %v351 = vadd.f32 %v283, %v343
  %v352 = vadd.f32 %v284, %v343
  %v353 = vadd.f32 %v285, %v343
  %v354 = vadd.f32 %v286, %v343
  %v355 = vadd.f32 %v287, %v343
  %v356 = vadd.f32 %v288, %v343
  %v357 = vadd.f32 %v289, %v343
  %v358 = vadd.f32 %v290, %v343
  %v359 = vadd.f32 %v291, %v343
  %v360 = vadd.f32 %v292, %v343
  %v361 = vadd.f32 %v293, %v343
  %v362 = vadd.f32 %v294, %v343
  %v363 = vadd.f32 %v295, %v343
  %v364 = vadd.f32 %v296, %v343
  %v365 = vadd.f32 %v297, %v343
  %v366 = vadd.f32 %v298, %v343
  %v367 = vadd.f32 %v299, %v343
  %v368 = vadd.f32 %v300, %v343
  %v369 = vadd.f32 %v301, %v343
  %v370 = vadd.f32 %v302, %v343
  %v371 = vadd.f32 %v303, %v343
  %v372 = vadd.f32 %v304, %v343
  %v373 = vadd.f32 %v305, %v343
  %v374 = vadd.f32 %v306, %v343
  %v375 = vadd.f32 %v307, %v343
  %v376 = vadd.f32 %v308, %v343
  %v377 = vadd.f32 %v309, %v343
  %v378 = vadd.f32 %v310, %v343
  %v379 = vadd.f32 %v311, %v343
  %v380 = vadd.f32 %v312, %v343
  %v381 = vadd.f32 %v313, %v343
  %v382 = vadd.f32 %v314, %v343
  %v383 = vadd.f32 %v315, %v343
  %v384 = vadd.f32 %v316, %v343
  %v385 = vadd.f32 %v317, %v343
  %v386 = vadd.f32 %v318, %v343
  %v387 = vadd.f32 %v319, %v343
  %v388 = vadd.f32 %v320, %v343
  %v389 = vadd.f32 %v321, %v343
  %v390 = vadd.f32 %v322, %v343
  %v391 = vadd.f32 %v323, %v343
  %v392 = vadd.f32 %v324, %v343
  %v393 = vadd.f32 %v325, %v343
  %v394 = vadd.f32 %v326, %v343
  %v395 = vadd.f32 %v327, %v343
  %v396 = vadd.f32 %v328, %v343
  %v397 = vadd.f32 %v329, %v343
  %v398 = vadd.f32 %v330, %v343
  %v399 = vadd.f32 %v331, %v343
  %v400 = vadd.f32 %v332, %v343
  %v401 = vadd.f32 %v333, %v343
  %v402 = vadd.f32 %v334, %v343
  %v403 = vadd.f32 %v335, %v343
  %v404 = vadd.f32 %v336, %v343
  %v405 = vadd.f32 %v337, %v343
  %v406 = vadd.f32 %v338, %v343
  %v407 = vadd.f32 %v339, %v343
  %v408 = vadd.f32 %v340, %v343
  %v409 = vadd.f32 %v345, %v209
  %v410 = vadd.f32 %v346, %v210
  %v411 = vadd.f32 %v347, %v211
  %v412 = vadd.f32 %v348, %v212
  %v413 = vadd.f32 %v349, %v213
  %v414 = vadd.f32 %v350, %v214
  %v415 = vadd.f32 %v351, %v215
  %v416 = vadd.f32 %v352, %v216
  %v417 = vadd.f32 %v353, %v217
  %v418 = vadd.f32 %v354, %v218
  %v419 = vadd.f32 %v355, %v219
  %v420 = vadd.f32 %v356, %v220
  %v421 = vadd.f32 %v357, %v221
  %v422 = vadd.f32 %v358, %v222
  %v423 = vadd.f32 %v359, %v223
  %v424 = vadd.f32 %v360, %v224
  %v425 = vadd.f32 %v361, %v225
  %v426 = vadd.f32 %v362, %v226
  %v427 = vadd.f32 %v363, %v227
  %v428 = vadd.f32 %v364, %v228
  %v429 = vadd.f32 %v365, %v229
  %v430 = vadd.f32 %v366, %v230
  %v431 = vadd.f32 %v367, %v231
  %v432 = vadd.f32 %v368, %v232
  %v433 = vadd.f32 %v369, %v233
  %v434 = vadd.f32 %v370, %v234
  %v435 = vadd.f32 %v371, %v235
  %v436 = vadd.f32 %v372, %v236
  %v437 = vadd.f32 %v373, %v237
  %v438 = vadd.f32 %v374, %v238
  %v439 = vadd.f32 %v375, %v239
  %v440 = vadd.f32 %v376, %v240
  %v441 = vadd.f32 %v377, %v241
  %v442 = vadd.f32 %v378, %v242
  %v443 = vadd.f32 %v379, %v243
  %v444 = vadd.f32 %v380, %v244
  %v445 = vadd.f32 %v381, %v245
  %v446 = vadd.f32 %v382, %v246
  %v447 = vadd.f32 %v383, %v247
  %v448 = vadd.f32 %v384, %v248
  %v449 = vadd.f32 %v385, %v249
  %v450 = vadd.f32 %v386, %v250
  %v451 = vadd.f32 %v387, %v251
  %v452 = vadd.f32 %v388, %v252
  %v453 = vadd.f32 %v389, %v253
  %v454 = vadd.f32 %v390, %v254
  %v455 = vadd.f32 %v391, %v255
  %v456 = vadd.f32 %v392, %v256
  %v457 = vadd.f32 %v393, %v257
  %v458 = vadd.f32 %v394, %v258
  %v459 = vadd.f32 %v395, %v259
  %v460 = vadd.f32 %v396, %v260
  %v461 = vadd.f32 %v397, %v261
  %v462 = vadd.f32 %v398, %v262
  %v463 = vadd.f32 %v399, %v263
  %v464 = vadd.f32 %v400, %v264
  %v465 = vadd.f32 %v401, %v265
  %v466 = vadd.f32 %v402, %v266
  %v467 = vadd.f32 %v403, %v267
  %v468 = vadd.f32 %v404, %v268
  %v469 = vadd.f32 %v405, %v269
  %v470 = vadd.f32 %v406, %v270
  %v471 = vadd.f32 %v407, %v271
  %v472 = vadd.f32 %v408, %v272
  %v473 = vmax.f32 %v409, 0.0
  %v474 = vmax.f32 %v410, 0.0
  %v475 = vmax.f32 %v411, 0.0
  %v476 = vmax.f32 %v412, 0.0
  %v477 = vmax.f32 %v413, 0.0
  %v478 = vmax.f32 %v414, 0.0
  %v479 = vmax.f32 %v415, 0.0
  %v480 = vmax.f32 %v416, 0.0
  %v481 = vmax.f32 %v417, 0.0
  %v482 = vmax.f32 %v418, 0.0
  %v483 = vmax.f32 %v419, 0.0
  %v484 = vmax.f32 %v420, 0.0
  %v485 = vmax.f32 %v421, 0.0
  %v486 = vmax.f32 %v422, 0.0
  %v487 = vmax.f32 %v423, 0.0
  %v488 = vmax.f32 %v424, 0.0
  %v489 = vmax.f32 %v425, 0.0
  %v490 = vmax.f32 %v426, 0.0
  %v491 = vmax.f32 %v427, 0.0
  %v492 = vmax.f32 %v428, 0.0
  %v493 = vmax.f32 %v429, 0.0
  %v494 = vmax.f32 %v430, 0.0
  %v495 = vmax.f32 %v431, 0.0
  %v496 = vmax.f32 %v432, 0.0
  %v497 = vmax.f32 %v433, 0.0
  %v498 = vmax.f32 %v434, 0.0
  %v499 = vmax.f32 %v435, 0.0
  %v500 = vmax.f32 %v436, 0.0
  %v501 = vmax.f32 %v437, 0.0
  %v502 = vmax.f32 %v438, 0.0
  %v503 = vmax.f32 %v439, 0.0
  %v504 = vmax.f32 %v440, 0.0
  %v505 = vmax.f32 %v441, 0.0
  %v506 = vmax.f32 %v442, 0.0
  %v507 = vmax.f32 %v443, 0.0
  %v508 = vmax.f32 %v444, 0.0
  %v509 = vmax.f32 %v445, 0.0
  %v510 = vmax.f32 %v446, 0.0
  %v511 = vmax.f32 %v447, 0.0
  %v512 = vmax.f32 %v448, 0.0
  %v513 = vmax.f32 %v449, 0.0
  %v514 = vmax.f32 %v450, 0.0
  %v515 = vmax.f32 %v451, 0.0
  %v516 = vmax.f32 %v452, 0.0
  %v517 = vmax.f32 %v453, 0.0
  %v518 = vmax.f32 %v454, 0.0
  %v519 = vmax.f32 %v455, 0.0
  %v520 = vmax.f32 %v456, 0.0
  %v521 = vmax.f32 %v457, 0.0
  %v522 = vmax.f32 %v458, 0.0
  %v523 = vmax.f32 %v459, 0.0
  %v524 = vmax.f32 %v460, 0.0
  %v525 = vmax.f32 %v461, 0.0
  %v526 = vmax.f32 %v462, 0.0
  %v527 = vmax.f32 %v463, 0.0
  %v528 = vmax.f32 %v464, 0.0
  %v529 = vmax.f32 %v465, 0.0
  %v530 = vmax.f32 %v466, 0.0
  %v531 = vmax.f32 %v467, 0.0
  %v532 = vmax.f32 %v468, 0.0
  %v533 = vmax.f32 %v469, 0.0
  %v534 = vmax.f32 %v470, 0.0
  %v535 = vmax.f32 %v471, 0.0
  %v536 = vmax.f32 %v472, 0.0
  %537 = vst [vmem:[%s4] sm:$0xff] %v473
  %538 = vst [vmem:[%s4 + $0x8] sm:$0xff] %v474
  %539 = vst [vmem:[%s4 + $0x10] sm:$0xff] %v475
  %540 = vst [vmem:[%s4 + $0x18] sm:$0xff] %v476
  %541 = vst [vmem:[%s4 + $0x20] sm:$0xff] %v477
  %542 = vst [vmem:[%s4 + $0x28] sm:$0xff] %v478
  %543 = vst [vmem:[%s4 + $0x30] sm:$0xff] %v479
  %544 = vst [vmem:[%s4 + $0x38] sm:$0xff] %v480
  %545 = vst [vmem:[%s4 + $0x40] sm:$0xff] %v481
  %546 = vst [vmem:[%s4 + $0x48] sm:$0xff] %v482
  %547 = vst [vmem:[%s4 + $0x50] sm:$0xff] %v483
  %548 = vst [vmem:[%s4 + $0x58] sm:$0xff] %v484
  %549 = vst [vmem:[%s4 + $0x60] sm:$0xff] %v485
  %550 = vst [vmem:[%s4 + $0x68] sm:$0xff] %v486
  %551 = vst [vmem:[%s4 + $0x70] sm:$0xff] %v487
  %552 = vst [vmem:[%s4 + $0x78] sm:$0xff] %v488
  %553 = vst [vmem:[%s4 + $0x80] sm:$0xff] %v489
  %554 = vst [vmem:[%s4 + $0x88] sm:$0xff] %v490
  %555 = vst [vmem:[%s4 + $0x90] sm:$0xff] %v491
  %556 = vst [vmem:[%s4 + $0x98] sm:$0xff] %v492
  %557 = vst [vmem:[%s4 + $0xa0] sm:$0xff] %v493
  %558 = vst [vmem:[%s4 + $0xa8] sm:$0xff] %v494
  %559 = vst [vmem:[%s4 + $0xb0] sm:$0xff] %v495
  %560 = vst [vmem:[%s4 + $0xb8] sm:$0xff] %v496
  %561 = vst [vmem:[%s4 + $0xc0] sm:$0xff] %v497
  %562 = vst [vmem:[%s4 + $0xc8] sm:$0xff] %v498
  %563 = vst [vmem:[%s4 + $0xd0] sm:$0xff] %v499
  %564 = vst [vmem:[%s4 + $0xd8] sm:$0xff] %v500
  %565 = vst [vmem:[%s4 + $0xe0] sm:$0xff] %v501
  %566 = vst [vmem:[%s4 + $0xe8] sm:$0xff] %v502
  %567 = vst [vmem:[%s4 + $0xf0] sm:$0xff] %v503
  %568 = vst [vmem:[%s4 + $0xf8] sm:$0xff] %v504
  %569 = vst [vmem:[%s4 + $0x100] sm:$0xff] %v505
  %570 = vst [vmem:[%s4 + $0x108] sm:$0xff] %v506
  %571 = vst [vmem:[%s4 + $0x110] sm:$0xff] %v507
  %572 = vst [vmem:[%s4 + $0x118] sm:$0xff] %v508
  %573 = vst [vmem:[%s4 + $0x120] sm:$0xff] %v509
  %574 = vst [vmem:[%s4 + $0x128] sm:$0xff] %v510
  %575 = vst [vmem:[%s4 + $0x130] sm:$0xff] %v511
  %576 = vst [vmem:[%s4 + $0x138] sm:$0xff] %v512
  %577 = vst [vmem:[%s4 + $0x140] sm:$0xff] %v513
  %578 = vst [vmem:[%s4 + $0x148] sm:$0xff] %v514
  %579 = vst [vmem:[%s4 + $0x150] sm:$0xff] %v515
  %580 = vst [vmem:[%s4 + $0x158] sm:$0xff] %v516
  %581 = vst [vmem:[%s4 + $0x160] sm:$0xff] %v517
  %582 = vst [vmem:[%s4 + $0x168] sm:$0xff] %v518
  %583 = vst [vmem:[%s4 + $0x170] sm:$0xff] %v519
  %584 = vst [vmem:[%s4 + $0x178] sm:$0xff] %v520
  %585 = vst [vmem:[%s4 + $0x180] sm:$0xff] %v521
  %586 = vst [vmem:[%s4 + $0x188] sm:$0xff] %v522
  %587 = vst [vmem:[%s4 + $0x190] sm:$0xff] %v523
  %588 = vst [vmem:[%s4 + $0x198] sm:$0xff] %v524
  %589 = vst [vmem:[%s4 + $0x1a0] sm:$0xff] %v525
  %590 = vst [vmem:[%s4 + $0x1a8] sm:$0xff] %v526
  %591 = vst [vmem:[%s4 + $0x1b0] sm:$0xff] %v527
  %592 = vst [vmem:[%s4 + $0x1b8] sm:$0xff] %v528
  %593 = vst [vmem:[%s4 + $0x1c0] sm:$0xff] %v529
  %594 = vst [vmem:[%s4 + $0x1c8] sm:$0xff] %v530
  %595 = vst [vmem:[%s4 + $0x1d0] sm:$0xff] %v531
  %596 = vst [vmem:[%s4 + $0x1d8] sm:$0xff] %v532
  %597 = vst [vmem:[%s4 + $0x1e0] sm:$0xff] %v533
  %598 = vst [vmem:[%s4 + $0x1e8] sm:$0xff] %v534
  %599 = vst [vmem:[%s4 + $0x1f0] sm:$0xff] %v535
  %600 = vst [vmem:[%s4 + $0x1f8] sm:$0xff] %v536
  // Predicated region
  $region18: #{resblock_forward.7} parent=0 // pred_check
    _
  $region19: #{resblock_forward.7} parent=0 // pred_check_branch
    %602 = sbr.rel (0) target = $region21
  $region20: #{resblock_forward.7} parent=0 // pred_region
    _
  $region21: #{resblock_forward.7} parent=0 // pred_fallthru
    _
  // Predicated region
  $region22: #{resblock_forward.7} parent=0 // pred_check
    _
  $region23: #{resblock_forward.7} parent=0 // pred_check_branch
    %604 = sbr.rel (0) target = $region25
  $region24: #{resblock_forward.7} parent=0 // pred_region
    _
  $region25: #{resblock_forward.7} parent=0 // pred_fallthru
    _

// kernel: resblock_forward.6
$region0: #{resblock_forward.6}
  #allocation0 [shape = 'u32[]', space=smem, size = 0x4, offset = 0x4, fixed_abs, tag = 'smem constant byte address 0x4 - core index']
  #allocation1 [shape = 'u32[72,128]{1,0:T(1,128)}', space=vmem, size = 0x9000, scoped, tag = 'internal scratch']
  #allocation2 [shape = 'bf16[18,16,384]{2,1,0:T(8,128)(2,1)}', space=vmem, size = 0x36000, scoped, tag = 'scratch operand']
  %s0 = inlined_call_operand.vmem [shape: bf16[2,16,16,128], index: 0, kind: input, shape index: {}]
  %s1 = inlined_call_operand.vmem [shape: f32[1,1,128], index: 1, kind: input, shape index: {}]
  %s2 = inlined_call_operand.vmem [shape: f32[1,1,128], index: 2, kind: input, shape index: {}]
  %s3 = inlined_call_operand.vmem [shape: bf16[3,384,128], index: 3, kind: input, shape index: {}]
  %s4 = inlined_call_operand.vmem [shape: bf16[2,16,16,128], index: 4, kind: output, shape index: {0}]
  %s5 = inlined_call_operand.vmem [shape: f32[2,1,128], index: 5, kind: output, shape index: {1}]
  %s6 = inlined_call_operand.vmem [shape: f32[2,1,128], index: 6, kind: output, shape index: {2}]
  %7 = xla_tuple %s4, %s5, %s6
  %s8 = sld [smem:[#allocation0]]
  $region65: #{resblock_forward.6} parent=0
    _
  %s10 = ssub.s32 1, %s8
  %s11 = scalar_select 0, %s10, %s8
  loop: start=0, step=1, limit=4
  $region2: #{resblock_forward.6} parent=0 // loop_pre_header
    _
  $region3: #{resblock_forward.6} parent=0 // loop_header
    %s13 = sphi 0, %s17
    %p14 = scmp.ge.s32.totalorder %s13, 4
    %s23 = sphi 0, %s25
    %s26 = sphi 0, %s23
    %s27 = sphi 0, %s26
    %s43 = sphi 0, %s27
    %s47 = sphi 0, %s47
    %s49 = sphi 0, %s47
    %s50 = sphi 0, %s49
    %s64 = sphi 0, %s50
    %s68 = sphi 0, %s68
    %s70 = sphi 0, %s68
    %s71 = sphi 0, %s70
    %s85 = sphi 0, %s71
    %s89 = sphi 0, %s89
    %s91 = sphi 0, %s89
    %s92 = sphi 0, %s91
    %s106 = sphi 0, %s92
    %s112 = sphi 0, %s114
    %s115 = sphi 0, %s112
    %s116 = sphi 0, %s115
    %s132 = sphi 0, %s116
    %s138 = sphi 0, %s140
    %s141 = sphi 0, %s138
    %s142 = sphi 0, %s141
    %s158 = sphi 0, %s142
    %s164 = sphi 0, %s166
    %s167 = sphi 0, %s164
    %s168 = sphi 0, %s167
    %s184 = sphi 0, %s168
  $region4: #{resblock_forward.6} parent=0 // loop_header_branch
    %16 = sbr.rel (%p14) target = $region8
  $region5: #{resblock_forward.6} parent=0 // loop_body
    %s18 = ssub.s32 %s13, 1
    %s19 = ssub.s32 %s13, 2
    %s20 = sadd.s32 %s13, 1
    %s21 = ssub.s32 %s13, %s20
    %p22 = scmp.eq.s32.totalorder %s21, 0
    %s24 = sadd.s32 %s23, 1
    %s25 = scalar_select %p22, %s23, %s24
    %p28 = pneg %p22
    %p29 = scmp.eq.s32.totalorder %s13, 1
    %p30 = por %p28, %p29
    %p31 = scmp.ne.s32.totalorder %s23, %s26
    %p32 = scmp.eq.s32.totalorder %s13, 0
    %p33 = por %p31, %p32
    %p34 = scmp.ne.s32.totalorder %s23, %s26
    %p35 = scmp.eq.s32.totalorder %s18, 1
    %p36 = por %p34, %p35
    %p37 = scmp.ne.s32.totalorder %s26, %s27
    %p38 = scmp.eq.s32.totalorder %s18, 0
    %p39 = por %p37, %p38
    %p40 = scmp.ne.s32.totalorder %s26, %s27
    %p41 = scmp.eq.s32.totalorder %s19, 1
    %p42 = por %p40, %p41
    %p44 = scmp.ne.s32.totalorder %s27, %s43
    %p45 = scmp.eq.s32.totalorder %s19, 0
    %p46 = por %p44, %p45
    %s48 = sadd.s32 %s47, 1
    %p51 = scmp.eq.s32.totalorder %s13, 1
    %p52 = scmp.ne.s32.totalorder %s47, %s49
    %p53 = scmp.eq.s32.totalorder %s13, 0
    %p54 = por %p52, %p53
    %p55 = scmp.ne.s32.totalorder %s47, %s49
    %p56 = scmp.eq.s32.totalorder %s18, 1
    %p57 = por %p55, %p56
    %p58 = scmp.ne.s32.totalorder %s49, %s50
    %p59 = scmp.eq.s32.totalorder %s18, 0
    %p60 = por %p58, %p59
    %p61 = scmp.ne.s32.totalorder %s49, %s50
    %p62 = scmp.eq.s32.totalorder %s19, 1
    %p63 = por %p61, %p62
    %p65 = scmp.ne.s32.totalorder %s50, %s64
    %p66 = scmp.eq.s32.totalorder %s19, 0
    %p67 = por %p65, %p66
    %s69 = sadd.s32 %s68, 1
    %p72 = scmp.eq.s32.totalorder %s13, 1
    %p73 = scmp.ne.s32.totalorder %s68, %s70
    %p74 = scmp.eq.s32.totalorder %s13, 0
    %p75 = por %p73, %p74
    %p76 = scmp.ne.s32.totalorder %s68, %s70
    %p77 = scmp.eq.s32.totalorder %s18, 1
    %p78 = por %p76, %p77
    %p79 = scmp.ne.s32.totalorder %s70, %s71
    %p80 = scmp.eq.s32.totalorder %s18, 0
    %p81 = por %p79, %p80
    %p82 = scmp.ne.s32.totalorder %s70, %s71
    %p83 = scmp.eq.s32.totalorder %s19, 1
    %p84 = por %p82, %p83
    %p86 = scmp.ne.s32.totalorder %s71, %s85
    %p87 = scmp.eq.s32.totalorder %s19, 0
    %p88 = por %p86, %p87
    %s90 = sadd.s32 %s89, 1
    %p93 = scmp.eq.s32.totalorder %s13, 1
    %p94 = scmp.ne.s32.totalorder %s89, %s91
    %p95 = scmp.eq.s32.totalorder %s13, 0
    %p96 = por %p94, %p95
    %p97 = scmp.ne.s32.totalorder %s89, %s91
    %p98 = scmp.eq.s32.totalorder %s18, 1
    %p99 = por %p97, %p98
    %p100 = scmp.ne.s32.totalorder %s91, %s92
    %p101 = scmp.eq.s32.totalorder %s18, 0
    %p102 = por %p100, %p101
    %p103 = scmp.ne.s32.totalorder %s91, %s92
    %p104 = scmp.eq.s32.totalorder %s19, 1
    %p105 = por %p103, %p104
    %p107 = scmp.ne.s32.totalorder %s92, %s106
    %p108 = scmp.eq.s32.totalorder %s19, 0
    %p109 = por %p107, %p108
    %s110 = ssub.s32 %s13, %s20
    %p111 = scmp.eq.s32.totalorder %s110, 0
    %s113 = sadd.s32 %s112, 1
    %s114 = scalar_select %p111, %s112, %s113
    %p117 = pneg %p111
    %p118 = scmp.eq.s32.totalorder %s13, 1
    %p119 = por %p117, %p118
    %p120 = scmp.ne.s32.totalorder %s112, %s115
    %p121 = scmp.eq.s32.totalorder %s13, 0
    %p122 = por %p120, %p121
    %p123 = scmp.ne.s32.totalorder %s112, %s115
    %p124 = scmp.eq.s32.totalorder %s18, 1
    %p125 = por %p123, %p124
    %p126 = scmp.ne.s32.totalorder %s115, %s116
    %p127 = scmp.eq.s32.totalorder %s18, 0
    %p128 = por %p126, %p127
    %p129 = scmp.ne.s32.totalorder %s115, %s116
    %p130 = scmp.eq.s32.totalorder %s19, 1
    %p131 = por %p129, %p130
    %p133 = scmp.ne.s32.totalorder %s116, %s132
    %p134 = scmp.eq.s32.totalorder %s19, 0
    %p135 = por %p133, %p134
    %s136 = ssub.s32 %s13, %s20
    %p137 = scmp.eq.s32.totalorder %s136, 0
    %s139 = sadd.s32 %s138, 1
    %s140 = scalar_select %p137, %s138, %s139
    %p143 = pneg %p137
    %p144 = scmp.eq.s32.totalorder %s13, 1
    %p145 = por %p143, %p144
    %p146 = scmp.ne.s32.totalorder %s138, %s141
    %p147 = scmp.eq.s32.totalorder %s13, 0
    %p148 = por %p146, %p147
    %p149 = scmp.ne.s32.totalorder %s138, %s141
    %p150 = scmp.eq.s32.totalorder %s18, 1
    %p151 = por %p149, %p150
    %p152 = scmp.ne.s32.totalorder %s141, %s142
    %p153 = scmp.eq.s32.totalorder %s18, 0
    %p154 = por %p152, %p153
    %p155 = scmp.ne.s32.totalorder %s141, %s142
    %p156 = scmp.eq.s32.totalorder %s19, 1
    %p157 = por %p155, %p156
    %p159 = scmp.ne.s32.totalorder %s142, %s158
    %p160 = scmp.eq.s32.totalorder %s19, 0
    %p161 = por %p159, %p160
    %s162 = ssub.s32 %s13, %s20
    %p163 = scmp.eq.s32.totalorder %s162, 0
    %s165 = sadd.s32 %s164, 1
    %s166 = scalar_select %p163, %s164, %s165
    %p169 = pneg %p163
    %p170 = scmp.eq.s32.totalorder %s13, 1
    %p171 = por %p169, %p170
    %p172 = scmp.ne.s32.totalorder %s164, %s167
    %p173 = scmp.eq.s32.totalorder %s13, 0
    %p174 = por %p172, %p173
    %p175 = scmp.ne.s32.totalorder %s164, %s167
    %p176 = scmp.eq.s32.totalorder %s18, 1
    %p177 = por %p175, %p176
    %p178 = scmp.ne.s32.totalorder %s167, %s168
    %p179 = scmp.eq.s32.totalorder %s18, 0
    %p180 = por %p178, %p179
    %p181 = scmp.ne.s32.totalorder %s167, %s168
    %p182 = scmp.eq.s32.totalorder %s19, 1
    %p183 = por %p181, %p182
    %p185 = scmp.ne.s32.totalorder %s168, %s184
    %p186 = scmp.eq.s32.totalorder %s19, 0
    %p187 = por %p185, %p186
    %p188 = scmp.le.s32.totalorder 1, %s13
    %p189 = scmp.lt.s32.totalorder %s13, 3
    %p190 = pnand %p188, %p189
    %p191 = pneg %p190
    // Predicated region
    $region9: #{resblock_forward.6} parent=5 // pred_check
      _
    $region10: #{resblock_forward.6} parent=5 // pred_check_branch
      %193 = sbr.rel (%p190) target = $region12
    $region11: #{resblock_forward.6} parent=5 // pred_region
      %s194 = ssub.s32 %s13, 1
      // Predicated region
      $region13: #{resblock_forward.6} parent=11 // pred_check
        %p195 = pneg %p60
      $region14: #{resblock_forward.6} parent=11 // pred_check_branch
        %197 = sbr.rel (%p195) target = $region16
      $region15: #{resblock_forward.6} parent=11 // pred_region
        _
      $region16: #{resblock_forward.6} parent=11 // pred_fallthru
        _
      // Predicated region
      $region17: #{resblock_forward.6} parent=11 // pred_check
        %p198 = pneg %p81
      $region18: #{resblock_forward.6} parent=11 // pred_check_branch
        %200 = sbr.rel (%p198) target = $region20
      $region19: #{resblock_forward.6} parent=11 // pred_region
        _
      $region20: #{resblock_forward.6} parent=11 // pred_fallthru
        _
      // Predicated region
      $region21: #{resblock_forward.6} parent=11 // pred_check
        %p201 = pneg %p102
      $region22: #{resblock_forward.6} parent=11 // pred_check_branch
        %203 = sbr.rel (%p201) target = $region24
      $region23: #{resblock_forward.6} parent=11 // pred_region
        _
      $region24: #{resblock_forward.6} parent=11 // pred_fallthru
        _
    $region12: #{resblock_forward.6} parent=5 // pred_fallthru
      _
    %p204 = scmp.lt.s32.totalorder %s13, 2
    // Predicated region
    $region25: #{resblock_forward.6} parent=5 // pred_check
      %p205 = pneg %p204
    $region26: #{resblock_forward.6} parent=5 // pred_check_branch
      %207 = sbr.rel (%p205) target = $region28
    $region27: #{resblock_forward.6} parent=5 // pred_region
      // Predicated region
      $region29: #{resblock_forward.6} parent=27 // pred_check
        %p208 = pneg %p33
      $region30: #{resblock_forward.6} parent=27 // pred_check_branch
        %210 = sbr.rel (%p208) target = $region32
      $region31: #{resblock_forward.6} parent=27 // pred_region
        %p211 = scmp.lt.s32.totalorder %s13, 1
        %s212 = scalar_select %p211, %s13, 1
        %s213 = smul.addr %s212, 32
        %s214 = smul.addr %s213, 4
        %s215 = scalar_lea.vmem %s0, %s214
      $region32: #{resblock_forward.6} parent=27 // pred_fallthru
        _
    $region28: #{resblock_forward.6} parent=5 // pred_fallthru
      _
    %p216 = scmp.le.s32.totalorder 1, %s13
    %p217 = scmp.lt.s32.totalorder %s13, 3
    %p218 = pnand %p216, %p217
    %p219 = pneg %p218
    // Predicated region
    $region33: #{resblock_forward.6} parent=5 // pred_check
      _
    $region34: #{resblock_forward.6} parent=5 // pred_check_branch
      %221 = sbr.rel (%p218) target = $region36
    $region35: #{resblock_forward.6} parent=5 // pred_region
      %s222 = ssub.s32 %s13, 1
      %p223 = scmp.lt.s32.totalorder %s18, 1
      %s224 = scalar_select %p223, %s18, 1
      %s225 = smul.addr %s224, 32
      %s226 = smul.addr %s225, 4
      %s227 = scalar_lea.vmem %s0, %s226
      %p228 = pneg %p39
      %p229 = pneg %p36
      %p230 = pneg %p60
      %p231 = pneg %p57
      %p232 = pneg %p81
      %p233 = pneg %p78
      %p234 = pneg %p102
      %p235 = pneg %p99
      %p236 = pneg %p128
      %p237 = pneg %p125
      %p238 = scmp.lt.s32.totalorder %s18, 1
      %s239 = scalar_select %p238, %s18, 1
      %s240 = smul.addr %s239, 32
      %s241 = smul.addr %s240, 4
      %s242 = scalar_lea.vmem %s4, %s241
      %p243 = pneg %p154
      %p244 = pneg %p151
      %p245 = scmp.lt.s32.totalorder %s18, 1
      %s246 = scalar_select %p245, %s18, 1
      %s247 = scalar_lea.vmem %s5, %s246
      %p248 = pneg %p180
      %p249 = pneg %p177
      %p250 = scmp.lt.s32.totalorder %s18, 1
      %s251 = scalar_select %p250, %s18, 1
      %s252 = scalar_lea.vmem %s6, %s251
      %p253 = scmp.lt.s32.totalorder %s18, 1
      %s254 = scalar_select %p253, %s18, 1
      %s255 = smul.addr %s254, 32
      %s256 = smul.addr %s255, 4
      %s257 = scalar_lea.vmem %s0, %s256
      %p258 = scmp.lt.s32.totalorder %s18, 1
      %s259 = scalar_select %p258, %s18, 1
      %s260 = smul.addr %s259, 32
      %s261 = smul.addr %s260, 4
      %s262 = scalar_lea.vmem %s4, %s261
      %p263 = scmp.lt.s32.totalorder %s18, 1
      %s264 = scalar_select %p263, %s18, 1
      %s265 = scalar_lea.vmem %s5, %s264
      %p266 = scmp.lt.s32.totalorder %s18, 1
      %s267 = scalar_select %p266, %s18, 1
      %s268 = scalar_lea.vmem %s6, %s267
      %v270 = vld [vmem:[%s257] sm:$0xf]
      %v271 = vld [vmem:[%s257 + $0x4] sm:$0xf]
      %v272 = vld [vmem:[%s257 + $0x8] sm:$0xf]
      %v273 = vld [vmem:[%s257 + $0xc] sm:$0xf]
      %v274 = vld [vmem:[%s257 + $0x10] sm:$0xf]
      %v275 = vld [vmem:[%s257 + $0x14] sm:$0xf]
      %v276 = vld [vmem:[%s257 + $0x18] sm:$0xf]
      %v277 = vld [vmem:[%s257 + $0x1c] sm:$0xf]
      %v278 = vld [vmem:[%s257 + $0x20] sm:$0xf]
      %v279 = vld [vmem:[%s257 + $0x24] sm:$0xf]
      %v280 = vld [vmem:[%s257 + $0x28] sm:$0xf]
      %v281 = vld [vmem:[%s257 + $0x2c] sm:$0xf]
      %v282 = vld [vmem:[%s257 + $0x30] sm:$0xf]
      %v283 = vld [vmem:[%s257 + $0x34] sm:$0xf]
      %v284 = vld [vmem:[%s257 + $0x38] sm:$0xf]
      %v285 = vld [vmem:[%s257 + $0x3c] sm:$0xf]
      %v286 = vld [vmem:[%s257 + $0x40] sm:$0xf]
      %v287 = vld [vmem:[%s257 + $0x44] sm:$0xf]
      %v288 = vld [vmem:[%s257 + $0x48] sm:$0xf]
      %v289 = vld [vmem:[%s257 + $0x4c] sm:$0xf]
      %v290 = vld [vmem:[%s257 + $0x50] sm:$0xf]
      %v291 = vld [vmem:[%s257 + $0x54] sm:$0xf]
      %v292 = vld [vmem:[%s257 + $0x58] sm:$0xf]
      %v293 = vld [vmem:[%s257 + $0x5c] sm:$0xf]
      %v294 = vld [vmem:[%s257 + $0x60] sm:$0xf]
      %v295 = vld [vmem:[%s257 + $0x64] sm:$0xf]
      %v296 = vld [vmem:[%s257 + $0x68] sm:$0xf]
      %v297 = vld [vmem:[%s257 + $0x6c] sm:$0xf]
      %v298 = vld [vmem:[%s257 + $0x70] sm:$0xf]
      %v299 = vld [vmem:[%s257 + $0x74] sm:$0xf]
      %v300 = vld [vmem:[%s257 + $0x78] sm:$0xf]
      %v301 = vld [vmem:[%s257 + $0x7c] sm:$0xf]
      %v302 = vunpack.c.l.bf16 %v270
      %v303 = vunpack.c.l.bf16 %v271
      %v304 = vunpack.c.l.bf16 %v272
      %v305 = vunpack.c.l.bf16 %v273
      %v306 = vunpack.c.l.bf16 %v274
      %v307 = vunpack.c.l.bf16 %v275
      %v308 = vunpack.c.l.bf16 %v276
      %v309 = vunpack.c.l.bf16 %v277
      %v310 = vunpack.c.l.bf16 %v278
      %v311 = vunpack.c.l.bf16 %v279
      %v312 = vunpack.c.l.bf16 %v280
      %v313 = vunpack.c.l.bf16 %v281
      %v314 = vunpack.c.l.bf16 %v282
      %v315 = vunpack.c.l.bf16 %v283
      %v316 = vunpack.c.l.bf16 %v284
      %v317 = vunpack.c.l.bf16 %v285
      %v318 = vunpack.c.l.bf16 %v286
      %v319 = vunpack.c.l.bf16 %v287
      %v320 = vunpack.c.l.bf16 %v288
      %v321 = vunpack.c.l.bf16 %v289
      %v322 = vunpack.c.l.bf16 %v290
      %v323 = vunpack.c.l.bf16 %v291
      %v324 = vunpack.c.l.bf16 %v292
      %v325 = vunpack.c.l.bf16 %v293
      %v326 = vunpack.c.l.bf16 %v294
      %v327 = vunpack.c.l.bf16 %v295
      %v328 = vunpack.c.l.bf16 %v296
      %v329 = vunpack.c.l.bf16 %v297
      %v330 = vunpack.c.l.bf16 %v298
      %v331 = vunpack.c.l.bf16 %v299
      %v332 = vunpack.c.l.bf16 %v300
      %v333 = vunpack.c.l.bf16 %v301
      %v334 = vld [vmem:[%s1] sm:$0x1]
      %v336 = vperm.slane %v334, 0
      %v338 = vmul.f32 %v302, %v336
      %v339 = vmul.f32 %v303, %v336
      %v340 = vmul.f32 %v304, %v336
      %v341 = vmul.f32 %v305, %v336
      %v342 = vmul.f32 %v306, %v336
      %v343 = vmul.f32 %v307, %v336
      %v344 = vmul.f32 %v308, %v336
      %v345 = vmul.f32 %v309, %v336
      %v346 = vmul.f32 %v310, %v336
      %v347 = vmul.f32 %v311, %v336
      %v348 = vmul.f32 %v312, %v336
      %v349 = vmul.f32 %v313, %v336
      %v350 = vmul.f32 %v314, %v336
      %v351 = vmul.f32 %v315, %v336
      %v352 = vmul.f32 %v316, %v336
      %v353 = vmul.f32 %v317, %v336
      %v354 = vmul.f32 %v318, %v336
      %v355 = vmul.f32 %v319, %v336
      %v356 = vmul.f32 %v320, %v336
      %v357 = vmul.f32 %v321, %v336
      %v358 = vmul.f32 %v322, %v336
      %v359 = vmul.f32 %v323, %v336
      %v360 = vmul.f32 %v324, %v336
      %v361 = vmul.f32 %v325, %v336
      %v362 = vmul.f32 %v326, %v336
      %v363 = vmul.f32 %v327, %v336
      %v364 = vmul.f32 %v328, %v336
      %v365 = vmul.f32 %v329, %v336
      %v366 = vmul.f32 %v330, %v336
      %v367 = vmul.f32 %v331, %v336
      %v368 = vmul.f32 %v332, %v336
      %v369 = vmul.f32 %v333, %v336
      %v370 = vld [vmem:[%s2] sm:$0x1]
      %v372 = vperm.slane %v370, 0
      %v374 = vadd.f32 %v338, %v372
      %v375 = vadd.f32 %v339, %v372
      %v376 = vadd.f32 %v340, %v372
      %v377 = vadd.f32 %v341, %v372
      %v378 = vadd.f32 %v342, %v372
      %v379 = vadd.f32 %v343, %v372
      %v380 = vadd.f32 %v344, %v372
      %v381 = vadd.f32 %v345, %v372
      %v382 = vadd.f32 %v346, %v372
      %v383 = vadd.f32 %v347, %v372
      %v384 = vadd.f32 %v348, %v372
      %v385 = vadd.f32 %v349, %v372
      %v386 = vadd.f32 %v350, %v372
      %v387 = vadd.f32 %v351, %v372
      %v388 = vadd.f32 %v352, %v372
      %v389 = vadd.f32 %v353, %v372
      %v390 = vadd.f32 %v354, %v372
      %v391 = vadd.f32 %v355, %v372
      %v392 = vadd.f32 %v356, %v372
      %v393 = vadd.f32 %v357, %v372
      %v394 = vadd.f32 %v358, %v372
      %v395 = vadd.f32 %v359, %v372
      %v396 = vadd.f32 %v360, %v372
      %v397 = vadd.f32 %v361, %v372
      %v398 = vadd.f32 %v362, %v372
      %v399 = vadd.f32 %v363, %v372
      %v400 = vadd.f32 %v364, %v372
      %v401 = vadd.f32 %v365, %v372
      %v402 = vadd.f32 %v366, %v372
      %v403 = vadd.f32 %v367, %v372
      %v404 = vadd.f32 %v368, %v372
      %v405 = vadd.f32 %v369, %v372
      %v406 = vmax.f32 %v374, 0.0
      %v407 = vmax.f32 %v375, 0.0
      %v408 = vmax.f32 %v376, 0.0
      %v409 = vmax.f32 %v377, 0.0
      %v410 = vmax.f32 %v378, 0.0
      %v411 = vmax.f32 %v379, 0.0
      %v412 = vmax.f32 %v380, 0.0
      %v413 = vmax.f32 %v381, 0.0
      %v414 = vmax.f32 %v382, 0.0
      %v415 = vmax.f32 %v383, 0.0
      %v416 = vmax.f32 %v384, 0.0
      %v417 = vmax.f32 %v385, 0.0
      %v418 = vmax.f32 %v386, 0.0
      %v419 = vmax.f32 %v387, 0.0
      %v420 = vmax.f32 %v388, 0.0
      %v421 = vmax.f32 %v389, 0.0
      %v422 = vmax.f32 %v390, 0.0
      %v423 = vmax.f32 %v391, 0.0
      %v424 = vmax.f32 %v392, 0.0
      %v425 = vmax.f32 %v393, 0.0
      %v426 = vmax.f32 %v394, 0.0
      %v427 = vmax.f32 %v395, 0.0
      %v428 = vmax.f32 %v396, 0.0
      %v429 = vmax.f32 %v397, 0.0
      %v430 = vmax.f32 %v398, 0.0
      %v431 = vmax.f32 %v399, 0.0
      %v432 = vmax.f32 %v400, 0.0
      %v433 = vmax.f32 %v401, 0.0
      %v434 = vmax.f32 %v402, 0.0
      %v435 = vmax.f32 %v403, 0.0
      %v436 = vmax.f32 %v404, 0.0
      %v437 = vmax.f32 %v405, 0.0
      %v438 = vpack.c.bf16 %v406, %v406
      %v439 = vpack.c.bf16 %v407, %v407
      %v440 = vpack.c.bf16 %v408, %v408
      %v441 = vpack.c.bf16 %v409, %v409
      %v442 = vpack.c.bf16 %v410, %v410
      %v443 = vpack.c.bf16 %v411, %v411
      %v444 = vpack.c.bf16 %v412, %v412
      %v445 = vpack.c.bf16 %v413, %v413
      %v446 = vpack.c.bf16 %v414, %v414
      %v447 = vpack.c.bf16 %v415, %v415
      %v448 = vpack.c.bf16 %v416, %v416
      %v449 = vpack.c.bf16 %v417, %v417
      %v450 = vpack.c.bf16 %v418, %v418
      %v451 = vpack.c.bf16 %v419, %v419
      %v452 = vpack.c.bf16 %v420, %v420
      %v453 = vpack.c.bf16 %v421, %v421
      %v454 = vpack.c.bf16 %v422, %v422
      %v455 = vpack.c.bf16 %v423, %v423
      %v456 = vpack.c.bf16 %v424, %v424
      %v457 = vpack.c.bf16 %v425, %v425
      %v458 = vpack.c.bf16 %v426, %v426
      %v459 = vpack.c.bf16 %v427, %v427
      %v460 = vpack.c.bf16 %v428, %v428
      %v461 = vpack.c.bf16 %v429, %v429
      %v462 = vpack.c.bf16 %v430, %v430
      %v463 = vpack.c.bf16 %v431, %v431
      %v464 = vpack.c.bf16 %v432, %v432
      %v465 = vpack.c.bf16 %v433, %v433
      %v466 = vpack.c.bf16 %v434, %v434
      %v467 = vpack.c.bf16 %v435, %v435
      %v468 = vpack.c.bf16 %v436, %v436
      %v469 = vpack.c.bf16 %v437, %v437
      %v502 = vunpack.c.l.b16 %v438
      %v503 = vunpack.c.l.b16 %v439
      %v504 = vunpack.c.l.b16 %v440
      %v505 = vunpack.c.l.b16 %v441
      %v506 = vunpack.c.l.b16 %v442
      %v507 = vunpack.c.l.b16 %v443
      %v508 = vunpack.c.l.b16 %v444
      %v509 = vunpack.c.l.b16 %v445
      %v510 = vunpack.c.l.b16 %v446
      %v511 = vunpack.c.l.b16 %v447
      %v512 = vunpack.c.l.b16 %v448
      %v513 = vunpack.c.l.b16 %v449
      %v514 = vunpack.c.l.b16 %v450
      %v515 = vunpack.c.l.b16 %v451
      %v516 = vunpack.c.l.b16 %v452
      %v517 = vunpack.c.l.b16 %v453
      %v518 = vunpack.c.l.b16 %v454
      %v519 = vunpack.c.l.b16 %v455
      %v520 = vunpack.c.l.b16 %v456
      %v521 = vunpack.c.l.b16 %v457
      %v522 = vunpack.c.l.b16 %v458
      %v523 = vunpack.c.l.b16 %v459
      %v524 = vunpack.c.l.b16 %v460
      %v525 = vunpack.c.l.b16 %v461
      %v526 = vunpack.c.l.b16 %v462
      %v527 = vunpack.c.l.b16 %v463
      %v528 = vunpack.c.l.b16 %v464
      %v529 = vunpack.c.l.b16 %v465
      %v530 = vunpack.c.l.b16 %v466
      %v531 = vunpack.c.l.b16 %v467
      %v532 = vunpack.c.l.b16 %v468
      %v533 = vunpack.c.l.b16 %v469
      %v534 = vpack.c.b16 %v503, %v502
      %v535 = vpack.c.b16 %v505, %v504
      %v536 = vpack.c.b16 %v507, %v506
      %v537 = vpack.c.b16 %v509, %v508
      %v538 = vpack.c.b16 %v511, %v510
      %v539 = vpack.c.b16 %v513, %v512
      %v540 = vpack.c.b16 %v515, %v514
      %v541 = vpack.c.b16 %v517, %v516
      %v542 = vpack.c.b16 %v519, %v518
      %v543 = vpack.c.b16 %v521, %v520
      %v544 = vpack.c.b16 %v523, %v522
      %v545 = vpack.c.b16 %v525, %v524
      %v546 = vpack.c.b16 %v527, %v526
      %v547 = vpack.c.b16 %v529, %v528
      %v548 = vpack.c.b16 %v531, %v530
      %v549 = vpack.c.b16 %v533, %v532
      %v551 = vshrl.u32 %v534, 16
      %v553 = vrot.slane %v551, 7
      %v554 = vshll.u32 %v534, 16
      %v556 = vor.u32 %v553, %v554
      %v558 = vshrl.u32 %v535, 16
      %v560 = vrot.slane %v558, 7
      %v561 = vshll.u32 %v535, 16
      %v563 = vor.u32 %v560, %v561
      %v565 = vshrl.u32 %v536, 16
      %v567 = vrot.slane %v565, 7
      %v568 = vshll.u32 %v536, 16
      %v570 = vor.u32 %v567, %v568
      %v572 = vshrl.u32 %v537, 16
      %v574 = vrot.slane %v572, 7
      %v575 = vshll.u32 %v537, 16
      %v577 = vor.u32 %v574, %v575
      %v579 = vshrl.u32 %v538, 16
      %v581 = vrot.slane %v579, 7
      %v582 = vshll.u32 %v538, 16
      %v584 = vor.u32 %v581, %v582
      %v586 = vshrl.u32 %v539, 16
      %v588 = vrot.slane %v586, 7
      %v589 = vshll.u32 %v539, 16
      %v591 = vor.u32 %v588, %v589
      %v593 = vshrl.u32 %v540, 16
      %v595 = vrot.slane %v593, 7
      %v596 = vshll.u32 %v540, 16
      %v598 = vor.u32 %v595, %v596
      %v600 = vshrl.u32 %v541, 16
      %v602 = vrot.slane %v600, 7
      %v603 = vshll.u32 %v541, 16
      %v605 = vor.u32 %v602, %v603
      %v607 = vshrl.u32 %v542, 16
      %v609 = vrot.slane %v607, 7
      %v610 = vshll.u32 %v542, 16
      %v612 = vor.u32 %v609, %v610
      %v614 = vshrl.u32 %v543, 16
      %v616 = vrot.slane %v614, 7
      %v617 = vshll.u32 %v543, 16
      %v619 = vor.u32 %v616, %v617
      %v621 = vshrl.u32 %v544, 16
      %v623 = vrot.slane %v621, 7
      %v624 = vshll.u32 %v544, 16
      %v626 = vor.u32 %v623, %v624
      %v628 = vshrl.u32 %v545, 16
      %v630 = vrot.slane %v628, 7
      %v631 = vshll.u32 %v545, 16
      %v633 = vor.u32 %v630, %v631
      %v635 = vshrl.u32 %v546, 16
      %v637 = vrot.slane %v635, 7
      %v638 = vshll.u32 %v546, 16
      %v640 = vor.u32 %v637, %v638
      %v642 = vshrl.u32 %v547, 16
      %v644 = vrot.slane %v642, 7
      %v645 = vshll.u32 %v547, 16
      %v647 = vor.u32 %v644, %v645
      %v649 = vshrl.u32 %v548, 16
      %v651 = vrot.slane %v649, 7
      %v652 = vshll.u32 %v548, 16
      %v654 = vor.u32 %v651, %v652
      %v656 = vshrl.u32 %v549, 16
      %v658 = vrot.slane %v656, 7
      %v659 = vshll.u32 %v549, 16
      %v661 = vor.u32 %v658, %v659
      %vm694 = vcmask 1040384
      %vm695 = vsmask.f32 256
      %vm696 = vmand %vm694, %vm695
      %v697 = vsel %vm696, 0, %v556
      %v698 = vsel %vm696, 0, %v563
      %v699 = vsel %vm696, 0, %v570
      %v700 = vsel %vm696, 0, %v577
      %v701 = vsel %vm696, 0, %v584
      %v702 = vsel %vm696, 0, %v591
      %v703 = vsel %vm696, 0, %v598
      %v704 = vsel %vm696, 0, %v605
      %v705 = vsel %vm696, 0, %v612
      %v706 = vsel %vm696, 0, %v619
      %v707 = vsel %vm696, 0, %v626
      %v708 = vsel %vm696, 0, %v633
      %v709 = vsel %vm696, 0, %v640
      %v710 = vsel %vm696, 0, %v647
      %v711 = vsel %vm696, 0, %v654
      %v712 = vsel %vm696, 0, %v661
      %v713 = vsel %vm696, %v553, 0
      %v714 = vsel %vm696, %v560, 0
      %v715 = vsel %vm696, %v567, 0
      %v716 = vsel %vm696, %v574, 0
      %v717 = vsel %vm696, %v581, 0
      %v718 = vsel %vm696, %v588, 0
      %v719 = vsel %vm696, %v595, 0
      %v720 = vsel %vm696, %v602, 0
      %v721 = vsel %vm696, %v609, 0
      %v722 = vsel %vm696, %v616, 0
      %v723 = vsel %vm696, %v623, 0
      %v724 = vsel %vm696, %v630, 0
      %v725 = vsel %vm696, %v637, 0
      %v726 = vsel %vm696, %v644, 0
      %v727 = vsel %vm696, %v651, 0
      %v728 = vsel %vm696, %v658, 0
      %729 = vst [vmem:[#allocation2] sm:$0xff] 0
      %730 = vst [vmem:[#allocation2 + $0x8] sm:$0xf] 0
      %731 = vst [vmem:[#allocation2 + $0xc] sm:$0xff] 0
      %732 = vst [vmem:[#allocation2 + $0x14] sm:$0xf] 0
      %s733 = scalar_lea.vmem [#allocation2], 408
      %734 = vst [vmem:[%s733] sm:$0xff] 0
      %735 = vst [vmem:[%s733 + $0x8] sm:$0xf] 0
      %736 = vst [vmem:[%s733 + $0xc] sm:$0xff] 0
      %737 = vst [vmem:[%s733 + $0x14] sm:$0xf] 0
      %v754 = vunpack.c.l.b16 %v697
      %v755 = vunpack.c.h.b16 %v697
      %v756 = vunpack.c.l.b16 %v698
      %v757 = vunpack.c.h.b16 %v698
      %v758 = vunpack.c.l.b16 %v699
      %v759 = vunpack.c.h.b16 %v699
      %v760 = vunpack.c.l.b16 %v700
      %v761 = vunpack.c.h.b16 %v700
      %v762 = vunpack.c.l.b16 %v701
      %v763 = vunpack.c.h.b16 %v701
      %v764 = vunpack.c.l.b16 %v702
      %v765 = vunpack.c.h.b16 %v702
      %v766 = vunpack.c.l.b16 %v703
      %v767 = vunpack.c.h.b16 %v703
      %v768 = vunpack.c.l.b16 %v704
      %v769 = vunpack.c.h.b16 %v704
      %v770 = vunpack.c.l.b16 %v705
      %v771 = vunpack.c.h.b16 %v705
      %v772 = vunpack.c.l.b16 %v706
      %v773 = vunpack.c.h.b16 %v706
      %v774 = vunpack.c.l.b16 %v707
      %v775 = vunpack.c.h.b16 %v707
      %v776 = vunpack.c.l.b16 %v708
      %v777 = vunpack.c.h.b16 %v708
      %v778 = vunpack.c.l.b16 %v709
      %v779 = vunpack.c.h.b16 %v709
      %v780 = vunpack.c.l.b16 %v710
      %v781 = vunpack.c.h.b16 %v710
      %v782 = vunpack.c.l.b16 %v711
      %v783 = vunpack.c.h.b16 %v711
      %v784 = vunpack.c.l.b16 %v712
      %v785 = vunpack.c.h.b16 %v712
      %v786 = vpack.c.b16 %v754, %v754
      %v787 = vpack.c.b16 %v755, %v755
      %v788 = vpack.c.b16 %v756, %v756
      %v789 = vpack.c.b16 %v757, %v757
      %v790 = vpack.c.b16 %v758, %v758
      %v791 = vpack.c.b16 %v759, %v759
      %v792 = vpack.c.b16 %v760, %v760
      %v793 = vpack.c.b16 %v761, %v761
      %v794 = vpack.c.b16 %v762, %v762
      %v795 = vpack.c.b16 %v763, %v763
      %v796 = vpack.c.b16 %v764, %v764
      %v797 = vpack.c.b16 %v765, %v765
      %v798 = vpack.c.b16 %v766, %v766
      %v799 = vpack.c.b16 %v767, %v767
      %v800 = vpack.c.b16 %v768, %v768
      %v801 = vpack.c.b16 %v769, %v769
      %v802 = vpack.c.b16 %v770, %v770
      %v803 = vpack.c.b16 %v771, %v771
      %v804 = vpack.c.b16 %v772, %v772
      %v805 = vpack.c.b16 %v773, %v773
      %v806 = vpack.c.b16 %v774, %v774
      %v807 = vpack.c.b16 %v775, %v775
      %v808 = vpack.c.b16 %v776, %v776
      %v809 = vpack.c.b16 %v777, %v777
      %v810 = vpack.c.b16 %v778, %v778
      %v811 = vpack.c.b16 %v779, %v779
      %v812 = vpack.c.b16 %v780, %v780
      %v813 = vpack.c.b16 %v781, %v781
      %v814 = vpack.c.b16 %v782, %v782
      %v815 = vpack.c.b16 %v783, %v783
      %v816 = vpack.c.b16 %v784, %v784
      %v817 = vpack.c.b16 %v785, %v785
      %s850 = scalar_lea.vmem [#allocation2], 24
      %851 = vst [vmem:[%s850] sm:$0xf] %v786
      %852 = vst [vmem:[%s850 + $0xc] sm:$0xf] %v787
      %853 = vst [vmem:[%s850 + $0x18] sm:$0xf] %v788
      %854 = vst [vmem:[%s850 + $0x24] sm:$0xf] %v789
      %855 = vst [vmem:[%s850 + $0x30] sm:$0xf] %v790
      %856 = vst [vmem:[%s850 + $0x3c] sm:$0xf] %v791
      %857 = vst [vmem:[%s850 + $0x48] sm:$0xf] %v792
      %858 = vst [vmem:[%s850 + $0x54] sm:$0xf] %v793
      %859 = vst [vmem:[%s850 + $0x60] sm:$0xf] %v794
      %860 = vst [vmem:[%s850 + $0x6c] sm:$0xf] %v795
      %861 = vst [vmem:[%s850 + $0x78] sm:$0xf] %v796
      %862 = vst [vmem:[%s850 + $0x84] sm:$0xf] %v797
      %863 = vst [vmem:[%s850 + $0x90] sm:$0xf] %v798
      %864 = vst [vmem:[%s850 + $0x9c] sm:$0xf] %v799
      %865 = vst [vmem:[%s850 + $0xa8] sm:$0xf] %v800
      %866 = vst [vmem:[%s850 + $0xb4] sm:$0xf] %v801
      %867 = vst [vmem:[%s850 + $0xc0] sm:$0xf] %v802
      %868 = vst [vmem:[%s850 + $0xcc] sm:$0xf] %v803
      %869 = vst [vmem:[%s850 + $0xd8] sm:$0xf] %v804
      %870 = vst [vmem:[%s850 + $0xe4] sm:$0xf] %v805
      %871 = vst [vmem:[%s850 + $0xf0] sm:$0xf] %v806
      %872 = vst [vmem:[%s850 + $0xfc] sm:$0xf] %v807
      %873 = vst [vmem:[%s850 + $0x108] sm:$0xf] %v808
      %874 = vst [vmem:[%s850 + $0x114] sm:$0xf] %v809
      %875 = vst [vmem:[%s850 + $0x120] sm:$0xf] %v810
      %876 = vst [vmem:[%s850 + $0x12c] sm:$0xf] %v811
      %877 = vst [vmem:[%s850 + $0x138] sm:$0xf] %v812
      %878 = vst [vmem:[%s850 + $0x144] sm:$0xf] %v813
      %879 = vst [vmem:[%s850 + $0x150] sm:$0xf] %v814
      %880 = vst [vmem:[%s850 + $0x15c] sm:$0xf] %v815
      %881 = vst [vmem:[%s850 + $0x168] sm:$0xf] %v816
      %882 = vst [vmem:[%s850 + $0x174] sm:$0xf] %v817
      %v899 = vunpack.c.l.b16 %v713
      %v900 = vunpack.c.l.b16 %v714
      %v901 = vunpack.c.l.b16 %v715
      %v902 = vunpack.c.l.b16 %v716
      %v903 = vunpack.c.l.b16 %v717
      %v904 = vunpack.c.l.b16 %v718
      %v905 = vunpack.c.l.b16 %v719
      %v906 = vunpack.c.l.b16 %v720
      %v907 = vunpack.c.l.b16 %v721
      %v908 = vunpack.c.l.b16 %v722
      %v909 = vunpack.c.l.b16 %v723
      %v910 = vunpack.c.l.b16 %v724
      %v911 = vunpack.c.l.b16 %v725
      %v912 = vunpack.c.l.b16 %v726
      %v913 = vunpack.c.l.b16 %v727
      %v914 = vunpack.c.l.b16 %v728
      %v915 = vpack.c.b16 %v899, %v899
      %v916 = vpack.c.b16 %v900, %v900
      %v917 = vpack.c.b16 %v901, %v901
      %v918 = vpack.c.b16 %v902, %v902
      %v919 = vpack.c.b16 %v903, %v903
      %v920 = vpack.c.b16 %v904, %v904
      %v921 = vpack.c.b16 %v905, %v905
      %v922 = vpack.c.b16 %v906, %v906
      %v923 = vpack.c.b16 %v907, %v907
      %v924 = vpack.c.b16 %v908, %v908
      %v925 = vpack.c.b16 %v909, %v909
      %v926 = vpack.c.b16 %v910, %v910
      %v927 = vpack.c.b16 %v911, %v911
      %v928 = vpack.c.b16 %v912, %v912
      %v929 = vpack.c.b16 %v913, %v913
      %v930 = vpack.c.b16 %v914, %v914
      %vm931 = vsmask.f32 3328
      %vm932 = vsmask.f32 7440
      %vm933 = vmor %vm931, %vm932
      %v935 = vshrl.u32 %v786, 16
      %v937 = vrot.slane %v935, 4
      %v938 = vshll.u32 %v786, 16
      %v940 = vrot.slane %v938, 5
      %v941 = vor.u32 %v937, %v940
      %v942 = vrot.slane %v941, 4
      %v944 = vshll.u32 %v787, 16
      %v946 = vrot.slane %v944, 5
      %v947 = vsel %vm933, %v942, %v946
      %v948 = vshrl.u32 %v787, 16
      %v950 = vrot.slane %v948, 4
      %v951 = vor.u32 %v950, %v946
      %v952 = vrot.slane %v951, 4
      %v954 = vshll.u32 %v915, 16
      %v956 = vrot.slane %v954, 5
      %v957 = vsel %vm933, %v952, %v956
      %v959 = vshrl.u32 %v788, 16
      %v961 = vrot.slane %v959, 4
      %v962 = vshll.u32 %v788, 16
      %v964 = vrot.slane %v962, 5
      %v965 = vor.u32 %v961, %v964
      %v966 = vrot.slane %v965, 4
      %v968 = vshll.u32 %v789, 16
      %v970 = vrot.slane %v968, 5
      %v971 = vsel %vm933, %v966, %v970
      %v972 = vshrl.u32 %v789, 16
      %v974 = vrot.slane %v972, 4
      %v975 = vor.u32 %v974, %v970
      %v976 = vrot.slane %v975, 4
      %v978 = vshll.u32 %v916, 16
      %v980 = vrot.slane %v978, 5
      %v981 = vsel %vm933, %v976, %v980
      %v983 = vshrl.u32 %v790, 16
      %v985 = vrot.slane %v983, 4
      %v986 = vshll.u32 %v790, 16
      %v988 = vrot.slane %v986, 5
      %v989 = vor.u32 %v985, %v988
      %v990 = vrot.slane %v989, 4
      %v992 = vshll.u32 %v791, 16
      %v994 = vrot.slane %v992, 5
      %v995 = vsel %vm933, %v990, %v994
      %v996 = vshrl.u32 %v791, 16
      %v998 = vrot.slane %v996, 4
      %v999 = vor.u32 %v998, %v994
      %v1000 = vrot.slane %v999, 4
      %v1002 = vshll.u32 %v917, 16
      %v1004 = vrot.slane %v1002, 5
      %v1005 = vsel %vm933, %v1000, %v1004
      %v1007 = vshrl.u32 %v792, 16
      %v1009 = vrot.slane %v1007, 4
      %v1010 = vshll.u32 %v792, 16
      %v1012 = vrot.slane %v1010, 5
      %v1013 = vor.u32 %v1009, %v1012
      %v1014 = vrot.slane %v1013, 4
      %v1016 = vshll.u32 %v793, 16
      %v1018 = vrot.slane %v1016, 5
      %v1019 = vsel %vm933, %v1014, %v1018
      %v1020 = vshrl.u32 %v793, 16
      %v1022 = vrot.slane %v1020, 4
      %v1023 = vor.u32 %v1022, %v1018
      %v1024 = vrot.slane %v1023, 4
      %v1026 = vshll.u32 %v918, 16
      %v1028 = vrot.slane %v1026, 5
      %v1029 = vsel %vm933, %v1024, %v1028
      %v1031 = vshrl.u32 %v794, 16
      %v1033 = vrot.slane %v1031, 4
      %v1034 = vshll.u32 %v794, 16
      %v1036 = vrot.slane %v1034, 5
      %v1037 = vor.u32 %v1033, %v1036
      %v1038 = vrot.slane %v1037, 4
      %v1040 = vshll.u32 %v795, 16
      %v1042 = vrot.slane %v1040, 5
      %v1043 = vsel %vm933, %v1038, %v1042
      %v1044 = vshrl.u32 %v795, 16
      %v1046 = vrot.slane %v1044, 4
      %v1047 = vor.u32 %v1046, %v1042
      %v1048 = vrot.slane %v1047, 4
      %v1050 = vshll.u32 %v919, 16
      %v1052 = vrot.slane %v1050, 5
      %v1053 = vsel %vm933, %v1048, %v1052
      %v1055 = vshrl.u32 %v796, 16
      %v1057 = vrot.slane %v1055, 4
      %v1058 = vshll.u32 %v796, 16
      %v1060 = vrot.slane %v1058, 5
      %v1061 = vor.u32 %v1057, %v1060
      %v1062 = vrot.slane %v1061, 4
      %v1064 = vshll.u32 %v797, 16
      %v1066 = vrot.slane %v1064, 5
      %v1067 = vsel %vm933, %v1062, %v1066
      %v1068 = vshrl.u32 %v797, 16
      %v1070 = vrot.slane %v1068, 4
      %v1071 = vor.u32 %v1070, %v1066
      %v1072 = vrot.slane %v1071, 4
      %v1074 = vshll.u32 %v920, 16
      %v1076 = vrot.slane %v1074, 5
      %v1077 = vsel %vm933, %v1072, %v1076
      %v1079 = vshrl.u32 %v798, 16
      %v1081 = vrot.slane %v1079, 4
      %v1082 = vshll.u32 %v798, 16
      %v1084 = vrot.slane %v1082, 5
      %v1085 = vor.u32 %v1081, %v1084
      %v1086 = vrot.slane %v1085, 4
      %v1088 = vshll.u32 %v799, 16
      %v1090 = vrot.slane %v1088, 5
      %v1091 = vsel %vm933, %v1086, %v1090
      %v1092 = vshrl.u32 %v799, 16
      %v1094 = vrot.slane %v1092, 4
      %v1095 = vor.u32 %v1094, %v1090
      %v1096 = vrot.slane %v1095, 4
      %v1098 = vshll.u32 %v921, 16
      %v1100 = vrot.slane %v1098, 5
      %v1101 = vsel %vm933, %v1096, %v1100
      %v1103 = vshrl.u32 %v800, 16
      %v1105 = vrot.slane %v1103, 4
      %v1106 = vshll.u32 %v800, 16
      %v1108 = vrot.slane %v1106, 5
      %v1109 = vor.u32 %v1105, %v1108
      %v1110 = vrot.slane %v1109, 4
      %v1112 = vshll.u32 %v801, 16
      %v1114 = vrot.slane %v1112, 5
      %v1115 = vsel %vm933, %v1110, %v1114
      %v1116 = vshrl.u32 %v801, 16
      %v1118 = vrot.slane %v1116, 4
      %v1119 = vor.u32 %v1118, %v1114
      %v1120 = vrot.slane %v1119, 4
      %v1122 = vshll.u32 %v922, 16
      %v1124 = vrot.slane %v1122, 5
      %v1125 = vsel %vm933, %v1120, %v1124
      %v1127 = vshrl.u32 %v802, 16
      %v1129 = vrot.slane %v1127, 4
      %v1130 = vshll.u32 %v802, 16
      %v1132 = vrot.slane %v1130, 5
      %v1133 = vor.u32 %v1129, %v1132
      %v1134 = vrot.slane %v1133, 4
      %v1136 = vshll.u32 %v803, 16
      %v1138 = vrot.slane %v1136, 5
      %v1139 = vsel %vm933, %v1134, %v1138
      %v1140 = vshrl.u32 %v803, 16
      %v1142 = vrot.slane %v1140, 4
      %v1143 = vor.u32 %v1142, %v1138
      %v1144 = vrot.slane %v1143, 4
      %v1146 = vshll.u32 %v923, 16
      %v1148 = vrot.slane %v1146, 5
      %v1149 = vsel %vm933, %v1144, %v1148
      %v1151 = vshrl.u32 %v804, 16
      %v1153 = vrot.slane %v1151, 4
      %v1154 = vshll.u32 %v804, 16
      %v1156 = vrot.slane %v1154, 5
      %v1157 = vor.u32 %v1153, %v1156
      %v1158 = vrot.slane %v1157, 4
      %v1160 = vshll.u32 %v805, 16
      %v1162 = vrot.slane %v1160, 5
      %v1163 = vsel %vm933, %v1158, %v1162
      %v1164 = vshrl.u32 %v805, 16
      %v1166 = vrot.slane %v1164, 4
      %v1167 = vor.u32 %v1166, %v1162
      %v1168 = vrot.slane %v1167, 4
      %v1170 = vshll.u32 %v924, 16
      %v1172 = vrot.slane %v1170, 5
      %v1173 = vsel %vm933, %v1168, %v1172
      %v1175 = vshrl.u32 %v806, 16
      %v1177 = vrot.slane %v1175, 4
      %v1178 = vshll.u32 %v806, 16
      %v1180 = vrot.slane %v1178, 5
      %v1181 = vor.u32 %v1177, %v1180
      %v1182 = vrot.slane %v1181, 4
      %v1184 = vshll.u32 %v807, 16
      %v1186 = vrot.slane %v1184, 5
      %v1187 = vsel %vm933, %v1182, %v1186
      %v1188 = vshrl.u32 %v807, 16
      %v1190 = vrot.slane %v1188, 4
      %v1191 = vor.u32 %v1190, %v1186
      %v1192 = vrot.slane %v1191, 4
      %v1194 = vshll.u32 %v925, 16
      %v1196 = vrot.slane %v1194, 5
      %v1197 = vsel %vm933, %v1192, %v1196
      %v1199 = vshrl.u32 %v808, 16
      %v1201 = vrot.slane %v1199, 4
      %v1202 = vshll.u32 %v808, 16
      %v1204 = vrot.slane %v1202, 5
      %v1205 = vor.u32 %v1201, %v1204
      %v1206 = vrot.slane %v1205, 4
      %v1208 = vshll.u32 %v809, 16
      %v1210 = vrot.slane %v1208, 5
      %v1211 = vsel %vm933, %v1206, %v1210
      %v1212 = vshrl.u32 %v809, 16
      %v1214 = vrot.slane %v1212, 4
      %v1215 = vor.u32 %v1214, %v1210
      %v1216 = vrot.slane %v1215, 4
      %v1218 = vshll.u32 %v926, 16
      %v1220 = vrot.slane %v1218, 5
      %v1221 = vsel %vm933, %v1216, %v1220
      %v1223 = vshrl.u32 %v810, 16
      %v1225 = vrot.slane %v1223, 4
      %v1226 = vshll.u32 %v810, 16
      %v1228 = vrot.slane %v1226, 5
      %v1229 = vor.u32 %v1225, %v1228
      %v1230 = vrot.slane %v1229, 4
      %v1232 = vshll.u32 %v811, 16
      %v1234 = vrot.slane %v1232, 5
      %v1235 = vsel %vm933, %v1230, %v1234
      %v1236 = vshrl.u32 %v811, 16
      %v1238 = vrot.slane %v1236, 4
      %v1239 = vor.u32 %v1238, %v1234
      %v1240 = vrot.slane %v1239, 4
      %v1242 = vshll.u32 %v927, 16
      %v1244 = vrot.slane %v1242, 5
      %v1245 = vsel %vm933, %v1240, %v1244
      %v1247 = vshrl.u32 %v812, 16
      %v1249 = vrot.slane %v1247, 4
      %v1250 = vshll.u32 %v812, 16
      %v1252 = vrot.slane %v1250, 5
      %v1253 = vor.u32 %v1249, %v1252
      %v1254 = vrot.slane %v1253, 4
      %v1256 = vshll.u32 %v813, 16
      %v1258 = vrot.slane %v1256, 5
      %v1259 = vsel %vm933, %v1254, %v1258
      %v1260 = vshrl.u32 %v813, 16
      %v1262 = vrot.slane %v1260, 4
      %v1263 = vor.u32 %v1262, %v1258
      %v1264 = vrot.slane %v1263, 4
      %v1266 = vshll.u32 %v928, 16
      %v1268 = vrot.slane %v1266, 5
      %v1269 = vsel %vm933, %v1264, %v1268
      %v1271 = vshrl.u32 %v814, 16
      %v1273 = vrot.slane %v1271, 4
      %v1274 = vshll.u32 %v814, 16
      %v1276 = vrot.slane %v1274, 5
      %v1277 = vor.u32 %v1273, %v1276
      %v1278 = vrot.slane %v1277, 4
      %v1280 = vshll.u32 %v815, 16
      %v1282 = vrot.slane %v1280, 5
      %v1283 = vsel %vm933, %v1278, %v1282
      %v1284 = vshrl.u32 %v815, 16
      %v1286 = vrot.slane %v1284, 4
      %v1287 = vor.u32 %v1286, %v1282
      %v1288 = vrot.slane %v1287, 4
      %v1290 = vshll.u32 %v929, 16
      %v1292 = vrot.slane %v1290, 5
      %v1293 = vsel %vm933, %v1288, %v1292
      %v1295 = vshrl.u32 %v816, 16
      %v1297 = vrot.slane %v1295, 4
      %v1298 = vshll.u32 %v816, 16
      %v1300 = vrot.slane %v1298, 5
      %v1301 = vor.u32 %v1297, %v1300
      %v1302 = vrot.slane %v1301, 4
      %v1304 = vshll.u32 %v817, 16
      %v1306 = vrot.slane %v1304, 5
      %v1307 = vsel %vm933, %v1302, %v1306
      %v1308 = vshrl.u32 %v817, 16
      %v1310 = vrot.slane %v1308, 4
      %v1311 = vor.u32 %v1310, %v1306
      %v1312 = vrot.slane %v1311, 4
      %v1314 = vshll.u32 %v930, 16
      %v1316 = vrot.slane %v1314, 5
      %v1317 = vsel %vm933, %v1312, %v1316
      %1350 = vst [vmem:[%s850 + $0x4] sm:$0xf] %v947
      %1351 = vst [vmem:[%s850 + $0x10] sm:$0xf] %v957
      %1352 = vst [vmem:[%s850 + $0x1c] sm:$0xf] %v971
      %1353 = vst [vmem:[%s850 + $0x28] sm:$0xf] %v981
      %1354 = vst [vmem:[%s850 + $0x34] sm:$0xf] %v995
      %1355 = vst [vmem:[%s850 + $0x40] sm:$0xf] %v1005
      %1356 = vst [vmem:[%s850 + $0x4c] sm:$0xf] %v1019
      %1357 = vst [vmem:[%s850 + $0x58] sm:$0xf] %v1029
      %1358 = vst [vmem:[%s850 + $0x64] sm:$0xf] %v1043
      %1359 = vst [vmem:[%s850 + $0x70] sm:$0xf] %v1053
      %1360 = vst [vmem:[%s850 + $0x7c] sm:$0xf] %v1067
      %1361 = vst [vmem:[%s850 + $0x88] sm:$0xf] %v1077
      %1362 = vst [vmem:[%s850 + $0x94] sm:$0xf] %v1091
      %1363 = vst [vmem:[%s850 + $0xa0] sm:$0xf] %v1101
      %1364 = vst [vmem:[%s850 + $0xac] sm:$0xf] %v1115
      %1365 = vst [vmem:[%s850 + $0xb8] sm:$0xf] %v1125
      %1366 = vst [vmem:[%s850 + $0xc4] sm:$0xf] %v1139
      %1367 = vst [vmem:[%s850 + $0xd0] sm:$0xf] %v1149
      %1368 = vst [vmem:[%s850 + $0xdc] sm:$0xf] %v1163
      %1369 = vst [vmem:[%s850 + $0xe8] sm:$0xf] %v1173
      %1370 = vst [vmem:[%s850 + $0xf4] sm:$0xf] %v1187
      %1371 = vst [vmem:[%s850 + $0x100] sm:$0xf] %v1197
      %1372 = vst [vmem:[%s850 + $0x10c] sm:$0xf] %v1211
      %1373 = vst [vmem:[%s850 + $0x118] sm:$0xf] %v1221
      %1374 = vst [vmem:[%s850 + $0x124] sm:$0xf] %v1235
      %1375 = vst [vmem:[%s850 + $0x130] sm:$0xf] %v1245
      %1376 = vst [vmem:[%s850 + $0x13c] sm:$0xf] %v1259
      %1377 = vst [vmem:[%s850 + $0x148] sm:$0xf] %v1269
      %1378 = vst [vmem:[%s850 + $0x154] sm:$0xf] %v1283
      %1379 = vst [vmem:[%s850 + $0x160] sm:$0xf] %v1293
      %1380 = vst [vmem:[%s850 + $0x16c] sm:$0xf] %v1307
      %1381 = vst [vmem:[%s850 + $0x178] sm:$0xf] %v1317
      %vm1382 = vcmask 1042432
      %vm1383 = vcmask 1046532
      %vm1384 = vmor %vm1382, %vm1383
      %v1385 = vrot.slane %v786, 5
      %v1386 = vrot.slane %v1385, 4
      %v1387 = vrot.slane %v787, 5
      %v1388 = vsel %vm1384, %v1386, %v1387
      %v1389 = vrot.slane %v1387, 4
      %v1390 = vrot.slane %v915, 5
      %v1391 = vsel %vm1384, %v1389, %v1390
      %v1392 = vrot.slane %v788, 5
      %v1393 = vrot.slane %v1392, 4
      %v1394 = vrot.slane %v789, 5
      %v1395 = vsel %vm1384, %v1393, %v1394
      %v1396 = vrot.slane %v1394, 4
      %v1397 = vrot.slane %v916, 5
      %v1398 = vsel %vm1384, %v1396, %v1397
      %v1399 = vrot.slane %v790, 5
      %v1400 = vrot.slane %v1399, 4
      %v1401 = vrot.slane %v791, 5
      %v1402 = vsel %vm1384, %v1400, %v1401
      %v1403 = vrot.slane %v1401, 4
      %v1404 = vrot.slane %v917, 5
      %v1405 = vsel %vm1384, %v1403, %v1404
      %v1406 = vrot.slane %v792, 5
      %v1407 = vrot.slane %v1406, 4
      %v1408 = vrot.slane %v793, 5
      %v1409 = vsel %vm1384, %v1407, %v1408
      %v1410 = vrot.slane %v1408, 4
      %v1411 = vrot.slane %v918, 5
      %v1412 = vsel %vm1384, %v1410, %v1411
      %v1413 = vrot.slane %v794, 5
      %v1414 = vrot.slane %v1413, 4
      %v1415 = vrot.slane %v795, 5
      %v1416 = vsel %vm1384, %v1414, %v1415
      %v1417 = vrot.slane %v1415, 4
      %v1418 = vrot.slane %v919, 5
      %v1419 = vsel %vm1384, %v1417, %v1418
      %v1420 = vrot.slane %v796, 5
      %v1421 = vrot.slane %v1420, 4
      %v1422 = vrot.slane %v797, 5
      %v1423 = vsel %vm1384, %v1421, %v1422
      %v1424 = vrot.slane %v1422, 4
      %v1425 = vrot.slane %v920, 5
      %v1426 = vsel %vm1384, %v1424, %v1425
      %v1427 = vrot.slane %v798, 5
      %v1428 = vrot.slane %v1427, 4
      %v1429 = vrot.slane %v799, 5
      %v1430 = vsel %vm1384, %v1428, %v1429
      %v1431 = vrot.slane %v1429, 4
      %v1432 = vrot.slane %v921, 5
      %v1433 = vsel %vm1384, %v1431, %v1432
      %v1434 = vrot.slane %v800, 5
      %v1435 = vrot.slane %v1434, 4
      %v1436 = vrot.slane %v801, 5
      %v1437 = vsel %vm1384, %v1435, %v1436
      %v1438 = vrot.slane %v1436, 4
      %v1439 = vrot.slane %v922, 5
      %v1440 = vsel %vm1384, %v1438, %v1439
      %v1441 = vrot.slane %v802, 5
      %v1442 = vrot.slane %v1441, 4
      %v1443 = vrot.slane %v803, 5
      %v1444 = vsel %vm1384, %v1442, %v1443
      %v1445 = vrot.slane %v1443, 4
      %v1446 = vrot.slane %v923, 5
      %v1447 = vsel %vm1384, %v1445, %v1446
      %v1448 = vrot.slane %v804, 5
      %v1449 = vrot.slane %v1448, 4
      %v1450 = vrot.slane %v805, 5
      %v1451 = vsel %vm1384, %v1449, %v1450
      %v1452 = vrot.slane %v1450, 4
      %v1453 = vrot.slane %v924, 5
      %v1454 = vsel %vm1384, %v1452, %v1453
      %v1455 = vrot.slane %v806, 5
      %v1456 = vrot.slane %v1455, 4
      %v1457 = vrot.slane %v807, 5
      %v1458 = vsel %vm1384, %v1456, %v1457
      %v1459 = vrot.slane %v1457, 4
      %v1460 = vrot.slane %v925, 5
      %v1461 = vsel %vm1384, %v1459, %v1460
      %v1462 = vrot.slane %v808, 5
      %v1463 = vrot.slane %v1462, 4
      %v1464 = vrot.slane %v809, 5
      %v1465 = vsel %vm1384, %v1463, %v1464
      %v1466 = vrot.slane %v1464, 4
      %v1467 = vrot.slane %v926, 5
      %v1468 = vsel %vm1384, %v1466, %v1467
      %v1469 = vrot.slane %v810, 5
      %v1470 = vrot.slane %v1469, 4
      %v1471 = vrot.slane %v811, 5
      %v1472 = vsel %vm1384, %v1470, %v1471
      %v1473 = vrot.slane %v1471, 4
      %v1474 = vrot.slane %v927, 5
      %v1475 = vsel %vm1384, %v1473, %v1474
      %v1476 = vrot.slane %v812, 5
      %v1477 = vrot.slane %v1476, 4
      %v1478 = vrot.slane %v813, 5
      %v1479 = vsel %vm1384, %v1477, %v1478
      %v1480 = vrot.slane %v1478, 4
      %v1481 = vrot.slane %v928, 5
      %v1482 = vsel %vm1384, %v1480, %v1481
      %v1483 = vrot.slane %v814, 5
      %v1484 = vrot.slane %v1483, 4
      %v1485 = vrot.slane %v815, 5
      %v1486 = vsel %vm1384, %v1484, %v1485
      %v1487 = vrot.slane %v1485, 4
      %v1488 = vrot.slane %v929, 5
      %v1489 = vsel %vm1384, %v1487, %v1488
      %v1490 = vrot.slane %v816, 5
      %v1491 = vrot.slane %v1490, 4
      %v1492 = vrot.slane %v817, 5
      %v1493 = vsel %vm1384, %v1491, %v1492
      %v1494 = vrot.slane %v1492, 4
      %v1495 = vrot.slane %v930, 5
      %v1496 = vsel %vm1384, %v1494, %v1495
      %1529 = vst [vmem:[%s850 + $0x8] sm:$0xf] %v1388
      %1530 = vst [vmem:[%s850 + $0x14] sm:$0xf] %v1391
      %1531 = vst [vmem:[%s850 + $0x20] sm:$0xf] %v1395
      %1532 = vst [vmem:[%s850 + $0x2c] sm:$0xf] %v1398
      %1533 = vst [vmem:[%s850 + $0x38] sm:$0xf] %v1402
      %1534 = vst [vmem:[%s850 + $0x44] sm:$0xf] %v1405
      %1535 = vst [vmem:[%s850 + $0x50] sm:$0xf] %v1409
      %1536 = vst [vmem:[%s850 + $0x5c] sm:$0xf] %v1412
      %1537 = vst [vmem:[%s850 + $0x68] sm:$0xf] %v1416
      %1538 = vst [vmem:[%s850 + $0x74] sm:$0xf] %v1419
      %1539 = vst [vmem:[%s850 + $0x80] sm:$0xf] %v1423
      %1540 = vst [vmem:[%s850 + $0x8c] sm:$0xf] %v1426
      %1541 = vst [vmem:[%s850 + $0x98] sm:$0xf] %v1430
      %1542 = vst [vmem:[%s850 + $0xa4] sm:$0xf] %v1433
      %1543 = vst [vmem:[%s850 + $0xb0] sm:$0xf] %v1437
      %1544 = vst [vmem:[%s850 + $0xbc] sm:$0xf] %v1440
      %1545 = vst [vmem:[%s850 + $0xc8] sm:$0xf] %v1444
      %1546 = vst [vmem:[%s850 + $0xd4] sm:$0xf] %v1447
      %1547 = vst [vmem:[%s850 + $0xe0] sm:$0xf] %v1451
      %1548 = vst [vmem:[%s850 + $0xec] sm:$0xf] %v1454
      %1549 = vst [vmem:[%s850 + $0xf8] sm:$0xf] %v1458
      %1550 = vst [vmem:[%s850 + $0x104] sm:$0xf] %v1461
      %1551 = vst [vmem:[%s850 + $0x110] sm:$0xf] %v1465
      %1552 = vst [vmem:[%s850 + $0x11c] sm:$0xf] %v1468
      %1553 = vst [vmem:[%s850 + $0x128] sm:$0xf] %v1472
      %1554 = vst [vmem:[%s850 + $0x134] sm:$0xf] %v1475
      %1555 = vst [vmem:[%s850 + $0x140] sm:$0xf] %v1479
      %1556 = vst [vmem:[%s850 + $0x14c] sm:$0xf] %v1482
      %1557 = vst [vmem:[%s850 + $0x158] sm:$0xf] %v1486
      %1558 = vst [vmem:[%s850 + $0x164] sm:$0xf] %v1489
      %1559 = vst [vmem:[%s850 + $0x170] sm:$0xf] %v1493
      %1560 = vst [vmem:[%s850 + $0x17c] sm:$0xf] %v1496
      %v1561 = vld [vmem:[#allocation2] sm:$0xff]
      %v1562 = vld [vmem:[#allocation2 + $0x8] sm:$0xf]
      %v1563 = vld [vmem:[#allocation2 + $0xc] sm:$0xff]
      %v1564 = vld [vmem:[#allocation2 + $0x14] sm:$0xf]
      %v1565 = vld [vmem:[#allocation2 + $0x18] sm:$0xff]
      %v1566 = vld [vmem:[#allocation2 + $0x20] sm:$0xf]
      %v1567 = vld [vmem:[#allocation2 + $0x24] sm:$0xff]
      %v1568 = vld [vmem:[#allocation2 + $0x2c] sm:$0xf]
      %v1569 = vld [vmem:[#allocation2 + $0x30] sm:$0xff]
      %v1570 = vld [vmem:[#allocation2 + $0x38] sm:$0xf]
      %v1571 = vld [vmem:[#allocation2 + $0x3c] sm:$0xff]
      %v1572 = vld [vmem:[#allocation2 + $0x44] sm:$0xf]
      %v1573 = vld [vmem:[#allocation2 + $0x48] sm:$0xff]
      %v1574 = vld [vmem:[#allocation2 + $0x50] sm:$0xf]
      %v1575 = vld [vmem:[#allocation2 + $0x54] sm:$0xff]
      %v1576 = vld [vmem:[#allocation2 + $0x5c] sm:$0xf]
      %v1577 = vld [vmem:[#allocation2 + $0x60] sm:$0xff]
      %v1578 = vld [vmem:[#allocation2 + $0x68] sm:$0xf]
      %v1579 = vld [vmem:[#allocation2 + $0x6c] sm:$0xff]
      %v1580 = vld [vmem:[#allocation2 + $0x74] sm:$0xf]
      %v1581 = vld [vmem:[#allocation2 + $0x78] sm:$0xff]
      %v1582 = vld [vmem:[#allocation2 + $0x80] sm:$0xf]
      %v1583 = vld [vmem:[#allocation2 + $0x84] sm:$0xff]
      %v1584 = vld [vmem:[#allocation2 + $0x8c] sm:$0xf]
      %v1585 = vld [vmem:[#allocation2 + $0x90] sm:$0xff]
      %v1586 = vld [vmem:[#allocation2 + $0x98] sm:$0xf]
      %v1587 = vld [vmem:[#allocation2 + $0x9c] sm:$0xff]
      %v1588 = vld [vmem:[#allocation2 + $0xa4] sm:$0xf]
      %v1589 = vld [vmem:[#allocation2 + $0xa8] sm:$0xff]
      %v1590 = vld [vmem:[#allocation2 + $0xb0] sm:$0xf]
      %v1591 = vld [vmem:[#allocation2 + $0xb4] sm:$0xff]
      %v1592 = vld [vmem:[#allocation2 + $0xbc] sm:$0xf]
      %v1593 = vld [vmem:[#allocation2 + $0xc0] sm:$0xff]
      %v1594 = vld [vmem:[#allocation2 + $0xc8] sm:$0xf]
      %v1595 = vld [vmem:[#allocation2 + $0xcc] sm:$0xff]
      %v1596 = vld [vmem:[#allocation2 + $0xd4] sm:$0xf]
      %v1597 = vld [vmem:[#allocation2 + $0xd8] sm:$0xff]
      %v1598 = vld [vmem:[#allocation2 + $0xe0] sm:$0xf]
      %v1599 = vld [vmem:[#allocation2 + $0xe4] sm:$0xff]
      %v1600 = vld [vmem:[#allocation2 + $0xec] sm:$0xf]
      %v1601 = vld [vmem:[#allocation2 + $0xf0] sm:$0xff]
      %v1602 = vld [vmem:[#allocation2 + $0xf8] sm:$0xf]
      %v1603 = vld [vmem:[#allocation2 + $0xfc] sm:$0xff]
      %v1604 = vld [vmem:[#allocation2 + $0x104] sm:$0xf]
      %v1605 = vld [vmem:[#allocation2 + $0x108] sm:$0xff]
      %v1606 = vld [vmem:[#allocation2 + $0x110] sm:$0xf]
      %v1607 = vld [vmem:[#allocation2 + $0x114] sm:$0xff]
      %v1608 = vld [vmem:[#allocation2 + $0x11c] sm:$0xf]
      %v1609 = vld [vmem:[#allocation2 + $0x120] sm:$0xff]
      %v1610 = vld [vmem:[#allocation2 + $0x128] sm:$0xf]
      %v1611 = vld [vmem:[#allocation2 + $0x12c] sm:$0xff]
      %v1612 = vld [vmem:[#allocation2 + $0x134] sm:$0xf]
      %v1613 = vld [vmem:[#allocation2 + $0x138] sm:$0xff]
      %v1614 = vld [vmem:[#allocation2 + $0x140] sm:$0xf]
      %v1615 = vld [vmem:[#allocation2 + $0x144] sm:$0xff]
      %v1616 = vld [vmem:[#allocation2 + $0x14c] sm:$0xf]
      %v1617 = vld [vmem:[#allocation2 + $0x150] sm:$0xff]
      %v1618 = vld [vmem:[#allocation2 + $0x158] sm:$0xf]
      %v1619 = vld [vmem:[#allocation2 + $0x15c] sm:$0xff]
      %v1620 = vld [vmem:[#allocation2 + $0x164] sm:$0xf]
      %v1621 = vld [vmem:[#allocation2 + $0x168] sm:$0xff]
      %v1622 = vld [vmem:[#allocation2 + $0x170] sm:$0xf]
      %v1623 = vld [vmem:[#allocation2 + $0x174] sm:$0xff]
      %v1624 = vld [vmem:[#allocation2 + $0x17c] sm:$0xf]
      %v1625 = vld [vmem:[%s3] sm:$0xf]
      %v1626 = vld [vmem:[%s3 + $0x4] sm:$0xf]
      %v1627 = vld [vmem:[%s3 + $0x8] sm:$0xf]
      %v1628 = vld [vmem:[%s3 + $0xc] sm:$0xf]
      %v1629 = vld [vmem:[%s3 + $0x10] sm:$0xf]
      %v1630 = vld [vmem:[%s3 + $0x14] sm:$0xf]
      %v1631 = vld [vmem:[%s3 + $0x18] sm:$0xf]
      %v1632 = vld [vmem:[%s3 + $0x1c] sm:$0xf]
      %v1633 = vld [vmem:[%s3 + $0x20] sm:$0xf]
      %v1634 = vld [vmem:[%s3 + $0x24] sm:$0xf]
      %v1635 = vld [vmem:[%s3 + $0x28] sm:$0xf]
      %v1636 = vld [vmem:[%s3 + $0x2c] sm:$0xf]
      %v1637 = vld [vmem:[%s3 + $0x30] sm:$0xf]
      %v1638 = vld [vmem:[%s3 + $0x34] sm:$0xf]
      %v1639 = vld [vmem:[%s3 + $0x38] sm:$0xf]
      %v1640 = vld [vmem:[%s3 + $0x3c] sm:$0xf]
      %v1641 = vld [vmem:[%s3 + $0x40] sm:$0xf]
      %v1642 = vld [vmem:[%s3 + $0x44] sm:$0xf]
      %v1643 = vld [vmem:[%s3 + $0x48] sm:$0xf]
      %v1644 = vld [vmem:[%s3 + $0x4c] sm:$0xf]
      %v1645 = vld [vmem:[%s3 + $0x50] sm:$0xf]
      %v1646 = vld [vmem:[%s3 + $0x54] sm:$0xf]
      %v1647 = vld [vmem:[%s3 + $0x58] sm:$0xf]
      %v1648 = vld [vmem:[%s3 + $0x5c] sm:$0xf]
      %v1649 = vld [vmem:[%s3 + $0x60] sm:$0xf]
      %v1650 = vld [vmem:[%s3 + $0x64] sm:$0xf]
      %v1651 = vld [vmem:[%s3 + $0x68] sm:$0xf]
      %v1652 = vld [vmem:[%s3 + $0x6c] sm:$0xf]
      %v1653 = vld [vmem:[%s3 + $0x70] sm:$0xf]
      %v1654 = vld [vmem:[%s3 + $0x74] sm:$0xf]
      %v1655 = vld [vmem:[%s3 + $0x78] sm:$0xf]
      %v1656 = vld [vmem:[%s3 + $0x7c] sm:$0xf]
      %v1657 = vld [vmem:[%s3 + $0x80] sm:$0xf]
      %v1658 = vld [vmem:[%s3 + $0x84] sm:$0xf]
      %v1659 = vld [vmem:[%s3 + $0x88] sm:$0xf]
      %v1660 = vld [vmem:[%s3 + $0x8c] sm:$0xf]
      %v1661 = vld [vmem:[%s3 + $0x90] sm:$0xf]
      %v1662 = vld [vmem:[%s3 + $0x94] sm:$0xf]
      %v1663 = vld [vmem:[%s3 + $0x98] sm:$0xf]
      %v1664 = vld [vmem:[%s3 + $0x9c] sm:$0xf]
      %v1665 = vld [vmem:[%s3 + $0xa0] sm:$0xf]
      %v1666 = vld [vmem:[%s3 + $0xa4] sm:$0xf]
      %v1667 = vld [vmem:[%s3 + $0xa8] sm:$0xf]
      %v1668 = vld [vmem:[%s3 + $0xac] sm:$0xf]
      %v1669 = vld [vmem:[%s3 + $0xb0] sm:$0xf]
      %v1670 = vld [vmem:[%s3 + $0xb4] sm:$0xf]
      %v1671 = vld [vmem:[%s3 + $0xb8] sm:$0xf]
      %v1672 = vld [vmem:[%s3 + $0xbc] sm:$0xf]
      %v1673 = vld [vmem:[%s850] sm:$0xff]
      %v1674 = vld [vmem:[%s850 + $0x8] sm:$0xf]
      %v1675 = vld [vmem:[%s850 + $0xc] sm:$0xff]
      %v1676 = vld [vmem:[%s850 + $0x14] sm:$0xf]
      %v1677 = vld [vmem:[%s850 + $0x18] sm:$0xff]
      %v1678 = vld [vmem:[%s850 + $0x20] sm:$0xf]
      %v1679 = vld [vmem:[%s850 + $0x24] sm:$0xff]
      %v1680 = vld [vmem:[%s850 + $0x2c] sm:$0xf]
      %v1681 = vld [vmem:[%s850 + $0x30] sm:$0xff]
      %v1682 = vld [vmem:[%s850 + $0x38] sm:$0xf]
      %v1683 = vld [vmem:[%s850 + $0x3c] sm:$0xff]
      %v1684 = vld [vmem:[%s850 + $0x44] sm:$0xf]
      %v1685 = vld [vmem:[%s850 + $0x48] sm:$0xff]
      %v1686 = vld [vmem:[%s850 + $0x50] sm:$0xf]
      %v1687 = vld [vmem:[%s850 + $0x54] sm:$0xff]
      %v1688 = vld [vmem:[%s850 + $0x5c] sm:$0xf]
      %v1689 = vld [vmem:[%s850 + $0x60] sm:$0xff]
      %v1690 = vld [vmem:[%s850 + $0x68] sm:$0xf]
      %v1691 = vld [vmem:[%s850 + $0x6c] sm:$0xff]
      %v1692 = vld [vmem:[%s850 + $0x74] sm:$0xf]
      %v1693 = vld [vmem:[%s850 + $0x78] sm:$0xff]
      %v1694 = vld [vmem:[%s850 + $0x80] sm:$0xf]
      %v1695 = vld [vmem:[%s850 + $0x84] sm:$0xff]
      %v1696 = vld [vmem:[%s850 + $0x8c] sm:$0xf]
      %v1697 = vld [vmem:[%s850 + $0x90] sm:$0xff]
      %v1698 = vld [vmem:[%s850 + $0x98] sm:$0xf]
      %v1699 = vld [vmem:[%s850 + $0x9c] sm:$0xff]
      %v1700 = vld [vmem:[%s850 + $0xa4] sm:$0xf]
      %v1701 = vld [vmem:[%s850 + $0xa8] sm:$0xff]
      %v1702 = vld [vmem:[%s850 + $0xb0] sm:$0xf]
      %v1703 = vld [vmem:[%s850 + $0xb4] sm:$0xff]
      %v1704 = vld [vmem:[%s850 + $0xbc] sm:$0xf]
      %v1705 = vld [vmem:[%s850 + $0xc0] sm:$0xff]
      %v1706 = vld [vmem:[%s850 + $0xc8] sm:$0xf]
      %v1707 = vld [vmem:[%s850 + $0xcc] sm:$0xff]
      %v1708 = vld [vmem:[%s850 + $0xd4] sm:$0xf]
      %v1709 = vld [vmem:[%s850 + $0xd8] sm:$0xff]
      %v1710 = vld [vmem:[%s850 + $0xe0] sm:$0xf]
      %v1711 = vld [vmem:[%s850 + $0xe4] sm:$0xff]
      %v1712 = vld [vmem:[%s850 + $0xec] sm:$0xf]
      %v1713 = vld [vmem:[%s850 + $0xf0] sm:$0xff]
      %v1714 = vld [vmem:[%s850 + $0xf8] sm:$0xf]
      %v1715 = vld [vmem:[%s850 + $0xfc] sm:$0xff]
      %v1716 = vld [vmem:[%s850 + $0x104] sm:$0xf]
      %v1717 = vld [vmem:[%s850 + $0x108] sm:$0xff]
      %v1718 = vld [vmem:[%s850 + $0x110] sm:$0xf]
      %v1719 = vld [vmem:[%s850 + $0x114] sm:$0xff]
      %v1720 = vld [vmem:[%s850 + $0x11c] sm:$0xf]
      %v1721 = vld [vmem:[%s850 + $0x120] sm:$0xff]
      %v1722 = vld [vmem:[%s850 + $0x128] sm:$0xf]
      %v1723 = vld [vmem:[%s850 + $0x12c] sm:$0xff]
      %v1724 = vld [vmem:[%s850 + $0x134] sm:$0xf]
      %v1725 = vld [vmem:[%s850 + $0x138] sm:$0xff]
      %v1726 = vld [vmem:[%s850 + $0x140] sm:$0xf]
      %v1727 = vld [vmem:[%s850 + $0x144] sm:$0xff]
      %v1728 = vld [vmem:[%s850 + $0x14c] sm:$0xf]
      %v1729 = vld [vmem:[%s850 + $0x150] sm:$0xff]
      %v1730 = vld [vmem:[%s850 + $0x158] sm:$0xf]
      %v1731 = vld [vmem:[%s850 + $0x15c] sm:$0xff]
      %v1732 = vld [vmem:[%s850 + $0x164] sm:$0xf]
      %v1733 = vld [vmem:[%s850 + $0x168] sm:$0xff]
      %v1734 = vld [vmem:[%s850 + $0x170] sm:$0xf]
      %v1735 = vld [vmem:[%s850 + $0x174] sm:$0xff]
      %v1736 = vld [vmem:[%s850 + $0x17c] sm:$0xf]
      %s1737 = scalar_lea.vmem %s3, 192
      %v1738 = vld [vmem:[%s1737] sm:$0xf]
      %v1739 = vld [vmem:[%s1737 + $0x4] sm:$0xf]
      %v1740 = vld [vmem:[%s1737 + $0x8] sm:$0xf]
      %v1741 = vld [vmem:[%s1737 + $0xc] sm:$0xf]
      %v1742 = vld [vmem:[%s1737 + $0x10] sm:$0xf]
      %v1743 = vld [vmem:[%s1737 + $0x14] sm:$0xf]
      %v1744 = vld [vmem:[%s1737 + $0x18] sm:$0xf]
      %v1745 = vld [vmem:[%s1737 + $0x1c] sm:$0xf]
      %v1746 = vld [vmem:[%s1737 + $0x20] sm:$0xf]
      %v1747 = vld [vmem:[%s1737 + $0x24] sm:$0xf]
      %v1748 = vld [vmem:[%s1737 + $0x28] sm:$0xf]
      %v1749 = vld [vmem:[%s1737 + $0x2c] sm:$0xf]
      %v1750 = vld [vmem:[%s1737 + $0x30] sm:$0xf]
      %v1751 = vld [vmem:[%s1737 + $0x34] sm:$0xf]
      %v1752 = vld [vmem:[%s1737 + $0x38] sm:$0xf]
      %v1753 = vld [vmem:[%s1737 + $0x3c] sm:$0xf]
      %v1754 = vld [vmem:[%s1737 + $0x40] sm:$0xf]
      %v1755 = vld [vmem:[%s1737 + $0x44] sm:$0xf]
      %v1756 = vld [vmem:[%s1737 + $0x48] sm:$0xf]
      %v1757 = vld [vmem:[%s1737 + $0x4c] sm:$0xf]
      %v1758 = vld [vmem:[%s1737 + $0x50] sm:$0xf]
      %v1759 = vld [vmem:[%s1737 + $0x54] sm:$0xf]
      %v1760 = vld [vmem:[%s1737 + $0x58] sm:$0xf]
      %v1761 = vld [vmem:[%s1737 + $0x5c] sm:$0xf]
      %v1762 = vld [vmem:[%s1737 + $0x60] sm:$0xf]
      %v1763 = vld [vmem:[%s1737 + $0x64] sm:$0xf]
      %v1764 = vld [vmem:[%s1737 + $0x68] sm:$0xf]
      %v1765 = vld [vmem:[%s1737 + $0x6c] sm:$0xf]
      %v1766 = vld [vmem:[%s1737 + $0x70] sm:$0xf]
      %v1767 = vld [vmem:[%s1737 + $0x74] sm:$0xf]
      %v1768 = vld [vmem:[%s1737 + $0x78] sm:$0xf]
      %v1769 = vld [vmem:[%s1737 + $0x7c] sm:$0xf]
      %v1770 = vld [vmem:[%s1737 + $0x80] sm:$0xf]
      %v1771 = vld [vmem:[%s1737 + $0x84] sm:$0xf]
      %v1772 = vld [vmem:[%s1737 + $0x88] sm:$0xf]
      %v1773 = vld [vmem:[%s1737 + $0x8c] sm:$0xf]
      %v1774 = vld [vmem:[%s1737 + $0x90] sm:$0xf]
      %v1775 = vld [vmem:[%s1737 + $0x94] sm:$0xf]
      %v1776 = vld [vmem:[%s1737 + $0x98] sm:$0xf]
      %v1777 = vld [vmem:[%s1737 + $0x9c] sm:$0xf]
      %v1778 = vld [vmem:[%s1737 + $0xa0] sm:$0xf]
      %v1779 = vld [vmem:[%s1737 + $0xa4] sm:$0xf]
      %v1780 = vld [vmem:[%s1737 + $0xa8] sm:$0xf]
      %v1781 = vld [vmem:[%s1737 + $0xac] sm:$0xf]
      %v1782 = vld [vmem:[%s1737 + $0xb0] sm:$0xf]
      %v1783 = vld [vmem:[%s1737 + $0xb4] sm:$0xf]
      %v1784 = vld [vmem:[%s1737 + $0xb8] sm:$0xf]
      %v1785 = vld [vmem:[%s1737 + $0xbc] sm:$0xf]
      %v1850 = vunpack.c.l.b16 %v1673
      %v1851 = vunpack.c.h.b16 %v1673
      %v1852 = vunpack.c.l.b16 %v1674
      %v1853 = vunpack.c.l.b16 %v1675
      %v1854 = vunpack.c.h.b16 %v1675
      %v1855 = vunpack.c.l.b16 %v1676
      %v1856 = vunpack.c.l.b16 %v1677
      %v1857 = vunpack.c.h.b16 %v1677
      %v1858 = vunpack.c.l.b16 %v1678
      %v1859 = vunpack.c.l.b16 %v1679
      %v1860 = vunpack.c.h.b16 %v1679
      %v1861 = vunpack.c.l.b16 %v1680
      %v1862 = vunpack.c.l.b16 %v1681
      %v1863 = vunpack.c.h.b16 %v1681
      %v1864 = vunpack.c.l.b16 %v1682
      %v1865 = vunpack.c.l.b16 %v1683
      %v1866 = vunpack.c.h.b16 %v1683
      %v1867 = vunpack.c.l.b16 %v1684
      %v1868 = vunpack.c.l.b16 %v1685
      %v1869 = vunpack.c.h.b16 %v1685
      %v1870 = vunpack.c.l.b16 %v1686
      %v1871 = vunpack.c.l.b16 %v1687
      %v1872 = vunpack.c.h.b16 %v1687
      %v1873 = vunpack.c.l.b16 %v1688
      %v1874 = vunpack.c.l.b16 %v1689
      %v1875 = vunpack.c.h.b16 %v1689
      %v1876 = vunpack.c.l.b16 %v1690
      %v1877 = vunpack.c.l.b16 %v1691
      %v1878 = vunpack.c.h.b16 %v1691
      %v1879 = vunpack.c.l.b16 %v1692
      %v1880 = vunpack.c.l.b16 %v1693
      %v1881 = vunpack.c.h.b16 %v1693
      %v1882 = vunpack.c.l.b16 %v1694
      %v1883 = vunpack.c.l.b16 %v1695
      %v1884 = vunpack.c.h.b16 %v1695
      %v1885 = vunpack.c.l.b16 %v1696
      %v1886 = vunpack.c.l.b16 %v1697
      %v1887 = vunpack.c.h.b16 %v1697
      %v1888 = vunpack.c.l.b16 %v1698
      %v1889 = vunpack.c.l.b16 %v1699
      %v1890 = vunpack.c.h.b16 %v1699
      %v1891 = vunpack.c.l.b16 %v1700
      %v1892 = vunpack.c.l.b16 %v1701
      %v1893 = vunpack.c.h.b16 %v1701
      %v1894 = vunpack.c.l.b16 %v1702
      %v1895 = vunpack.c.l.b16 %v1703
      %v1896 = vunpack.c.h.b16 %v1703
      %v1897 = vunpack.c.l.b16 %v1704
      %v1898 = vunpack.c.l.b16 %v1705
      %v1899 = vunpack.c.h.b16 %v1705
      %v1900 = vunpack.c.l.b16 %v1706
      %v1901 = vunpack.c.l.b16 %v1707
      %v1902 = vunpack.c.h.b16 %v1707
      %v1903 = vunpack.c.l.b16 %v1708
      %v1904 = vunpack.c.l.b16 %v1709
      %v1905 = vunpack.c.h.b16 %v1709
      %v1906 = vunpack.c.l.b16 %v1710
      %v1907 = vunpack.c.l.b16 %v1711
      %v1908 = vunpack.c.h.b16 %v1711
      %v1909 = vunpack.c.l.b16 %v1712
      %v1910 = vunpack.c.l.b16 %v1713
      %v1911 = vunpack.c.h.b16 %v1713
      %v1912 = vunpack.c.l.b16 %v1714
      %v1913 = vunpack.c.l.b16 %v1715
      %v1914 = vunpack.c.h.b16 %v1715
      %v1915 = vunpack.c.l.b16 %v1716
      %v1916 = vunpack.c.l.b16 %v1717
      %v1917 = vunpack.c.h.b16 %v1717
      %v1918 = vunpack.c.l.b16 %v1718
      %v1919 = vunpack.c.l.b16 %v1719
      %v1920 = vunpack.c.h.b16 %v1719
      %v1921 = vunpack.c.l.b16 %v1720
      %v1922 = vunpack.c.l.b16 %v1721
      %v1923 = vunpack.c.h.b16 %v1721
      %v1924 = vunpack.c.l.b16 %v1722
      %v1925 = vunpack.c.l.b16 %v1723
      %v1926 = vunpack.c.h.b16 %v1723
      %v1927 = vunpack.c.l.b16 %v1724
      %v1928 = vunpack.c.l.b16 %v1725
      %v1929 = vunpack.c.h.b16 %v1725
      %v1930 = vunpack.c.l.b16 %v1726
      %v1931 = vunpack.c.l.b16 %v1727
      %v1932 = vunpack.c.h.b16 %v1727
      %v1933 = vunpack.c.l.b16 %v1728
      %v1934 = vunpack.c.l.b16 %v1729
      %v1935 = vunpack.c.h.b16 %v1729
      %v1936 = vunpack.c.l.b16 %v1730
      %v1937 = vunpack.c.l.b16 %v1731
      %v1938 = vunpack.c.h.b16 %v1731
      %v1939 = vunpack.c.l.b16 %v1732
      %v1940 = vunpack.c.l.b16 %v1733
      %v1941 = vunpack.c.h.b16 %v1733
      %v1942 = vunpack.c.l.b16 %v1734
      %v1943 = vunpack.c.l.b16 %v1735
      %v1944 = vunpack.c.h.b16 %v1735
      %v1945 = vunpack.c.l.b16 %v1736
      %v1946 = vpack.c.b16 %v1853, %v1850
      %v1947 = vpack.c.b16 %v1854, %v1851
      %v1948 = vpack.c.b16 %v1855, %v1852
      %v1949 = vpack.c.b16 %v1859, %v1856
      %v1950 = vpack.c.b16 %v1860, %v1857
      %v1951 = vpack.c.b16 %v1861, %v1858
      %v1952 = vpack.c.b16 %v1865, %v1862
      %v1953 = vpack.c.b16 %v1866, %v1863
      %v1954 = vpack.c.b16 %v1867, %v1864
      %v1955 = vpack.c.b16 %v1871, %v1868
      %v1956 = vpack.c.b16 %v1872, %v1869
      %v1957 = vpack.c.b16 %v1873, %v1870
      %v1958 = vpack.c.b16 %v1877, %v1874
      %v1959 = vpack.c.b16 %v1878, %v1875
      %v1960 = vpack.c.b16 %v1879, %v1876
      %v1961 = vpack.c.b16 %v1883, %v1880
      %v1962 = vpack.c.b16 %v1884, %v1881
      %v1963 = vpack.c.b16 %v1885, %v1882
      %v1964 = vpack.c.b16 %v1889, %v1886
      %v1965 = vpack.c.b16 %v1890, %v1887
      %v1966 = vpack.c.b16 %v1891, %v1888
      %v1967 = vpack.c.b16 %v1895, %v1892
      %v1968 = vpack.c.b16 %v1896, %v1893
      %v1969 = vpack.c.b16 %v1897, %v1894
      %v1970 = vpack.c.b16 %v1901, %v1898
      %v1971 = vpack.c.b16 %v1902, %v1899
      %v1972 = vpack.c.b16 %v1903, %v1900
      %v1973 = vpack.c.b16 %v1907, %v1904
      %v1974 = vpack.c.b16 %v1908, %v1905
      %v1975 = vpack.c.b16 %v1909, %v1906
      %v1976 = vpack.c.b16 %v1913, %v1910
      %v1977 = vpack.c.b16 %v1914, %v1911
      %v1978 = vpack.c.b16 %v1915, %v1912
      %v1979 = vpack.c.b16 %v1919, %v1916
      %v1980 = vpack.c.b16 %v1920, %v1917
      %v1981 = vpack.c.b16 %v1921, %v1918
      %v1982 = vpack.c.b16 %v1925, %v1922
      %v1983 = vpack.c.b16 %v1926, %v1923
      %v1984 = vpack.c.b16 %v1927, %v1924
      %v1985 = vpack.c.b16 %v1931, %v1928
      %v1986 = vpack.c.b16 %v1932, %v1929
      %v1987 = vpack.c.b16 %v1933, %v1930
      %v1988 = vpack.c.b16 %v1937, %v1934
      %v1989 = vpack.c.b16 %v1938, %v1935
      %v1990 = vpack.c.b16 %v1939, %v1936
      %v1991 = vpack.c.b16 %v1943, %v1940
      %v1992 = vpack.c.b16 %v1944, %v1941
      %v1993 = vpack.c.b16 %v1945, %v1942
      %v2090 = vunpack.c.l.b16 %v1738
      %v2091 = vunpack.c.l.b16 %v1739
      %v2092 = vunpack.c.l.b16 %v1740
      %v2093 = vunpack.c.l.b16 %v1741
      %v2094 = vunpack.c.l.b16 %v1742
      %v2095 = vunpack.c.l.b16 %v1743
      %v2096 = vunpack.c.l.b16 %v1744
      %v2097 = vunpack.c.l.b16 %v1745
      %v2098 = vunpack.c.l.b16 %v1746
      %v2099 = vunpack.c.l.b16 %v1747
      %v2100 = vunpack.c.l.b16 %v1748
      %v2101 = vunpack.c.l.b16 %v1749
      %v2102 = vunpack.c.l.b16 %v1750
      %v2103 = vunpack.c.l.b16 %v1751
      %v2104 = vunpack.c.l.b16 %v1752
      %v2105 = vunpack.c.l.b16 %v1753
      %v2106 = vunpack.c.l.b16 %v1754
      %v2107 = vunpack.c.l.b16 %v1755
      %v2108 = vunpack.c.l.b16 %v1756
      %v2109 = vunpack.c.l.b16 %v1757
      %v2110 = vunpack.c.l.b16 %v1758
      %v2111 = vunpack.c.l.b16 %v1759
      %v2112 = vunpack.c.l.b16 %v1760
      %v2113 = vunpack.c.l.b16 %v1761
      %v2114 = vunpack.c.l.b16 %v1762
      %v2115 = vunpack.c.l.b16 %v1763
      %v2116 = vunpack.c.l.b16 %v1764
      %v2117 = vunpack.c.l.b16 %v1765
      %v2118 = vunpack.c.l.b16 %v1766
      %v2119 = vunpack.c.l.b16 %v1767
      %v2120 = vunpack.c.l.b16 %v1768
      %v2121 = vunpack.c.l.b16 %v1769
      %v2122 = vunpack.c.l.b16 %v1770
      %v2123 = vunpack.c.l.b16 %v1771
      %v2124 = vunpack.c.l.b16 %v1772
      %v2125 = vunpack.c.l.b16 %v1773
      %v2126 = vunpack.c.l.b16 %v1774
      %v2127 = vunpack.c.l.b16 %v1775
      %v2128 = vunpack.c.l.b16 %v1776
      %v2129 = vunpack.c.l.b16 %v1777
      %v2130 = vunpack.c.l.b16 %v1778
      %v2131 = vunpack.c.l.b16 %v1779
      %v2132 = vunpack.c.l.b16 %v1780
      %v2133 = vunpack.c.l.b16 %v1781
      %v2134 = vunpack.c.l.b16 %v1782
      %v2135 = vunpack.c.l.b16 %v1783
      %v2136 = vunpack.c.l.b16 %v1784
      %v2137 = vunpack.c.l.b16 %v1785
      %v2138 = vpack.c.b16 %v2091, %v2090
      %v2139 = vpack.c.b16 %v2093, %v2092
      %v2140 = vpack.c.b16 %v2095, %v2094
      %v2141 = vpack.c.b16 %v2097, %v2096
      %v2142 = vpack.c.b16 %v2099, %v2098
      %v2143 = vpack.c.b16 %v2101, %v2100
      %v2144 = vpack.c.b16 %v2103, %v2102
      %v2145 = vpack.c.b16 %v2105, %v2104
      %v2146 = vpack.c.b16 %v2107, %v2106
      %v2147 = vpack.c.b16 %v2109, %v2108
      %v2148 = vpack.c.b16 %v2111, %v2110
      %v2149 = vpack.c.b16 %v2113, %v2112
      %v2150 = vpack.c.b16 %v2115, %v2114
      %v2151 = vpack.c.b16 %v2117, %v2116
      %v2152 = vpack.c.b16 %v2119, %v2118
      %v2153 = vpack.c.b16 %v2121, %v2120
      %v2154 = vpack.c.b16 %v2123, %v2122
      %v2155 = vpack.c.b16 %v2125, %v2124
      %v2156 = vpack.c.b16 %v2127, %v2126
      %v2157 = vpack.c.b16 %v2129, %v2128
      %v2158 = vpack.c.b16 %v2131, %v2130
      %v2159 = vpack.c.b16 %v2133, %v2132
      %v2160 = vpack.c.b16 %v2135, %v2134
      %v2161 = vpack.c.b16 %v2137, %v2136
      %2186 = vmatpush.bf16.msra.mxu0 %v2145
      %2187 = vmatpush.bf16.msra.mxu0 %v2144
      %2188 = vmatpush.bf16.msra.mxu0 %v2143
      %2189 = vmatpush.bf16.msra.mxu0 %v2142
      %2190 = vmatpush.bf16.msra.mxu0 %v2141
      %2191 = vmatpush.bf16.msra.mxu0 %v2140
      %2192 = vmatpush.bf16.msra.mxu0 %v2139
      %2193 = vmatpush.bf16.msra.mxu0 %v2138
      %2194 = vmatmul.bf16.gmra.mxu0 %v1946
      %v2195 = vpop.f32.mrf.mxu0
      %v2196 = vadd.f32 0.0, %v2195
      %v2197 = vpop.f32.mrf.mxu0
      %v2198 = vadd.f32 0.0, %v2197
      %2199 = vmatmul.bf16.gmra.mxu0 %v1949
      %v2200 = vpop.f32.mrf.mxu0
      %v2201 = vadd.f32 0.0, %v2200
      %v2202 = vpop.f32.mrf.mxu0
      %v2203 = vadd.f32 0.0, %v2202
      %2204 = vmatmul.bf16.gmra.mxu0 %v1952
      %v2205 = vpop.f32.mrf.mxu0
      %v2206 = vadd.f32 0.0, %v2205
      %v2207 = vpop.f32.mrf.mxu0
      %v2208 = vadd.f32 0.0, %v2207
      %2209 = vmatmul.bf16.gmra.mxu0 %v1955
      %v2210 = vpop.f32.mrf.mxu0
      %v2211 = vadd.f32 0.0, %v2210
      %v2212 = vpop.f32.mrf.mxu0
      %v2213 = vadd.f32 0.0, %v2212
      %2214 = vmatmul.bf16.gmra.mxu0 %v1958
      %v2215 = vpop.f32.mrf.mxu0
      %v2216 = vadd.f32 0.0, %v2215
      %v2217 = vpop.f32.mrf.mxu0
      %v2218 = vadd.f32 0.0, %v2217
      %2219 = vmatmul.bf16.gmra.mxu0 %v1961
      %v2220 = vpop.f32.mrf.mxu0
      %v2221 = vadd.f32 0.0, %v2220
      %v2222 = vpop.f32.mrf.mxu0
      %v2223 = vadd.f32 0.0, %v2222
      %2224 = vmatmul.bf16.gmra.mxu0 %v1964
      %v2225 = vpop.f32.mrf.mxu0
      %v2226 = vadd.f32 0.0, %v2225
      %v2227 = vpop.f32.mrf.mxu0
      %v2228 = vadd.f32 0.0, %v2227
      %2229 = vmatmul.bf16.gmra.mxu0 %v1967
      %v2230 = vpop.f32.mrf.mxu0
      %v2231 = vadd.f32 0.0, %v2230
      %v2232 = vpop.f32.mrf.mxu0
      %v2233 = vadd.f32 0.0, %v2232
      %2234 = vmatmul.bf16.gmra.mxu0 %v1970
      %v2235 = vpop.f32.mrf.mxu0
      %v2236 = vadd.f32 0.0, %v2235
      %v2237 = vpop.f32.mrf.mxu0
      %v2238 = vadd.f32 0.0, %v2237
      %2239 = vmatmul.bf16.gmra.mxu0 %v1973
      %v2240 = vpop.f32.mrf.mxu0
      %v2241 = vadd.f32 0.0, %v2240
      %v2242 = vpop.f32.mrf.mxu0
      %v2243 = vadd.f32 0.0, %v2242
      %2244 = vmatmul.bf16.gmra.mxu0 %v1976
      %v2245 = vpop.f32.mrf.mxu0
      %v2246 = vadd.f32 0.0, %v2245
      %v2247 = vpop.f32.mrf.mxu0
      %v2248 = vadd.f32 0.0, %v2247
      %2249 = vmatmul.bf16.gmra.mxu0 %v1979
      %v2250 = vpop.f32.mrf.mxu0
      %v2251 = vadd.f32 0.0, %v2250
      %v2252 = vpop.f32.mrf.mxu0
      %v2253 = vadd.f32 0.0, %v2252
      %2254 = vmatmul.bf16.gmra.mxu0 %v1982
      %v2255 = vpop.f32.mrf.mxu0
      %v2256 = vadd.f32 0.0, %v2255
      %v2257 = vpop.f32.mrf.mxu0
      %v2258 = vadd.f32 0.0, %v2257
      %2259 = vmatmul.bf16.gmra.mxu0 %v1985
      %v2260 = vpop.f32.mrf.mxu0
      %v2261 = vadd.f32 0.0, %v2260
      %v2262 = vpop.f32.mrf.mxu0
      %v2263 = vadd.f32 0.0, %v2262
      %2264 = vmatmul.bf16.gmra.mxu0 %v1988
      %v2265 = vpop.f32.mrf.mxu0
      %v2266 = vadd.f32 0.0, %v2265
      %v2267 = vpop.f32.mrf.mxu0
      %v2268 = vadd.f32 0.0, %v2267
      %2269 = vmatmul.bf16.gmra.mxu0 %v1991
      %v2270 = vpop.f32.mrf.mxu0
      %v2271 = vadd.f32 0.0, %v2270
      %v2272 = vpop.f32.mrf.mxu0
      %v2273 = vadd.f32 0.0, %v2272
      %2274 = vdwg.mxu0
      %2275 = vmatpush.bf16.msra.mxu0 %v2153
      %2276 = vmatpush.bf16.msra.mxu0 %v2152
      %2277 = vmatpush.bf16.msra.mxu0 %v2151
      %2278 = vmatpush.bf16.msra.mxu0 %v2150
      %2279 = vmatpush.bf16.msra.mxu0 %v2149
      %2280 = vmatpush.bf16.msra.mxu0 %v2148
      %2281 = vmatpush.bf16.msra.mxu0 %v2147
      %2282 = vmatpush.bf16.msra.mxu0 %v2146
      %2283 = vmatmul.bf16.gmra.mxu0 %v1947
      %v2284 = vpop.f32.mrf.mxu0
      %v2285 = vadd.f32 %v2196, %v2284
      %v2286 = vpop.f32.mrf.mxu0
      %v2287 = vadd.f32 %v2198, %v2286
      %2288 = vmatmul.bf16.gmra.mxu0 %v1950
      %v2289 = vpop.f32.mrf.mxu0
      %v2290 = vadd.f32 %v2201, %v2289
      %v2291 = vpop.f32.mrf.mxu0
      %v2292 = vadd.f32 %v2203, %v2291
      %2293 = vmatmul.bf16.gmra.mxu0 %v1953
      %v2294 = vpop.f32.mrf.mxu0
      %v2295 = vadd.f32 %v2206, %v2294
      %v2296 = vpop.f32.mrf.mxu0
      %v2297 = vadd.f32 %v2208, %v2296
      %2298 = vmatmul.bf16.gmra.mxu0 %v1956
      %v2299 = vpop.f32.mrf.mxu0
      %v2300 = vadd.f32 %v2211, %v2299
      %v2301 = vpop.f32.mrf.mxu0
      %v2302 = vadd.f32 %v2213, %v2301
      %2303 = vmatmul.bf16.gmra.mxu0 %v1959
      %v2304 = vpop.f32.mrf.mxu0
      %v2305 = vadd.f32 %v2216, %v2304
      %v2306 = vpop.f32.mrf.mxu0
      %v2307 = vadd.f32 %v2218, %v2306
      %2308 = vmatmul.bf16.gmra.mxu0 %v1962
      %v2309 = vpop.f32.mrf.mxu0
      %v2310 = vadd.f32 %v2221, %v2309
      %v2311 = vpop.f32.mrf.mxu0
      %v2312 = vadd.f32 %v2223, %v2311
      %2313 = vmatmul.bf16.gmra.mxu0 %v1965
      %v2314 = vpop.f32.mrf.mxu0
      %v2315 = vadd.f32 %v2226, %v2314
      %v2316 = vpop.f32.mrf.mxu0
      %v2317 = vadd.f32 %v2228, %v2316
      %2318 = vmatmul.bf16.gmra.mxu0 %v1968
      %v2319 = vpop.f32.mrf.mxu0
      %v2320 = vadd.f32 %v2231, %v2319
      %v2321 = vpop.f32.mrf.mxu0
      %v2322 = vadd.f32 %v2233, %v2321
      %2323 = vmatmul.bf16.gmra.mxu0 %v1971
      %v2324 = vpop.f32.mrf.mxu0
      %v2325 = vadd.f32 %v2236, %v2324
      %v2326 = vpop.f32.mrf.mxu0
      %v2327 = vadd.f32 %v2238, %v2326
      %2328 = vmatmul.bf16.gmra.mxu0 %v1974
      %v2329 = vpop.f32.mrf.mxu0
      %v2330 = vadd.f32 %v2241, %v2329
      %v2331 = vpop.f32.mrf.mxu0
      %v2332 = vadd.f32 %v2243, %v2331
      %2333 = vmatmul.bf16.gmra.mxu0 %v1977
      %v2334 = vpop.f32.mrf.mxu0
      %v2335 = vadd.f32 %v2246, %v2334
      %v2336 = vpop.f32.mrf.mxu0
      %v2337 = vadd.f32 %v2248, %v2336
      %2338 = vmatmul.bf16.gmra.mxu0 %v1980
      %v2339 = vpop.f32.mrf.mxu0
      %v2340 = vadd.f32 %v2251, %v2339
      %v2341 = vpop.f32.mrf.mxu0
      %v2342 = vadd.f32 %v2253, %v2341
      %2343 = vmatmul.bf16.gmra.mxu0 %v1983
      %v2344 = vpop.f32.mrf.mxu0
      %v2345 = vadd.f32 %v2256, %v2344
      %v2346 = vpop.f32.mrf.mxu0
      %v2347 = vadd.f32 %v2258, %v2346
      %2348 = vmatmul.bf16.gmra.mxu0 %v1986
      %v2349 = vpop.f32.mrf.mxu0
      %v2350 = vadd.f32 %v2261, %v2349
      %v2351 = vpop.f32.mrf.mxu0
      %v2352 = vadd.f32 %v2263, %v2351
      %2353 = vmatmul.bf16.gmra.mxu0 %v1989
      %v2354 = vpop.f32.mrf.mxu0
      %v2355 = vadd.f32 %v2266, %v2354
      %v2356 = vpop.f32.mrf.mxu0
      %v2357 = vadd.f32 %v2268, %v2356
      %2358 = vmatmul.bf16.gmra.mxu0 %v1992
      %v2359 = vpop.f32.mrf.mxu0
      %v2360 = vadd.f32 %v2271, %v2359
      %v2361 = vpop.f32.mrf.mxu0
      %v2362 = vadd.f32 %v2273, %v2361
      %2363 = vdwg.mxu0
      %2364 = vmatpush.bf16.msra.mxu0 %v2161
      %2365 = vmatpush.bf16.msra.mxu0 %v2160
      %2366 = vmatpush.bf16.msra.mxu0 %v2159
      %2367 = vmatpush.bf16.msra.mxu0 %v2158
      %2368 = vmatpush.bf16.msra.mxu0 %v2157
      %2369 = vmatpush.bf16.msra.mxu0 %v2156
      %2370 = vmatpush.bf16.msra.mxu0 %v2155
      %2371 = vmatpush.bf16.msra.mxu0 %v2154
      %2372 = vmatmul.bf16.gmra.mxu0 %v1948
      %v2373 = vpop.f32.mrf.mxu0
      %v2374 = vadd.f32 %v2285, %v2373
      %v2375 = vpop.f32.mrf.mxu0
      %v2376 = vadd.f32 %v2287, %v2375
      %2377 = vmatmul.bf16.gmra.mxu0 %v1951
      %v2378 = vpop.f32.mrf.mxu0
      %v2379 = vadd.f32 %v2290, %v2378
      %v2380 = vpop.f32.mrf.mxu0
      %v2381 = vadd.f32 %v2292, %v2380
      %2382 = vmatmul.bf16.gmra.mxu0 %v1954
      %v2383 = vpop.f32.mrf.mxu0
      %v2384 = vadd.f32 %v2295, %v2383
      %v2385 = vpop.f32.mrf.mxu0
      %v2386 = vadd.f32 %v2297, %v2385
      %2387 = vmatmul.bf16.gmra.mxu0 %v1957
      %v2388 = vpop.f32.mrf.mxu0
      %v2389 = vadd.f32 %v2300, %v2388
      %v2390 = vpop.f32.mrf.mxu0
      %v2391 = vadd.f32 %v2302, %v2390
      %2392 = vmatmul.bf16.gmra.mxu0 %v1960
      %v2393 = vpop.f32.mrf.mxu0
      %v2394 = vadd.f32 %v2305, %v2393
      %v2395 = vpop.f32.mrf.mxu0
      %v2396 = vadd.f32 %v2307, %v2395
      %2397 = vmatmul.bf16.gmra.mxu0 %v1963
      %v2398 = vpop.f32.mrf.mxu0
      %v2399 = vadd.f32 %v2310, %v2398
      %v2400 = vpop.f32.mrf.mxu0
      %v2401 = vadd.f32 %v2312, %v2400
      %2402 = vmatmul.bf16.gmra.mxu0 %v1966
      %v2403 = vpop.f32.mrf.mxu0
      %v2404 = vadd.f32 %v2315, %v2403
      %v2405 = vpop.f32.mrf.mxu0
      %v2406 = vadd.f32 %v2317, %v2405
      %2407 = vmatmul.bf16.gmra.mxu0 %v1969
      %v2408 = vpop.f32.mrf.mxu0
      %v2409 = vadd.f32 %v2320, %v2408
      %v2410 = vpop.f32.mrf.mxu0
      %v2411 = vadd.f32 %v2322, %v2410
      %2412 = vmatmul.bf16.gmra.mxu0 %v1972
      %v2413 = vpop.f32.mrf.mxu0
      %v2414 = vadd.f32 %v2325, %v2413
      %v2415 = vpop.f32.mrf.mxu0
      %v2416 = vadd.f32 %v2327, %v2415
      %2417 = vmatmul.bf16.gmra.mxu0 %v1975
      %v2418 = vpop.f32.mrf.mxu0
      %v2419 = vadd.f32 %v2330, %v2418
      %v2420 = vpop.f32.mrf.mxu0
      %v2421 = vadd.f32 %v2332, %v2420
      %2422 = vmatmul.bf16.gmra.mxu0 %v1978
      %v2423 = vpop.f32.mrf.mxu0
      %v2424 = vadd.f32 %v2335, %v2423
      %v2425 = vpop.f32.mrf.mxu0
      %v2426 = vadd.f32 %v2337, %v2425
      %2427 = vmatmul.bf16.gmra.mxu0 %v1981
      %v2428 = vpop.f32.mrf.mxu0
      %v2429 = vadd.f32 %v2340, %v2428
      %v2430 = vpop.f32.mrf.mxu0
      %v2431 = vadd.f32 %v2342, %v2430
      %2432 = vmatmul.bf16.gmra.mxu0 %v1984
      %v2433 = vpop.f32.mrf.mxu0
      %v2434 = vadd.f32 %v2345, %v2433
      %v2435 = vpop.f32.mrf.mxu0
      %v2436 = vadd.f32 %v2347, %v2435
      %2437 = vmatmul.bf16.gmra.mxu0 %v1987
      %v2438 = vpop.f32.mrf.mxu0
      %v2439 = vadd.f32 %v2350, %v2438
      %v2440 = vpop.f32.mrf.mxu0
      %v2441 = vadd.f32 %v2352, %v2440
      %2442 = vmatmul.bf16.gmra.mxu0 %v1990
      %v2443 = vpop.f32.mrf.mxu0
      %v2444 = vadd.f32 %v2355, %v2443
      %v2445 = vpop.f32.mrf.mxu0
      %v2446 = vadd.f32 %v2357, %v2445
      %2447 = vmatmul.bf16.gmra.mxu0 %v1993
      %v2448 = vpop.f32.mrf.mxu0
      %v2449 = vadd.f32 %v2360, %v2448
      %v2450 = vpop.f32.mrf.mxu0
      %v2451 = vadd.f32 %v2362, %v2450
      %2452 = vdwg.mxu0
      %v2517 = vunpack.c.l.b16 %v1561
      %v2518 = vunpack.c.h.b16 %v1561
      %v2519 = vunpack.c.l.b16 %v1562
      %v2520 = vunpack.c.l.b16 %v1563
      %v2521 = vunpack.c.h.b16 %v1563
      %v2522 = vunpack.c.l.b16 %v1564
      %v2523 = vunpack.c.l.b16 %v1565
      %v2524 = vunpack.c.h.b16 %v1565
      %v2525 = vunpack.c.l.b16 %v1566
      %v2526 = vunpack.c.l.b16 %v1567
      %v2527 = vunpack.c.h.b16 %v1567
      %v2528 = vunpack.c.l.b16 %v1568
      %v2529 = vunpack.c.l.b16 %v1569
      %v2530 = vunpack.c.h.b16 %v1569
      %v2531 = vunpack.c.l.b16 %v1570
      %v2532 = vunpack.c.l.b16 %v1571
      %v2533 = vunpack.c.h.b16 %v1571
      %v2534 = vunpack.c.l.b16 %v1572
      %v2535 = vunpack.c.l.b16 %v1573
      %v2536 = vunpack.c.h.b16 %v1573
      %v2537 = vunpack.c.l.b16 %v1574
      %v2538 = vunpack.c.l.b16 %v1575
      %v2539 = vunpack.c.h.b16 %v1575
      %v2540 = vunpack.c.l.b16 %v1576
      %v2541 = vunpack.c.l.b16 %v1577
      %v2542 = vunpack.c.h.b16 %v1577
      %v2543 = vunpack.c.l.b16 %v1578
      %v2544 = vunpack.c.l.b16 %v1579
      %v2545 = vunpack.c.h.b16 %v1579
      %v2546 = vunpack.c.l.b16 %v1580
      %v2547 = vunpack.c.l.b16 %v1581
      %v2548 = vunpack.c.h.b16 %v1581
      %v2549 = vunpack.c.l.b16 %v1582
      %v2550 = vunpack.c.l.b16 %v1583
      %v2551 = vunpack.c.h.b16 %v1583
      %v2552 = vunpack.c.l.b16 %v1584
      %v2553 = vunpack.c.l.b16 %v1585
      %v2554 = vunpack.c.h.b16 %v1585
      %v2555 = vunpack.c.l.b16 %v1586
      %v2556 = vunpack.c.l.b16 %v1587
      %v2557 = vunpack.c.h.b16 %v1587
      %v2558 = vunpack.c.l.b16 %v1588
      %v2559 = vunpack.c.l.b16 %v1589
      %v2560 = vunpack.c.h.b16 %v1589
      %v2561 = vunpack.c.l.b16 %v1590
      %v2562 = vunpack.c.l.b16 %v1591
      %v2563 = vunpack.c.h.b16 %v1591
      %v2564 = vunpack.c.l.b16 %v1592
      %v2565 = vunpack.c.l.b16 %v1593
      %v2566 = vunpack.c.h.b16 %v1593
      %v2567 = vunpack.c.l.b16 %v1594
      %v2568 = vunpack.c.l.b16 %v1595
      %v2569 = vunpack.c.h.b16 %v1595
      %v2570 = vunpack.c.l.b16 %v1596
      %v2571 = vunpack.c.l.b16 %v1597
      %v2572 = vunpack.c.h.b16 %v1597
      %v2573 = vunpack.c.l.b16 %v1598
      %v2574 = vunpack.c.l.b16 %v1599
      %v2575 = vunpack.c.h.b16 %v1599
      %v2576 = vunpack.c.l.b16 %v1600
      %v2577 = vunpack.c.l.b16 %v1601
      %v2578 = vunpack.c.h.b16 %v1601
      %v2579 = vunpack.c.l.b16 %v1602
      %v2580 = vunpack.c.l.b16 %v1603
      %v2581 = vunpack.c.h.b16 %v1603
      %v2582 = vunpack.c.l.b16 %v1604
      %v2583 = vunpack.c.l.b16 %v1605
      %v2584 = vunpack.c.h.b16 %v1605
      %v2585 = vunpack.c.l.b16 %v1606
      %v2586 = vunpack.c.l.b16 %v1607
      %v2587 = vunpack.c.h.b16 %v1607
      %v2588 = vunpack.c.l.b16 %v1608
      %v2589 = vunpack.c.l.b16 %v1609
      %v2590 = vunpack.c.h.b16 %v1609
      %v2591 = vunpack.c.l.b16 %v1610
      %v2592 = vunpack.c.l.b16 %v1611
      %v2593 = vunpack.c.h.b16 %v1611
      %v2594 = vunpack.c.l.b16 %v1612
      %v2595 = vunpack.c.l.b16 %v1613
      %v2596 = vunpack.c.h.b16 %v1613
      %v2597 = vunpack.c.l.b16 %v1614
      %v2598 = vunpack.c.l.b16 %v1615
      %v2599 = vunpack.c.h.b16 %v1615
      %v2600 = vunpack.c.l.b16 %v1616
      %v2601 = vunpack.c.l.b16 %v1617
      %v2602 = vunpack.c.h.b16 %v1617
      %v2603 = vunpack.c.l.b16 %v1618
      %v2604 = vunpack.c.l.b16 %v1619
      %v2605 = vunpack.c.h.b16 %v1619
      %v2606 = vunpack.c.l.b16 %v1620
      %v2607 = vunpack.c.l.b16 %v1621
      %v2608 = vunpack.c.h.b16 %v1621
      %v2609 = vunpack.c.l.b16 %v1622
      %v2610 = vunpack.c.l.b16 %v1623
      %v2611 = vunpack.c.h.b16 %v1623
      %v2612 = vunpack.c.l.b16 %v1624
      %v2613 = vpack.c.b16 %v2520, %v2517
      %v2614 = vpack.c.b16 %v2521, %v2518
      %v2615 = vpack.c.b16 %v2522, %v2519
      %v2616 = vpack.c.b16 %v2526, %v2523
      %v2617 = vpack.c.b16 %v2527, %v2524
      %v2618 = vpack.c.b16 %v2528, %v2525
      %v2619 = vpack.c.b16 %v2532, %v2529
      %v2620 = vpack.c.b16 %v2533, %v2530
      %v2621 = vpack.c.b16 %v2534, %v2531
      %v2622 = vpack.c.b16 %v2538, %v2535
      %v2623 = vpack.c.b16 %v2539, %v2536
      %v2624 = vpack.c.b16 %v2540, %v2537
      %v2625 = vpack.c.b16 %v2544, %v2541
      %v2626 = vpack.c.b16 %v2545, %v2542
      %v2627 = vpack.c.b16 %v2546, %v2543
      %v2628 = vpack.c.b16 %v2550, %v2547
      %v2629 = vpack.c.b16 %v2551, %v2548
      %v2630 = vpack.c.b16 %v2552, %v2549
      %v2631 = vpack.c.b16 %v2556, %v2553
      %v2632 = vpack.c.b16 %v2557, %v2554
      %v2633 = vpack.c.b16 %v2558, %v2555
      %v2634 = vpack.c.b16 %v2562, %v2559
      %v2635 = vpack.c.b16 %v2563, %v2560
      %v2636 = vpack.c.b16 %v2564, %v2561
      %v2637 = vpack.c.b16 %v2568, %v2565
      %v2638 = vpack.c.b16 %v2569, %v2566
      %v2639 = vpack.c.b16 %v2570, %v2567
      %v2640 = vpack.c.b16 %v2574, %v2571
      %v2641 = vpack.c.b16 %v2575, %v2572
      %v2642 = vpack.c.b16 %v2576, %v2573
      %v2643 = vpack.c.b16 %v2580, %v2577
      %v2644 = vpack.c.b16 %v2581, %v2578
      %v2645 = vpack.c.b16 %v2582, %v2579
      %v2646 = vpack.c.b16 %v2586, %v2583
      %v2647 = vpack.c.b16 %v2587, %v2584
      %v2648 = vpack.c.b16 %v2588, %v2585
      %v2649 = vpack.c.b16 %v2592, %v2589
      %v2650 = vpack.c.b16 %v2593, %v2590
      %v2651 = vpack.c.b16 %v2594, %v2591
      %v2652 = vpack.c.b16 %v2598, %v2595
      %v2653 = vpack.c.b16 %v2599, %v2596
      %v2654 = vpack.c.b16 %v2600, %v2597
      %v2655 = vpack.c.b16 %v2604, %v2601
      %v2656 = vpack.c.b16 %v2605, %v2602
      %v2657 = vpack.c.b16 %v2606, %v2603
      %v2658 = vpack.c.b16 %v2610, %v2607
      %v2659 = vpack.c.b16 %v2611, %v2608
      %v2660 = vpack.c.b16 %v2612, %v2609
      %v2757 = vunpack.c.l.b16 %v1625
      %v2758 = vunpack.c.l.b16 %v1626
      %v2759 = vunpack.c.l.b16 %v1627
      %v2760 = vunpack.c.l.b16 %v1628
      %v2761 = vunpack.c.l.b16 %v1629
      %v2762 = vunpack.c.l.b16 %v1630
      %v2763 = vunpack.c.l.b16 %v1631
      %v2764 = vunpack.c.l.b16 %v1632
      %v2765 = vunpack.c.l.b16 %v1633
      %v2766 = vunpack.c.l.b16 %v1634
      %v2767 = vunpack.c.l.b16 %v1635
      %v2768 = vunpack.c.l.b16 %v1636
      %v2769 = vunpack.c.l.b16 %v1637
      %v2770 = vunpack.c.l.b16 %v1638
      %v2771 = vunpack.c.l.b16 %v1639
      %v2772 = vunpack.c.l.b16 %v1640
      %v2773 = vunpack.c.l.b16 %v1641
      %v2774 = vunpack.c.l.b16 %v1642
      %v2775 = vunpack.c.l.b16 %v1643
      %v2776 = vunpack.c.l.b16 %v1644
      %v2777 = vunpack.c.l.b16 %v1645
      %v2778 = vunpack.c.l.b16 %v1646
      %v2779 = vunpack.c.l.b16 %v1647
      %v2780 = vunpack.c.l.b16 %v1648
      %v2781 = vunpack.c.l.b16 %v1649
      %v2782 = vunpack.c.l.b16 %v1650
      %v2783 = vunpack.c.l.b16 %v1651
      %v2784 = vunpack.c.l.b16 %v1652
      %v2785 = vunpack.c.l.b16 %v1653
      %v2786 = vunpack.c.l.b16 %v1654
      %v2787 = vunpack.c.l.b16 %v1655
      %v2788 = vunpack.c.l.b16 %v1656
      %v2789 = vunpack.c.l.b16 %v1657
      %v2790 = vunpack.c.l.b16 %v1658
      %v2791 = vunpack.c.l.b16 %v1659
      %v2792 = vunpack.c.l.b16 %v1660
      %v2793 = vunpack.c.l.b16 %v1661
      %v2794 = vunpack.c.l.b16 %v1662
      %v2795 = vunpack.c.l.b16 %v1663
      %v2796 = vunpack.c.l.b16 %v1664
      %v2797 = vunpack.c.l.b16 %v1665
      %v2798 = vunpack.c.l.b16 %v1666
      %v2799 = vunpack.c.l.b16 %v1667
      %v2800 = vunpack.c.l.b16 %v1668
      %v2801 = vunpack.c.l.b16 %v1669
      %v2802 = vunpack.c.l.b16 %v1670
      %v2803 = vunpack.c.l.b16 %v1671
      %v2804 = vunpack.c.l.b16 %v1672
      %v2805 = vpack.c.b16 %v2758, %v2757
      %v2806 = vpack.c.b16 %v2760, %v2759
      %v2807 = vpack.c.b16 %v2762, %v2761
      %v2808 = vpack.c.b16 %v2764, %v2763
      %v2809 = vpack.c.b16 %v2766, %v2765
      %v2810 = vpack.c.b16 %v2768, %v2767
      %v2811 = vpack.c.b16 %v2770, %v2769
      %v2812 = vpack.c.b16 %v2772, %v2771
      %v2813 = vpack.c.b16 %v2774, %v2773
      %v2814 = vpack.c.b16 %v2776, %v2775
      %v2815 = vpack.c.b16 %v2778, %v2777
      %v2816 = vpack.c.b16 %v2780, %v2779
      %v2817 = vpack.c.b16 %v2782, %v2781
      %v2818 = vpack.c.b16 %v2784, %v2783
      %v2819 = vpack.c.b16 %v2786, %v2785
      %v2820 = vpack.c.b16 %v2788, %v2787
      %v2821 = vpack.c.b16 %v2790, %v2789
      %v2822 = vpack.c.b16 %v2792, %v2791
      %v2823 = vpack.c.b16 %v2794, %v2793
      %v2824 = vpack.c.b16 %v2796, %v2795
      %v2825 = vpack.c.b16 %v2798, %v2797
      %v2826 = vpack.c.b16 %v2800, %v2799
      %v2827 = vpack.c.b16 %v2802, %v2801
      %v2828 = vpack.c.b16 %v2804, %v2803
      %2853 = vmatpush.bf16.msra.mxu0 %v2812
      %2854 = vmatpush.bf16.msra.mxu0 %v2811
      %2855 = vmatpush.bf16.msra.mxu0 %v2810
      %2856 = vmatpush.bf16.msra.mxu0 %v2809
      %2857 = vmatpush.bf16.msra.mxu0 %v2808
      %2858 = vmatpush.bf16.msra.mxu0 %v2807
      %2859 = vmatpush.bf16.msra.mxu0 %v2806
      %2860 = vmatpush.bf16.msra.mxu0 %v2805
      %2861 = vmatmul.bf16.gmra.mxu0 %v2613
      %v2862 = vpop.f32.mrf.mxu0
      %v2863 = vadd.f32 %v2374, %v2862
      %v2864 = vpop.f32.mrf.mxu0
      %v2865 = vadd.f32 %v2376, %v2864
      %2866 = vmatmul.bf16.gmra.mxu0 %v2616
      %v2867 = vpop.f32.mrf.mxu0
      %v2868 = vadd.f32 %v2379, %v2867
      %v2869 = vpop.f32.mrf.mxu0
      %v2870 = vadd.f32 %v2381, %v2869
      %2871 = vmatmul.bf16.gmra.mxu0 %v2619
      %v2872 = vpop.f32.mrf.mxu0
      %v2873 = vadd.f32 %v2384, %v2872
      %v2874 = vpop.f32.mrf.mxu0
      %v2875 = vadd.f32 %v2386, %v2874
      %2876 = vmatmul.bf16.gmra.mxu0 %v2622
      %v2877 = vpop.f32.mrf.mxu0
      %v2878 = vadd.f32 %v2389, %v2877
      %v2879 = vpop.f32.mrf.mxu0
      %v2880 = vadd.f32 %v2391, %v2879
      %2881 = vmatmul.bf16.gmra.mxu0 %v2625
      %v2882 = vpop.f32.mrf.mxu0
      %v2883 = vadd.f32 %v2394, %v2882
      %v2884 = vpop.f32.mrf.mxu0
      %v2885 = vadd.f32 %v2396, %v2884
      %2886 = vmatmul.bf16.gmra.mxu0 %v2628
      %v2887 = vpop.f32.mrf.mxu0
      %v2888 = vadd.f32 %v2399, %v2887
      %v2889 = vpop.f32.mrf.mxu0
      %v2890 = vadd.f32 %v2401, %v2889
      %2891 = vmatmul.bf16.gmra.mxu0 %v2631
      %v2892 = vpop.f32.mrf.mxu0
      %v2893 = vadd.f32 %v2404, %v2892
      %v2894 = vpop.f32.mrf.mxu0
      %v2895 = vadd.f32 %v2406, %v2894
      %2896 = vmatmul.bf16.gmra.mxu0 %v2634
      %v2897 = vpop.f32.mrf.mxu0
      %v2898 = vadd.f32 %v2409, %v2897
      %v2899 = vpop.f32.mrf.mxu0
      %v2900 = vadd.f32 %v2411, %v2899
      %2901 = vmatmul.bf16.gmra.mxu0 %v2637
      %v2902 = vpop.f32.mrf.mxu0
      %v2903 = vadd.f32 %v2414, %v2902
      %v2904 = vpop.f32.mrf.mxu0
      %v2905 = vadd.f32 %v2416, %v2904
      %2906 = vmatmul.bf16.gmra.mxu0 %v2640
      %v2907 = vpop.f32.mrf.mxu0
      %v2908 = vadd.f32 %v2419, %v2907
      %v2909 = vpop.f32.mrf.mxu0
      %v2910 = vadd.f32 %v2421, %v2909
      %2911 = vmatmul.bf16.gmra.mxu0 %v2643
      %v2912 = vpop.f32.mrf.mxu0
      %v2913 = vadd.f32 %v2424, %v2912
      %v2914 = vpop.f32.mrf.mxu0
      %v2915 = vadd.f32 %v2426, %v2914
      %2916 = vmatmul.bf16.gmra.mxu0 %v2646
      %v2917 = vpop.f32.mrf.mxu0
      %v2918 = vadd.f32 %v2429, %v2917
      %v2919 = vpop.f32.mrf.mxu0
      %v2920 = vadd.f32 %v2431, %v2919
      %2921 = vmatmul.bf16.gmra.mxu0 %v2649
      %v2922 = vpop.f32.mrf.mxu0
      %v2923 = vadd.f32 %v2434, %v2922
      %v2924 = vpop.f32.mrf.mxu0
      %v2925 = vadd.f32 %v2436, %v2924
      %2926 = vmatmul.bf16.gmra.mxu0 %v2652
      %v2927 = vpop.f32.mrf.mxu0
      %v2928 = vadd.f32 %v2439, %v2927
      %v2929 = vpop.f32.mrf.mxu0
      %v2930 = vadd.f32 %v2441, %v2929
      %2931 = vmatmul.bf16.gmra.mxu0 %v2655
      %v2932 = vpop.f32.mrf.mxu0
      %v2933 = vadd.f32 %v2444, %v2932
      %v2934 = vpop.f32.mrf.mxu0
      %v2935 = vadd.f32 %v2446, %v2934
      %2936 = vmatmul.bf16.gmra.mxu0 %v2658
      %v2937 = vpop.f32.mrf.mxu0
      %v2938 = vadd.f32 %v2449, %v2937
      %v2939 = vpop.f32.mrf.mxu0
      %v2940 = vadd.f32 %v2451, %v2939
      %2941 = vdwg.mxu0
      %2942 = vmatpush.bf16.msra.mxu0 %v2820
      %2943 = vmatpush.bf16.msra.mxu0 %v2819
      %2944 = vmatpush.bf16.msra.mxu0 %v2818
      %2945 = vmatpush.bf16.msra.mxu0 %v2817
      %2946 = vmatpush.bf16.msra.mxu0 %v2816
      %2947 = vmatpush.bf16.msra.mxu0 %v2815
      %2948 = vmatpush.bf16.msra.mxu0 %v2814
      %2949 = vmatpush.bf16.msra.mxu0 %v2813
      %2950 = vmatmul.bf16.gmra.mxu0 %v2614
      %v2951 = vpop.f32.mrf.mxu0
      %v2952 = vadd.f32 %v2863, %v2951
      %v2953 = vpop.f32.mrf.mxu0
      %v2954 = vadd.f32 %v2865, %v2953
      %2955 = vmatmul.bf16.gmra.mxu0 %v2617
      %v2956 = vpop.f32.mrf.mxu0
      %v2957 = vadd.f32 %v2868, %v2956
      %v2958 = vpop.f32.mrf.mxu0
      %v2959 = vadd.f32 %v2870, %v2958
      %2960 = vmatmul.bf16.gmra.mxu0 %v2620
      %v2961 = vpop.f32.mrf.mxu0
      %v2962 = vadd.f32 %v2873, %v2961
      %v2963 = vpop.f32.mrf.mxu0
      %v2964 = vadd.f32 %v2875, %v2963
      %2965 = vmatmul.bf16.gmra.mxu0 %v2623
      %v2966 = vpop.f32.mrf.mxu0
      %v2967 = vadd.f32 %v2878, %v2966
      %v2968 = vpop.f32.mrf.mxu0
      %v2969 = vadd.f32 %v2880, %v2968
      %2970 = vmatmul.bf16.gmra.mxu0 %v2626
      %v2971 = vpop.f32.mrf.mxu0
      %v2972 = vadd.f32 %v2883, %v2971
      %v2973 = vpop.f32.mrf.mxu0
      %v2974 = vadd.f32 %v2885, %v2973
      %2975 = vmatmul.bf16.gmra.mxu0 %v2629
      %v2976 = vpop.f32.mrf.mxu0
      %v2977 = vadd.f32 %v2888, %v2976
      %v2978 = vpop.f32.mrf.mxu0
      %v2979 = vadd.f32 %v2890, %v2978
      %2980 = vmatmul.bf16.gmra.mxu0 %v2632
      %v2981 = vpop.f32.mrf.mxu0
      %v2982 = vadd.f32 %v2893, %v2981
      %v2983 = vpop.f32.mrf.mxu0
      %v2984 = vadd.f32 %v2895, %v2983
      %2985 = vmatmul.bf16.gmra.mxu0 %v2635
      %v2986 = vpop.f32.mrf.mxu0
      %v2987 = vadd.f32 %v2898, %v2986
      %v2988 = vpop.f32.mrf.mxu0
      %v2989 = vadd.f32 %v2900, %v2988
      %2990 = vmatmul.bf16.gmra.mxu0 %v2638
      %v2991 = vpop.f32.mrf.mxu0
      %v2992 = vadd.f32 %v2903, %v2991
      %v2993 = vpop.f32.mrf.mxu0
      %v2994 = vadd.f32 %v2905, %v2993
      %2995 = vmatmul.bf16.gmra.mxu0 %v2641
      %v2996 = vpop.f32.mrf.mxu0
      %v2997 = vadd.f32 %v2908, %v2996
      %v2998 = vpop.f32.mrf.mxu0
      %v2999 = vadd.f32 %v2910, %v2998
      %3000 = vmatmul.bf16.gmra.mxu0 %v2644
      %v3001 = vpop.f32.mrf.mxu0
      %v3002 = vadd.f32 %v2913, %v3001
      %v3003 = vpop.f32.mrf.mxu0
      %v3004 = vadd.f32 %v2915, %v3003
      %3005 = vmatmul.bf16.gmra.mxu0 %v2647
      %v3006 = vpop.f32.mrf.mxu0
      %v3007 = vadd.f32 %v2918, %v3006
      %v3008 = vpop.f32.mrf.mxu0
      %v3009 = vadd.f32 %v2920, %v3008
      %3010 = vmatmul.bf16.gmra.mxu0 %v2650
      %v3011 = vpop.f32.mrf.mxu0
      %v3012 = vadd.f32 %v2923, %v3011
      %v3013 = vpop.f32.mrf.mxu0
      %v3014 = vadd.f32 %v2925, %v3013
      %3015 = vmatmul.bf16.gmra.mxu0 %v2653
      %v3016 = vpop.f32.mrf.mxu0
      %v3017 = vadd.f32 %v2928, %v3016
      %v3018 = vpop.f32.mrf.mxu0
      %v3019 = vadd.f32 %v2930, %v3018
      %3020 = vmatmul.bf16.gmra.mxu0 %v2656
      %v3021 = vpop.f32.mrf.mxu0
      %v3022 = vadd.f32 %v2933, %v3021
      %v3023 = vpop.f32.mrf.mxu0
      %v3024 = vadd.f32 %v2935, %v3023
      %3025 = vmatmul.bf16.gmra.mxu0 %v2659
      %v3026 = vpop.f32.mrf.mxu0
      %v3027 = vadd.f32 %v2938, %v3026
      %v3028 = vpop.f32.mrf.mxu0
      %v3029 = vadd.f32 %v2940, %v3028
      %3030 = vdwg.mxu0
      %3031 = vmatpush.bf16.msra.mxu0 %v2828
      %3032 = vmatpush.bf16.msra.mxu0 %v2827
      %3033 = vmatpush.bf16.msra.mxu0 %v2826
      %3034 = vmatpush.bf16.msra.mxu0 %v2825
      %3035 = vmatpush.bf16.msra.mxu0 %v2824
      %3036 = vmatpush.bf16.msra.mxu0 %v2823
      %3037 = vmatpush.bf16.msra.mxu0 %v2822
      %3038 = vmatpush.bf16.msra.mxu0 %v2821
      %3039 = vmatmul.bf16.gmra.mxu0 %v2615
      %v3040 = vpop.f32.mrf.mxu0
      %v3041 = vadd.f32 %v2952, %v3040
      %v3042 = vpop.f32.mrf.mxu0
      %v3043 = vadd.f32 %v2954, %v3042
      %3044 = vmatmul.bf16.gmra.mxu0 %v2618
      %v3045 = vpop.f32.mrf.mxu0
      %v3046 = vadd.f32 %v2957, %v3045
      %v3047 = vpop.f32.mrf.mxu0
      %v3048 = vadd.f32 %v2959, %v3047
      %3049 = vmatmul.bf16.gmra.mxu0 %v2621
      %v3050 = vpop.f32.mrf.mxu0
      %v3051 = vadd.f32 %v2962, %v3050
      %v3052 = vpop.f32.mrf.mxu0
      %v3053 = vadd.f32 %v2964, %v3052
      %3054 = vmatmul.bf16.gmra.mxu0 %v2624
      %v3055 = vpop.f32.mrf.mxu0
      %v3056 = vadd.f32 %v2967, %v3055
      %v3057 = vpop.f32.mrf.mxu0
      %v3058 = vadd.f32 %v2969, %v3057
      %3059 = vmatmul.bf16.gmra.mxu0 %v2627
      %v3060 = vpop.f32.mrf.mxu0
      %v3061 = vadd.f32 %v2972, %v3060
      %v3062 = vpop.f32.mrf.mxu0
      %v3063 = vadd.f32 %v2974, %v3062
      %3064 = vmatmul.bf16.gmra.mxu0 %v2630
      %v3065 = vpop.f32.mrf.mxu0
      %v3066 = vadd.f32 %v2977, %v3065
      %v3067 = vpop.f32.mrf.mxu0
      %v3068 = vadd.f32 %v2979, %v3067
      %3069 = vmatmul.bf16.gmra.mxu0 %v2633
      %v3070 = vpop.f32.mrf.mxu0
      %v3071 = vadd.f32 %v2982, %v3070
      %v3072 = vpop.f32.mrf.mxu0
      %v3073 = vadd.f32 %v2984, %v3072
      %3074 = vmatmul.bf16.gmra.mxu0 %v2636
      %v3075 = vpop.f32.mrf.mxu0
      %v3076 = vadd.f32 %v2987, %v3075
      %v3077 = vpop.f32.mrf.mxu0
      %v3078 = vadd.f32 %v2989, %v3077
      %3079 = vmatmul.bf16.gmra.mxu0 %v2639
      %v3080 = vpop.f32.mrf.mxu0
      %v3081 = vadd.f32 %v2992, %v3080
      %v3082 = vpop.f32.mrf.mxu0
      %v3083 = vadd.f32 %v2994, %v3082
      %3084 = vmatmul.bf16.gmra.mxu0 %v2642
      %v3085 = vpop.f32.mrf.mxu0
      %v3086 = vadd.f32 %v2997, %v3085
      %v3087 = vpop.f32.mrf.mxu0
      %v3088 = vadd.f32 %v2999, %v3087
      %3089 = vmatmul.bf16.gmra.mxu0 %v2645
      %v3090 = vpop.f32.mrf.mxu0
      %v3091 = vadd.f32 %v3002, %v3090
      %v3092 = vpop.f32.mrf.mxu0
      %v3093 = vadd.f32 %v3004, %v3092
      %3094 = vmatmul.bf16.gmra.mxu0 %v2648
      %v3095 = vpop.f32.mrf.mxu0
      %v3096 = vadd.f32 %v3007, %v3095
      %v3097 = vpop.f32.mrf.mxu0
      %v3098 = vadd.f32 %v3009, %v3097
      %3099 = vmatmul.bf16.gmra.mxu0 %v2651
      %v3100 = vpop.f32.mrf.mxu0
      %v3101 = vadd.f32 %v3012, %v3100
      %v3102 = vpop.f32.mrf.mxu0
      %v3103 = vadd.f32 %v3014, %v3102
      %3104 = vmatmul.bf16.gmra.mxu0 %v2654
      %v3105 = vpop.f32.mrf.mxu0
      %v3106 = vadd.f32 %v3017, %v3105
      %v3107 = vpop.f32.mrf.mxu0
      %v3108 = vadd.f32 %v3019, %v3107
      %3109 = vmatmul.bf16.gmra.mxu0 %v2657
      %v3110 = vpop.f32.mrf.mxu0
      %v3111 = vadd.f32 %v3022, %v3110
      %v3112 = vpop.f32.mrf.mxu0
      %v3113 = vadd.f32 %v3024, %v3112
      %3114 = vmatmul.bf16.gmra.mxu0 %v2660
      %v3115 = vpop.f32.mrf.mxu0
      %v3116 = vadd.f32 %v3027, %v3115
      %v3117 = vpop.f32.mrf.mxu0
      %v3118 = vadd.f32 %v3029, %v3117
      %3119 = vdwg.mxu0
      %s3120 = scalar_lea.vmem [#allocation2], 48
      %v3121 = vld [vmem:[%s3120] sm:$0xff]
      %v3122 = vld [vmem:[%s3120 + $0x8] sm:$0xf]
      %v3123 = vld [vmem:[%s3120 + $0xc] sm:$0xff]
      %v3124 = vld [vmem:[%s3120 + $0x14] sm:$0xf]
      %v3125 = vld [vmem:[%s3120 + $0x18] sm:$0xff]
      %v3126 = vld [vmem:[%s3120 + $0x20] sm:$0xf]
      %v3127 = vld [vmem:[%s3120 + $0x24] sm:$0xff]
      %v3128 = vld [vmem:[%s3120 + $0x2c] sm:$0xf]
      %v3129 = vld [vmem:[%s3120 + $0x30] sm:$0xff]
      %v3130 = vld [vmem:[%s3120 + $0x38] sm:$0xf]
      %v3131 = vld [vmem:[%s3120 + $0x3c] sm:$0xff]
      %v3132 = vld [vmem:[%s3120 + $0x44] sm:$0xf]
      %v3133 = vld [vmem:[%s3120 + $0x48] sm:$0xff]
      %v3134 = vld [vmem:[%s3120 + $0x50] sm:$0xf]
      %v3135 = vld [vmem:[%s3120 + $0x54] sm:$0xff]
      %v3136 = vld [vmem:[%s3120 + $0x5c] sm:$0xf]
      %v3137 = vld [vmem:[%s3120 + $0x60] sm:$0xff]
      %v3138 = vld [vmem:[%s3120 + $0x68] sm:$0xf]
      %v3139 = vld [vmem:[%s3120 + $0x6c] sm:$0xff]
      %v3140 = vld [vmem:[%s3120 + $0x74] sm:$0xf]
      %v3141 = vld [vmem:[%s3120 + $0x78] sm:$0xff]
      %v3142 = vld [vmem:[%s3120 + $0x80] sm:$0xf]
      %v3143 = vld [vmem:[%s3120 + $0x84] sm:$0xff]
      %v3144 = vld [vmem:[%s3120 + $0x8c] sm:$0xf]
      %v3145 = vld [vmem:[%s3120 + $0x90] sm:$0xff]
      %v3146 = vld [vmem:[%s3120 + $0x98] sm:$0xf]
      %v3147 = vld [vmem:[%s3120 + $0x9c] sm:$0xff]
      %v3148 = vld [vmem:[%s3120 + $0xa4] sm:$0xf]
      %v3149 = vld [vmem:[%s3120 + $0xa8] sm:$0xff]
      %v3150 = vld [vmem:[%s3120 + $0xb0] sm:$0xf]
      %v3151 = vld [vmem:[%s3120 + $0xb4] sm:$0xff]
      %v3152 = vld [vmem:[%s3120 + $0xbc] sm:$0xf]
      %v3153 = vld [vmem:[%s3120 + $0xc0] sm:$0xff]
      %v3154 = vld [vmem:[%s3120 + $0xc8] sm:$0xf]
      %v3155 = vld [vmem:[%s3120 + $0xcc] sm:$0xff]
      %v3156 = vld [vmem:[%s3120 + $0xd4] sm:$0xf]
      %v3157 = vld [vmem:[%s3120 + $0xd8] sm:$0xff]
      %v3158 = vld [vmem:[%s3120 + $0xe0] sm:$0xf]
      %v3159 = vld [vmem:[%s3120 + $0xe4] sm:$0xff]
      %v3160 = vld [vmem:[%s3120 + $0xec] sm:$0xf]
      %v3161 = vld [vmem:[%s3120 + $0xf0] sm:$0xff]
      %v3162 = vld [vmem:[%s3120 + $0xf8] sm:$0xf]
      %v3163 = vld [vmem:[%s3120 + $0xfc] sm:$0xff]
      %v3164 = vld [vmem:[%s3120 + $0x104] sm:$0xf]
      %v3165 = vld [vmem:[%s3120 + $0x108] sm:$0xff]
      %v3166 = vld [vmem:[%s3120 + $0x110] sm:$0xf]
      %v3167 = vld [vmem:[%s3120 + $0x114] sm:$0xff]
      %v3168 = vld [vmem:[%s3120 + $0x11c] sm:$0xf]
      %v3169 = vld [vmem:[%s3120 + $0x120] sm:$0xff]
      %v3170 = vld [vmem:[%s3120 + $0x128] sm:$0xf]
      %v3171 = vld [vmem:[%s3120 + $0x12c] sm:$0xff]
      %v3172 = vld [vmem:[%s3120 + $0x134] sm:$0xf]
      %v3173 = vld [vmem:[%s3120 + $0x138] sm:$0xff]
      %v3174 = vld [vmem:[%s3120 + $0x140] sm:$0xf]
      %v3175 = vld [vmem:[%s3120 + $0x144] sm:$0xff]
      %v3176 = vld [vmem:[%s3120 + $0x14c] sm:$0xf]
      %v3177 = vld [vmem:[%s3120 + $0x150] sm:$0xff]
      %v3178 = vld [vmem:[%s3120 + $0x158] sm:$0xf]
      %v3179 = vld [vmem:[%s3120 + $0x15c] sm:$0xff]
      %v3180 = vld [vmem:[%s3120 + $0x164] sm:$0xf]
      %v3181 = vld [vmem:[%s3120 + $0x168] sm:$0xff]
      %v3182 = vld [vmem:[%s3120 + $0x170] sm:$0xf]
      %v3183 = vld [vmem:[%s3120 + $0x174] sm:$0xff]
      %v3184 = vld [vmem:[%s3120 + $0x17c] sm:$0xf]
      %s3185 = scalar_lea.vmem %s3, 384
      %v3186 = vld [vmem:[%s3185] sm:$0xf]
      %v3187 = vld [vmem:[%s3185 + $0x4] sm:$0xf]
      %v3188 = vld [vmem:[%s3185 + $0x8] sm:$0xf]
      %v3189 = vld [vmem:[%s3185 + $0xc] sm:$0xf]
      %v3190 = vld [vmem:[%s3185 + $0x10] sm:$0xf]
      %v3191 = vld [vmem:[%s3185 + $0x14] sm:$0xf]
      %v3192 = vld [vmem:[%s3185 + $0x18] sm:$0xf]
      %v3193 = vld [vmem:[%s3185 + $0x1c] sm:$0xf]
      %v3194 = vld [vmem:[%s3185 + $0x20] sm:$0xf]
      %v3195 = vld [vmem:[%s3185 + $0x24] sm:$0xf]
      %v3196 = vld [vmem:[%s3185 + $0x28] sm:$0xf]
      %v3197 = vld [vmem:[%s3185 + $0x2c] sm:$0xf]
      %v3198 = vld [vmem:[%s3185 + $0x30] sm:$0xf]
      %v3199 = vld [vmem:[%s3185 + $0x34] sm:$0xf]
      %v3200 = vld [vmem:[%s3185 + $0x38] sm:$0xf]
      %v3201 = vld [vmem:[%s3185 + $0x3c] sm:$0xf]
      %v3202 = vld [vmem:[%s3185 + $0x40] sm:$0xf]
      %v3203 = vld [vmem:[%s3185 + $0x44] sm:$0xf]
      %v3204 = vld [vmem:[%s3185 + $0x48] sm:$0xf]
      %v3205 = vld [vmem:[%s3185 + $0x4c] sm:$0xf]
      %v3206 = vld [vmem:[%s3185 + $0x50] sm:$0xf]
      %v3207 = vld [vmem:[%s3185 + $0x54] sm:$0xf]
      %v3208 = vld [vmem:[%s3185 + $0x58] sm:$0xf]
      %v3209 = vld [vmem:[%s3185 + $0x5c] sm:$0xf]
      %v3210 = vld [vmem:[%s3185 + $0x60] sm:$0xf]
      %v3211 = vld [vmem:[%s3185 + $0x64] sm:$0xf]
      %v3212 = vld [vmem:[%s3185 + $0x68] sm:$0xf]
      %v3213 = vld [vmem:[%s3185 + $0x6c] sm:$0xf]
      %v3214 = vld [vmem:[%s3185 + $0x70] sm:$0xf]
      %v3215 = vld [vmem:[%s3185 + $0x74] sm:$0xf]
      %v3216 = vld [vmem:[%s3185 + $0x78] sm:$0xf]
      %v3217 = vld [vmem:[%s3185 + $0x7c] sm:$0xf]
      %v3218 = vld [vmem:[%s3185 + $0x80] sm:$0xf]
      %v3219 = vld [vmem:[%s3185 + $0x84] sm:$0xf]
      %v3220 = vld [vmem:[%s3185 + $0x88] sm:$0xf]
      %v3221 = vld [vmem:[%s3185 + $0x8c] sm:$0xf]
      %v3222 = vld [vmem:[%s3185 + $0x90] sm:$0xf]
      %v3223 = vld [vmem:[%s3185 + $0x94] sm:$0xf]
      %v3224 = vld [vmem:[%s3185 + $0x98] sm:$0xf]
      %v3225 = vld [vmem:[%s3185 + $0x9c] sm:$0xf]
      %v3226 = vld [vmem:[%s3185 + $0xa0] sm:$0xf]
      %v3227 = vld [vmem:[%s3185 + $0xa4] sm:$0xf]
      %v3228 = vld [vmem:[%s3185 + $0xa8] sm:$0xf]
      %v3229 = vld [vmem:[%s3185 + $0xac] sm:$0xf]
      %v3230 = vld [vmem:[%s3185 + $0xb0] sm:$0xf]
      %v3231 = vld [vmem:[%s3185 + $0xb4] sm:$0xf]
      %v3232 = vld [vmem:[%s3185 + $0xb8] sm:$0xf]
      %v3233 = vld [vmem:[%s3185 + $0xbc] sm:$0xf]
      %v3298 = vunpack.c.l.b16 %v3121
      %v3299 = vunpack.c.h.b16 %v3121
      %v3300 = vunpack.c.l.b16 %v3122
      %v3301 = vunpack.c.l.b16 %v3123
      %v3302 = vunpack.c.h.b16 %v3123
      %v3303 = vunpack.c.l.b16 %v3124
      %v3304 = vunpack.c.l.b16 %v3125
      %v3305 = vunpack.c.h.b16 %v3125
      %v3306 = vunpack.c.l.b16 %v3126
      %v3307 = vunpack.c.l.b16 %v3127
      %v3308 = vunpack.c.h.b16 %v3127
      %v3309 = vunpack.c.l.b16 %v3128
      %v3310 = vunpack.c.l.b16 %v3129
      %v3311 = vunpack.c.h.b16 %v3129
      %v3312 = vunpack.c.l.b16 %v3130
      %v3313 = vunpack.c.l.b16 %v3131
      %v3314 = vunpack.c.h.b16 %v3131
      %v3315 = vunpack.c.l.b16 %v3132
      %v3316 = vunpack.c.l.b16 %v3133
      %v3317 = vunpack.c.h.b16 %v3133
      %v3318 = vunpack.c.l.b16 %v3134
      %v3319 = vunpack.c.l.b16 %v3135
      %v3320 = vunpack.c.h.b16 %v3135
      %v3321 = vunpack.c.l.b16 %v3136
      %v3322 = vunpack.c.l.b16 %v3137
      %v3323 = vunpack.c.h.b16 %v3137
      %v3324 = vunpack.c.l.b16 %v3138
      %v3325 = vunpack.c.l.b16 %v3139
      %v3326 = vunpack.c.h.b16 %v3139
      %v3327 = vunpack.c.l.b16 %v3140
      %v3328 = vunpack.c.l.b16 %v3141
      %v3329 = vunpack.c.h.b16 %v3141
      %v3330 = vunpack.c.l.b16 %v3142
      %v3331 = vunpack.c.l.b16 %v3143
      %v3332 = vunpack.c.h.b16 %v3143
      %v3333 = vunpack.c.l.b16 %v3144
      %v3334 = vunpack.c.l.b16 %v3145
      %v3335 = vunpack.c.h.b16 %v3145
      %v3336 = vunpack.c.l.b16 %v3146
      %v3337 = vunpack.c.l.b16 %v3147
      %v3338 = vunpack.c.h.b16 %v3147
      %v3339 = vunpack.c.l.b16 %v3148
      %v3340 = vunpack.c.l.b16 %v3149
      %v3341 = vunpack.c.h.b16 %v3149
      %v3342 = vunpack.c.l.b16 %v3150
      %v3343 = vunpack.c.l.b16 %v3151
      %v3344 = vunpack.c.h.b16 %v3151
      %v3345 = vunpack.c.l.b16 %v3152
      %v3346 = vunpack.c.l.b16 %v3153
      %v3347 = vunpack.c.h.b16 %v3153
      %v3348 = vunpack.c.l.b16 %v3154
      %v3349 = vunpack.c.l.b16 %v3155
      %v3350 = vunpack.c.h.b16 %v3155
      %v3351 = vunpack.c.l.b16 %v3156
      %v3352 = vunpack.c.l.b16 %v3157
      %v3353 = vunpack.c.h.b16 %v3157
      %v3354 = vunpack.c.l.b16 %v3158
      %v3355 = vunpack.c.l.b16 %v3159
      %v3356 = vunpack.c.h.b16 %v3159
      %v3357 = vunpack.c.l.b16 %v3160
      %v3358 = vunpack.c.l.b16 %v3161
      %v3359 = vunpack.c.h.b16 %v3161
      %v3360 = vunpack.c.l.b16 %v3162
      %v3361 = vunpack.c.l.b16 %v3163
      %v3362 = vunpack.c.h.b16 %v3163
      %v3363 = vunpack.c.l.b16 %v3164
      %v3364 = vunpack.c.l.b16 %v3165
      %v3365 = vunpack.c.h.b16 %v3165
      %v3366 = vunpack.c.l.b16 %v3166
      %v3367 = vunpack.c.l.b16 %v3167
      %v3368 = vunpack.c.h.b16 %v3167
      %v3369 = vunpack.c.l.b16 %v3168
      %v3370 = vunpack.c.l.b16 %v3169
      %v3371 = vunpack.c.h.b16 %v3169
      %v3372 = vunpack.c.l.b16 %v3170
      %v3373 = vunpack.c.l.b16 %v3171
      %v3374 = vunpack.c.h.b16 %v3171
      %v3375 = vunpack.c.l.b16 %v3172
      %v3376 = vunpack.c.l.b16 %v3173
      %v3377 = vunpack.c.h.b16 %v3173
      %v3378 = vunpack.c.l.b16 %v3174
      %v3379 = vunpack.c.l.b16 %v3175
      %v3380 = vunpack.c.h.b16 %v3175
      %v3381 = vunpack.c.l.b16 %v3176
      %v3382 = vunpack.c.l.b16 %v3177
      %v3383 = vunpack.c.h.b16 %v3177
      %v3384 = vunpack.c.l.b16 %v3178
      %v3385 = vunpack.c.l.b16 %v3179
      %v3386 = vunpack.c.h.b16 %v3179
      %v3387 = vunpack.c.l.b16 %v3180
      %v3388 = vunpack.c.l.b16 %v3181
      %v3389 = vunpack.c.h.b16 %v3181
      %v3390 = vunpack.c.l.b16 %v3182
      %v3391 = vunpack.c.l.b16 %v3183
      %v3392 = vunpack.c.h.b16 %v3183
      %v3393 = vunpack.c.l.b16 %v3184
      %v3394 = vpack.c.b16 %v3301, %v3298
      %v3395 = vpack.c.b16 %v3302, %v3299
      %v3396 = vpack.c.b16 %v3303, %v3300
      %v3397 = vpack.c.b16 %v3307, %v3304
      %v3398 = vpack.c.b16 %v3308, %v3305
      %v3399 = vpack.c.b16 %v3309, %v3306
      %v3400 = vpack.c.b16 %v3313, %v3310
      %v3401 = vpack.c.b16 %v3314, %v3311
      %v3402 = vpack.c.b16 %v3315, %v3312
      %v3403 = vpack.c.b16 %v3319, %v3316
      %v3404 = vpack.c.b16 %v3320, %v3317
      %v3405 = vpack.c.b16 %v3321, %v3318
      %v3406 = vpack.c.b16 %v3325, %v3322
      %v3407 = vpack.c.b16 %v3326, %v3323
      %v3408 = vpack.c.b16 %v3327, %v3324
      %v3409 = vpack.c.b16 %v3331, %v3328
      %v3410 = vpack.c.b16 %v3332, %v3329
      %v3411 = vpack.c.b16 %v3333, %v3330
      %v3412 = vpack.c.b16 %v3337, %v3334
      %v3413 = vpack.c.b16 %v3338, %v3335
      %v3414 = vpack.c.b16 %v3339, %v3336
      %v3415 = vpack.c.b16 %v3343, %v3340
      %v3416 = vpack.c.b16 %v3344, %v3341
      %v3417 = vpack.c.b16 %v3345, %v3342
      %v3418 = vpack.c.b16 %v3349, %v3346
      %v3419 = vpack.c.b16 %v3350, %v3347
      %v3420 = vpack.c.b16 %v3351, %v3348
      %v3421 = vpack.c.b16 %v3355, %v3352
      %v3422 = vpack.c.b16 %v3356, %v3353
      %v3423 = vpack.c.b16 %v3357, %v3354
      %v3424 = vpack.c.b16 %v3361, %v3358
      %v3425 = vpack.c.b16 %v3362, %v3359
      %v3426 = vpack.c.b16 %v3363, %v3360
      %v3427 = vpack.c.b16 %v3367, %v3364
      %v3428 = vpack.c.b16 %v3368, %v3365
      %v3429 = vpack.c.b16 %v3369, %v3366
      %v3430 = vpack.c.b16 %v3373, %v3370
      %v3431 = vpack.c.b16 %v3374, %v3371
      %v3432 = vpack.c.b16 %v3375, %v3372
      %v3433 = vpack.c.b16 %v3379, %v3376
      %v3434 = vpack.c.b16 %v3380, %v3377
      %v3435 = vpack.c.b16 %v3381, %v3378
      %v3436 = vpack.c.b16 %v3385, %v3382
      %v3437 = vpack.c.b16 %v3386, %v3383
      %v3438 = vpack.c.b16 %v3387, %v3384
      %v3439 = vpack.c.b16 %v3391, %v3388
      %v3440 = vpack.c.b16 %v3392, %v3389
      %v3441 = vpack.c.b16 %v3393, %v3390
      %v3538 = vunpack.c.l.b16 %v3186
      %v3539 = vunpack.c.l.b16 %v3187
      %v3540 = vunpack.c.l.b16 %v3188
      %v3541 = vunpack.c.l.b16 %v3189
      %v3542 = vunpack.c.l.b16 %v3190
      %v3543 = vunpack.c.l.b16 %v3191
      %v3544 = vunpack.c.l.b16 %v3192
      %v3545 = vunpack.c.l.b16 %v3193
      %v3546 = vunpack.c.l.b16 %v3194
      %v3547 = vunpack.c.l.b16 %v3195
      %v3548 = vunpack.c.l.b16 %v3196
      %v3549 = vunpack.c.l.b16 %v3197
      %v3550 = vunpack.c.l.b16 %v3198
      %v3551 = vunpack.c.l.b16 %v3199
      %v3552 = vunpack.c.l.b16 %v3200
      %v3553 = vunpack.c.l.b16 %v3201
      %v3554 = vunpack.c.l.b16 %v3202
      %v3555 = vunpack.c.l.b16 %v3203
      %v3556 = vunpack.c.l.b16 %v3204
      %v3557 = vunpack.c.l.b16 %v3205
      %v3558 = vunpack.c.l.b16 %v3206
      %v3559 = vunpack.c.l.b16 %v3207
      %v3560 = vunpack.c.l.b16 %v3208
      %v3561 = vunpack.c.l.b16 %v3209
      %v3562 = vunpack.c.l.b16 %v3210
      %v3563 = vunpack.c.l.b16 %v3211
      %v3564 = vunpack.c.l.b16 %v3212
      %v3565 = vunpack.c.l.b16 %v3213
      %v3566 = vunpack.c.l.b16 %v3214
      %v3567 = vunpack.c.l.b16 %v3215
      %v3568 = vunpack.c.l.b16 %v3216
      %v3569 = vunpack.c.l.b16 %v3217
      %v3570 = vunpack.c.l.b16 %v3218
      %v3571 = vunpack.c.l.b16 %v3219
      %v3572 = vunpack.c.l.b16 %v3220
      %v3573 = vunpack.c.l.b16 %v3221
      %v3574 = vunpack.c.l.b16 %v3222
      %v3575 = vunpack.c.l.b16 %v3223
      %v3576 = vunpack.c.l.b16 %v3224
      %v3577 = vunpack.c.l.b16 %v3225
      %v3578 = vunpack.c.l.b16 %v3226
      %v3579 = vunpack.c.l.b16 %v3227
      %v3580 = vunpack.c.l.b16 %v3228
      %v3581 = vunpack.c.l.b16 %v3229
      %v3582 = vunpack.c.l.b16 %v3230
      %v3583 = vunpack.c.l.b16 %v3231
      %v3584 = vunpack.c.l.b16 %v3232
      %v3585 = vunpack.c.l.b16 %v3233
      %v3586 = vpack.c.b16 %v3539, %v3538
      %v3587 = vpack.c.b16 %v3541, %v3540
      %v3588 = vpack.c.b16 %v3543, %v3542
      %v3589 = vpack.c.b16 %v3545, %v3544
      %v3590 = vpack.c.b16 %v3547, %v3546
      %v3591 = vpack.c.b16 %v3549, %v3548
      %v3592 = vpack.c.b16 %v3551, %v3550
      %v3593 = vpack.c.b16 %v3553, %v3552
      %v3594 = vpack.c.b16 %v3555, %v3554
      %v3595 = vpack.c.b16 %v3557, %v3556
      %v3596 = vpack.c.b16 %v3559, %v3558
      %v3597 = vpack.c.b16 %v3561, %v3560
      %v3598 = vpack.c.b16 %v3563, %v3562
      %v3599 = vpack.c.b16 %v3565, %v3564
      %v3600 = vpack.c.b16 %v3567, %v3566
      %v3601 = vpack.c.b16 %v3569, %v3568
      %v3602 = vpack.c.b16 %v3571, %v3570
      %v3603 = vpack.c.b16 %v3573, %v3572
      %v3604 = vpack.c.b16 %v3575, %v3574
      %v3605 = vpack.c.b16 %v3577, %v3576
      %v3606 = vpack.c.b16 %v3579, %v3578
      %v3607 = vpack.c.b16 %v3581, %v3580
      %v3608 = vpack.c.b16 %v3583, %v3582
      %v3609 = vpack.c.b16 %v3585, %v3584
      %3634 = vmatpush.bf16.msra.mxu0 %v3593
      %3635 = vmatpush.bf16.msra.mxu0 %v3592
      %3636 = vmatpush.bf16.msra.mxu0 %v3591
      %3637 = vmatpush.bf16.msra.mxu0 %v3590
      %3638 = vmatpush.bf16.msra.mxu0 %v3589
      %3639 = vmatpush.bf16.msra.mxu0 %v3588
      %3640 = vmatpush.bf16.msra.mxu0 %v3587
      %3641 = vmatpush.bf16.msra.mxu0 %v3586
      %3642 = vmatmul.bf16.gmra.mxu0 %v3394
      %v3643 = vpop.f32.mrf.mxu0
      %v3644 = vadd.f32 0.0, %v3643
      %v3645 = vpop.f32.mrf.mxu0
      %v3646 = vadd.f32 0.0, %v3645
      %3647 = vmatmul.bf16.gmra.mxu0 %v3397
      %v3648 = vpop.f32.mrf.mxu0
      %v3649 = vadd.f32 0.0, %v3648
      %v3650 = vpop.f32.mrf.mxu0
      %v3651 = vadd.f32 0.0, %v3650
      %3652 = vmatmul.bf16.gmra.mxu0 %v3400
      %v3653 = vpop.f32.mrf.mxu0
      %v3654 = vadd.f32 0.0, %v3653
      %v3655 = vpop.f32.mrf.mxu0
      %v3656 = vadd.f32 0.0, %v3655
      %3657 = vmatmul.bf16.gmra.mxu0 %v3403
      %v3658 = vpop.f32.mrf.mxu0
      %v3659 = vadd.f32 0.0, %v3658
      %v3660 = vpop.f32.mrf.mxu0
      %v3661 = vadd.f32 0.0, %v3660
      %3662 = vmatmul.bf16.gmra.mxu0 %v3406
      %v3663 = vpop.f32.mrf.mxu0
      %v3664 = vadd.f32 0.0, %v3663
      %v3665 = vpop.f32.mrf.mxu0
      %v3666 = vadd.f32 0.0, %v3665
      %3667 = vmatmul.bf16.gmra.mxu0 %v3409
      %v3668 = vpop.f32.mrf.mxu0
      %v3669 = vadd.f32 0.0, %v3668
      %v3670 = vpop.f32.mrf.mxu0
      %v3671 = vadd.f32 0.0, %v3670
      %3672 = vmatmul.bf16.gmra.mxu0 %v3412
      %v3673 = vpop.f32.mrf.mxu0
      %v3674 = vadd.f32 0.0, %v3673
      %v3675 = vpop.f32.mrf.mxu0
      %v3676 = vadd.f32 0.0, %v3675
      %3677 = vmatmul.bf16.gmra.mxu0 %v3415
      %v3678 = vpop.f32.mrf.mxu0
      %v3679 = vadd.f32 0.0, %v3678
      %v3680 = vpop.f32.mrf.mxu0
      %v3681 = vadd.f32 0.0, %v3680
      %3682 = vmatmul.bf16.gmra.mxu0 %v3418
      %v3683 = vpop.f32.mrf.mxu0
      %v3684 = vadd.f32 0.0, %v3683
      %v3685 = vpop.f32.mrf.mxu0
      %v3686 = vadd.f32 0.0, %v3685
      %3687 = vmatmul.bf16.gmra.mxu0 %v3421
      %v3688 = vpop.f32.mrf.mxu0
      %v3689 = vadd.f32 0.0, %v3688
      %v3690 = vpop.f32.mrf.mxu0
      %v3691 = vadd.f32 0.0, %v3690
      %3692 = vmatmul.bf16.gmra.mxu0 %v3424
      %v3693 = vpop.f32.mrf.mxu0
      %v3694 = vadd.f32 0.0, %v3693
      %v3695 = vpop.f32.mrf.mxu0
      %v3696 = vadd.f32 0.0, %v3695
      %3697 = vmatmul.bf16.gmra.mxu0 %v3427
      %v3698 = vpop.f32.mrf.mxu0
      %v3699 = vadd.f32 0.0, %v3698
      %v3700 = vpop.f32.mrf.mxu0
      %v3701 = vadd.f32 0.0, %v3700
      %3702 = vmatmul.bf16.gmra.mxu0 %v3430
      %v3703 = vpop.f32.mrf.mxu0
      %v3704 = vadd.f32 0.0, %v3703
      %v3705 = vpop.f32.mrf.mxu0
      %v3706 = vadd.f32 0.0, %v3705
      %3707 = vmatmul.bf16.gmra.mxu0 %v3433
      %v3708 = vpop.f32.mrf.mxu0
      %v3709 = vadd.f32 0.0, %v3708
      %v3710 = vpop.f32.mrf.mxu0
      %v3711 = vadd.f32 0.0, %v3710
      %3712 = vmatmul.bf16.gmra.mxu0 %v3436
      %v3713 = vpop.f32.mrf.mxu0
      %v3714 = vadd.f32 0.0, %v3713
      %v3715 = vpop.f32.mrf.mxu0
      %v3716 = vadd.f32 0.0, %v3715
      %3717 = vmatmul.bf16.gmra.mxu0 %v3439
      %v3718 = vpop.f32.mrf.mxu0
      %v3719 = vadd.f32 0.0, %v3718
      %v3720 = vpop.f32.mrf.mxu0
      %v3721 = vadd.f32 0.0, %v3720
      %3722 = vdwg.mxu0
      %3723 = vmatpush.bf16.msra.mxu0 %v3601
      %3724 = vmatpush.bf16.msra.mxu0 %v3600
      %3725 = vmatpush.bf16.msra.mxu0 %v3599
      %3726 = vmatpush.bf16.msra.mxu0 %v3598
      %3727 = vmatpush.bf16.msra.mxu0 %v3597
      %3728 = vmatpush.bf16.msra.mxu0 %v3596
      %3729 = vmatpush.bf16.msra.mxu0 %v3595
      %3730 = vmatpush.bf16.msra.mxu0 %v3594
      %3731 = vmatmul.bf16.gmra.mxu0 %v3395
      %v3732 = vpop.f32.mrf.mxu0
      %v3733 = vadd.f32 %v3644, %v3732
      %v3734 = vpop.f32.mrf.mxu0
      %v3735 = vadd.f32 %v3646, %v3734
      %3736 = vmatmul.bf16.gmra.mxu0 %v3398
      %v3737 = vpop.f32.mrf.mxu0
      %v3738 = vadd.f32 %v3649, %v3737
      %v3739 = vpop.f32.mrf.mxu0
      %v3740 = vadd.f32 %v3651, %v3739
      %3741 = vmatmul.bf16.gmra.mxu0 %v3401
      %v3742 = vpop.f32.mrf.mxu0
      %v3743 = vadd.f32 %v3654, %v3742
      %v3744 = vpop.f32.mrf.mxu0
      %v3745 = vadd.f32 %v3656, %v3744
      %3746 = vmatmul.bf16.gmra.mxu0 %v3404
      %v3747 = vpop.f32.mrf.mxu0
      %v3748 = vadd.f32 %v3659, %v3747
      %v3749 = vpop.f32.mrf.mxu0
      %v3750 = vadd.f32 %v3661, %v3749
      %3751 = vmatmul.bf16.gmra.mxu0 %v3407
      %v3752 = vpop.f32.mrf.mxu0
      %v3753 = vadd.f32 %v3664, %v3752
      %v3754 = vpop.f32.mrf.mxu0
      %v3755 = vadd.f32 %v3666, %v3754
      %3756 = vmatmul.bf16.gmra.mxu0 %v3410
      %v3757 = vpop.f32.mrf.mxu0
      %v3758 = vadd.f32 %v3669, %v3757
      %v3759 = vpop.f32.mrf.mxu0
      %v3760 = vadd.f32 %v3671, %v3759
      %3761 = vmatmul.bf16.gmra.mxu0 %v3413
      %v3762 = vpop.f32.mrf.mxu0
      %v3763 = vadd.f32 %v3674, %v3762
      %v3764 = vpop.f32.mrf.mxu0
      %v3765 = vadd.f32 %v3676, %v3764
      %3766 = vmatmul.bf16.gmra.mxu0 %v3416
      %v3767 = vpop.f32.mrf.mxu0
      %v3768 = vadd.f32 %v3679, %v3767
      %v3769 = vpop.f32.mrf.mxu0
      %v3770 = vadd.f32 %v3681, %v3769
      %3771 = vmatmul.bf16.gmra.mxu0 %v3419
      %v3772 = vpop.f32.mrf.mxu0
      %v3773 = vadd.f32 %v3684, %v3772
      %v3774 = vpop.f32.mrf.mxu0
      %v3775 = vadd.f32 %v3686, %v3774
      %3776 = vmatmul.bf16.gmra.mxu0 %v3422
      %v3777 = vpop.f32.mrf.mxu0
      %v3778 = vadd.f32 %v3689, %v3777
      %v3779 = vpop.f32.mrf.mxu0
      %v3780 = vadd.f32 %v3691, %v3779
      %3781 = vmatmul.bf16.gmra.mxu0 %v3425
      %v3782 = vpop.f32.mrf.mxu0
      %v3783 = vadd.f32 %v3694, %v3782
      %v3784 = vpop.f32.mrf.mxu0
      %v3785 = vadd.f32 %v3696, %v3784
      %3786 = vmatmul.bf16.gmra.mxu0 %v3428
      %v3787 = vpop.f32.mrf.mxu0
      %v3788 = vadd.f32 %v3699, %v3787
      %v3789 = vpop.f32.mrf.mxu0
      %v3790 = vadd.f32 %v3701, %v3789
      %3791 = vmatmul.bf16.gmra.mxu0 %v3431
      %v3792 = vpop.f32.mrf.mxu0
      %v3793 = vadd.f32 %v3704, %v3792
      %v3794 = vpop.f32.mrf.mxu0
      %v3795 = vadd.f32 %v3706, %v3794
      %3796 = vmatmul.bf16.gmra.mxu0 %v3434
      %v3797 = vpop.f32.mrf.mxu0
      %v3798 = vadd.f32 %v3709, %v3797
      %v3799 = vpop.f32.mrf.mxu0
      %v3800 = vadd.f32 %v3711, %v3799
      %3801 = vmatmul.bf16.gmra.mxu0 %v3437
      %v3802 = vpop.f32.mrf.mxu0
      %v3803 = vadd.f32 %v3714, %v3802
      %v3804 = vpop.f32.mrf.mxu0
      %v3805 = vadd.f32 %v3716, %v3804
      %3806 = vmatmul.bf16.gmra.mxu0 %v3440
      %v3807 = vpop.f32.mrf.mxu0
      %v3808 = vadd.f32 %v3719, %v3807
      %v3809 = vpop.f32.mrf.mxu0
      %v3810 = vadd.f32 %v3721, %v3809
      %3811 = vdwg.mxu0
      %3812 = vmatpush.bf16.msra.mxu0 %v3609
      %3813 = vmatpush.bf16.msra.mxu0 %v3608
      %3814 = vmatpush.bf16.msra.mxu0 %v3607
      %3815 = vmatpush.bf16.msra.mxu0 %v3606
      %3816 = vmatpush.bf16.msra.mxu0 %v3605
      %3817 = vmatpush.bf16.msra.mxu0 %v3604
      %3818 = vmatpush.bf16.msra.mxu0 %v3603
      %3819 = vmatpush.bf16.msra.mxu0 %v3602
      %3820 = vmatmul.bf16.gmra.mxu0 %v3396
      %v3821 = vpop.f32.mrf.mxu0
      %v3822 = vadd.f32 %v3733, %v3821
      %v3823 = vpop.f32.mrf.mxu0
      %v3824 = vadd.f32 %v3735, %v3823
      %3825 = vmatmul.bf16.gmra.mxu0 %v3399
      %v3826 = vpop.f32.mrf.mxu0
      %v3827 = vadd.f32 %v3738, %v3826
      %v3828 = vpop.f32.mrf.mxu0
      %v3829 = vadd.f32 %v3740, %v3828
      %3830 = vmatmul.bf16.gmra.mxu0 %v3402
      %v3831 = vpop.f32.mrf.mxu0
      %v3832 = vadd.f32 %v3743, %v3831
      %v3833 = vpop.f32.mrf.mxu0
      %v3834 = vadd.f32 %v3745, %v3833
      %3835 = vmatmul.bf16.gmra.mxu0 %v3405
      %v3836 = vpop.f32.mrf.mxu0
      %v3837 = vadd.f32 %v3748, %v3836
      %v3838 = vpop.f32.mrf.mxu0
      %v3839 = vadd.f32 %v3750, %v3838
      %3840 = vmatmul.bf16.gmra.mxu0 %v3408
      %v3841 = vpop.f32.mrf.mxu0
      %v3842 = vadd.f32 %v3753, %v3841
      %v3843 = vpop.f32.mrf.mxu0
      %v3844 = vadd.f32 %v3755, %v3843
      %3845 = vmatmul.bf16.gmra.mxu0 %v3411
      %v3846 = vpop.f32.mrf.mxu0
      %v3847 = vadd.f32 %v3758, %v3846
      %v3848 = vpop.f32.mrf.mxu0
      %v3849 = vadd.f32 %v3760, %v3848
      %3850 = vmatmul.bf16.gmra.mxu0 %v3414
      %v3851 = vpop.f32.mrf.mxu0
      %v3852 = vadd.f32 %v3763, %v3851
      %v3853 = vpop.f32.mrf.mxu0
      %v3854 = vadd.f32 %v3765, %v3853
      %3855 = vmatmul.bf16.gmra.mxu0 %v3417
      %v3856 = vpop.f32.mrf.mxu0
      %v3857 = vadd.f32 %v3768, %v3856
      %v3858 = vpop.f32.mrf.mxu0
      %v3859 = vadd.f32 %v3770, %v3858
      %3860 = vmatmul.bf16.gmra.mxu0 %v3420
      %v3861 = vpop.f32.mrf.mxu0
      %v3862 = vadd.f32 %v3773, %v3861
      %v3863 = vpop.f32.mrf.mxu0
      %v3864 = vadd.f32 %v3775, %v3863
      %3865 = vmatmul.bf16.gmra.mxu0 %v3423
      %v3866 = vpop.f32.mrf.mxu0
      %v3867 = vadd.f32 %v3778, %v3866
      %v3868 = vpop.f32.mrf.mxu0
      %v3869 = vadd.f32 %v3780, %v3868
      %3870 = vmatmul.bf16.gmra.mxu0 %v3426
      %v3871 = vpop.f32.mrf.mxu0
      %v3872 = vadd.f32 %v3783, %v3871
      %v3873 = vpop.f32.mrf.mxu0
      %v3874 = vadd.f32 %v3785, %v3873
      %3875 = vmatmul.bf16.gmra.mxu0 %v3429
      %v3876 = vpop.f32.mrf.mxu0
      %v3877 = vadd.f32 %v3788, %v3876
      %v3878 = vpop.f32.mrf.mxu0
      %v3879 = vadd.f32 %v3790, %v3878
      %3880 = vmatmul.bf16.gmra.mxu0 %v3432
      %v3881 = vpop.f32.mrf.mxu0
      %v3882 = vadd.f32 %v3793, %v3881
      %v3883 = vpop.f32.mrf.mxu0
      %v3884 = vadd.f32 %v3795, %v3883
      %3885 = vmatmul.bf16.gmra.mxu0 %v3435
      %v3886 = vpop.f32.mrf.mxu0
      %v3887 = vadd.f32 %v3798, %v3886
      %v3888 = vpop.f32.mrf.mxu0
      %v3889 = vadd.f32 %v3800, %v3888
      %3890 = vmatmul.bf16.gmra.mxu0 %v3438
      %v3891 = vpop.f32.mrf.mxu0
      %v3892 = vadd.f32 %v3803, %v3891
      %v3893 = vpop.f32.mrf.mxu0
      %v3894 = vadd.f32 %v3805, %v3893
      %3895 = vmatmul.bf16.gmra.mxu0 %v3441
      %v3896 = vpop.f32.mrf.mxu0
      %v3897 = vadd.f32 %v3808, %v3896
      %v3898 = vpop.f32.mrf.mxu0
      %v3899 = vadd.f32 %v3810, %v3898
      %3900 = vdwg.mxu0
      %v3901 = vadd.f32 %v3041, %v3822
      %v3902 = vadd.f32 %v3043, %v3824
      %v3903 = vadd.f32 %v3046, %v3827
      %v3904 = vadd.f32 %v3048, %v3829
      %v3905 = vadd.f32 %v3051, %v3832
      %v3906 = vadd.f32 %v3053, %v3834
      %v3907 = vadd.f32 %v3056, %v3837
      %v3908 = vadd.f32 %v3058, %v3839
      %v3909 = vadd.f32 %v3061, %v3842
      %v3910 = vadd.f32 %v3063, %v3844
      %v3911 = vadd.f32 %v3066, %v3847
      %v3912 = vadd.f32 %v3068, %v3849
      %v3913 = vadd.f32 %v3071, %v3852
      %v3914 = vadd.f32 %v3073, %v3854
      %v3915 = vadd.f32 %v3076, %v3857
      %v3916 = vadd.f32 %v3078, %v3859
      %v3917 = vadd.f32 %v3081, %v3862
      %v3918 = vadd.f32 %v3083, %v3864
      %v3919 = vadd.f32 %v3086, %v3867
      %v3920 = vadd.f32 %v3088, %v3869
      %v3921 = vadd.f32 %v3091, %v3872
      %v3922 = vadd.f32 %v3093, %v3874
      %v3923 = vadd.f32 %v3096, %v3877
      %v3924 = vadd.f32 %v3098, %v3879
      %v3925 = vadd.f32 %v3101, %v3882
      %v3926 = vadd.f32 %v3103, %v3884
      %v3927 = vadd.f32 %v3106, %v3887
      %v3928 = vadd.f32 %v3108, %v3889
      %v3929 = vadd.f32 %v3111, %v3892
      %v3930 = vadd.f32 %v3113, %v3894
      %v3931 = vadd.f32 %v3116, %v3897
      %v3932 = vadd.f32 %v3118, %v3899
      %v3933 = vadd.f32 %v3901, %v3902
      %v3934 = vadd.f32 %v3933, %v3903
      %v3935 = vadd.f32 %v3934, %v3904
      %v3936 = vadd.f32 %v3935, %v3905
      %v3937 = vadd.f32 %v3936, %v3906
      %v3938 = vadd.f32 %v3937, %v3907
      %v3939 = vadd.f32 %v3938, %v3908
      %v3940 = vadd.f32 %v3939, %v3909
      %v3941 = vadd.f32 %v3940, %v3910
      %v3942 = vadd.f32 %v3941, %v3911
      %v3943 = vadd.f32 %v3942, %v3912
      %v3944 = vadd.f32 %v3943, %v3913
      %v3945 = vadd.f32 %v3944, %v3914
      %v3946 = vadd.f32 %v3945, %v3915
      %v3947 = vadd.f32 %v3946, %v3916
      %v3948 = vadd.f32 %v3947, %v3917
      %v3949 = vadd.f32 %v3948, %v3918
      %v3950 = vadd.f32 %v3949, %v3919
      %v3951 = vadd.f32 %v3950, %v3920
      %v3952 = vadd.f32 %v3951, %v3921
      %v3953 = vadd.f32 %v3952, %v3922
      %v3954 = vadd.f32 %v3953, %v3923
      %v3955 = vadd.f32 %v3954, %v3924
      %v3956 = vadd.f32 %v3955, %v3925
      %v3957 = vadd.f32 %v3956, %v3926
      %v3958 = vadd.f32 %v3957, %v3927
      %v3959 = vadd.f32 %v3958, %v3928
      %v3960 = vadd.f32 %v3959, %v3929
      %v3961 = vadd.f32 %v3960, %v3930
      %v3962 = vadd.f32 %v3961, %v3931
      %v3963 = vadd.f32 %v3962, %v3932
      %v3964 = vrot.slane %v3963, 4
      %v3965 = vadd.f32 %v3963, %v3964
      %v3966 = vrot.slane %v3965, 2
      %v3967 = vadd.f32 %v3965, %v3966
      %v3968 = vrot.slane %v3967, 1
      %v3969 = vadd.f32 %v3967, %v3968
      %3970 = vst [vmem:[%s265] sm:$0x1] %v3969
      %v3971 = vmul.f32 %v3901, %v3901
      %v3972 = vmul.f32 %v3902, %v3902
      %v3973 = vmul.f32 %v3903, %v3903
      %v3974 = vmul.f32 %v3904, %v3904
      %v3975 = vmul.f32 %v3905, %v3905
      %v3976 = vmul.f32 %v3906, %v3906
      %v3977 = vmul.f32 %v3907, %v3907
      %v3978 = vmul.f32 %v3908, %v3908
      %v3979 = vmul.f32 %v3909, %v3909
      %v3980 = vmul.f32 %v3910, %v3910
      %v3981 = vmul.f32 %v3911, %v3911
      %v3982 = vmul.f32 %v3912, %v3912
      %v3983 = vmul.f32 %v3913, %v3913
      %v3984 = vmul.f32 %v3914, %v3914
      %v3985 = vmul.f32 %v3915, %v3915
      %v3986 = vmul.f32 %v3916, %v3916
      %v3987 = vmul.f32 %v3917, %v3917
      %v3988 = vmul.f32 %v3918, %v3918
      %v3989 = vmul.f32 %v3919, %v3919
      %v3990 = vmul.f32 %v3920, %v3920
      %v3991 = vmul.f32 %v3921, %v3921
      %v3992 = vmul.f32 %v3922, %v3922
      %v3993 = vmul.f32 %v3923, %v3923
      %v3994 = vmul.f32 %v3924, %v3924
      %v3995 = vmul.f32 %v3925, %v3925
      %v3996 = vmul.f32 %v3926, %v3926
      %v3997 = vmul.f32 %v3927, %v3927
      %v3998 = vmul.f32 %v3928, %v3928
      %v3999 = vmul.f32 %v3929, %v3929
      %v4000 = vmul.f32 %v3930, %v3930
      %v4001 = vmul.f32 %v3931, %v3931
      %v4002 = vmul.f32 %v3932, %v3932
      %v4003 = vadd.f32 %v3971, %v3972
      %v4004 = vadd.f32 %v4003, %v3973
      %v4005 = vadd.f32 %v4004, %v3974
      %v4006 = vadd.f32 %v4005, %v3975
      %v4007 = vadd.f32 %v4006, %v3976
      %v4008 = vadd.f32 %v4007, %v3977
      %v4009 = vadd.f32 %v4008, %v3978
      %v4010 = vadd.f32 %v4009, %v3979
      %v4011 = vadd.f32 %v4010, %v3980
      %v4012 = vadd.f32 %v4011, %v3981
      %v4013 = vadd.f32 %v4012, %v3982
      %v4014 = vadd.f32 %v4013, %v3983
      %v4015 = vadd.f32 %v4014, %v3984
      %v4016 = vadd.f32 %v4015, %v3985
      %v4017 = vadd.f32 %v4016, %v3986
      %v4018 = vadd.f32 %v4017, %v3987
      %v4019 = vadd.f32 %v4018, %v3988
      %v4020 = vadd.f32 %v4019, %v3989
      %v4021 = vadd.f32 %v4020, %v3990
      %v4022 = vadd.f32 %v4021, %v3991
      %v4023 = vadd.f32 %v4022, %v3992
      %v4024 = vadd.f32 %v4023, %v3993
      %v4025 = vadd.f32 %v4024, %v3994
      %v4026 = vadd.f32 %v4025, %v3995
      %v4027 = vadd.f32 %v4026, %v3996
      %v4028 = vadd.f32 %v4027, %v3997
      %v4029 = vadd.f32 %v4028, %v3998
      %v4030 = vadd.f32 %v4029, %v3999
      %v4031 = vadd.f32 %v4030, %v4000
      %v4032 = vadd.f32 %v4031, %v4001
      %v4033 = vadd.f32 %v4032, %v4002
      %v4034 = vrot.slane %v4033, 4
      %v4035 = vadd.f32 %v4033, %v4034
      %v4036 = vrot.slane %v4035, 2
      %v4037 = vadd.f32 %v4035, %v4036
      %v4038 = vrot.slane %v4037, 1
      %v4039 = vadd.f32 %v4037, %v4038
      %4040 = vst [vmem:[%s268] sm:$0x1] %v4039
      %v4041 = vpack.c.bf16 %v3901, %v3901
      %v4042 = vpack.c.bf16 %v3902, %v3902
      %v4043 = vpack.c.bf16 %v3903, %v3903
      %v4044 = vpack.c.bf16 %v3904, %v3904
      %v4045 = vpack.c.bf16 %v3905, %v3905
      %v4046 = vpack.c.bf16 %v3906, %v3906
      %v4047 = vpack.c.bf16 %v3907, %v3907
      %v4048 = vpack.c.bf16 %v3908, %v3908
      %v4049 = vpack.c.bf16 %v3909, %v3909
      %v4050 = vpack.c.bf16 %v3910, %v3910
      %v4051 = vpack.c.bf16 %v3911, %v3911
      %v4052 = vpack.c.bf16 %v3912, %v3912
      %v4053 = vpack.c.bf16 %v3913, %v3913
      %v4054 = vpack.c.bf16 %v3914, %v3914
      %v4055 = vpack.c.bf16 %v3915, %v3915
      %v4056 = vpack.c.bf16 %v3916, %v3916
      %v4057 = vpack.c.bf16 %v3917, %v3917
      %v4058 = vpack.c.bf16 %v3918, %v3918
      %v4059 = vpack.c.bf16 %v3919, %v3919
      %v4060 = vpack.c.bf16 %v3920, %v3920
      %v4061 = vpack.c.bf16 %v3921, %v3921
      %v4062 = vpack.c.bf16 %v3922, %v3922
      %v4063 = vpack.c.bf16 %v3923, %v3923
      %v4064 = vpack.c.bf16 %v3924, %v3924
      %v4065 = vpack.c.bf16 %v3925, %v3925
      %v4066 = vpack.c.bf16 %v3926, %v3926
      %v4067 = vpack.c.bf16 %v3927, %v3927
      %v4068 = vpack.c.bf16 %v3928, %v3928
      %v4069 = vpack.c.bf16 %v3929, %v3929
      %v4070 = vpack.c.bf16 %v3930, %v3930
      %v4071 = vpack.c.bf16 %v3931, %v3931
      %v4072 = vpack.c.bf16 %v3932, %v3932
      %4073 = vst [vmem:[%s262] sm:$0xf] %v4041
      %4074 = vst [vmem:[%s262 + $0x4] sm:$0xf] %v4042
      %4075 = vst [vmem:[%s262 + $0x8] sm:$0xf] %v4043
      %4076 = vst [vmem:[%s262 + $0xc] sm:$0xf] %v4044
      %4077 = vst [vmem:[%s262 + $0x10] sm:$0xf] %v4045
      %4078 = vst [vmem:[%s262 + $0x14] sm:$0xf] %v4046
      %4079 = vst [vmem:[%s262 + $0x18] sm:$0xf] %v4047
      %4080 = vst [vmem:[%s262 + $0x1c] sm:$0xf] %v4048
      %4081 = vst [vmem:[%s262 + $0x20] sm:$0xf] %v4049
      %4082 = vst [vmem:[%s262 + $0x24] sm:$0xf] %v4050
      %4083 = vst [vmem:[%s262 + $0x28] sm:$0xf] %v4051
      %4084 = vst [vmem:[%s262 + $0x2c] sm:$0xf] %v4052
      %4085 = vst [vmem:[%s262 + $0x30] sm:$0xf] %v4053
      %4086 = vst [vmem:[%s262 + $0x34] sm:$0xf] %v4054
      %4087 = vst [vmem:[%s262 + $0x38] sm:$0xf] %v4055
      %4088 = vst [vmem:[%s262 + $0x3c] sm:$0xf] %v4056
      %4089 = vst [vmem:[%s262 + $0x40] sm:$0xf] %v4057
      %4090 = vst [vmem:[%s262 + $0x44] sm:$0xf] %v4058
      %4091 = vst [vmem:[%s262 + $0x48] sm:$0xf] %v4059
      %4092 = vst [vmem:[%s262 + $0x4c] sm:$0xf] %v4060
      %4093 = vst [vmem:[%s262 + $0x50] sm:$0xf] %v4061
      %4094 = vst [vmem:[%s262 + $0x54] sm:$0xf] %v4062
      %4095 = vst [vmem:[%s262 + $0x58] sm:$0xf] %v4063
      %4096 = vst [vmem:[%s262 + $0x5c] sm:$0xf] %v4064
      %4097 = vst [vmem:[%s262 + $0x60] sm:$0xf] %v4065
      %4098 = vst [vmem:[%s262 + $0x64] sm:$0xf] %v4066
      %4099 = vst [vmem:[%s262 + $0x68] sm:$0xf] %v4067
      %4100 = vst [vmem:[%s262 + $0x6c] sm:$0xf] %v4068
      %4101 = vst [vmem:[%s262 + $0x70] sm:$0xf] %v4069
      %4102 = vst [vmem:[%s262 + $0x74] sm:$0xf] %v4070
      %4103 = vst [vmem:[%s262 + $0x78] sm:$0xf] %v4071
      %4104 = vst [vmem:[%s262 + $0x7c] sm:$0xf] %v4072
      %p4105 = scmp.lt.s32.totalorder %s18, 1
      %s4106 = scalar_select %p4105, %s18, 1
      %s4107 = smul.addr %s4106, 32
      %s4108 = smul.addr %s4107, 4
      %s4109 = scalar_lea.vmem %s4, %s4108
      %p4110 = scmp.lt.s32.totalorder %s18, 1
      %s4111 = scalar_select %p4110, %s18, 1
      %s4112 = scalar_lea.vmem %s5, %s4111
      %p4113 = scmp.lt.s32.totalorder %s18, 1
      %s4114 = scalar_select %p4113, %s18, 1
      %s4115 = scalar_lea.vmem %s6, %s4114
      // Predicated region
      $region37: #{resblock_forward.6} parent=35 // pred_check
        %p4116 = pneg %p125
      $region38: #{resblock_forward.6} parent=35 // pred_check_branch
        %4118 = sbr.rel (%p4116) target = $region40
      $region39: #{resblock_forward.6} parent=35 // pred_region
        _
      $region40: #{resblock_forward.6} parent=35 // pred_fallthru
        _
      // Predicated region
      $region41: #{resblock_forward.6} parent=35 // pred_check
        %p4119 = pneg %p151
      $region42: #{resblock_forward.6} parent=35 // pred_check_branch
        %4121 = sbr.rel (%p4119) target = $region44
      $region43: #{resblock_forward.6} parent=35 // pred_region
        _
      $region44: #{resblock_forward.6} parent=35 // pred_fallthru
        _
      // Predicated region
      $region45: #{resblock_forward.6} parent=35 // pred_check
        %p4122 = pneg %p177
      $region46: #{resblock_forward.6} parent=35 // pred_check_branch
        %4124 = sbr.rel (%p4122) target = $region48
      $region47: #{resblock_forward.6} parent=35 // pred_region
        _
      $region48: #{resblock_forward.6} parent=35 // pred_fallthru
        _
    $region36: #{resblock_forward.6} parent=5 // pred_fallthru
      _
    %p4125 = scmp.le.s32.totalorder 2, %s13
    // Predicated region
    $region49: #{resblock_forward.6} parent=5 // pred_check
      %p4126 = pneg %p4125
    $region50: #{resblock_forward.6} parent=5 // pred_check_branch
      %4128 = sbr.rel (%p4126) target = $region52
    $region51: #{resblock_forward.6} parent=5 // pred_region
      %s4129 = ssub.s32 %s13, 2
      // Predicated region
      $region53: #{resblock_forward.6} parent=51 // pred_check
        %p4130 = pneg %p131
      $region54: #{resblock_forward.6} parent=51 // pred_check_branch
        %4132 = sbr.rel (%p4130) target = $region56
      $region55: #{resblock_forward.6} parent=51 // pred_region
        %p4133 = scmp.lt.s32.totalorder %s19, 1
        %s4134 = scalar_select %p4133, %s19, 1
        %s4135 = smul.addr %s4134, 32
        %s4136 = smul.addr %s4135, 4
        %s4137 = scalar_lea.vmem %s4, %s4136
      $region56: #{resblock_forward.6} parent=51 // pred_fallthru
        _
      // Predicated region
      $region57: #{resblock_forward.6} parent=51 // pred_check
        %p4138 = pneg %p157
      $region58: #{resblock_forward.6} parent=51 // pred_check_branch
        %4140 = sbr.rel (%p4138) target = $region60
      $region59: #{resblock_forward.6} parent=51 // pred_region
        %p4141 = scmp.lt.s32.totalorder %s19, 1
        %s4142 = scalar_select %p4141, %s19, 1
        %s4143 = scalar_lea.vmem %s5, %s4142
      $region60: #{resblock_forward.6} parent=51 // pred_fallthru
        _
      // Predicated region
      $region61: #{resblock_forward.6} parent=51 // pred_check
        %p4144 = pneg %p183
      $region62: #{resblock_forward.6} parent=51 // pred_check_branch
        %4146 = sbr.rel (%p4144) target = $region64
      $region63: #{resblock_forward.6} parent=51 // pred_region
        %p4147 = scmp.lt.s32.totalorder %s19, 1
        %s4148 = scalar_select %p4147, %s19, 1
        %s4149 = scalar_lea.vmem %s6, %s4148
      $region64: #{resblock_forward.6} parent=51 // pred_fallthru
        _
    $region52: #{resblock_forward.6} parent=5 // pred_fallthru
      _
  $region6: #{resblock_forward.6} parent=0 // loop_footer
    %s17 = sadd.s32 1, %s13
  $region7: #{resblock_forward.6} parent=0 // loop_footer_branch
    %12 = sbr.rel target = $region3
  $region8: #{resblock_forward.6} parent=0 // loop_exit
    _

// kernel: resblock_forward.5
$region0: #{resblock_forward.5}
  #allocation0 [shape = 'u32[]', space=smem, size = 0x4, offset = 0x4, fixed_abs, tag = 'smem constant byte address 0x4 - core index']
  #allocation1 [shape = 'u32[72,128]{1,0:T(1,128)}', space=vmem, size = 0x9000, scoped, tag = 'internal scratch']
  #allocation2 [shape = 'bf16[18,16,384]{2,1,0:T(8,128)(2,1)}', space=vmem, size = 0x36000, scoped, tag = 'scratch operand']
  %s0 = inlined_call_operand.vmem [shape: bf16[2,16,16,128], index: 0, kind: input, shape index: {}]
  %s1 = inlined_call_operand.vmem [shape: bf16[3,384,128], index: 1, kind: input, shape index: {}]
  %s2 = inlined_call_operand.vmem [shape: bf16[2,16,16,128], index: 2, kind: output, shape index: {0}]
  %s3 = inlined_call_operand.vmem [shape: f32[2,1,128], index: 3, kind: output, shape index: {1}]
  %s4 = inlined_call_operand.vmem [shape: f32[2,1,128], index: 4, kind: output, shape index: {2}]
  %5 = xla_tuple %s2, %s3, %s4
  %s6 = sld [smem:[#allocation0]]
  $region57: #{resblock_forward.5} parent=0
    _
  %s8 = ssub.s32 1, %s6
  %s9 = scalar_select 0, %s8, %s6
  loop: start=0, step=1, limit=4
  $region2: #{resblock_forward.5} parent=0 // loop_pre_header
    _
  $region3: #{resblock_forward.5} parent=0 // loop_header
    %s11 = sphi 0, %s15
    %p12 = scmp.ge.s32.totalorder %s11, 4
    %s21 = sphi 0, %s23
    %s24 = sphi 0, %s21
    %s25 = sphi 0, %s24
    %s41 = sphi 0, %s25
    %s45 = sphi 0, %s45
    %s47 = sphi 0, %s45
    %s48 = sphi 0, %s47
    %s62 = sphi 0, %s48
    %s68 = sphi 0, %s70
    %s71 = sphi 0, %s68
    %s72 = sphi 0, %s71
    %s88 = sphi 0, %s72
    %s94 = sphi 0, %s96
    %s97 = sphi 0, %s94
    %s98 = sphi 0, %s97
    %s114 = sphi 0, %s98
    %s120 = sphi 0, %s122
    %s123 = sphi 0, %s120
    %s124 = sphi 0, %s123
    %s140 = sphi 0, %s124
  $region4: #{resblock_forward.5} parent=0 // loop_header_branch
    %14 = sbr.rel (%p12) target = $region8
  $region5: #{resblock_forward.5} parent=0 // loop_body
    %s16 = ssub.s32 %s11, 1
    %s17 = ssub.s32 %s11, 2
    %s18 = sadd.s32 %s11, 1
    %s19 = ssub.s32 %s11, %s18
    %p20 = scmp.eq.s32.totalorder %s19, 0
    %s22 = sadd.s32 %s21, 1
    %s23 = scalar_select %p20, %s21, %s22
    %p26 = pneg %p20
    %p27 = scmp.eq.s32.totalorder %s11, 1
    %p28 = por %p26, %p27
    %p29 = scmp.ne.s32.totalorder %s21, %s24
    %p30 = scmp.eq.s32.totalorder %s11, 0
    %p31 = por %p29, %p30
    %p32 = scmp.ne.s32.totalorder %s21, %s24
    %p33 = scmp.eq.s32.totalorder %s16, 1
    %p34 = por %p32, %p33
    %p35 = scmp.ne.s32.totalorder %s24, %s25
    %p36 = scmp.eq.s32.totalorder %s16, 0
    %p37 = por %p35, %p36
    %p38 = scmp.ne.s32.totalorder %s24, %s25
    %p39 = scmp.eq.s32.totalorder %s17, 1
    %p40 = por %p38, %p39
    %p42 = scmp.ne.s32.totalorder %s25, %s41
    %p43 = scmp.eq.s32.totalorder %s17, 0
    %p44 = por %p42, %p43
    %s46 = sadd.s32 %s45, 1
    %p49 = scmp.eq.s32.totalorder %s11, 1
    %p50 = scmp.ne.s32.totalorder %s45, %s47
    %p51 = scmp.eq.s32.totalorder %s11, 0
    %p52 = por %p50, %p51
    %p53 = scmp.ne.s32.totalorder %s45, %s47
    %p54 = scmp.eq.s32.totalorder %s16, 1
    %p55 = por %p53, %p54
    %p56 = scmp.ne.s32.totalorder %s47, %s48
    %p57 = scmp.eq.s32.totalorder %s16, 0
    %p58 = por %p56, %p57
    %p59 = scmp.ne.s32.totalorder %s47, %s48
    %p60 = scmp.eq.s32.totalorder %s17, 1
    %p61 = por %p59, %p60
    %p63 = scmp.ne.s32.totalorder %s48, %s62
    %p64 = scmp.eq.s32.totalorder %s17, 0
    %p65 = por %p63, %p64
    %s66 = ssub.s32 %s11, %s18
    %p67 = scmp.eq.s32.totalorder %s66, 0
    %s69 = sadd.s32 %s68, 1
    %s70 = scalar_select %p67, %s68, %s69
    %p73 = pneg %p67
    %p74 = scmp.eq.s32.totalorder %s11, 1
    %p75 = por %p73, %p74
    %p76 = scmp.ne.s32.totalorder %s68, %s71
    %p77 = scmp.eq.s32.totalorder %s11, 0
    %p78 = por %p76, %p77
    %p79 = scmp.ne.s32.totalorder %s68, %s71
    %p80 = scmp.eq.s32.totalorder %s16, 1
    %p81 = por %p79, %p80
    %p82 = scmp.ne.s32.totalorder %s71, %s72
    %p83 = scmp.eq.s32.totalorder %s16, 0
    %p84 = por %p82, %p83
    %p85 = scmp.ne.s32.totalorder %s71, %s72
    %p86 = scmp.eq.s32.totalorder %s17, 1
    %p87 = por %p85, %p86
    %p89 = scmp.ne.s32.totalorder %s72, %s88
    %p90 = scmp.eq.s32.totalorder %s17, 0
    %p91 = por %p89, %p90
    %s92 = ssub.s32 %s11, %s18
    %p93 = scmp.eq.s32.totalorder %s92, 0
    %s95 = sadd.s32 %s94, 1
    %s96 = scalar_select %p93, %s94, %s95
    %p99 = pneg %p93
    %p100 = scmp.eq.s32.totalorder %s11, 1
    %p101 = por %p99, %p100
    %p102 = scmp.ne.s32.totalorder %s94, %s97
    %p103 = scmp.eq.s32.totalorder %s11, 0
    %p104 = por %p102, %p103
    %p105 = scmp.ne.s32.totalorder %s94, %s97
    %p106 = scmp.eq.s32.totalorder %s16, 1
    %p107 = por %p105, %p106
    %p108 = scmp.ne.s32.totalorder %s97, %s98
    %p109 = scmp.eq.s32.totalorder %s16, 0
    %p110 = por %p108, %p109
    %p111 = scmp.ne.s32.totalorder %s97, %s98
    %p112 = scmp.eq.s32.totalorder %s17, 1
    %p113 = por %p111, %p112
    %p115 = scmp.ne.s32.totalorder %s98, %s114
    %p116 = scmp.eq.s32.totalorder %s17, 0
    %p117 = por %p115, %p116
    %s118 = ssub.s32 %s11, %s18
    %p119 = scmp.eq.s32.totalorder %s118, 0
    %s121 = sadd.s32 %s120, 1
    %s122 = scalar_select %p119, %s120, %s121
    %p125 = pneg %p119
    %p126 = scmp.eq.s32.totalorder %s11, 1
    %p127 = por %p125, %p126
    %p128 = scmp.ne.s32.totalorder %s120, %s123
    %p129 = scmp.eq.s32.totalorder %s11, 0
    %p130 = por %p128, %p129
    %p131 = scmp.ne.s32.totalorder %s120, %s123
    %p132 = scmp.eq.s32.totalorder %s16, 1
    %p133 = por %p131, %p132
    %p134 = scmp.ne.s32.totalorder %s123, %s124
    %p135 = scmp.eq.s32.totalorder %s16, 0
    %p136 = por %p134, %p135
    %p137 = scmp.ne.s32.totalorder %s123, %s124
    %p138 = scmp.eq.s32.totalorder %s17, 1
    %p139 = por %p137, %p138
    %p141 = scmp.ne.s32.totalorder %s124, %s140
    %p142 = scmp.eq.s32.totalorder %s17, 0
    %p143 = por %p141, %p142
    %p144 = scmp.le.s32.totalorder 1, %s11
    %p145 = scmp.lt.s32.totalorder %s11, 3
    %p146 = pnand %p144, %p145
    %p147 = pneg %p146
    // Predicated region
    $region9: #{resblock_forward.5} parent=5 // pred_check
      _
    $region10: #{resblock_forward.5} parent=5 // pred_check_branch
      %149 = sbr.rel (%p146) target = $region12
    $region11: #{resblock_forward.5} parent=5 // pred_region
      %s150 = ssub.s32 %s11, 1
      // Predicated region
      $region13: #{resblock_forward.5} parent=11 // pred_check
        %p151 = pneg %p58
      $region14: #{resblock_forward.5} parent=11 // pred_check_branch
        %153 = sbr.rel (%p151) target = $region16
      $region15: #{resblock_forward.5} parent=11 // pred_region
        _
      $region16: #{resblock_forward.5} parent=11 // pred_fallthru
        _
    $region12: #{resblock_forward.5} parent=5 // pred_fallthru
      _
    %p154 = scmp.lt.s32.totalorder %s11, 2
    // Predicated region
    $region17: #{resblock_forward.5} parent=5 // pred_check
      %p155 = pneg %p154
    $region18: #{resblock_forward.5} parent=5 // pred_check_branch
      %157 = sbr.rel (%p155) target = $region20
    $region19: #{resblock_forward.5} parent=5 // pred_region
      // Predicated region
      $region21: #{resblock_forward.5} parent=19 // pred_check
        %p158 = pneg %p31
      $region22: #{resblock_forward.5} parent=19 // pred_check_branch
        %160 = sbr.rel (%p158) target = $region24
      $region23: #{resblock_forward.5} parent=19 // pred_region
        %p161 = scmp.lt.s32.totalorder %s11, 1
        %s162 = scalar_select %p161, %s11, 1
        %s163 = smul.addr %s162, 32
        %s164 = smul.addr %s163, 4
        %s165 = scalar_lea.vmem %s0, %s164
      $region24: #{resblock_forward.5} parent=19 // pred_fallthru
        _
    $region20: #{resblock_forward.5} parent=5 // pred_fallthru
      _
    %p166 = scmp.le.s32.totalorder 1, %s11
    %p167 = scmp.lt.s32.totalorder %s11, 3
    %p168 = pnand %p166, %p167
    %p169 = pneg %p168
    // Predicated region
    $region25: #{resblock_forward.5} parent=5 // pred_check
      _
    $region26: #{resblock_forward.5} parent=5 // pred_check_branch
      %171 = sbr.rel (%p168) target = $region28
    $region27: #{resblock_forward.5} parent=5 // pred_region
      %s172 = ssub.s32 %s11, 1
      %p173 = scmp.lt.s32.totalorder %s16, 1
      %s174 = scalar_select %p173, %s16, 1
      %s175 = smul.addr %s174, 32
      %s176 = smul.addr %s175, 4
      %s177 = scalar_lea.vmem %s0, %s176
      %p178 = pneg %p37
      %p179 = pneg %p34
      %p180 = pneg %p58
      %p181 = pneg %p55
      %p182 = pneg %p84
      %p183 = pneg %p81
      %p184 = scmp.lt.s32.totalorder %s16, 1
      %s185 = scalar_select %p184, %s16, 1
      %s186 = smul.addr %s185, 32
      %s187 = smul.addr %s186, 4
      %s188 = scalar_lea.vmem %s2, %s187
      %p189 = pneg %p110
      %p190 = pneg %p107
      %p191 = scmp.lt.s32.totalorder %s16, 1
      %s192 = scalar_select %p191, %s16, 1
      %s193 = scalar_lea.vmem %s3, %s192
      %p194 = pneg %p136
      %p195 = pneg %p133
      %p196 = scmp.lt.s32.totalorder %s16, 1
      %s197 = scalar_select %p196, %s16, 1
      %s198 = scalar_lea.vmem %s4, %s197
      %p199 = scmp.lt.s32.totalorder %s16, 1
      %s200 = scalar_select %p199, %s16, 1
      %s201 = smul.addr %s200, 32
      %s202 = smul.addr %s201, 4
      %s203 = scalar_lea.vmem %s0, %s202
      %p204 = scmp.lt.s32.totalorder %s16, 1
      %s205 = scalar_select %p204, %s16, 1
      %s206 = smul.addr %s205, 32
      %s207 = smul.addr %s206, 4
      %s208 = scalar_lea.vmem %s2, %s207
      %p209 = scmp.lt.s32.totalorder %s16, 1
      %s210 = scalar_select %p209, %s16, 1
      %s211 = scalar_lea.vmem %s3, %s210
      %p212 = scmp.lt.s32.totalorder %s16, 1
      %s213 = scalar_select %p212, %s16, 1
      %s214 = scalar_lea.vmem %s4, %s213
      %v216 = vld [vmem:[%s203] sm:$0xf]
      %v217 = vld [vmem:[%s203 + $0x4] sm:$0xf]
      %v218 = vld [vmem:[%s203 + $0x8] sm:$0xf]
      %v219 = vld [vmem:[%s203 + $0xc] sm:$0xf]
      %v220 = vld [vmem:[%s203 + $0x10] sm:$0xf]
      %v221 = vld [vmem:[%s203 + $0x14] sm:$0xf]
      %v222 = vld [vmem:[%s203 + $0x18] sm:$0xf]
      %v223 = vld [vmem:[%s203 + $0x1c] sm:$0xf]
      %v224 = vld [vmem:[%s203 + $0x20] sm:$0xf]
      %v225 = vld [vmem:[%s203 + $0x24] sm:$0xf]
      %v226 = vld [vmem:[%s203 + $0x28] sm:$0xf]
      %v227 = vld [vmem:[%s203 + $0x2c] sm:$0xf]
      %v228 = vld [vmem:[%s203 + $0x30] sm:$0xf]
      %v229 = vld [vmem:[%s203 + $0x34] sm:$0xf]
      %v230 = vld [vmem:[%s203 + $0x38] sm:$0xf]
      %v231 = vld [vmem:[%s203 + $0x3c] sm:$0xf]
      %v232 = vld [vmem:[%s203 + $0x40] sm:$0xf]
      %v233 = vld [vmem:[%s203 + $0x44] sm:$0xf]
      %v234 = vld [vmem:[%s203 + $0x48] sm:$0xf]
      %v235 = vld [vmem:[%s203 + $0x4c] sm:$0xf]
      %v236 = vld [vmem:[%s203 + $0x50] sm:$0xf]
      %v237 = vld [vmem:[%s203 + $0x54] sm:$0xf]
      %v238 = vld [vmem:[%s203 + $0x58] sm:$0xf]
      %v239 = vld [vmem:[%s203 + $0x5c] sm:$0xf]
      %v240 = vld [vmem:[%s203 + $0x60] sm:$0xf]
      %v241 = vld [vmem:[%s203 + $0x64] sm:$0xf]
      %v242 = vld [vmem:[%s203 + $0x68] sm:$0xf]
      %v243 = vld [vmem:[%s203 + $0x6c] sm:$0xf]
      %v244 = vld [vmem:[%s203 + $0x70] sm:$0xf]
      %v245 = vld [vmem:[%s203 + $0x74] sm:$0xf]
      %v246 = vld [vmem:[%s203 + $0x78] sm:$0xf]
      %v247 = vld [vmem:[%s203 + $0x7c] sm:$0xf]
      %v280 = vunpack.c.l.b16 %v216
      %v281 = vunpack.c.l.b16 %v217
      %v282 = vunpack.c.l.b16 %v218
      %v283 = vunpack.c.l.b16 %v219
      %v284 = vunpack.c.l.b16 %v220
      %v285 = vunpack.c.l.b16 %v221
      %v286 = vunpack.c.l.b16 %v222
      %v287 = vunpack.c.l.b16 %v223
      %v288 = vunpack.c.l.b16 %v224
      %v289 = vunpack.c.l.b16 %v225
      %v290 = vunpack.c.l.b16 %v226
      %v291 = vunpack.c.l.b16 %v227
      %v292 = vunpack.c.l.b16 %v228
      %v293 = vunpack.c.l.b16 %v229
      %v294 = vunpack.c.l.b16 %v230
      %v295 = vunpack.c.l.b16 %v231
      %v296 = vunpack.c.l.b16 %v232
      %v297 = vunpack.c.l.b16 %v233
      %v298 = vunpack.c.l.b16 %v234
      %v299 = vunpack.c.l.b16 %v235
      %v300 = vunpack.c.l.b16 %v236
      %v301 = vunpack.c.l.b16 %v237
      %v302 = vunpack.c.l.b16 %v238
      %v303 = vunpack.c.l.b16 %v239
      %v304 = vunpack.c.l.b16 %v240
      %v305 = vunpack.c.l.b16 %v241
      %v306 = vunpack.c.l.b16 %v242
      %v307 = vunpack.c.l.b16 %v243
      %v308 = vunpack.c.l.b16 %v244
      %v309 = vunpack.c.l.b16 %v245
      %v310 = vunpack.c.l.b16 %v246
      %v311 = vunpack.c.l.b16 %v247
      %v312 = vpack.c.b16 %v281, %v280
      %v313 = vpack.c.b16 %v283, %v282
      %v314 = vpack.c.b16 %v285, %v284
      %v315 = vpack.c.b16 %v287, %v286
      %v316 = vpack.c.b16 %v289, %v288
      %v317 = vpack.c.b16 %v291, %v290
      %v318 = vpack.c.b16 %v293, %v292
      %v319 = vpack.c.b16 %v295, %v294
      %v320 = vpack.c.b16 %v297, %v296
      %v321 = vpack.c.b16 %v299, %v298
      %v322 = vpack.c.b16 %v301, %v300
      %v323 = vpack.c.b16 %v303, %v302
      %v324 = vpack.c.b16 %v305, %v304
      %v325 = vpack.c.b16 %v307, %v306
      %v326 = vpack.c.b16 %v309, %v308
      %v327 = vpack.c.b16 %v311, %v310
      %v329 = vshrl.u32 %v312, 16
      %v331 = vrot.slane %v329, 7
      %v332 = vshll.u32 %v312, 16
      %v334 = vor.u32 %v331, %v332
      %v336 = vshrl.u32 %v313, 16
      %v338 = vrot.slane %v336, 7
      %v339 = vshll.u32 %v313, 16
      %v341 = vor.u32 %v338, %v339
      %v343 = vshrl.u32 %v314, 16
      %v345 = vrot.slane %v343, 7
      %v346 = vshll.u32 %v314, 16
      %v348 = vor.u32 %v345, %v346
      %v350 = vshrl.u32 %v315, 16
      %v352 = vrot.slane %v350, 7
      %v353 = vshll.u32 %v315, 16
      %v355 = vor.u32 %v352, %v353
      %v357 = vshrl.u32 %v316, 16
      %v359 = vrot.slane %v357, 7
      %v360 = vshll.u32 %v316, 16
      %v362 = vor.u32 %v359, %v360
      %v364 = vshrl.u32 %v317, 16
      %v366 = vrot.slane %v364, 7
      %v367 = vshll.u32 %v317, 16
      %v369 = vor.u32 %v366, %v367
      %v371 = vshrl.u32 %v318, 16
      %v373 = vrot.slane %v371, 7
      %v374 = vshll.u32 %v318, 16
      %v376 = vor.u32 %v373, %v374
      %v378 = vshrl.u32 %v319, 16
      %v380 = vrot.slane %v378, 7
      %v381 = vshll.u32 %v319, 16
      %v383 = vor.u32 %v380, %v381
      %v385 = vshrl.u32 %v320, 16
      %v387 = vrot.slane %v385, 7
      %v388 = vshll.u32 %v320, 16
      %v390 = vor.u32 %v387, %v388
      %v392 = vshrl.u32 %v321, 16
      %v394 = vrot.slane %v392, 7
      %v395 = vshll.u32 %v321, 16
      %v397 = vor.u32 %v394, %v395
      %v399 = vshrl.u32 %v322, 16
      %v401 = vrot.slane %v399, 7
      %v402 = vshll.u32 %v322, 16
      %v404 = vor.u32 %v401, %v402
      %v406 = vshrl.u32 %v323, 16
      %v408 = vrot.slane %v406, 7
      %v409 = vshll.u32 %v323, 16
      %v411 = vor.u32 %v408, %v409
      %v413 = vshrl.u32 %v324, 16
      %v415 = vrot.slane %v413, 7
      %v416 = vshll.u32 %v324, 16
      %v418 = vor.u32 %v415, %v416
      %v420 = vshrl.u32 %v325, 16
      %v422 = vrot.slane %v420, 7
      %v423 = vshll.u32 %v325, 16
      %v425 = vor.u32 %v422, %v423
      %v427 = vshrl.u32 %v326, 16
      %v429 = vrot.slane %v427, 7
      %v430 = vshll.u32 %v326, 16
      %v432 = vor.u32 %v429, %v430
      %v434 = vshrl.u32 %v327, 16
      %v436 = vrot.slane %v434, 7
      %v437 = vshll.u32 %v327, 16
      %v439 = vor.u32 %v436, %v437
      %vm472 = vcmask 1040384
      %vm473 = vsmask.f32 256
      %vm474 = vmand %vm472, %vm473
      %v475 = vsel %vm474, 0, %v334
      %v476 = vsel %vm474, 0, %v341
      %v477 = vsel %vm474, 0, %v348
      %v478 = vsel %vm474, 0, %v355
      %v479 = vsel %vm474, 0, %v362
      %v480 = vsel %vm474, 0, %v369
      %v481 = vsel %vm474, 0, %v376
      %v482 = vsel %vm474, 0, %v383
      %v483 = vsel %vm474, 0, %v390
      %v484 = vsel %vm474, 0, %v397
      %v485 = vsel %vm474, 0, %v404
      %v486 = vsel %vm474, 0, %v411
      %v487 = vsel %vm474, 0, %v418
      %v488 = vsel %vm474, 0, %v425
      %v489 = vsel %vm474, 0, %v432
      %v490 = vsel %vm474, 0, %v439
      %v491 = vsel %vm474, %v331, 0
      %v492 = vsel %vm474, %v338, 0
      %v493 = vsel %vm474, %v345, 0
      %v494 = vsel %vm474, %v352, 0
      %v495 = vsel %vm474, %v359, 0
      %v496 = vsel %vm474, %v366, 0
      %v497 = vsel %vm474, %v373, 0
      %v498 = vsel %vm474, %v380, 0
      %v499 = vsel %vm474, %v387, 0
      %v500 = vsel %vm474, %v394, 0
      %v501 = vsel %vm474, %v401, 0
      %v502 = vsel %vm474, %v408, 0
      %v503 = vsel %vm474, %v415, 0
      %v504 = vsel %vm474, %v422, 0
      %v505 = vsel %vm474, %v429, 0
      %v506 = vsel %vm474, %v436, 0
      %507 = vst [vmem:[#allocation2] sm:$0xff] 0
      %508 = vst [vmem:[#allocation2 + $0x8] sm:$0xf] 0
      %509 = vst [vmem:[#allocation2 + $0xc] sm:$0xff] 0
      %510 = vst [vmem:[#allocation2 + $0x14] sm:$0xf] 0
      %s511 = scalar_lea.vmem [#allocation2], 408
      %512 = vst [vmem:[%s511] sm:$0xff] 0
      %513 = vst [vmem:[%s511 + $0x8] sm:$0xf] 0
      %514 = vst [vmem:[%s511 + $0xc] sm:$0xff] 0
      %515 = vst [vmem:[%s511 + $0x14] sm:$0xf] 0
      %v532 = vunpack.c.l.b16 %v475
      %v533 = vunpack.c.h.b16 %v475
      %v534 = vunpack.c.l.b16 %v476
      %v535 = vunpack.c.h.b16 %v476
      %v536 = vunpack.c.l.b16 %v477
      %v537 = vunpack.c.h.b16 %v477
      %v538 = vunpack.c.l.b16 %v478
      %v539 = vunpack.c.h.b16 %v478
      %v540 = vunpack.c.l.b16 %v479
      %v541 = vunpack.c.h.b16 %v479
      %v542 = vunpack.c.l.b16 %v480
      %v543 = vunpack.c.h.b16 %v480
      %v544 = vunpack.c.l.b16 %v481
      %v545 = vunpack.c.h.b16 %v481
      %v546 = vunpack.c.l.b16 %v482
      %v547 = vunpack.c.h.b16 %v482
      %v548 = vunpack.c.l.b16 %v483
      %v549 = vunpack.c.h.b16 %v483
      %v550 = vunpack.c.l.b16 %v484
      %v551 = vunpack.c.h.b16 %v484
      %v552 = vunpack.c.l.b16 %v485
      %v553 = vunpack.c.h.b16 %v485
      %v554 = vunpack.c.l.b16 %v486
      %v555 = vunpack.c.h.b16 %v486
      %v556 = vunpack.c.l.b16 %v487
      %v557 = vunpack.c.h.b16 %v487
      %v558 = vunpack.c.l.b16 %v488
      %v559 = vunpack.c.h.b16 %v488
      %v560 = vunpack.c.l.b16 %v489
      %v561 = vunpack.c.h.b16 %v489
      %v562 = vunpack.c.l.b16 %v490
      %v563 = vunpack.c.h.b16 %v490
      %v564 = vpack.c.b16 %v532, %v532
      %v565 = vpack.c.b16 %v533, %v533
      %v566 = vpack.c.b16 %v534, %v534
      %v567 = vpack.c.b16 %v535, %v535
      %v568 = vpack.c.b16 %v536, %v536
      %v569 = vpack.c.b16 %v537, %v537
      %v570 = vpack.c.b16 %v538, %v538
      %v571 = vpack.c.b16 %v539, %v539
      %v572 = vpack.c.b16 %v540, %v540
      %v573 = vpack.c.b16 %v541, %v541
      %v574 = vpack.c.b16 %v542, %v542
      %v575 = vpack.c.b16 %v543, %v543
      %v576 = vpack.c.b16 %v544, %v544
      %v577 = vpack.c.b16 %v545, %v545
      %v578 = vpack.c.b16 %v546, %v546
      %v579 = vpack.c.b16 %v547, %v547
      %v580 = vpack.c.b16 %v548, %v548
      %v581 = vpack.c.b16 %v549, %v549
      %v582 = vpack.c.b16 %v550, %v550
      %v583 = vpack.c.b16 %v551, %v551
      %v584 = vpack.c.b16 %v552, %v552
      %v585 = vpack.c.b16 %v553, %v553
      %v586 = vpack.c.b16 %v554, %v554
      %v587 = vpack.c.b16 %v555, %v555
      %v588 = vpack.c.b16 %v556, %v556
      %v589 = vpack.c.b16 %v557, %v557
      %v590 = vpack.c.b16 %v558, %v558
      %v591 = vpack.c.b16 %v559, %v559
      %v592 = vpack.c.b16 %v560, %v560
      %v593 = vpack.c.b16 %v561, %v561
      %v594 = vpack.c.b16 %v562, %v562
      %v595 = vpack.c.b16 %v563, %v563
      %s628 = scalar_lea.vmem [#allocation2], 24
      %629 = vst [vmem:[%s628] sm:$0xf] %v564
      %630 = vst [vmem:[%s628 + $0xc] sm:$0xf] %v565
      %631 = vst [vmem:[%s628 + $0x18] sm:$0xf] %v566
      %632 = vst [vmem:[%s628 + $0x24] sm:$0xf] %v567
      %633 = vst [vmem:[%s628 + $0x30] sm:$0xf] %v568
      %634 = vst [vmem:[%s628 + $0x3c] sm:$0xf] %v569
      %635 = vst [vmem:[%s628 + $0x48] sm:$0xf] %v570
      %636 = vst [vmem:[%s628 + $0x54] sm:$0xf] %v571
      %637 = vst [vmem:[%s628 + $0x60] sm:$0xf] %v572
      %638 = vst [vmem:[%s628 + $0x6c] sm:$0xf] %v573
      %639 = vst [vmem:[%s628 + $0x78] sm:$0xf] %v574
      %640 = vst [vmem:[%s628 + $0x84] sm:$0xf] %v575
      %641 = vst [vmem:[%s628 + $0x90] sm:$0xf] %v576
      %642 = vst [vmem:[%s628 + $0x9c] sm:$0xf] %v577
      %643 = vst [vmem:[%s628 + $0xa8] sm:$0xf] %v578
      %644 = vst [vmem:[%s628 + $0xb4] sm:$0xf] %v579
      %645 = vst [vmem:[%s628 + $0xc0] sm:$0xf] %v580
      %646 = vst [vmem:[%s628 + $0xcc] sm:$0xf] %v581
      %647 = vst [vmem:[%s628 + $0xd8] sm:$0xf] %v582
      %648 = vst [vmem:[%s628 + $0xe4] sm:$0xf] %v583
      %649 = vst [vmem:[%s628 + $0xf0] sm:$0xf] %v584
      %650 = vst [vmem:[%s628 + $0xfc] sm:$0xf] %v585
      %651 = vst [vmem:[%s628 + $0x108] sm:$0xf] %v586
      %652 = vst [vmem:[%s628 + $0x114] sm:$0xf] %v587
      %653 = vst [vmem:[%s628 + $0x120] sm:$0xf] %v588
      %654 = vst [vmem:[%s628 + $0x12c] sm:$0xf] %v589
      %655 = vst [vmem:[%s628 + $0x138] sm:$0xf] %v590
      %656 = vst [vmem:[%s628 + $0x144] sm:$0xf] %v591
      %657 = vst [vmem:[%s628 + $0x150] sm:$0xf] %v592
      %658 = vst [vmem:[%s628 + $0x15c] sm:$0xf] %v593
      %659 = vst [vmem:[%s628 + $0x168] sm:$0xf] %v594
      %660 = vst [vmem:[%s628 + $0x174] sm:$0xf] %v595
      %v677 = vunpack.c.l.b16 %v491
      %v678 = vunpack.c.l.b16 %v492
      %v679 = vunpack.c.l.b16 %v493
      %v680 = vunpack.c.l.b16 %v494
      %v681 = vunpack.c.l.b16 %v495
      %v682 = vunpack.c.l.b16 %v496
      %v683 = vunpack.c.l.b16 %v497
      %v684 = vunpack.c.l.b16 %v498
      %v685 = vunpack.c.l.b16 %v499
      %v686 = vunpack.c.l.b16 %v500
      %v687 = vunpack.c.l.b16 %v501
      %v688 = vunpack.c.l.b16 %v502
      %v689 = vunpack.c.l.b16 %v503
      %v690 = vunpack.c.l.b16 %v504
      %v691 = vunpack.c.l.b16 %v505
      %v692 = vunpack.c.l.b16 %v506
      %v693 = vpack.c.b16 %v677, %v677
      %v694 = vpack.c.b16 %v678, %v678
      %v695 = vpack.c.b16 %v679, %v679
      %v696 = vpack.c.b16 %v680, %v680
      %v697 = vpack.c.b16 %v681, %v681
      %v698 = vpack.c.b16 %v682, %v682
      %v699 = vpack.c.b16 %v683, %v683
      %v700 = vpack.c.b16 %v684, %v684
      %v701 = vpack.c.b16 %v685, %v685
      %v702 = vpack.c.b16 %v686, %v686
      %v703 = vpack.c.b16 %v687, %v687
      %v704 = vpack.c.b16 %v688, %v688
      %v705 = vpack.c.b16 %v689, %v689
      %v706 = vpack.c.b16 %v690, %v690
      %v707 = vpack.c.b16 %v691, %v691
      %v708 = vpack.c.b16 %v692, %v692
      %vm709 = vsmask.f32 3328
      %vm710 = vsmask.f32 7440
      %vm711 = vmor %vm709, %vm710
      %v713 = vshrl.u32 %v564, 16
      %v715 = vrot.slane %v713, 4
      %v716 = vshll.u32 %v564, 16
      %v718 = vrot.slane %v716, 5
      %v719 = vor.u32 %v715, %v718
      %v720 = vrot.slane %v719, 4
      %v722 = vshll.u32 %v565, 16
      %v724 = vrot.slane %v722, 5
      %v725 = vsel %vm711, %v720, %v724
      %v726 = vshrl.u32 %v565, 16
      %v728 = vrot.slane %v726, 4
      %v729 = vor.u32 %v728, %v724
      %v730 = vrot.slane %v729, 4
      %v732 = vshll.u32 %v693, 16
      %v734 = vrot.slane %v732, 5
      %v735 = vsel %vm711, %v730, %v734
      %v737 = vshrl.u32 %v566, 16
      %v739 = vrot.slane %v737, 4
      %v740 = vshll.u32 %v566, 16
      %v742 = vrot.slane %v740, 5
      %v743 = vor.u32 %v739, %v742
      %v744 = vrot.slane %v743, 4
      %v746 = vshll.u32 %v567, 16
      %v748 = vrot.slane %v746, 5
      %v749 = vsel %vm711, %v744, %v748
      %v750 = vshrl.u32 %v567, 16
      %v752 = vrot.slane %v750, 4
      %v753 = vor.u32 %v752, %v748
      %v754 = vrot.slane %v753, 4
      %v756 = vshll.u32 %v694, 16
      %v758 = vrot.slane %v756, 5
      %v759 = vsel %vm711, %v754, %v758
      %v761 = vshrl.u32 %v568, 16
      %v763 = vrot.slane %v761, 4
      %v764 = vshll.u32 %v568, 16
      %v766 = vrot.slane %v764, 5
      %v767 = vor.u32 %v763, %v766
      %v768 = vrot.slane %v767, 4
      %v770 = vshll.u32 %v569, 16
      %v772 = vrot.slane %v770, 5
      %v773 = vsel %vm711, %v768, %v772
      %v774 = vshrl.u32 %v569, 16
      %v776 = vrot.slane %v774, 4
      %v777 = vor.u32 %v776, %v772
      %v778 = vrot.slane %v777, 4
      %v780 = vshll.u32 %v695, 16
      %v782 = vrot.slane %v780, 5
      %v783 = vsel %vm711, %v778, %v782
      %v785 = vshrl.u32 %v570, 16
      %v787 = vrot.slane %v785, 4
      %v788 = vshll.u32 %v570, 16
      %v790 = vrot.slane %v788, 5
      %v791 = vor.u32 %v787, %v790
      %v792 = vrot.slane %v791, 4
      %v794 = vshll.u32 %v571, 16
      %v796 = vrot.slane %v794, 5
      %v797 = vsel %vm711, %v792, %v796
      %v798 = vshrl.u32 %v571, 16
      %v800 = vrot.slane %v798, 4
      %v801 = vor.u32 %v800, %v796
      %v802 = vrot.slane %v801, 4
      %v804 = vshll.u32 %v696, 16
      %v806 = vrot.slane %v804, 5
      %v807 = vsel %vm711, %v802, %v806
      %v809 = vshrl.u32 %v572, 16
      %v811 = vrot.slane %v809, 4
      %v812 = vshll.u32 %v572, 16
      %v814 = vrot.slane %v812, 5
      %v815 = vor.u32 %v811, %v814
      %v816 = vrot.slane %v815, 4
      %v818 = vshll.u32 %v573, 16
      %v820 = vrot.slane %v818, 5
      %v821 = vsel %vm711, %v816, %v820
      %v822 = vshrl.u32 %v573, 16
      %v824 = vrot.slane %v822, 4
      %v825 = vor.u32 %v824, %v820
      %v826 = vrot.slane %v825, 4
      %v828 = vshll.u32 %v697, 16
      %v830 = vrot.slane %v828, 5
      %v831 = vsel %vm711, %v826, %v830
      %v833 = vshrl.u32 %v574, 16
      %v835 = vrot.slane %v833, 4
      %v836 = vshll.u32 %v574, 16
      %v838 = vrot.slane %v836, 5
      %v839 = vor.u32 %v835, %v838
      %v840 = vrot.slane %v839, 4
      %v842 = vshll.u32 %v575, 16
      %v844 = vrot.slane %v842, 5
      %v845 = vsel %vm711, %v840, %v844
      %v846 = vshrl.u32 %v575, 16
      %v848 = vrot.slane %v846, 4
      %v849 = vor.u32 %v848, %v844
      %v850 = vrot.slane %v849, 4
      %v852 = vshll.u32 %v698, 16
      %v854 = vrot.slane %v852, 5
      %v855 = vsel %vm711, %v850, %v854
      %v857 = vshrl.u32 %v576, 16
      %v859 = vrot.slane %v857, 4
      %v860 = vshll.u32 %v576, 16
      %v862 = vrot.slane %v860, 5
      %v863 = vor.u32 %v859, %v862
      %v864 = vrot.slane %v863, 4
      %v866 = vshll.u32 %v577, 16
      %v868 = vrot.slane %v866, 5
      %v869 = vsel %vm711, %v864, %v868
      %v870 = vshrl.u32 %v577, 16
      %v872 = vrot.slane %v870, 4
      %v873 = vor.u32 %v872, %v868
      %v874 = vrot.slane %v873, 4
      %v876 = vshll.u32 %v699, 16
      %v878 = vrot.slane %v876, 5
      %v879 = vsel %vm711, %v874, %v878
      %v881 = vshrl.u32 %v578, 16
      %v883 = vrot.slane %v881, 4
      %v884 = vshll.u32 %v578, 16
      %v886 = vrot.slane %v884, 5
      %v887 = vor.u32 %v883, %v886
      %v888 = vrot.slane %v887, 4
      %v890 = vshll.u32 %v579, 16
      %v892 = vrot.slane %v890, 5
      %v893 = vsel %vm711, %v888, %v892
      %v894 = vshrl.u32 %v579, 16
      %v896 = vrot.slane %v894, 4
      %v897 = vor.u32 %v896, %v892
      %v898 = vrot.slane %v897, 4
      %v900 = vshll.u32 %v700, 16
      %v902 = vrot.slane %v900, 5
      %v903 = vsel %vm711, %v898, %v902
      %v905 = vshrl.u32 %v580, 16
      %v907 = vrot.slane %v905, 4
      %v908 = vshll.u32 %v580, 16
      %v910 = vrot.slane %v908, 5
      %v911 = vor.u32 %v907, %v910
      %v912 = vrot.slane %v911, 4
      %v914 = vshll.u32 %v581, 16
      %v916 = vrot.slane %v914, 5
      %v917 = vsel %vm711, %v912, %v916
      %v918 = vshrl.u32 %v581, 16
      %v920 = vrot.slane %v918, 4
      %v921 = vor.u32 %v920, %v916
      %v922 = vrot.slane %v921, 4
      %v924 = vshll.u32 %v701, 16
      %v926 = vrot.slane %v924, 5
      %v927 = vsel %vm711, %v922, %v926
      %v929 = vshrl.u32 %v582, 16
      %v931 = vrot.slane %v929, 4
      %v932 = vshll.u32 %v582, 16
      %v934 = vrot.slane %v932, 5
      %v935 = vor.u32 %v931, %v934
      %v936 = vrot.slane %v935, 4
      %v938 = vshll.u32 %v583, 16
      %v940 = vrot.slane %v938, 5
      %v941 = vsel %vm711, %v936, %v940
      %v942 = vshrl.u32 %v583, 16
      %v944 = vrot.slane %v942, 4
      %v945 = vor.u32 %v944, %v940
      %v946 = vrot.slane %v945, 4
      %v948 = vshll.u32 %v702, 16
      %v950 = vrot.slane %v948, 5
      %v951 = vsel %vm711, %v946, %v950
      %v953 = vshrl.u32 %v584, 16
      %v955 = vrot.slane %v953, 4
      %v956 = vshll.u32 %v584, 16
      %v958 = vrot.slane %v956, 5
      %v959 = vor.u32 %v955, %v958
      %v960 = vrot.slane %v959, 4
      %v962 = vshll.u32 %v585, 16
      %v964 = vrot.slane %v962, 5
      %v965 = vsel %vm711, %v960, %v964
      %v966 = vshrl.u32 %v585, 16
      %v968 = vrot.slane %v966, 4
      %v969 = vor.u32 %v968, %v964
      %v970 = vrot.slane %v969, 4
      %v972 = vshll.u32 %v703, 16
      %v974 = vrot.slane %v972, 5
      %v975 = vsel %vm711, %v970, %v974
      %v977 = vshrl.u32 %v586, 16
      %v979 = vrot.slane %v977, 4
      %v980 = vshll.u32 %v586, 16
      %v982 = vrot.slane %v980, 5
      %v983 = vor.u32 %v979, %v982
      %v984 = vrot.slane %v983, 4
      %v986 = vshll.u32 %v587, 16
      %v988 = vrot.slane %v986, 5
      %v989 = vsel %vm711, %v984, %v988
      %v990 = vshrl.u32 %v587, 16
      %v992 = vrot.slane %v990, 4
      %v993 = vor.u32 %v992, %v988
      %v994 = vrot.slane %v993, 4
      %v996 = vshll.u32 %v704, 16
      %v998 = vrot.slane %v996, 5
      %v999 = vsel %vm711, %v994, %v998
      %v1001 = vshrl.u32 %v588, 16
      %v1003 = vrot.slane %v1001, 4
      %v1004 = vshll.u32 %v588, 16
      %v1006 = vrot.slane %v1004, 5
      %v1007 = vor.u32 %v1003, %v1006
      %v1008 = vrot.slane %v1007, 4
      %v1010 = vshll.u32 %v589, 16
      %v1012 = vrot.slane %v1010, 5
      %v1013 = vsel %vm711, %v1008, %v1012
      %v1014 = vshrl.u32 %v589, 16
      %v1016 = vrot.slane %v1014, 4
      %v1017 = vor.u32 %v1016, %v1012
      %v1018 = vrot.slane %v1017, 4
      %v1020 = vshll.u32 %v705, 16
      %v1022 = vrot.slane %v1020, 5
      %v1023 = vsel %vm711, %v1018, %v1022
      %v1025 = vshrl.u32 %v590, 16
      %v1027 = vrot.slane %v1025, 4
      %v1028 = vshll.u32 %v590, 16
      %v1030 = vrot.slane %v1028, 5
      %v1031 = vor.u32 %v1027, %v1030
      %v1032 = vrot.slane %v1031, 4
      %v1034 = vshll.u32 %v591, 16
      %v1036 = vrot.slane %v1034, 5
      %v1037 = vsel %vm711, %v1032, %v1036
      %v1038 = vshrl.u32 %v591, 16
      %v1040 = vrot.slane %v1038, 4
      %v1041 = vor.u32 %v1040, %v1036
      %v1042 = vrot.slane %v1041, 4
      %v1044 = vshll.u32 %v706, 16
      %v1046 = vrot.slane %v1044, 5
      %v1047 = vsel %vm711, %v1042, %v1046
      %v1049 = vshrl.u32 %v592, 16
      %v1051 = vrot.slane %v1049, 4
      %v1052 = vshll.u32 %v592, 16
      %v1054 = vrot.slane %v1052, 5
      %v1055 = vor.u32 %v1051, %v1054
      %v1056 = vrot.slane %v1055, 4
      %v1058 = vshll.u32 %v593, 16
      %v1060 = vrot.slane %v1058, 5
      %v1061 = vsel %vm711, %v1056, %v1060
      %v1062 = vshrl.u32 %v593, 16
      %v1064 = vrot.slane %v1062, 4
      %v1065 = vor.u32 %v1064, %v1060
      %v1066 = vrot.slane %v1065, 4
      %v1068 = vshll.u32 %v707, 16
      %v1070 = vrot.slane %v1068, 5
      %v1071 = vsel %vm711, %v1066, %v1070
      %v1073 = vshrl.u32 %v594, 16
      %v1075 = vrot.slane %v1073, 4
      %v1076 = vshll.u32 %v594, 16
      %v1078 = vrot.slane %v1076, 5
      %v1079 = vor.u32 %v1075, %v1078
      %v1080 = vrot.slane %v1079, 4
      %v1082 = vshll.u32 %v595, 16
      %v1084 = vrot.slane %v1082, 5
      %v1085 = vsel %vm711, %v1080, %v1084
      %v1086 = vshrl.u32 %v595, 16
      %v1088 = vrot.slane %v1086, 4
      %v1089 = vor.u32 %v1088, %v1084
      %v1090 = vrot.slane %v1089, 4
      %v1092 = vshll.u32 %v708, 16
      %v1094 = vrot.slane %v1092, 5
      %v1095 = vsel %vm711, %v1090, %v1094
      %1128 = vst [vmem:[%s628 + $0x4] sm:$0xf] %v725
      %1129 = vst [vmem:[%s628 + $0x10] sm:$0xf] %v735
      %1130 = vst [vmem:[%s628 + $0x1c] sm:$0xf] %v749
      %1131 = vst [vmem:[%s628 + $0x28] sm:$0xf] %v759
      %1132 = vst [vmem:[%s628 + $0x34] sm:$0xf] %v773
      %1133 = vst [vmem:[%s628 + $0x40] sm:$0xf] %v783
      %1134 = vst [vmem:[%s628 + $0x4c] sm:$0xf] %v797
      %1135 = vst [vmem:[%s628 + $0x58] sm:$0xf] %v807
      %1136 = vst [vmem:[%s628 + $0x64] sm:$0xf] %v821
      %1137 = vst [vmem:[%s628 + $0x70] sm:$0xf] %v831
      %1138 = vst [vmem:[%s628 + $0x7c] sm:$0xf] %v845
      %1139 = vst [vmem:[%s628 + $0x88] sm:$0xf] %v855
      %1140 = vst [vmem:[%s628 + $0x94] sm:$0xf] %v869
      %1141 = vst [vmem:[%s628 + $0xa0] sm:$0xf] %v879
      %1142 = vst [vmem:[%s628 + $0xac] sm:$0xf] %v893
      %1143 = vst [vmem:[%s628 + $0xb8] sm:$0xf] %v903
      %1144 = vst [vmem:[%s628 + $0xc4] sm:$0xf] %v917
      %1145 = vst [vmem:[%s628 + $0xd0] sm:$0xf] %v927
      %1146 = vst [vmem:[%s628 + $0xdc] sm:$0xf] %v941
      %1147 = vst [vmem:[%s628 + $0xe8] sm:$0xf] %v951
      %1148 = vst [vmem:[%s628 + $0xf4] sm:$0xf] %v965
      %1149 = vst [vmem:[%s628 + $0x100] sm:$0xf] %v975
      %1150 = vst [vmem:[%s628 + $0x10c] sm:$0xf] %v989
      %1151 = vst [vmem:[%s628 + $0x118] sm:$0xf] %v999
      %1152 = vst [vmem:[%s628 + $0x124] sm:$0xf] %v1013
      %1153 = vst [vmem:[%s628 + $0x130] sm:$0xf] %v1023
      %1154 = vst [vmem:[%s628 + $0x13c] sm:$0xf] %v1037
      %1155 = vst [vmem:[%s628 + $0x148] sm:$0xf] %v1047
      %1156 = vst [vmem:[%s628 + $0x154] sm:$0xf] %v1061
      %1157 = vst [vmem:[%s628 + $0x160] sm:$0xf] %v1071
      %1158 = vst [vmem:[%s628 + $0x16c] sm:$0xf] %v1085
      %1159 = vst [vmem:[%s628 + $0x178] sm:$0xf] %v1095
      %vm1160 = vcmask 1042432
      %vm1161 = vcmask 1046532
      %vm1162 = vmor %vm1160, %vm1161
      %v1163 = vrot.slane %v564, 5
      %v1164 = vrot.slane %v1163, 4
      %v1165 = vrot.slane %v565, 5
      %v1166 = vsel %vm1162, %v1164, %v1165
      %v1167 = vrot.slane %v1165, 4
      %v1168 = vrot.slane %v693, 5
      %v1169 = vsel %vm1162, %v1167, %v1168
      %v1170 = vrot.slane %v566, 5
      %v1171 = vrot.slane %v1170, 4
      %v1172 = vrot.slane %v567, 5
      %v1173 = vsel %vm1162, %v1171, %v1172
      %v1174 = vrot.slane %v1172, 4
      %v1175 = vrot.slane %v694, 5
      %v1176 = vsel %vm1162, %v1174, %v1175
      %v1177 = vrot.slane %v568, 5
      %v1178 = vrot.slane %v1177, 4
      %v1179 = vrot.slane %v569, 5
      %v1180 = vsel %vm1162, %v1178, %v1179
      %v1181 = vrot.slane %v1179, 4
      %v1182 = vrot.slane %v695, 5
      %v1183 = vsel %vm1162, %v1181, %v1182
      %v1184 = vrot.slane %v570, 5
      %v1185 = vrot.slane %v1184, 4
      %v1186 = vrot.slane %v571, 5
      %v1187 = vsel %vm1162, %v1185, %v1186
      %v1188 = vrot.slane %v1186, 4
      %v1189 = vrot.slane %v696, 5
      %v1190 = vsel %vm1162, %v1188, %v1189
      %v1191 = vrot.slane %v572, 5
      %v1192 = vrot.slane %v1191, 4
      %v1193 = vrot.slane %v573, 5
      %v1194 = vsel %vm1162, %v1192, %v1193
      %v1195 = vrot.slane %v1193, 4
      %v1196 = vrot.slane %v697, 5
      %v1197 = vsel %vm1162, %v1195, %v1196
      %v1198 = vrot.slane %v574, 5
      %v1199 = vrot.slane %v1198, 4
      %v1200 = vrot.slane %v575, 5
      %v1201 = vsel %vm1162, %v1199, %v1200
      %v1202 = vrot.slane %v1200, 4
      %v1203 = vrot.slane %v698, 5
      %v1204 = vsel %vm1162, %v1202, %v1203
      %v1205 = vrot.slane %v576, 5
      %v1206 = vrot.slane %v1205, 4
      %v1207 = vrot.slane %v577, 5
      %v1208 = vsel %vm1162, %v1206, %v1207
      %v1209 = vrot.slane %v1207, 4
      %v1210 = vrot.slane %v699, 5
      %v1211 = vsel %vm1162, %v1209, %v1210
      %v1212 = vrot.slane %v578, 5
      %v1213 = vrot.slane %v1212, 4
      %v1214 = vrot.slane %v579, 5
      %v1215 = vsel %vm1162, %v1213, %v1214
      %v1216 = vrot.slane %v1214, 4
      %v1217 = vrot.slane %v700, 5
      %v1218 = vsel %vm1162, %v1216, %v1217
      %v1219 = vrot.slane %v580, 5
      %v1220 = vrot.slane %v1219, 4
      %v1221 = vrot.slane %v581, 5
      %v1222 = vsel %vm1162, %v1220, %v1221
      %v1223 = vrot.slane %v1221, 4
      %v1224 = vrot.slane %v701, 5
      %v1225 = vsel %vm1162, %v1223, %v1224
      %v1226 = vrot.slane %v582, 5
      %v1227 = vrot.slane %v1226, 4
      %v1228 = vrot.slane %v583, 5
      %v1229 = vsel %vm1162, %v1227, %v1228
      %v1230 = vrot.slane %v1228, 4
      %v1231 = vrot.slane %v702, 5
      %v1232 = vsel %vm1162, %v1230, %v1231
      %v1233 = vrot.slane %v584, 5
      %v1234 = vrot.slane %v1233, 4
      %v1235 = vrot.slane %v585, 5
      %v1236 = vsel %vm1162, %v1234, %v1235
      %v1237 = vrot.slane %v1235, 4
      %v1238 = vrot.slane %v703, 5
      %v1239 = vsel %vm1162, %v1237, %v1238
      %v1240 = vrot.slane %v586, 5
      %v1241 = vrot.slane %v1240, 4
      %v1242 = vrot.slane %v587, 5
      %v1243 = vsel %vm1162, %v1241, %v1242
      %v1244 = vrot.slane %v1242, 4
      %v1245 = vrot.slane %v704, 5
      %v1246 = vsel %vm1162, %v1244, %v1245
      %v1247 = vrot.slane %v588, 5
      %v1248 = vrot.slane %v1247, 4
      %v1249 = vrot.slane %v589, 5
      %v1250 = vsel %vm1162, %v1248, %v1249
      %v1251 = vrot.slane %v1249, 4
      %v1252 = vrot.slane %v705, 5
      %v1253 = vsel %vm1162, %v1251, %v1252
      %v1254 = vrot.slane %v590, 5
      %v1255 = vrot.slane %v1254, 4
      %v1256 = vrot.slane %v591, 5
      %v1257 = vsel %vm1162, %v1255, %v1256
      %v1258 = vrot.slane %v1256, 4
      %v1259 = vrot.slane %v706, 5
      %v1260 = vsel %vm1162, %v1258, %v1259
      %v1261 = vrot.slane %v592, 5
      %v1262 = vrot.slane %v1261, 4
      %v1263 = vrot.slane %v593, 5
      %v1264 = vsel %vm1162, %v1262, %v1263
      %v1265 = vrot.slane %v1263, 4
      %v1266 = vrot.slane %v707, 5
      %v1267 = vsel %vm1162, %v1265, %v1266
      %v1268 = vrot.slane %v594, 5
      %v1269 = vrot.slane %v1268, 4
      %v1270 = vrot.slane %v595, 5
      %v1271 = vsel %vm1162, %v1269, %v1270
      %v1272 = vrot.slane %v1270, 4
      %v1273 = vrot.slane %v708, 5
      %v1274 = vsel %vm1162, %v1272, %v1273
      %1307 = vst [vmem:[%s628 + $0x8] sm:$0xf] %v1166
      %1308 = vst [vmem:[%s628 + $0x14] sm:$0xf] %v1169
      %1309 = vst [vmem:[%s628 + $0x20] sm:$0xf] %v1173
      %1310 = vst [vmem:[%s628 + $0x2c] sm:$0xf] %v1176
      %1311 = vst [vmem:[%s628 + $0x38] sm:$0xf] %v1180
      %1312 = vst [vmem:[%s628 + $0x44] sm:$0xf] %v1183
      %1313 = vst [vmem:[%s628 + $0x50] sm:$0xf] %v1187
      %1314 = vst [vmem:[%s628 + $0x5c] sm:$0xf] %v1190
      %1315 = vst [vmem:[%s628 + $0x68] sm:$0xf] %v1194
      %1316 = vst [vmem:[%s628 + $0x74] sm:$0xf] %v1197
      %1317 = vst [vmem:[%s628 + $0x80] sm:$0xf] %v1201
      %1318 = vst [vmem:[%s628 + $0x8c] sm:$0xf] %v1204
      %1319 = vst [vmem:[%s628 + $0x98] sm:$0xf] %v1208
      %1320 = vst [vmem:[%s628 + $0xa4] sm:$0xf] %v1211
      %1321 = vst [vmem:[%s628 + $0xb0] sm:$0xf] %v1215
      %1322 = vst [vmem:[%s628 + $0xbc] sm:$0xf] %v1218
      %1323 = vst [vmem:[%s628 + $0xc8] sm:$0xf] %v1222
      %1324 = vst [vmem:[%s628 + $0xd4] sm:$0xf] %v1225
      %1325 = vst [vmem:[%s628 + $0xe0] sm:$0xf] %v1229
      %1326 = vst [vmem:[%s628 + $0xec] sm:$0xf] %v1232
      %1327 = vst [vmem:[%s628 + $0xf8] sm:$0xf] %v1236
      %1328 = vst [vmem:[%s628 + $0x104] sm:$0xf] %v1239
      %1329 = vst [vmem:[%s628 + $0x110] sm:$0xf] %v1243
      %1330 = vst [vmem:[%s628 + $0x11c] sm:$0xf] %v1246
      %1331 = vst [vmem:[%s628 + $0x128] sm:$0xf] %v1250
      %1332 = vst [vmem:[%s628 + $0x134] sm:$0xf] %v1253
      %1333 = vst [vmem:[%s628 + $0x140] sm:$0xf] %v1257
      %1334 = vst [vmem:[%s628 + $0x14c] sm:$0xf] %v1260
      %1335 = vst [vmem:[%s628 + $0x158] sm:$0xf] %v1264
      %1336 = vst [vmem:[%s628 + $0x164] sm:$0xf] %v1267
      %1337 = vst [vmem:[%s628 + $0x170] sm:$0xf] %v1271
      %1338 = vst [vmem:[%s628 + $0x17c] sm:$0xf] %v1274
      %v1339 = vld [vmem:[#allocation2] sm:$0xff]
      %v1340 = vld [vmem:[#allocation2 + $0x8] sm:$0xf]
      %v1341 = vld [vmem:[#allocation2 + $0xc] sm:$0xff]
      %v1342 = vld [vmem:[#allocation2 + $0x14] sm:$0xf]
      %v1343 = vld [vmem:[#allocation2 + $0x18] sm:$0xff]
      %v1344 = vld [vmem:[#allocation2 + $0x20] sm:$0xf]
      %v1345 = vld [vmem:[#allocation2 + $0x24] sm:$0xff]
      %v1346 = vld [vmem:[#allocation2 + $0x2c] sm:$0xf]
      %v1347 = vld [vmem:[#allocation2 + $0x30] sm:$0xff]
      %v1348 = vld [vmem:[#allocation2 + $0x38] sm:$0xf]
      %v1349 = vld [vmem:[#allocation2 + $0x3c] sm:$0xff]
      %v1350 = vld [vmem:[#allocation2 + $0x44] sm:$0xf]
      %v1351 = vld [vmem:[#allocation2 + $0x48] sm:$0xff]
      %v1352 = vld [vmem:[#allocation2 + $0x50] sm:$0xf]
      %v1353 = vld [vmem:[#allocation2 + $0x54] sm:$0xff]
      %v1354 = vld [vmem:[#allocation2 + $0x5c] sm:$0xf]
      %v1355 = vld [vmem:[#allocation2 + $0x60] sm:$0xff]
      %v1356 = vld [vmem:[#allocation2 + $0x68] sm:$0xf]
      %v1357 = vld [vmem:[#allocation2 + $0x6c] sm:$0xff]
      %v1358 = vld [vmem:[#allocation2 + $0x74] sm:$0xf]
      %v1359 = vld [vmem:[#allocation2 + $0x78] sm:$0xff]
      %v1360 = vld [vmem:[#allocation2 + $0x80] sm:$0xf]
      %v1361 = vld [vmem:[#allocation2 + $0x84] sm:$0xff]
      %v1362 = vld [vmem:[#allocation2 + $0x8c] sm:$0xf]
      %v1363 = vld [vmem:[#allocation2 + $0x90] sm:$0xff]
      %v1364 = vld [vmem:[#allocation2 + $0x98] sm:$0xf]
      %v1365 = vld [vmem:[#allocation2 + $0x9c] sm:$0xff]
      %v1366 = vld [vmem:[#allocation2 + $0xa4] sm:$0xf]
      %v1367 = vld [vmem:[#allocation2 + $0xa8] sm:$0xff]
      %v1368 = vld [vmem:[#allocation2 + $0xb0] sm:$0xf]
      %v1369 = vld [vmem:[#allocation2 + $0xb4] sm:$0xff]
      %v1370 = vld [vmem:[#allocation2 + $0xbc] sm:$0xf]
      %v1371 = vld [vmem:[#allocation2 + $0xc0] sm:$0xff]
      %v1372 = vld [vmem:[#allocation2 + $0xc8] sm:$0xf]
      %v1373 = vld [vmem:[#allocation2 + $0xcc] sm:$0xff]
      %v1374 = vld [vmem:[#allocation2 + $0xd4] sm:$0xf]
      %v1375 = vld [vmem:[#allocation2 + $0xd8] sm:$0xff]
      %v1376 = vld [vmem:[#allocation2 + $0xe0] sm:$0xf]
      %v1377 = vld [vmem:[#allocation2 + $0xe4] sm:$0xff]
      %v1378 = vld [vmem:[#allocation2 + $0xec] sm:$0xf]
      %v1379 = vld [vmem:[#allocation2 + $0xf0] sm:$0xff]
      %v1380 = vld [vmem:[#allocation2 + $0xf8] sm:$0xf]
      %v1381 = vld [vmem:[#allocation2 + $0xfc] sm:$0xff]
      %v1382 = vld [vmem:[#allocation2 + $0x104] sm:$0xf]
      %v1383 = vld [vmem:[#allocation2 + $0x108] sm:$0xff]
      %v1384 = vld [vmem:[#allocation2 + $0x110] sm:$0xf]
      %v1385 = vld [vmem:[#allocation2 + $0x114] sm:$0xff]
      %v1386 = vld [vmem:[#allocation2 + $0x11c] sm:$0xf]
      %v1387 = vld [vmem:[#allocation2 + $0x120] sm:$0xff]
      %v1388 = vld [vmem:[#allocation2 + $0x128] sm:$0xf]
      %v1389 = vld [vmem:[#allocation2 + $0x12c] sm:$0xff]
      %v1390 = vld [vmem:[#allocation2 + $0x134] sm:$0xf]
      %v1391 = vld [vmem:[#allocation2 + $0x138] sm:$0xff]
      %v1392 = vld [vmem:[#allocation2 + $0x140] sm:$0xf]
      %v1393 = vld [vmem:[#allocation2 + $0x144] sm:$0xff]
      %v1394 = vld [vmem:[#allocation2 + $0x14c] sm:$0xf]
      %v1395 = vld [vmem:[#allocation2 + $0x150] sm:$0xff]
      %v1396 = vld [vmem:[#allocation2 + $0x158] sm:$0xf]
      %v1397 = vld [vmem:[#allocation2 + $0x15c] sm:$0xff]
      %v1398 = vld [vmem:[#allocation2 + $0x164] sm:$0xf]
      %v1399 = vld [vmem:[#allocation2 + $0x168] sm:$0xff]
      %v1400 = vld [vmem:[#allocation2 + $0x170] sm:$0xf]
      %v1401 = vld [vmem:[#allocation2 + $0x174] sm:$0xff]
      %v1402 = vld [vmem:[#allocation2 + $0x17c] sm:$0xf]
      %v1403 = vld [vmem:[%s1] sm:$0xf]
      %v1404 = vld [vmem:[%s1 + $0x4] sm:$0xf]
      %v1405 = vld [vmem:[%s1 + $0x8] sm:$0xf]
      %v1406 = vld [vmem:[%s1 + $0xc] sm:$0xf]
      %v1407 = vld [vmem:[%s1 + $0x10] sm:$0xf]
      %v1408 = vld [vmem:[%s1 + $0x14] sm:$0xf]
      %v1409 = vld [vmem:[%s1 + $0x18] sm:$0xf]
      %v1410 = vld [vmem:[%s1 + $0x1c] sm:$0xf]
      %v1411 = vld [vmem:[%s1 + $0x20] sm:$0xf]
      %v1412 = vld [vmem:[%s1 + $0x24] sm:$0xf]
      %v1413 = vld [vmem:[%s1 + $0x28] sm:$0xf]
      %v1414 = vld [vmem:[%s1 + $0x2c] sm:$0xf]
      %v1415 = vld [vmem:[%s1 + $0x30] sm:$0xf]
      %v1416 = vld [vmem:[%s1 + $0x34] sm:$0xf]
      %v1417 = vld [vmem:[%s1 + $0x38] sm:$0xf]
      %v1418 = vld [vmem:[%s1 + $0x3c] sm:$0xf]
      %v1419 = vld [vmem:[%s1 + $0x40] sm:$0xf]
      %v1420 = vld [vmem:[%s1 + $0x44] sm:$0xf]
      %v1421 = vld [vmem:[%s1 + $0x48] sm:$0xf]
      %v1422 = vld [vmem:[%s1 + $0x4c] sm:$0xf]
      %v1423 = vld [vmem:[%s1 + $0x50] sm:$0xf]
      %v1424 = vld [vmem:[%s1 + $0x54] sm:$0xf]
      %v1425 = vld [vmem:[%s1 + $0x58] sm:$0xf]
      %v1426 = vld [vmem:[%s1 + $0x5c] sm:$0xf]
      %v1427 = vld [vmem:[%s1 + $0x60] sm:$0xf]
      %v1428 = vld [vmem:[%s1 + $0x64] sm:$0xf]
      %v1429 = vld [vmem:[%s1 + $0x68] sm:$0xf]
      %v1430 = vld [vmem:[%s1 + $0x6c] sm:$0xf]
      %v1431 = vld [vmem:[%s1 + $0x70] sm:$0xf]
      %v1432 = vld [vmem:[%s1 + $0x74] sm:$0xf]
      %v1433 = vld [vmem:[%s1 + $0x78] sm:$0xf]
      %v1434 = vld [vmem:[%s1 + $0x7c] sm:$0xf]
      %v1435 = vld [vmem:[%s1 + $0x80] sm:$0xf]
      %v1436 = vld [vmem:[%s1 + $0x84] sm:$0xf]
      %v1437 = vld [vmem:[%s1 + $0x88] sm:$0xf]
      %v1438 = vld [vmem:[%s1 + $0x8c] sm:$0xf]
      %v1439 = vld [vmem:[%s1 + $0x90] sm:$0xf]
      %v1440 = vld [vmem:[%s1 + $0x94] sm:$0xf]
      %v1441 = vld [vmem:[%s1 + $0x98] sm:$0xf]
      %v1442 = vld [vmem:[%s1 + $0x9c] sm:$0xf]
      %v1443 = vld [vmem:[%s1 + $0xa0] sm:$0xf]
      %v1444 = vld [vmem:[%s1 + $0xa4] sm:$0xf]
      %v1445 = vld [vmem:[%s1 + $0xa8] sm:$0xf]
      %v1446 = vld [vmem:[%s1 + $0xac] sm:$0xf]
      %v1447 = vld [vmem:[%s1 + $0xb0] sm:$0xf]
      %v1448 = vld [vmem:[%s1 + $0xb4] sm:$0xf]
      %v1449 = vld [vmem:[%s1 + $0xb8] sm:$0xf]
      %v1450 = vld [vmem:[%s1 + $0xbc] sm:$0xf]
      %v1451 = vld [vmem:[%s628] sm:$0xff]
      %v1452 = vld [vmem:[%s628 + $0x8] sm:$0xf]
      %v1453 = vld [vmem:[%s628 + $0xc] sm:$0xff]
      %v1454 = vld [vmem:[%s628 + $0x14] sm:$0xf]
      %v1455 = vld [vmem:[%s628 + $0x18] sm:$0xff]
      %v1456 = vld [vmem:[%s628 + $0x20] sm:$0xf]
      %v1457 = vld [vmem:[%s628 + $0x24] sm:$0xff]
      %v1458 = vld [vmem:[%s628 + $0x2c] sm:$0xf]
      %v1459 = vld [vmem:[%s628 + $0x30] sm:$0xff]
      %v1460 = vld [vmem:[%s628 + $0x38] sm:$0xf]
      %v1461 = vld [vmem:[%s628 + $0x3c] sm:$0xff]
      %v1462 = vld [vmem:[%s628 + $0x44] sm:$0xf]
      %v1463 = vld [vmem:[%s628 + $0x48] sm:$0xff]
      %v1464 = vld [vmem:[%s628 + $0x50] sm:$0xf]
      %v1465 = vld [vmem:[%s628 + $0x54] sm:$0xff]
      %v1466 = vld [vmem:[%s628 + $0x5c] sm:$0xf]
      %v1467 = vld [vmem:[%s628 + $0x60] sm:$0xff]
      %v1468 = vld [vmem:[%s628 + $0x68] sm:$0xf]
      %v1469 = vld [vmem:[%s628 + $0x6c] sm:$0xff]
      %v1470 = vld [vmem:[%s628 + $0x74] sm:$0xf]
      %v1471 = vld [vmem:[%s628 + $0x78] sm:$0xff]
      %v1472 = vld [vmem:[%s628 + $0x80] sm:$0xf]
      %v1473 = vld [vmem:[%s628 + $0x84] sm:$0xff]
      %v1474 = vld [vmem:[%s628 + $0x8c] sm:$0xf]
      %v1475 = vld [vmem:[%s628 + $0x90] sm:$0xff]
      %v1476 = vld [vmem:[%s628 + $0x98] sm:$0xf]
      %v1477 = vld [vmem:[%s628 + $0x9c] sm:$0xff]
      %v1478 = vld [vmem:[%s628 + $0xa4] sm:$0xf]
      %v1479 = vld [vmem:[%s628 + $0xa8] sm:$0xff]
      %v1480 = vld [vmem:[%s628 + $0xb0] sm:$0xf]
      %v1481 = vld [vmem:[%s628 + $0xb4] sm:$0xff]
      %v1482 = vld [vmem:[%s628 + $0xbc] sm:$0xf]
      %v1483 = vld [vmem:[%s628 + $0xc0] sm:$0xff]
      %v1484 = vld [vmem:[%s628 + $0xc8] sm:$0xf]
      %v1485 = vld [vmem:[%s628 + $0xcc] sm:$0xff]
      %v1486 = vld [vmem:[%s628 + $0xd4] sm:$0xf]
      %v1487 = vld [vmem:[%s628 + $0xd8] sm:$0xff]
      %v1488 = vld [vmem:[%s628 + $0xe0] sm:$0xf]
      %v1489 = vld [vmem:[%s628 + $0xe4] sm:$0xff]
      %v1490 = vld [vmem:[%s628 + $0xec] sm:$0xf]
      %v1491 = vld [vmem:[%s628 + $0xf0] sm:$0xff]
      %v1492 = vld [vmem:[%s628 + $0xf8] sm:$0xf]
      %v1493 = vld [vmem:[%s628 + $0xfc] sm:$0xff]
      %v1494 = vld [vmem:[%s628 + $0x104] sm:$0xf]
      %v1495 = vld [vmem:[%s628 + $0x108] sm:$0xff]
      %v1496 = vld [vmem:[%s628 + $0x110] sm:$0xf]
      %v1497 = vld [vmem:[%s628 + $0x114] sm:$0xff]
      %v1498 = vld [vmem:[%s628 + $0x11c] sm:$0xf]
      %v1499 = vld [vmem:[%s628 + $0x120] sm:$0xff]
      %v1500 = vld [vmem:[%s628 + $0x128] sm:$0xf]
      %v1501 = vld [vmem:[%s628 + $0x12c] sm:$0xff]
      %v1502 = vld [vmem:[%s628 + $0x134] sm:$0xf]
      %v1503 = vld [vmem:[%s628 + $0x138] sm:$0xff]
      %v1504 = vld [vmem:[%s628 + $0x140] sm:$0xf]
      %v1505 = vld [vmem:[%s628 + $0x144] sm:$0xff]
      %v1506 = vld [vmem:[%s628 + $0x14c] sm:$0xf]
      %v1507 = vld [vmem:[%s628 + $0x150] sm:$0xff]
      %v1508 = vld [vmem:[%s628 + $0x158] sm:$0xf]
      %v1509 = vld [vmem:[%s628 + $0x15c] sm:$0xff]
      %v1510 = vld [vmem:[%s628 + $0x164] sm:$0xf]
      %v1511 = vld [vmem:[%s628 + $0x168] sm:$0xff]
      %v1512 = vld [vmem:[%s628 + $0x170] sm:$0xf]
      %v1513 = vld [vmem:[%s628 + $0x174] sm:$0xff]
      %v1514 = vld [vmem:[%s628 + $0x17c] sm:$0xf]
      %s1515 = scalar_lea.vmem %s1, 192
      %v1516 = vld [vmem:[%s1515] sm:$0xf]
      %v1517 = vld [vmem:[%s1515 + $0x4] sm:$0xf]
      %v1518 = vld [vmem:[%s1515 + $0x8] sm:$0xf]
      %v1519 = vld [vmem:[%s1515 + $0xc] sm:$0xf]
      %v1520 = vld [vmem:[%s1515 + $0x10] sm:$0xf]
      %v1521 = vld [vmem:[%s1515 + $0x14] sm:$0xf]
      %v1522 = vld [vmem:[%s1515 + $0x18] sm:$0xf]
      %v1523 = vld [vmem:[%s1515 + $0x1c] sm:$0xf]
      %v1524 = vld [vmem:[%s1515 + $0x20] sm:$0xf]
      %v1525 = vld [vmem:[%s1515 + $0x24] sm:$0xf]
      %v1526 = vld [vmem:[%s1515 + $0x28] sm:$0xf]
      %v1527 = vld [vmem:[%s1515 + $0x2c] sm:$0xf]
      %v1528 = vld [vmem:[%s1515 + $0x30] sm:$0xf]
      %v1529 = vld [vmem:[%s1515 + $0x34] sm:$0xf]
      %v1530 = vld [vmem:[%s1515 + $0x38] sm:$0xf]
      %v1531 = vld [vmem:[%s1515 + $0x3c] sm:$0xf]
      %v1532 = vld [vmem:[%s1515 + $0x40] sm:$0xf]
      %v1533 = vld [vmem:[%s1515 + $0x44] sm:$0xf]
      %v1534 = vld [vmem:[%s1515 + $0x48] sm:$0xf]
      %v1535 = vld [vmem:[%s1515 + $0x4c] sm:$0xf]
      %v1536 = vld [vmem:[%s1515 + $0x50] sm:$0xf]
      %v1537 = vld [vmem:[%s1515 + $0x54] sm:$0xf]
      %v1538 = vld [vmem:[%s1515 + $0x58] sm:$0xf]
      %v1539 = vld [vmem:[%s1515 + $0x5c] sm:$0xf]
      %v1540 = vld [vmem:[%s1515 + $0x60] sm:$0xf]
      %v1541 = vld [vmem:[%s1515 + $0x64] sm:$0xf]
      %v1542 = vld [vmem:[%s1515 + $0x68] sm:$0xf]
      %v1543 = vld [vmem:[%s1515 + $0x6c] sm:$0xf]
      %v1544 = vld [vmem:[%s1515 + $0x70] sm:$0xf]
      %v1545 = vld [vmem:[%s1515 + $0x74] sm:$0xf]
      %v1546 = vld [vmem:[%s1515 + $0x78] sm:$0xf]
      %v1547 = vld [vmem:[%s1515 + $0x7c] sm:$0xf]
      %v1548 = vld [vmem:[%s1515 + $0x80] sm:$0xf]
      %v1549 = vld [vmem:[%s1515 + $0x84] sm:$0xf]
      %v1550 = vld [vmem:[%s1515 + $0x88] sm:$0xf]
      %v1551 = vld [vmem:[%s1515 + $0x8c] sm:$0xf]
      %v1552 = vld [vmem:[%s1515 + $0x90] sm:$0xf]
      %v1553 = vld [vmem:[%s1515 + $0x94] sm:$0xf]
      %v1554 = vld [vmem:[%s1515 + $0x98] sm:$0xf]
      %v1555 = vld [vmem:[%s1515 + $0x9c] sm:$0xf]
      %v1556 = vld [vmem:[%s1515 + $0xa0] sm:$0xf]
      %v1557 = vld [vmem:[%s1515 + $0xa4] sm:$0xf]
      %v1558 = vld [vmem:[%s1515 + $0xa8] sm:$0xf]
      %v1559 = vld [vmem:[%s1515 + $0xac] sm:$0xf]
      %v1560 = vld [vmem:[%s1515 + $0xb0] sm:$0xf]
      %v1561 = vld [vmem:[%s1515 + $0xb4] sm:$0xf]
      %v1562 = vld [vmem:[%s1515 + $0xb8] sm:$0xf]
      %v1563 = vld [vmem:[%s1515 + $0xbc] sm:$0xf]
      %v1628 = vunpack.c.l.b16 %v1451
      %v1629 = vunpack.c.h.b16 %v1451
      %v1630 = vunpack.c.l.b16 %v1452
      %v1631 = vunpack.c.l.b16 %v1453
      %v1632 = vunpack.c.h.b16 %v1453
      %v1633 = vunpack.c.l.b16 %v1454
      %v1634 = vunpack.c.l.b16 %v1455
      %v1635 = vunpack.c.h.b16 %v1455
      %v1636 = vunpack.c.l.b16 %v1456
      %v1637 = vunpack.c.l.b16 %v1457
      %v1638 = vunpack.c.h.b16 %v1457
      %v1639 = vunpack.c.l.b16 %v1458
      %v1640 = vunpack.c.l.b16 %v1459
      %v1641 = vunpack.c.h.b16 %v1459
      %v1642 = vunpack.c.l.b16 %v1460
      %v1643 = vunpack.c.l.b16 %v1461
      %v1644 = vunpack.c.h.b16 %v1461
      %v1645 = vunpack.c.l.b16 %v1462
      %v1646 = vunpack.c.l.b16 %v1463
      %v1647 = vunpack.c.h.b16 %v1463
      %v1648 = vunpack.c.l.b16 %v1464
      %v1649 = vunpack.c.l.b16 %v1465
      %v1650 = vunpack.c.h.b16 %v1465
      %v1651 = vunpack.c.l.b16 %v1466
      %v1652 = vunpack.c.l.b16 %v1467
      %v1653 = vunpack.c.h.b16 %v1467
      %v1654 = vunpack.c.l.b16 %v1468
      %v1655 = vunpack.c.l.b16 %v1469
      %v1656 = vunpack.c.h.b16 %v1469
      %v1657 = vunpack.c.l.b16 %v1470
      %v1658 = vunpack.c.l.b16 %v1471
      %v1659 = vunpack.c.h.b16 %v1471
      %v1660 = vunpack.c.l.b16 %v1472
      %v1661 = vunpack.c.l.b16 %v1473
      %v1662 = vunpack.c.h.b16 %v1473
      %v1663 = vunpack.c.l.b16 %v1474
      %v1664 = vunpack.c.l.b16 %v1475
      %v1665 = vunpack.c.h.b16 %v1475
      %v1666 = vunpack.c.l.b16 %v1476
      %v1667 = vunpack.c.l.b16 %v1477
      %v1668 = vunpack.c.h.b16 %v1477
      %v1669 = vunpack.c.l.b16 %v1478
      %v1670 = vunpack.c.l.b16 %v1479
      %v1671 = vunpack.c.h.b16 %v1479
      %v1672 = vunpack.c.l.b16 %v1480
      %v1673 = vunpack.c.l.b16 %v1481
      %v1674 = vunpack.c.h.b16 %v1481
      %v1675 = vunpack.c.l.b16 %v1482
      %v1676 = vunpack.c.l.b16 %v1483
      %v1677 = vunpack.c.h.b16 %v1483
      %v1678 = vunpack.c.l.b16 %v1484
      %v1679 = vunpack.c.l.b16 %v1485
      %v1680 = vunpack.c.h.b16 %v1485
      %v1681 = vunpack.c.l.b16 %v1486
      %v1682 = vunpack.c.l.b16 %v1487
      %v1683 = vunpack.c.h.b16 %v1487
      %v1684 = vunpack.c.l.b16 %v1488
      %v1685 = vunpack.c.l.b16 %v1489
      %v1686 = vunpack.c.h.b16 %v1489
      %v1687 = vunpack.c.l.b16 %v1490
      %v1688 = vunpack.c.l.b16 %v1491
      %v1689 = vunpack.c.h.b16 %v1491
      %v1690 = vunpack.c.l.b16 %v1492
      %v1691 = vunpack.c.l.b16 %v1493
      %v1692 = vunpack.c.h.b16 %v1493
      %v1693 = vunpack.c.l.b16 %v1494
      %v1694 = vunpack.c.l.b16 %v1495
      %v1695 = vunpack.c.h.b16 %v1495
      %v1696 = vunpack.c.l.b16 %v1496
      %v1697 = vunpack.c.l.b16 %v1497
      %v1698 = vunpack.c.h.b16 %v1497
      %v1699 = vunpack.c.l.b16 %v1498
      %v1700 = vunpack.c.l.b16 %v1499
      %v1701 = vunpack.c.h.b16 %v1499
      %v1702 = vunpack.c.l.b16 %v1500
      %v1703 = vunpack.c.l.b16 %v1501
      %v1704 = vunpack.c.h.b16 %v1501
      %v1705 = vunpack.c.l.b16 %v1502
      %v1706 = vunpack.c.l.b16 %v1503
      %v1707 = vunpack.c.h.b16 %v1503
      %v1708 = vunpack.c.l.b16 %v1504
      %v1709 = vunpack.c.l.b16 %v1505
      %v1710 = vunpack.c.h.b16 %v1505
      %v1711 = vunpack.c.l.b16 %v1506
      %v1712 = vunpack.c.l.b16 %v1507
      %v1713 = vunpack.c.h.b16 %v1507
      %v1714 = vunpack.c.l.b16 %v1508
      %v1715 = vunpack.c.l.b16 %v1509
      %v1716 = vunpack.c.h.b16 %v1509
      %v1717 = vunpack.c.l.b16 %v1510
      %v1718 = vunpack.c.l.b16 %v1511
      %v1719 = vunpack.c.h.b16 %v1511
      %v1720 = vunpack.c.l.b16 %v1512
      %v1721 = vunpack.c.l.b16 %v1513
      %v1722 = vunpack.c.h.b16 %v1513
      %v1723 = vunpack.c.l.b16 %v1514
      %v1724 = vpack.c.b16 %v1631, %v1628
      %v1725 = vpack.c.b16 %v1632, %v1629
      %v1726 = vpack.c.b16 %v1633, %v1630
      %v1727 = vpack.c.b16 %v1637, %v1634
      %v1728 = vpack.c.b16 %v1638, %v1635
      %v1729 = vpack.c.b16 %v1639, %v1636
      %v1730 = vpack.c.b16 %v1643, %v1640
      %v1731 = vpack.c.b16 %v1644, %v1641
      %v1732 = vpack.c.b16 %v1645, %v1642
      %v1733 = vpack.c.b16 %v1649, %v1646
      %v1734 = vpack.c.b16 %v1650, %v1647
      %v1735 = vpack.c.b16 %v1651, %v1648
      %v1736 = vpack.c.b16 %v1655, %v1652
      %v1737 = vpack.c.b16 %v1656, %v1653
      %v1738 = vpack.c.b16 %v1657, %v1654
      %v1739 = vpack.c.b16 %v1661, %v1658
      %v1740 = vpack.c.b16 %v1662, %v1659
      %v1741 = vpack.c.b16 %v1663, %v1660
      %v1742 = vpack.c.b16 %v1667, %v1664
      %v1743 = vpack.c.b16 %v1668, %v1665
      %v1744 = vpack.c.b16 %v1669, %v1666
      %v1745 = vpack.c.b16 %v1673, %v1670
      %v1746 = vpack.c.b16 %v1674, %v1671
      %v1747 = vpack.c.b16 %v1675, %v1672
      %v1748 = vpack.c.b16 %v1679, %v1676
      %v1749 = vpack.c.b16 %v1680, %v1677
      %v1750 = vpack.c.b16 %v1681, %v1678
      %v1751 = vpack.c.b16 %v1685, %v1682
      %v1752 = vpack.c.b16 %v1686, %v1683
      %v1753 = vpack.c.b16 %v1687, %v1684
      %v1754 = vpack.c.b16 %v1691, %v1688
      %v1755 = vpack.c.b16 %v1692, %v1689
      %v1756 = vpack.c.b16 %v1693, %v1690
      %v1757 = vpack.c.b16 %v1697, %v1694
      %v1758 = vpack.c.b16 %v1698, %v1695
      %v1759 = vpack.c.b16 %v1699, %v1696
      %v1760 = vpack.c.b16 %v1703, %v1700
      %v1761 = vpack.c.b16 %v1704, %v1701
      %v1762 = vpack.c.b16 %v1705, %v1702
      %v1763 = vpack.c.b16 %v1709, %v1706
      %v1764 = vpack.c.b16 %v1710, %v1707
      %v1765 = vpack.c.b16 %v1711, %v1708
      %v1766 = vpack.c.b16 %v1715, %v1712
      %v1767 = vpack.c.b16 %v1716, %v1713
      %v1768 = vpack.c.b16 %v1717, %v1714
      %v1769 = vpack.c.b16 %v1721, %v1718
      %v1770 = vpack.c.b16 %v1722, %v1719
      %v1771 = vpack.c.b16 %v1723, %v1720
      %v1868 = vunpack.c.l.b16 %v1516
      %v1869 = vunpack.c.l.b16 %v1517
      %v1870 = vunpack.c.l.b16 %v1518
      %v1871 = vunpack.c.l.b16 %v1519
      %v1872 = vunpack.c.l.b16 %v1520
      %v1873 = vunpack.c.l.b16 %v1521
      %v1874 = vunpack.c.l.b16 %v1522
      %v1875 = vunpack.c.l.b16 %v1523
      %v1876 = vunpack.c.l.b16 %v1524
      %v1877 = vunpack.c.l.b16 %v1525
      %v1878 = vunpack.c.l.b16 %v1526
      %v1879 = vunpack.c.l.b16 %v1527
      %v1880 = vunpack.c.l.b16 %v1528
      %v1881 = vunpack.c.l.b16 %v1529
      %v1882 = vunpack.c.l.b16 %v1530
      %v1883 = vunpack.c.l.b16 %v1531
      %v1884 = vunpack.c.l.b16 %v1532
      %v1885 = vunpack.c.l.b16 %v1533
      %v1886 = vunpack.c.l.b16 %v1534
      %v1887 = vunpack.c.l.b16 %v1535
      %v1888 = vunpack.c.l.b16 %v1536
      %v1889 = vunpack.c.l.b16 %v1537
      %v1890 = vunpack.c.l.b16 %v1538
      %v1891 = vunpack.c.l.b16 %v1539
      %v1892 = vunpack.c.l.b16 %v1540
      %v1893 = vunpack.c.l.b16 %v1541
      %v1894 = vunpack.c.l.b16 %v1542
      %v1895 = vunpack.c.l.b16 %v1543
      %v1896 = vunpack.c.l.b16 %v1544
      %v1897 = vunpack.c.l.b16 %v1545
      %v1898 = vunpack.c.l.b16 %v1546
      %v1899 = vunpack.c.l.b16 %v1547
      %v1900 = vunpack.c.l.b16 %v1548
      %v1901 = vunpack.c.l.b16 %v1549
      %v1902 = vunpack.c.l.b16 %v1550
      %v1903 = vunpack.c.l.b16 %v1551
      %v1904 = vunpack.c.l.b16 %v1552
      %v1905 = vunpack.c.l.b16 %v1553
      %v1906 = vunpack.c.l.b16 %v1554
      %v1907 = vunpack.c.l.b16 %v1555
      %v1908 = vunpack.c.l.b16 %v1556
      %v1909 = vunpack.c.l.b16 %v1557
      %v1910 = vunpack.c.l.b16 %v1558
      %v1911 = vunpack.c.l.b16 %v1559
      %v1912 = vunpack.c.l.b16 %v1560
      %v1913 = vunpack.c.l.b16 %v1561
      %v1914 = vunpack.c.l.b16 %v1562
      %v1915 = vunpack.c.l.b16 %v1563
      %v1916 = vpack.c.b16 %v1869, %v1868
      %v1917 = vpack.c.b16 %v1871, %v1870
      %v1918 = vpack.c.b16 %v1873, %v1872
      %v1919 = vpack.c.b16 %v1875, %v1874
      %v1920 = vpack.c.b16 %v1877, %v1876
      %v1921 = vpack.c.b16 %v1879, %v1878
      %v1922 = vpack.c.b16 %v1881, %v1880
      %v1923 = vpack.c.b16 %v1883, %v1882
      %v1924 = vpack.c.b16 %v1885, %v1884
      %v1925 = vpack.c.b16 %v1887, %v1886
      %v1926 = vpack.c.b16 %v1889, %v1888
      %v1927 = vpack.c.b16 %v1891, %v1890
      %v1928 = vpack.c.b16 %v1893, %v1892
      %v1929 = vpack.c.b16 %v1895, %v1894
      %v1930 = vpack.c.b16 %v1897, %v1896
      %v1931 = vpack.c.b16 %v1899, %v1898
      %v1932 = vpack.c.b16 %v1901, %v1900
      %v1933 = vpack.c.b16 %v1903, %v1902
      %v1934 = vpack.c.b16 %v1905, %v1904
      %v1935 = vpack.c.b16 %v1907, %v1906
      %v1936 = vpack.c.b16 %v1909, %v1908
      %v1937 = vpack.c.b16 %v1911, %v1910
      %v1938 = vpack.c.b16 %v1913, %v1912
      %v1939 = vpack.c.b16 %v1915, %v1914
      %1964 = vmatpush.bf16.msra.mxu0 %v1923
      %1965 = vmatpush.bf16.msra.mxu0 %v1922
      %1966 = vmatpush.bf16.msra.mxu0 %v1921
      %1967 = vmatpush.bf16.msra.mxu0 %v1920
      %1968 = vmatpush.bf16.msra.mxu0 %v1919
      %1969 = vmatpush.bf16.msra.mxu0 %v1918
      %1970 = vmatpush.bf16.msra.mxu0 %v1917
      %1971 = vmatpush.bf16.msra.mxu0 %v1916
      %1972 = vmatmul.bf16.gmra.mxu0 %v1724
      %v1973 = vpop.f32.mrf.mxu0
      %v1974 = vadd.f32 0.0, %v1973
      %v1975 = vpop.f32.mrf.mxu0
      %v1976 = vadd.f32 0.0, %v1975
      %1977 = vmatmul.bf16.gmra.mxu0 %v1727
      %v1978 = vpop.f32.mrf.mxu0
      %v1979 = vadd.f32 0.0, %v1978
      %v1980 = vpop.f32.mrf.mxu0
      %v1981 = vadd.f32 0.0, %v1980
      %1982 = vmatmul.bf16.gmra.mxu0 %v1730
      %v1983 = vpop.f32.mrf.mxu0
      %v1984 = vadd.f32 0.0, %v1983
      %v1985 = vpop.f32.mrf.mxu0
      %v1986 = vadd.f32 0.0, %v1985
      %1987 = vmatmul.bf16.gmra.mxu0 %v1733
      %v1988 = vpop.f32.mrf.mxu0
      %v1989 = vadd.f32 0.0, %v1988
      %v1990 = vpop.f32.mrf.mxu0
      %v1991 = vadd.f32 0.0, %v1990
      %1992 = vmatmul.bf16.gmra.mxu0 %v1736
      %v1993 = vpop.f32.mrf.mxu0
      %v1994 = vadd.f32 0.0, %v1993
      %v1995 = vpop.f32.mrf.mxu0
      %v1996 = vadd.f32 0.0, %v1995
      %1997 = vmatmul.bf16.gmra.mxu0 %v1739
      %v1998 = vpop.f32.mrf.mxu0
      %v1999 = vadd.f32 0.0, %v1998
      %v2000 = vpop.f32.mrf.mxu0
      %v2001 = vadd.f32 0.0, %v2000
      %2002 = vmatmul.bf16.gmra.mxu0 %v1742
      %v2003 = vpop.f32.mrf.mxu0
      %v2004 = vadd.f32 0.0, %v2003
      %v2005 = vpop.f32.mrf.mxu0
      %v2006 = vadd.f32 0.0, %v2005
      %2007 = vmatmul.bf16.gmra.mxu0 %v1745
      %v2008 = vpop.f32.mrf.mxu0
      %v2009 = vadd.f32 0.0, %v2008
      %v2010 = vpop.f32.mrf.mxu0
      %v2011 = vadd.f32 0.0, %v2010
      %2012 = vmatmul.bf16.gmra.mxu0 %v1748
      %v2013 = vpop.f32.mrf.mxu0
      %v2014 = vadd.f32 0.0, %v2013
      %v2015 = vpop.f32.mrf.mxu0
      %v2016 = vadd.f32 0.0, %v2015
      %2017 = vmatmul.bf16.gmra.mxu0 %v1751
      %v2018 = vpop.f32.mrf.mxu0
      %v2019 = vadd.f32 0.0, %v2018
      %v2020 = vpop.f32.mrf.mxu0
      %v2021 = vadd.f32 0.0, %v2020
      %2022 = vmatmul.bf16.gmra.mxu0 %v1754
      %v2023 = vpop.f32.mrf.mxu0
      %v2024 = vadd.f32 0.0, %v2023
      %v2025 = vpop.f32.mrf.mxu0
      %v2026 = vadd.f32 0.0, %v2025
      %2027 = vmatmul.bf16.gmra.mxu0 %v1757
      %v2028 = vpop.f32.mrf.mxu0
      %v2029 = vadd.f32 0.0, %v2028
      %v2030 = vpop.f32.mrf.mxu0
      %v2031 = vadd.f32 0.0, %v2030
      %2032 = vmatmul.bf16.gmra.mxu0 %v1760
      %v2033 = vpop.f32.mrf.mxu0
      %v2034 = vadd.f32 0.0, %v2033
      %v2035 = vpop.f32.mrf.mxu0
      %v2036 = vadd.f32 0.0, %v2035
      %2037 = vmatmul.bf16.gmra.mxu0 %v1763
      %v2038 = vpop.f32.mrf.mxu0
      %v2039 = vadd.f32 0.0, %v2038
      %v2040 = vpop.f32.mrf.mxu0
      %v2041 = vadd.f32 0.0, %v2040
      %2042 = vmatmul.bf16.gmra.mxu0 %v1766
      %v2043 = vpop.f32.mrf.mxu0
      %v2044 = vadd.f32 0.0, %v2043
      %v2045 = vpop.f32.mrf.mxu0
      %v2046 = vadd.f32 0.0, %v2045
      %2047 = vmatmul.bf16.gmra.mxu0 %v1769
      %v2048 = vpop.f32.mrf.mxu0
      %v2049 = vadd.f32 0.0, %v2048
      %v2050 = vpop.f32.mrf.mxu0
      %v2051 = vadd.f32 0.0, %v2050
      %2052 = vdwg.mxu0
      %2053 = vmatpush.bf16.msra.mxu0 %v1931
      %2054 = vmatpush.bf16.msra.mxu0 %v1930
      %2055 = vmatpush.bf16.msra.mxu0 %v1929
      %2056 = vmatpush.bf16.msra.mxu0 %v1928
      %2057 = vmatpush.bf16.msra.mxu0 %v1927
      %2058 = vmatpush.bf16.msra.mxu0 %v1926
      %2059 = vmatpush.bf16.msra.mxu0 %v1925
      %2060 = vmatpush.bf16.msra.mxu0 %v1924
      %2061 = vmatmul.bf16.gmra.mxu0 %v1725
      %v2062 = vpop.f32.mrf.mxu0
      %v2063 = vadd.f32 %v1974, %v2062
      %v2064 = vpop.f32.mrf.mxu0
      %v2065 = vadd.f32 %v1976, %v2064
      %2066 = vmatmul.bf16.gmra.mxu0 %v1728
      %v2067 = vpop.f32.mrf.mxu0
      %v2068 = vadd.f32 %v1979, %v2067
      %v2069 = vpop.f32.mrf.mxu0
      %v2070 = vadd.f32 %v1981, %v2069
      %2071 = vmatmul.bf16.gmra.mxu0 %v1731
      %v2072 = vpop.f32.mrf.mxu0
      %v2073 = vadd.f32 %v1984, %v2072
      %v2074 = vpop.f32.mrf.mxu0
      %v2075 = vadd.f32 %v1986, %v2074
      %2076 = vmatmul.bf16.gmra.mxu0 %v1734
      %v2077 = vpop.f32.mrf.mxu0
      %v2078 = vadd.f32 %v1989, %v2077
      %v2079 = vpop.f32.mrf.mxu0
      %v2080 = vadd.f32 %v1991, %v2079
      %2081 = vmatmul.bf16.gmra.mxu0 %v1737
      %v2082 = vpop.f32.mrf.mxu0
      %v2083 = vadd.f32 %v1994, %v2082
      %v2084 = vpop.f32.mrf.mxu0
      %v2085 = vadd.f32 %v1996, %v2084
      %2086 = vmatmul.bf16.gmra.mxu0 %v1740
      %v2087 = vpop.f32.mrf.mxu0
      %v2088 = vadd.f32 %v1999, %v2087
      %v2089 = vpop.f32.mrf.mxu0
      %v2090 = vadd.f32 %v2001, %v2089
      %2091 = vmatmul.bf16.gmra.mxu0 %v1743
      %v2092 = vpop.f32.mrf.mxu0
      %v2093 = vadd.f32 %v2004, %v2092
      %v2094 = vpop.f32.mrf.mxu0
      %v2095 = vadd.f32 %v2006, %v2094
      %2096 = vmatmul.bf16.gmra.mxu0 %v1746
      %v2097 = vpop.f32.mrf.mxu0
      %v2098 = vadd.f32 %v2009, %v2097
      %v2099 = vpop.f32.mrf.mxu0
      %v2100 = vadd.f32 %v2011, %v2099
      %2101 = vmatmul.bf16.gmra.mxu0 %v1749
      %v2102 = vpop.f32.mrf.mxu0
      %v2103 = vadd.f32 %v2014, %v2102
      %v2104 = vpop.f32.mrf.mxu0
      %v2105 = vadd.f32 %v2016, %v2104
      %2106 = vmatmul.bf16.gmra.mxu0 %v1752
      %v2107 = vpop.f32.mrf.mxu0
      %v2108 = vadd.f32 %v2019, %v2107
      %v2109 = vpop.f32.mrf.mxu0
      %v2110 = vadd.f32 %v2021, %v2109
      %2111 = vmatmul.bf16.gmra.mxu0 %v1755
      %v2112 = vpop.f32.mrf.mxu0
      %v2113 = vadd.f32 %v2024, %v2112
      %v2114 = vpop.f32.mrf.mxu0
      %v2115 = vadd.f32 %v2026, %v2114
      %2116 = vmatmul.bf16.gmra.mxu0 %v1758
      %v2117 = vpop.f32.mrf.mxu0
      %v2118 = vadd.f32 %v2029, %v2117
      %v2119 = vpop.f32.mrf.mxu0
      %v2120 = vadd.f32 %v2031, %v2119
      %2121 = vmatmul.bf16.gmra.mxu0 %v1761
      %v2122 = vpop.f32.mrf.mxu0
      %v2123 = vadd.f32 %v2034, %v2122
      %v2124 = vpop.f32.mrf.mxu0
      %v2125 = vadd.f32 %v2036, %v2124
      %2126 = vmatmul.bf16.gmra.mxu0 %v1764
      %v2127 = vpop.f32.mrf.mxu0
      %v2128 = vadd.f32 %v2039, %v2127
      %v2129 = vpop.f32.mrf.mxu0
      %v2130 = vadd.f32 %v2041, %v2129
      %2131 = vmatmul.bf16.gmra.mxu0 %v1767
      %v2132 = vpop.f32.mrf.mxu0
      %v2133 = vadd.f32 %v2044, %v2132
      %v2134 = vpop.f32.mrf.mxu0
      %v2135 = vadd.f32 %v2046, %v2134
      %2136 = vmatmul.bf16.gmra.mxu0 %v1770
      %v2137 = vpop.f32.mrf.mxu0
      %v2138 = vadd.f32 %v2049, %v2137
      %v2139 = vpop.f32.mrf.mxu0
      %v2140 = vadd.f32 %v2051, %v2139
      %2141 = vdwg.mxu0
      %2142 = vmatpush.bf16.msra.mxu0 %v1939
      %2143 = vmatpush.bf16.msra.mxu0 %v1938
      %2144 = vmatpush.bf16.msra.mxu0 %v1937
      %2145 = vmatpush.bf16.msra.mxu0 %v1936
      %2146 = vmatpush.bf16.msra.mxu0 %v1935
      %2147 = vmatpush.bf16.msra.mxu0 %v1934
      %2148 = vmatpush.bf16.msra.mxu0 %v1933
      %2149 = vmatpush.bf16.msra.mxu0 %v1932
      %2150 = vmatmul.bf16.gmra.mxu0 %v1726
      %v2151 = vpop.f32.mrf.mxu0
      %v2152 = vadd.f32 %v2063, %v2151
      %v2153 = vpop.f32.mrf.mxu0
      %v2154 = vadd.f32 %v2065, %v2153
      %2155 = vmatmul.bf16.gmra.mxu0 %v1729
      %v2156 = vpop.f32.mrf.mxu0
      %v2157 = vadd.f32 %v2068, %v2156
      %v2158 = vpop.f32.mrf.mxu0
      %v2159 = vadd.f32 %v2070, %v2158
      %2160 = vmatmul.bf16.gmra.mxu0 %v1732
      %v2161 = vpop.f32.mrf.mxu0
      %v2162 = vadd.f32 %v2073, %v2161
      %v2163 = vpop.f32.mrf.mxu0
      %v2164 = vadd.f32 %v2075, %v2163
      %2165 = vmatmul.bf16.gmra.mxu0 %v1735
      %v2166 = vpop.f32.mrf.mxu0
      %v2167 = vadd.f32 %v2078, %v2166
      %v2168 = vpop.f32.mrf.mxu0
      %v2169 = vadd.f32 %v2080, %v2168
      %2170 = vmatmul.bf16.gmra.mxu0 %v1738
      %v2171 = vpop.f32.mrf.mxu0
      %v2172 = vadd.f32 %v2083, %v2171
      %v2173 = vpop.f32.mrf.mxu0
      %v2174 = vadd.f32 %v2085, %v2173
      %2175 = vmatmul.bf16.gmra.mxu0 %v1741
      %v2176 = vpop.f32.mrf.mxu0
      %v2177 = vadd.f32 %v2088, %v2176
      %v2178 = vpop.f32.mrf.mxu0
      %v2179 = vadd.f32 %v2090, %v2178
      %2180 = vmatmul.bf16.gmra.mxu0 %v1744
      %v2181 = vpop.f32.mrf.mxu0
      %v2182 = vadd.f32 %v2093, %v2181
      %v2183 = vpop.f32.mrf.mxu0
      %v2184 = vadd.f32 %v2095, %v2183
      %2185 = vmatmul.bf16.gmra.mxu0 %v1747
      %v2186 = vpop.f32.mrf.mxu0
      %v2187 = vadd.f32 %v2098, %v2186
      %v2188 = vpop.f32.mrf.mxu0
      %v2189 = vadd.f32 %v2100, %v2188
      %2190 = vmatmul.bf16.gmra.mxu0 %v1750
      %v2191 = vpop.f32.mrf.mxu0
      %v2192 = vadd.f32 %v2103, %v2191
      %v2193 = vpop.f32.mrf.mxu0
      %v2194 = vadd.f32 %v2105, %v2193
      %2195 = vmatmul.bf16.gmra.mxu0 %v1753
      %v2196 = vpop.f32.mrf.mxu0
      %v2197 = vadd.f32 %v2108, %v2196
      %v2198 = vpop.f32.mrf.mxu0
      %v2199 = vadd.f32 %v2110, %v2198
      %2200 = vmatmul.bf16.gmra.mxu0 %v1756
      %v2201 = vpop.f32.mrf.mxu0
      %v2202 = vadd.f32 %v2113, %v2201
      %v2203 = vpop.f32.mrf.mxu0
      %v2204 = vadd.f32 %v2115, %v2203
      %2205 = vmatmul.bf16.gmra.mxu0 %v1759
      %v2206 = vpop.f32.mrf.mxu0
      %v2207 = vadd.f32 %v2118, %v2206
      %v2208 = vpop.f32.mrf.mxu0
      %v2209 = vadd.f32 %v2120, %v2208
      %2210 = vmatmul.bf16.gmra.mxu0 %v1762
      %v2211 = vpop.f32.mrf.mxu0
      %v2212 = vadd.f32 %v2123, %v2211
      %v2213 = vpop.f32.mrf.mxu0
      %v2214 = vadd.f32 %v2125, %v2213
      %2215 = vmatmul.bf16.gmra.mxu0 %v1765
      %v2216 = vpop.f32.mrf.mxu0
      %v2217 = vadd.f32 %v2128, %v2216
      %v2218 = vpop.f32.mrf.mxu0
      %v2219 = vadd.f32 %v2130, %v2218
      %2220 = vmatmul.bf16.gmra.mxu0 %v1768
      %v2221 = vpop.f32.mrf.mxu0
      %v2222 = vadd.f32 %v2133, %v2221
      %v2223 = vpop.f32.mrf.mxu0
      %v2224 = vadd.f32 %v2135, %v2223
      %2225 = vmatmul.bf16.gmra.mxu0 %v1771
      %v2226 = vpop.f32.mrf.mxu0
      %v2227 = vadd.f32 %v2138, %v2226
      %v2228 = vpop.f32.mrf.mxu0
      %v2229 = vadd.f32 %v2140, %v2228
      %2230 = vdwg.mxu0
      %v2295 = vunpack.c.l.b16 %v1339
      %v2296 = vunpack.c.h.b16 %v1339
      %v2297 = vunpack.c.l.b16 %v1340
      %v2298 = vunpack.c.l.b16 %v1341
      %v2299 = vunpack.c.h.b16 %v1341
      %v2300 = vunpack.c.l.b16 %v1342
      %v2301 = vunpack.c.l.b16 %v1343
      %v2302 = vunpack.c.h.b16 %v1343
      %v2303 = vunpack.c.l.b16 %v1344
      %v2304 = vunpack.c.l.b16 %v1345
      %v2305 = vunpack.c.h.b16 %v1345
      %v2306 = vunpack.c.l.b16 %v1346
      %v2307 = vunpack.c.l.b16 %v1347
      %v2308 = vunpack.c.h.b16 %v1347
      %v2309 = vunpack.c.l.b16 %v1348
      %v2310 = vunpack.c.l.b16 %v1349
      %v2311 = vunpack.c.h.b16 %v1349
      %v2312 = vunpack.c.l.b16 %v1350
      %v2313 = vunpack.c.l.b16 %v1351
      %v2314 = vunpack.c.h.b16 %v1351
      %v2315 = vunpack.c.l.b16 %v1352
      %v2316 = vunpack.c.l.b16 %v1353
      %v2317 = vunpack.c.h.b16 %v1353
      %v2318 = vunpack.c.l.b16 %v1354
      %v2319 = vunpack.c.l.b16 %v1355
      %v2320 = vunpack.c.h.b16 %v1355
      %v2321 = vunpack.c.l.b16 %v1356
      %v2322 = vunpack.c.l.b16 %v1357
      %v2323 = vunpack.c.h.b16 %v1357
      %v2324 = vunpack.c.l.b16 %v1358
      %v2325 = vunpack.c.l.b16 %v1359
      %v2326 = vunpack.c.h.b16 %v1359
      %v2327 = vunpack.c.l.b16 %v1360
      %v2328 = vunpack.c.l.b16 %v1361
      %v2329 = vunpack.c.h.b16 %v1361
      %v2330 = vunpack.c.l.b16 %v1362
      %v2331 = vunpack.c.l.b16 %v1363
      %v2332 = vunpack.c.h.b16 %v1363
      %v2333 = vunpack.c.l.b16 %v1364
      %v2334 = vunpack.c.l.b16 %v1365
      %v2335 = vunpack.c.h.b16 %v1365
      %v2336 = vunpack.c.l.b16 %v1366
      %v2337 = vunpack.c.l.b16 %v1367
      %v2338 = vunpack.c.h.b16 %v1367
      %v2339 = vunpack.c.l.b16 %v1368
      %v2340 = vunpack.c.l.b16 %v1369
      %v2341 = vunpack.c.h.b16 %v1369
      %v2342 = vunpack.c.l.b16 %v1370
      %v2343 = vunpack.c.l.b16 %v1371
      %v2344 = vunpack.c.h.b16 %v1371
      %v2345 = vunpack.c.l.b16 %v1372
      %v2346 = vunpack.c.l.b16 %v1373
      %v2347 = vunpack.c.h.b16 %v1373
      %v2348 = vunpack.c.l.b16 %v1374
      %v2349 = vunpack.c.l.b16 %v1375
      %v2350 = vunpack.c.h.b16 %v1375
      %v2351 = vunpack.c.l.b16 %v1376
      %v2352 = vunpack.c.l.b16 %v1377
      %v2353 = vunpack.c.h.b16 %v1377
      %v2354 = vunpack.c.l.b16 %v1378
      %v2355 = vunpack.c.l.b16 %v1379
      %v2356 = vunpack.c.h.b16 %v1379
      %v2357 = vunpack.c.l.b16 %v1380
      %v2358 = vunpack.c.l.b16 %v1381
      %v2359 = vunpack.c.h.b16 %v1381
      %v2360 = vunpack.c.l.b16 %v1382
      %v2361 = vunpack.c.l.b16 %v1383
      %v2362 = vunpack.c.h.b16 %v1383
      %v2363 = vunpack.c.l.b16 %v1384
      %v2364 = vunpack.c.l.b16 %v1385
      %v2365 = vunpack.c.h.b16 %v1385
      %v2366 = vunpack.c.l.b16 %v1386
      %v2367 = vunpack.c.l.b16 %v1387
      %v2368 = vunpack.c.h.b16 %v1387
      %v2369 = vunpack.c.l.b16 %v1388
      %v2370 = vunpack.c.l.b16 %v1389
      %v2371 = vunpack.c.h.b16 %v1389
      %v2372 = vunpack.c.l.b16 %v1390
      %v2373 = vunpack.c.l.b16 %v1391
      %v2374 = vunpack.c.h.b16 %v1391
      %v2375 = vunpack.c.l.b16 %v1392
      %v2376 = vunpack.c.l.b16 %v1393
      %v2377 = vunpack.c.h.b16 %v1393
      %v2378 = vunpack.c.l.b16 %v1394
      %v2379 = vunpack.c.l.b16 %v1395
      %v2380 = vunpack.c.h.b16 %v1395
      %v2381 = vunpack.c.l.b16 %v1396
      %v2382 = vunpack.c.l.b16 %v1397
      %v2383 = vunpack.c.h.b16 %v1397
      %v2384 = vunpack.c.l.b16 %v1398
      %v2385 = vunpack.c.l.b16 %v1399
      %v2386 = vunpack.c.h.b16 %v1399
      %v2387 = vunpack.c.l.b16 %v1400
      %v2388 = vunpack.c.l.b16 %v1401
      %v2389 = vunpack.c.h.b16 %v1401
      %v2390 = vunpack.c.l.b16 %v1402
      %v2391 = vpack.c.b16 %v2298, %v2295
      %v2392 = vpack.c.b16 %v2299, %v2296
      %v2393 = vpack.c.b16 %v2300, %v2297
      %v2394 = vpack.c.b16 %v2304, %v2301
      %v2395 = vpack.c.b16 %v2305, %v2302
      %v2396 = vpack.c.b16 %v2306, %v2303
      %v2397 = vpack.c.b16 %v2310, %v2307
      %v2398 = vpack.c.b16 %v2311, %v2308
      %v2399 = vpack.c.b16 %v2312, %v2309
      %v2400 = vpack.c.b16 %v2316, %v2313
      %v2401 = vpack.c.b16 %v2317, %v2314
      %v2402 = vpack.c.b16 %v2318, %v2315
      %v2403 = vpack.c.b16 %v2322, %v2319
      %v2404 = vpack.c.b16 %v2323, %v2320
      %v2405 = vpack.c.b16 %v2324, %v2321
      %v2406 = vpack.c.b16 %v2328, %v2325
      %v2407 = vpack.c.b16 %v2329, %v2326
      %v2408 = vpack.c.b16 %v2330, %v2327
      %v2409 = vpack.c.b16 %v2334, %v2331
      %v2410 = vpack.c.b16 %v2335, %v2332
      %v2411 = vpack.c.b16 %v2336, %v2333
      %v2412 = vpack.c.b16 %v2340, %v2337
      %v2413 = vpack.c.b16 %v2341, %v2338
      %v2414 = vpack.c.b16 %v2342, %v2339
      %v2415 = vpack.c.b16 %v2346, %v2343
      %v2416 = vpack.c.b16 %v2347, %v2344
      %v2417 = vpack.c.b16 %v2348, %v2345
      %v2418 = vpack.c.b16 %v2352, %v2349
      %v2419 = vpack.c.b16 %v2353, %v2350
      %v2420 = vpack.c.b16 %v2354, %v2351
      %v2421 = vpack.c.b16 %v2358, %v2355
      %v2422 = vpack.c.b16 %v2359, %v2356
      %v2423 = vpack.c.b16 %v2360, %v2357
      %v2424 = vpack.c.b16 %v2364, %v2361
      %v2425 = vpack.c.b16 %v2365, %v2362
      %v2426 = vpack.c.b16 %v2366, %v2363
      %v2427 = vpack.c.b16 %v2370, %v2367
      %v2428 = vpack.c.b16 %v2371, %v2368
      %v2429 = vpack.c.b16 %v2372, %v2369
      %v2430 = vpack.c.b16 %v2376, %v2373
      %v2431 = vpack.c.b16 %v2377, %v2374
      %v2432 = vpack.c.b16 %v2378, %v2375
      %v2433 = vpack.c.b16 %v2382, %v2379
      %v2434 = vpack.c.b16 %v2383, %v2380
      %v2435 = vpack.c.b16 %v2384, %v2381
      %v2436 = vpack.c.b16 %v2388, %v2385
      %v2437 = vpack.c.b16 %v2389, %v2386
      %v2438 = vpack.c.b16 %v2390, %v2387
      %v2535 = vunpack.c.l.b16 %v1403
      %v2536 = vunpack.c.l.b16 %v1404
      %v2537 = vunpack.c.l.b16 %v1405
      %v2538 = vunpack.c.l.b16 %v1406
      %v2539 = vunpack.c.l.b16 %v1407
      %v2540 = vunpack.c.l.b16 %v1408
      %v2541 = vunpack.c.l.b16 %v1409
      %v2542 = vunpack.c.l.b16 %v1410
      %v2543 = vunpack.c.l.b16 %v1411
      %v2544 = vunpack.c.l.b16 %v1412
      %v2545 = vunpack.c.l.b16 %v1413
      %v2546 = vunpack.c.l.b16 %v1414
      %v2547 = vunpack.c.l.b16 %v1415
      %v2548 = vunpack.c.l.b16 %v1416
      %v2549 = vunpack.c.l.b16 %v1417
      %v2550 = vunpack.c.l.b16 %v1418
      %v2551 = vunpack.c.l.b16 %v1419
      %v2552 = vunpack.c.l.b16 %v1420
      %v2553 = vunpack.c.l.b16 %v1421
      %v2554 = vunpack.c.l.b16 %v1422
      %v2555 = vunpack.c.l.b16 %v1423
      %v2556 = vunpack.c.l.b16 %v1424
      %v2557 = vunpack.c.l.b16 %v1425
      %v2558 = vunpack.c.l.b16 %v1426
      %v2559 = vunpack.c.l.b16 %v1427
      %v2560 = vunpack.c.l.b16 %v1428
      %v2561 = vunpack.c.l.b16 %v1429
      %v2562 = vunpack.c.l.b16 %v1430
      %v2563 = vunpack.c.l.b16 %v1431
      %v2564 = vunpack.c.l.b16 %v1432
      %v2565 = vunpack.c.l.b16 %v1433
      %v2566 = vunpack.c.l.b16 %v1434
      %v2567 = vunpack.c.l.b16 %v1435
      %v2568 = vunpack.c.l.b16 %v1436
      %v2569 = vunpack.c.l.b16 %v1437
      %v2570 = vunpack.c.l.b16 %v1438
      %v2571 = vunpack.c.l.b16 %v1439
      %v2572 = vunpack.c.l.b16 %v1440
      %v2573 = vunpack.c.l.b16 %v1441
      %v2574 = vunpack.c.l.b16 %v1442
      %v2575 = vunpack.c.l.b16 %v1443
      %v2576 = vunpack.c.l.b16 %v1444
      %v2577 = vunpack.c.l.b16 %v1445
      %v2578 = vunpack.c.l.b16 %v1446
      %v2579 = vunpack.c.l.b16 %v1447
      %v2580 = vunpack.c.l.b16 %v1448
      %v2581 = vunpack.c.l.b16 %v1449
      %v2582 = vunpack.c.l.b16 %v1450
      %v2583 = vpack.c.b16 %v2536, %v2535
      %v2584 = vpack.c.b16 %v2538, %v2537
      %v2585 = vpack.c.b16 %v2540, %v2539
      %v2586 = vpack.c.b16 %v2542, %v2541
      %v2587 = vpack.c.b16 %v2544, %v2543
      %v2588 = vpack.c.b16 %v2546, %v2545
      %v2589 = vpack.c.b16 %v2548, %v2547
      %v2590 = vpack.c.b16 %v2550, %v2549
      %v2591 = vpack.c.b16 %v2552, %v2551
      %v2592 = vpack.c.b16 %v2554, %v2553
      %v2593 = vpack.c.b16 %v2556, %v2555
      %v2594 = vpack.c.b16 %v2558, %v2557
      %v2595 = vpack.c.b16 %v2560, %v2559
      %v2596 = vpack.c.b16 %v2562, %v2561
      %v2597 = vpack.c.b16 %v2564, %v2563
      %v2598 = vpack.c.b16 %v2566, %v2565
      %v2599 = vpack.c.b16 %v2568, %v2567
      %v2600 = vpack.c.b16 %v2570, %v2569
      %v2601 = vpack.c.b16 %v2572, %v2571
      %v2602 = vpack.c.b16 %v2574, %v2573
      %v2603 = vpack.c.b16 %v2576, %v2575
      %v2604 = vpack.c.b16 %v2578, %v2577
      %v2605 = vpack.c.b16 %v2580, %v2579
      %v2606 = vpack.c.b16 %v2582, %v2581
      %2631 = vmatpush.bf16.msra.mxu0 %v2590
      %2632 = vmatpush.bf16.msra.mxu0 %v2589
      %2633 = vmatpush.bf16.msra.mxu0 %v2588
      %2634 = vmatpush.bf16.msra.mxu0 %v2587
      %2635 = vmatpush.bf16.msra.mxu0 %v2586
      %2636 = vmatpush.bf16.msra.mxu0 %v2585
      %2637 = vmatpush.bf16.msra.mxu0 %v2584
      %2638 = vmatpush.bf16.msra.mxu0 %v2583
      %2639 = vmatmul.bf16.gmra.mxu0 %v2391
      %v2640 = vpop.f32.mrf.mxu0
      %v2641 = vadd.f32 %v2152, %v2640
      %v2642 = vpop.f32.mrf.mxu0
      %v2643 = vadd.f32 %v2154, %v2642
      %2644 = vmatmul.bf16.gmra.mxu0 %v2394
      %v2645 = vpop.f32.mrf.mxu0
      %v2646 = vadd.f32 %v2157, %v2645
      %v2647 = vpop.f32.mrf.mxu0
      %v2648 = vadd.f32 %v2159, %v2647
      %2649 = vmatmul.bf16.gmra.mxu0 %v2397
      %v2650 = vpop.f32.mrf.mxu0
      %v2651 = vadd.f32 %v2162, %v2650
      %v2652 = vpop.f32.mrf.mxu0
      %v2653 = vadd.f32 %v2164, %v2652
      %2654 = vmatmul.bf16.gmra.mxu0 %v2400
      %v2655 = vpop.f32.mrf.mxu0
      %v2656 = vadd.f32 %v2167, %v2655
      %v2657 = vpop.f32.mrf.mxu0
      %v2658 = vadd.f32 %v2169, %v2657
      %2659 = vmatmul.bf16.gmra.mxu0 %v2403
      %v2660 = vpop.f32.mrf.mxu0
      %v2661 = vadd.f32 %v2172, %v2660
      %v2662 = vpop.f32.mrf.mxu0
      %v2663 = vadd.f32 %v2174, %v2662
      %2664 = vmatmul.bf16.gmra.mxu0 %v2406
      %v2665 = vpop.f32.mrf.mxu0
      %v2666 = vadd.f32 %v2177, %v2665
      %v2667 = vpop.f32.mrf.mxu0
      %v2668 = vadd.f32 %v2179, %v2667
      %2669 = vmatmul.bf16.gmra.mxu0 %v2409
      %v2670 = vpop.f32.mrf.mxu0
      %v2671 = vadd.f32 %v2182, %v2670
      %v2672 = vpop.f32.mrf.mxu0
      %v2673 = vadd.f32 %v2184, %v2672
      %2674 = vmatmul.bf16.gmra.mxu0 %v2412
      %v2675 = vpop.f32.mrf.mxu0
      %v2676 = vadd.f32 %v2187, %v2675
      %v2677 = vpop.f32.mrf.mxu0
      %v2678 = vadd.f32 %v2189, %v2677
      %2679 = vmatmul.bf16.gmra.mxu0 %v2415
      %v2680 = vpop.f32.mrf.mxu0
      %v2681 = vadd.f32 %v2192, %v2680
      %v2682 = vpop.f32.mrf.mxu0
      %v2683 = vadd.f32 %v2194, %v2682
      %2684 = vmatmul.bf16.gmra.mxu0 %v2418
      %v2685 = vpop.f32.mrf.mxu0
      %v2686 = vadd.f32 %v2197, %v2685
      %v2687 = vpop.f32.mrf.mxu0
      %v2688 = vadd.f32 %v2199, %v2687
      %2689 = vmatmul.bf16.gmra.mxu0 %v2421
      %v2690 = vpop.f32.mrf.mxu0
      %v2691 = vadd.f32 %v2202, %v2690
      %v2692 = vpop.f32.mrf.mxu0
      %v2693 = vadd.f32 %v2204, %v2692
      %2694 = vmatmul.bf16.gmra.mxu0 %v2424
      %v2695 = vpop.f32.mrf.mxu0
      %v2696 = vadd.f32 %v2207, %v2695
      %v2697 = vpop.f32.mrf.mxu0
      %v2698 = vadd.f32 %v2209, %v2697
      %2699 = vmatmul.bf16.gmra.mxu0 %v2427
      %v2700 = vpop.f32.mrf.mxu0
      %v2701 = vadd.f32 %v2212, %v2700
      %v2702 = vpop.f32.mrf.mxu0
      %v2703 = vadd.f32 %v2214, %v2702
      %2704 = vmatmul.bf16.gmra.mxu0 %v2430
      %v2705 = vpop.f32.mrf.mxu0
      %v2706 = vadd.f32 %v2217, %v2705
      %v2707 = vpop.f32.mrf.mxu0
      %v2708 = vadd.f32 %v2219, %v2707
      %2709 = vmatmul.bf16.gmra.mxu0 %v2433
      %v2710 = vpop.f32.mrf.mxu0
      %v2711 = vadd.f32 %v2222, %v2710
      %v2712 = vpop.f32.mrf.mxu0
      %v2713 = vadd.f32 %v2224, %v2712
      %2714 = vmatmul.bf16.gmra.mxu0 %v2436
      %v2715 = vpop.f32.mrf.mxu0
      %v2716 = vadd.f32 %v2227, %v2715
      %v2717 = vpop.f32.mrf.mxu0
      %v2718 = vadd.f32 %v2229, %v2717
      %2719 = vdwg.mxu0
      %2720 = vmatpush.bf16.msra.mxu0 %v2598
      %2721 = vmatpush.bf16.msra.mxu0 %v2597
      %2722 = vmatpush.bf16.msra.mxu0 %v2596
      %2723 = vmatpush.bf16.msra.mxu0 %v2595
      %2724 = vmatpush.bf16.msra.mxu0 %v2594
      %2725 = vmatpush.bf16.msra.mxu0 %v2593
      %2726 = vmatpush.bf16.msra.mxu0 %v2592
      %2727 = vmatpush.bf16.msra.mxu0 %v2591
      %2728 = vmatmul.bf16.gmra.mxu0 %v2392
      %v2729 = vpop.f32.mrf.mxu0
      %v2730 = vadd.f32 %v2641, %v2729
      %v2731 = vpop.f32.mrf.mxu0
      %v2732 = vadd.f32 %v2643, %v2731
      %2733 = vmatmul.bf16.gmra.mxu0 %v2395
      %v2734 = vpop.f32.mrf.mxu0
      %v2735 = vadd.f32 %v2646, %v2734
      %v2736 = vpop.f32.mrf.mxu0
      %v2737 = vadd.f32 %v2648, %v2736
      %2738 = vmatmul.bf16.gmra.mxu0 %v2398
      %v2739 = vpop.f32.mrf.mxu0
      %v2740 = vadd.f32 %v2651, %v2739
      %v2741 = vpop.f32.mrf.mxu0
      %v2742 = vadd.f32 %v2653, %v2741
      %2743 = vmatmul.bf16.gmra.mxu0 %v2401
      %v2744 = vpop.f32.mrf.mxu0
      %v2745 = vadd.f32 %v2656, %v2744
      %v2746 = vpop.f32.mrf.mxu0
      %v2747 = vadd.f32 %v2658, %v2746
      %2748 = vmatmul.bf16.gmra.mxu0 %v2404
      %v2749 = vpop.f32.mrf.mxu0
      %v2750 = vadd.f32 %v2661, %v2749
      %v2751 = vpop.f32.mrf.mxu0
      %v2752 = vadd.f32 %v2663, %v2751
      %2753 = vmatmul.bf16.gmra.mxu0 %v2407
      %v2754 = vpop.f32.mrf.mxu0
      %v2755 = vadd.f32 %v2666, %v2754
      %v2756 = vpop.f32.mrf.mxu0
      %v2757 = vadd.f32 %v2668, %v2756
      %2758 = vmatmul.bf16.gmra.mxu0 %v2410
      %v2759 = vpop.f32.mrf.mxu0
      %v2760 = vadd.f32 %v2671, %v2759
      %v2761 = vpop.f32.mrf.mxu0
      %v2762 = vadd.f32 %v2673, %v2761
      %2763 = vmatmul.bf16.gmra.mxu0 %v2413
      %v2764 = vpop.f32.mrf.mxu0
      %v2765 = vadd.f32 %v2676, %v2764
      %v2766 = vpop.f32.mrf.mxu0
      %v2767 = vadd.f32 %v2678, %v2766
      %2768 = vmatmul.bf16.gmra.mxu0 %v2416
      %v2769 = vpop.f32.mrf.mxu0
      %v2770 = vadd.f32 %v2681, %v2769
      %v2771 = vpop.f32.mrf.mxu0
      %v2772 = vadd.f32 %v2683, %v2771
      %2773 = vmatmul.bf16.gmra.mxu0 %v2419
      %v2774 = vpop.f32.mrf.mxu0
      %v2775 = vadd.f32 %v2686, %v2774
      %v2776 = vpop.f32.mrf.mxu0
      %v2777 = vadd.f32 %v2688, %v2776
      %2778 = vmatmul.bf16.gmra.mxu0 %v2422
      %v2779 = vpop.f32.mrf.mxu0
      %v2780 = vadd.f32 %v2691, %v2779
      %v2781 = vpop.f32.mrf.mxu0
      %v2782 = vadd.f32 %v2693, %v2781
      %2783 = vmatmul.bf16.gmra.mxu0 %v2425
      %v2784 = vpop.f32.mrf.mxu0
      %v2785 = vadd.f32 %v2696, %v2784
      %v2786 = vpop.f32.mrf.mxu0
      %v2787 = vadd.f32 %v2698, %v2786
      %2788 = vmatmul.bf16.gmra.mxu0 %v2428
      %v2789 = vpop.f32.mrf.mxu0
      %v2790 = vadd.f32 %v2701, %v2789
      %v2791 = vpop.f32.mrf.mxu0
      %v2792 = vadd.f32 %v2703, %v2791
      %2793 = vmatmul.bf16.gmra.mxu0 %v2431
      %v2794 = vpop.f32.mrf.mxu0
      %v2795 = vadd.f32 %v2706, %v2794
      %v2796 = vpop.f32.mrf.mxu0
      %v2797 = vadd.f32 %v2708, %v2796
      %2798 = vmatmul.bf16.gmra.mxu0 %v2434
      %v2799 = vpop.f32.mrf.mxu0
      %v2800 = vadd.f32 %v2711, %v2799
      %v2801 = vpop.f32.mrf.mxu0
      %v2802 = vadd.f32 %v2713, %v2801
      %2803 = vmatmul.bf16.gmra.mxu0 %v2437
      %v2804 = vpop.f32.mrf.mxu0
      %v2805 = vadd.f32 %v2716, %v2804
      %v2806 = vpop.f32.mrf.mxu0
      %v2807 = vadd.f32 %v2718, %v2806
      %2808 = vdwg.mxu0
      %2809 = vmatpush.bf16.msra.mxu0 %v2606
      %2810 = vmatpush.bf16.msra.mxu0 %v2605
      %2811 = vmatpush.bf16.msra.mxu0 %v2604
      %2812 = vmatpush.bf16.msra.mxu0 %v2603
      %2813 = vmatpush.bf16.msra.mxu0 %v2602
      %2814 = vmatpush.bf16.msra.mxu0 %v2601
      %2815 = vmatpush.bf16.msra.mxu0 %v2600
      %2816 = vmatpush.bf16.msra.mxu0 %v2599
      %2817 = vmatmul.bf16.gmra.mxu0 %v2393
      %v2818 = vpop.f32.mrf.mxu0
      %v2819 = vadd.f32 %v2730, %v2818
      %v2820 = vpop.f32.mrf.mxu0
      %v2821 = vadd.f32 %v2732, %v2820
      %2822 = vmatmul.bf16.gmra.mxu0 %v2396
      %v2823 = vpop.f32.mrf.mxu0
      %v2824 = vadd.f32 %v2735, %v2823
      %v2825 = vpop.f32.mrf.mxu0
      %v2826 = vadd.f32 %v2737, %v2825
      %2827 = vmatmul.bf16.gmra.mxu0 %v2399
      %v2828 = vpop.f32.mrf.mxu0
      %v2829 = vadd.f32 %v2740, %v2828
      %v2830 = vpop.f32.mrf.mxu0
      %v2831 = vadd.f32 %v2742, %v2830
      %2832 = vmatmul.bf16.gmra.mxu0 %v2402
      %v2833 = vpop.f32.mrf.mxu0
      %v2834 = vadd.f32 %v2745, %v2833
      %v2835 = vpop.f32.mrf.mxu0
      %v2836 = vadd.f32 %v2747, %v2835
      %2837 = vmatmul.bf16.gmra.mxu0 %v2405
      %v2838 = vpop.f32.mrf.mxu0
      %v2839 = vadd.f32 %v2750, %v2838
      %v2840 = vpop.f32.mrf.mxu0
      %v2841 = vadd.f32 %v2752, %v2840
      %2842 = vmatmul.bf16.gmra.mxu0 %v2408
      %v2843 = vpop.f32.mrf.mxu0
      %v2844 = vadd.f32 %v2755, %v2843
      %v2845 = vpop.f32.mrf.mxu0
      %v2846 = vadd.f32 %v2757, %v2845
      %2847 = vmatmul.bf16.gmra.mxu0 %v2411
      %v2848 = vpop.f32.mrf.mxu0
      %v2849 = vadd.f32 %v2760, %v2848
      %v2850 = vpop.f32.mrf.mxu0
      %v2851 = vadd.f32 %v2762, %v2850
      %2852 = vmatmul.bf16.gmra.mxu0 %v2414
      %v2853 = vpop.f32.mrf.mxu0
      %v2854 = vadd.f32 %v2765, %v2853
      %v2855 = vpop.f32.mrf.mxu0
      %v2856 = vadd.f32 %v2767, %v2855
      %2857 = vmatmul.bf16.gmra.mxu0 %v2417
      %v2858 = vpop.f32.mrf.mxu0
      %v2859 = vadd.f32 %v2770, %v2858
      %v2860 = vpop.f32.mrf.mxu0
      %v2861 = vadd.f32 %v2772, %v2860
      %2862 = vmatmul.bf16.gmra.mxu0 %v2420
      %v2863 = vpop.f32.mrf.mxu0
      %v2864 = vadd.f32 %v2775, %v2863
      %v2865 = vpop.f32.mrf.mxu0
      %v2866 = vadd.f32 %v2777, %v2865
      %2867 = vmatmul.bf16.gmra.mxu0 %v2423
      %v2868 = vpop.f32.mrf.mxu0
      %v2869 = vadd.f32 %v2780, %v2868
      %v2870 = vpop.f32.mrf.mxu0
      %v2871 = vadd.f32 %v2782, %v2870
      %2872 = vmatmul.bf16.gmra.mxu0 %v2426
      %v2873 = vpop.f32.mrf.mxu0
      %v2874 = vadd.f32 %v2785, %v2873
      %v2875 = vpop.f32.mrf.mxu0
      %v2876 = vadd.f32 %v2787, %v2875
      %2877 = vmatmul.bf16.gmra.mxu0 %v2429
      %v2878 = vpop.f32.mrf.mxu0
      %v2879 = vadd.f32 %v2790, %v2878
      %v2880 = vpop.f32.mrf.mxu0
      %v2881 = vadd.f32 %v2792, %v2880
      %2882 = vmatmul.bf16.gmra.mxu0 %v2432
      %v2883 = vpop.f32.mrf.mxu0
      %v2884 = vadd.f32 %v2795, %v2883
      %v2885 = vpop.f32.mrf.mxu0
      %v2886 = vadd.f32 %v2797, %v2885
      %2887 = vmatmul.bf16.gmra.mxu0 %v2435
      %v2888 = vpop.f32.mrf.mxu0
      %v2889 = vadd.f32 %v2800, %v2888
      %v2890 = vpop.f32.mrf.mxu0
      %v2891 = vadd.f32 %v2802, %v2890
      %2892 = vmatmul.bf16.gmra.mxu0 %v2438
      %v2893 = vpop.f32.mrf.mxu0
      %v2894 = vadd.f32 %v2805, %v2893
      %v2895 = vpop.f32.mrf.mxu0
      %v2896 = vadd.f32 %v2807, %v2895
      %2897 = vdwg.mxu0
      %s2898 = scalar_lea.vmem [#allocation2], 48
      %v2899 = vld [vmem:[%s2898] sm:$0xff]
      %v2900 = vld [vmem:[%s2898 + $0x8] sm:$0xf]
      %v2901 = vld [vmem:[%s2898 + $0xc] sm:$0xff]
      %v2902 = vld [vmem:[%s2898 + $0x14] sm:$0xf]
      %v2903 = vld [vmem:[%s2898 + $0x18] sm:$0xff]
      %v2904 = vld [vmem:[%s2898 + $0x20] sm:$0xf]
      %v2905 = vld [vmem:[%s2898 + $0x24] sm:$0xff]
      %v2906 = vld [vmem:[%s2898 + $0x2c] sm:$0xf]
      %v2907 = vld [vmem:[%s2898 + $0x30] sm:$0xff]
      %v2908 = vld [vmem:[%s2898 + $0x38] sm:$0xf]
      %v2909 = vld [vmem:[%s2898 + $0x3c] sm:$0xff]
      %v2910 = vld [vmem:[%s2898 + $0x44] sm:$0xf]
      %v2911 = vld [vmem:[%s2898 + $0x48] sm:$0xff]
      %v2912 = vld [vmem:[%s2898 + $0x50] sm:$0xf]
      %v2913 = vld [vmem:[%s2898 + $0x54] sm:$0xff]
      %v2914 = vld [vmem:[%s2898 + $0x5c] sm:$0xf]
      %v2915 = vld [vmem:[%s2898 + $0x60] sm:$0xff]
      %v2916 = vld [vmem:[%s2898 + $0x68] sm:$0xf]
      %v2917 = vld [vmem:[%s2898 + $0x6c] sm:$0xff]
      %v2918 = vld [vmem:[%s2898 + $0x74] sm:$0xf]
      %v2919 = vld [vmem:[%s2898 + $0x78] sm:$0xff]
      %v2920 = vld [vmem:[%s2898 + $0x80] sm:$0xf]
      %v2921 = vld [vmem:[%s2898 + $0x84] sm:$0xff]
      %v2922 = vld [vmem:[%s2898 + $0x8c] sm:$0xf]
      %v2923 = vld [vmem:[%s2898 + $0x90] sm:$0xff]
      %v2924 = vld [vmem:[%s2898 + $0x98] sm:$0xf]
      %v2925 = vld [vmem:[%s2898 + $0x9c] sm:$0xff]
      %v2926 = vld [vmem:[%s2898 + $0xa4] sm:$0xf]
      %v2927 = vld [vmem:[%s2898 + $0xa8] sm:$0xff]
      %v2928 = vld [vmem:[%s2898 + $0xb0] sm:$0xf]
      %v2929 = vld [vmem:[%s2898 + $0xb4] sm:$0xff]
      %v2930 = vld [vmem:[%s2898 + $0xbc] sm:$0xf]
      %v2931 = vld [vmem:[%s2898 + $0xc0] sm:$0xff]
      %v2932 = vld [vmem:[%s2898 + $0xc8] sm:$0xf]
      %v2933 = vld [vmem:[%s2898 + $0xcc] sm:$0xff]
      %v2934 = vld [vmem:[%s2898 + $0xd4] sm:$0xf]
      %v2935 = vld [vmem:[%s2898 + $0xd8] sm:$0xff]
      %v2936 = vld [vmem:[%s2898 + $0xe0] sm:$0xf]
      %v2937 = vld [vmem:[%s2898 + $0xe4] sm:$0xff]
      %v2938 = vld [vmem:[%s2898 + $0xec] sm:$0xf]
      %v2939 = vld [vmem:[%s2898 + $0xf0] sm:$0xff]
      %v2940 = vld [vmem:[%s2898 + $0xf8] sm:$0xf]
      %v2941 = vld [vmem:[%s2898 + $0xfc] sm:$0xff]
      %v2942 = vld [vmem:[%s2898 + $0x104] sm:$0xf]
      %v2943 = vld [vmem:[%s2898 + $0x108] sm:$0xff]
      %v2944 = vld [vmem:[%s2898 + $0x110] sm:$0xf]
      %v2945 = vld [vmem:[%s2898 + $0x114] sm:$0xff]
      %v2946 = vld [vmem:[%s2898 + $0x11c] sm:$0xf]
      %v2947 = vld [vmem:[%s2898 + $0x120] sm:$0xff]
      %v2948 = vld [vmem:[%s2898 + $0x128] sm:$0xf]
      %v2949 = vld [vmem:[%s2898 + $0x12c] sm:$0xff]
      %v2950 = vld [vmem:[%s2898 + $0x134] sm:$0xf]
      %v2951 = vld [vmem:[%s2898 + $0x138] sm:$0xff]
      %v2952 = vld [vmem:[%s2898 + $0x140] sm:$0xf]
      %v2953 = vld [vmem:[%s2898 + $0x144] sm:$0xff]
      %v2954 = vld [vmem:[%s2898 + $0x14c] sm:$0xf]
      %v2955 = vld [vmem:[%s2898 + $0x150] sm:$0xff]
      %v2956 = vld [vmem:[%s2898 + $0x158] sm:$0xf]
      %v2957 = vld [vmem:[%s2898 + $0x15c] sm:$0xff]
      %v2958 = vld [vmem:[%s2898 + $0x164] sm:$0xf]
      %v2959 = vld [vmem:[%s2898 + $0x168] sm:$0xff]
      %v2960 = vld [vmem:[%s2898 + $0x170] sm:$0xf]
      %v2961 = vld [vmem:[%s2898 + $0x174] sm:$0xff]
      %v2962 = vld [vmem:[%s2898 + $0x17c] sm:$0xf]
      %s2963 = scalar_lea.vmem %s1, 384
      %v2964 = vld [vmem:[%s2963] sm:$0xf]
      %v2965 = vld [vmem:[%s2963 + $0x4] sm:$0xf]
      %v2966 = vld [vmem:[%s2963 + $0x8] sm:$0xf]
      %v2967 = vld [vmem:[%s2963 + $0xc] sm:$0xf]
      %v2968 = vld [vmem:[%s2963 + $0x10] sm:$0xf]
      %v2969 = vld [vmem:[%s2963 + $0x14] sm:$0xf]
      %v2970 = vld [vmem:[%s2963 + $0x18] sm:$0xf]
      %v2971 = vld [vmem:[%s2963 + $0x1c] sm:$0xf]
      %v2972 = vld [vmem:[%s2963 + $0x20] sm:$0xf]
      %v2973 = vld [vmem:[%s2963 + $0x24] sm:$0xf]
      %v2974 = vld [vmem:[%s2963 + $0x28] sm:$0xf]
      %v2975 = vld [vmem:[%s2963 + $0x2c] sm:$0xf]
      %v2976 = vld [vmem:[%s2963 + $0x30] sm:$0xf]
      %v2977 = vld [vmem:[%s2963 + $0x34] sm:$0xf]
      %v2978 = vld [vmem:[%s2963 + $0x38] sm:$0xf]
      %v2979 = vld [vmem:[%s2963 + $0x3c] sm:$0xf]
      %v2980 = vld [vmem:[%s2963 + $0x40] sm:$0xf]
      %v2981 = vld [vmem:[%s2963 + $0x44] sm:$0xf]
      %v2982 = vld [vmem:[%s2963 + $0x48] sm:$0xf]
      %v2983 = vld [vmem:[%s2963 + $0x4c] sm:$0xf]
      %v2984 = vld [vmem:[%s2963 + $0x50] sm:$0xf]
      %v2985 = vld [vmem:[%s2963 + $0x54] sm:$0xf]
      %v2986 = vld [vmem:[%s2963 + $0x58] sm:$0xf]
      %v2987 = vld [vmem:[%s2963 + $0x5c] sm:$0xf]
      %v2988 = vld [vmem:[%s2963 + $0x60] sm:$0xf]
      %v2989 = vld [vmem:[%s2963 + $0x64] sm:$0xf]
      %v2990 = vld [vmem:[%s2963 + $0x68] sm:$0xf]
      %v2991 = vld [vmem:[%s2963 + $0x6c] sm:$0xf]
      %v2992 = vld [vmem:[%s2963 + $0x70] sm:$0xf]
      %v2993 = vld [vmem:[%s2963 + $0x74] sm:$0xf]
      %v2994 = vld [vmem:[%s2963 + $0x78] sm:$0xf]
      %v2995 = vld [vmem:[%s2963 + $0x7c] sm:$0xf]
      %v2996 = vld [vmem:[%s2963 + $0x80] sm:$0xf]
      %v2997 = vld [vmem:[%s2963 + $0x84] sm:$0xf]
      %v2998 = vld [vmem:[%s2963 + $0x88] sm:$0xf]
      %v2999 = vld [vmem:[%s2963 + $0x8c] sm:$0xf]
      %v3000 = vld [vmem:[%s2963 + $0x90] sm:$0xf]
      %v3001 = vld [vmem:[%s2963 + $0x94] sm:$0xf]
      %v3002 = vld [vmem:[%s2963 + $0x98] sm:$0xf]
      %v3003 = vld [vmem:[%s2963 + $0x9c] sm:$0xf]
      %v3004 = vld [vmem:[%s2963 + $0xa0] sm:$0xf]
      %v3005 = vld [vmem:[%s2963 + $0xa4] sm:$0xf]
      %v3006 = vld [vmem:[%s2963 + $0xa8] sm:$0xf]
      %v3007 = vld [vmem:[%s2963 + $0xac] sm:$0xf]
      %v3008 = vld [vmem:[%s2963 + $0xb0] sm:$0xf]
      %v3009 = vld [vmem:[%s2963 + $0xb4] sm:$0xf]
      %v3010 = vld [vmem:[%s2963 + $0xb8] sm:$0xf]
      %v3011 = vld [vmem:[%s2963 + $0xbc] sm:$0xf]
      %v3076 = vunpack.c.l.b16 %v2899
      %v3077 = vunpack.c.h.b16 %v2899
      %v3078 = vunpack.c.l.b16 %v2900
      %v3079 = vunpack.c.l.b16 %v2901
      %v3080 = vunpack.c.h.b16 %v2901
      %v3081 = vunpack.c.l.b16 %v2902
      %v3082 = vunpack.c.l.b16 %v2903
      %v3083 = vunpack.c.h.b16 %v2903
      %v3084 = vunpack.c.l.b16 %v2904
      %v3085 = vunpack.c.l.b16 %v2905
      %v3086 = vunpack.c.h.b16 %v2905
      %v3087 = vunpack.c.l.b16 %v2906
      %v3088 = vunpack.c.l.b16 %v2907
      %v3089 = vunpack.c.h.b16 %v2907
      %v3090 = vunpack.c.l.b16 %v2908
      %v3091 = vunpack.c.l.b16 %v2909
      %v3092 = vunpack.c.h.b16 %v2909
      %v3093 = vunpack.c.l.b16 %v2910
      %v3094 = vunpack.c.l.b16 %v2911
      %v3095 = vunpack.c.h.b16 %v2911
      %v3096 = vunpack.c.l.b16 %v2912
      %v3097 = vunpack.c.l.b16 %v2913
      %v3098 = vunpack.c.h.b16 %v2913
      %v3099 = vunpack.c.l.b16 %v2914
      %v3100 = vunpack.c.l.b16 %v2915
      %v3101 = vunpack.c.h.b16 %v2915
      %v3102 = vunpack.c.l.b16 %v2916
      %v3103 = vunpack.c.l.b16 %v2917
      %v3104 = vunpack.c.h.b16 %v2917
      %v3105 = vunpack.c.l.b16 %v2918
      %v3106 = vunpack.c.l.b16 %v2919
      %v3107 = vunpack.c.h.b16 %v2919
      %v3108 = vunpack.c.l.b16 %v2920
      %v3109 = vunpack.c.l.b16 %v2921
      %v3110 = vunpack.c.h.b16 %v2921
      %v3111 = vunpack.c.l.b16 %v2922
      %v3112 = vunpack.c.l.b16 %v2923
      %v3113 = vunpack.c.h.b16 %v2923
      %v3114 = vunpack.c.l.b16 %v2924
      %v3115 = vunpack.c.l.b16 %v2925
      %v3116 = vunpack.c.h.b16 %v2925
      %v3117 = vunpack.c.l.b16 %v2926
      %v3118 = vunpack.c.l.b16 %v2927
      %v3119 = vunpack.c.h.b16 %v2927
      %v3120 = vunpack.c.l.b16 %v2928
      %v3121 = vunpack.c.l.b16 %v2929
      %v3122 = vunpack.c.h.b16 %v2929
      %v3123 = vunpack.c.l.b16 %v2930
      %v3124 = vunpack.c.l.b16 %v2931
      %v3125 = vunpack.c.h.b16 %v2931
      %v3126 = vunpack.c.l.b16 %v2932
      %v3127 = vunpack.c.l.b16 %v2933
      %v3128 = vunpack.c.h.b16 %v2933
      %v3129 = vunpack.c.l.b16 %v2934
      %v3130 = vunpack.c.l.b16 %v2935
      %v3131 = vunpack.c.h.b16 %v2935
      %v3132 = vunpack.c.l.b16 %v2936
      %v3133 = vunpack.c.l.b16 %v2937
      %v3134 = vunpack.c.h.b16 %v2937
      %v3135 = vunpack.c.l.b16 %v2938
      %v3136 = vunpack.c.l.b16 %v2939
      %v3137 = vunpack.c.h.b16 %v2939
      %v3138 = vunpack.c.l.b16 %v2940
      %v3139 = vunpack.c.l.b16 %v2941
      %v3140 = vunpack.c.h.b16 %v2941
      %v3141 = vunpack.c.l.b16 %v2942
      %v3142 = vunpack.c.l.b16 %v2943
      %v3143 = vunpack.c.h.b16 %v2943
      %v3144 = vunpack.c.l.b16 %v2944
      %v3145 = vunpack.c.l.b16 %v2945
      %v3146 = vunpack.c.h.b16 %v2945
      %v3147 = vunpack.c.l.b16 %v2946
      %v3148 = vunpack.c.l.b16 %v2947
      %v3149 = vunpack.c.h.b16 %v2947
      %v3150 = vunpack.c.l.b16 %v2948
      %v3151 = vunpack.c.l.b16 %v2949
      %v3152 = vunpack.c.h.b16 %v2949
      %v3153 = vunpack.c.l.b16 %v2950
      %v3154 = vunpack.c.l.b16 %v2951
      %v3155 = vunpack.c.h.b16 %v2951
      %v3156 = vunpack.c.l.b16 %v2952
      %v3157 = vunpack.c.l.b16 %v2953
      %v3158 = vunpack.c.h.b16 %v2953
      %v3159 = vunpack.c.l.b16 %v2954
      %v3160 = vunpack.c.l.b16 %v2955
      %v3161 = vunpack.c.h.b16 %v2955
      %v3162 = vunpack.c.l.b16 %v2956
      %v3163 = vunpack.c.l.b16 %v2957
      %v3164 = vunpack.c.h.b16 %v2957
      %v3165 = vunpack.c.l.b16 %v2958
      %v3166 = vunpack.c.l.b16 %v2959
      %v3167 = vunpack.c.h.b16 %v2959
      %v3168 = vunpack.c.l.b16 %v2960
      %v3169 = vunpack.c.l.b16 %v2961
      %v3170 = vunpack.c.h.b16 %v2961
      %v3171 = vunpack.c.l.b16 %v2962
      %v3172 = vpack.c.b16 %v3079, %v3076
      %v3173 = vpack.c.b16 %v3080, %v3077
      %v3174 = vpack.c.b16 %v3081, %v3078
      %v3175 = vpack.c.b16 %v3085, %v3082
      %v3176 = vpack.c.b16 %v3086, %v3083
      %v3177 = vpack.c.b16 %v3087, %v3084
      %v3178 = vpack.c.b16 %v3091, %v3088
      %v3179 = vpack.c.b16 %v3092, %v3089
      %v3180 = vpack.c.b16 %v3093, %v3090
      %v3181 = vpack.c.b16 %v3097, %v3094
      %v3182 = vpack.c.b16 %v3098, %v3095
      %v3183 = vpack.c.b16 %v3099, %v3096
      %v3184 = vpack.c.b16 %v3103, %v3100
      %v3185 = vpack.c.b16 %v3104, %v3101
      %v3186 = vpack.c.b16 %v3105, %v3102
      %v3187 = vpack.c.b16 %v3109, %v3106
      %v3188 = vpack.c.b16 %v3110, %v3107
      %v3189 = vpack.c.b16 %v3111, %v3108
      %v3190 = vpack.c.b16 %v3115, %v3112
      %v3191 = vpack.c.b16 %v3116, %v3113
      %v3192 = vpack.c.b16 %v3117, %v3114
      %v3193 = vpack.c.b16 %v3121, %v3118
      %v3194 = vpack.c.b16 %v3122, %v3119
      %v3195 = vpack.c.b16 %v3123, %v3120
      %v3196 = vpack.c.b16 %v3127, %v3124
      %v3197 = vpack.c.b16 %v3128, %v3125
      %v3198 = vpack.c.b16 %v3129, %v3126
      %v3199 = vpack.c.b16 %v3133, %v3130
      %v3200 = vpack.c.b16 %v3134, %v3131
      %v3201 = vpack.c.b16 %v3135, %v3132
      %v3202 = vpack.c.b16 %v3139, %v3136
      %v3203 = vpack.c.b16 %v3140, %v3137
      %v3204 = vpack.c.b16 %v3141, %v3138
      %v3205 = vpack.c.b16 %v3145, %v3142
      %v3206 = vpack.c.b16 %v3146, %v3143
      %v3207 = vpack.c.b16 %v3147, %v3144
      %v3208 = vpack.c.b16 %v3151, %v3148
      %v3209 = vpack.c.b16 %v3152, %v3149
      %v3210 = vpack.c.b16 %v3153, %v3150
      %v3211 = vpack.c.b16 %v3157, %v3154
      %v3212 = vpack.c.b16 %v3158, %v3155
      %v3213 = vpack.c.b16 %v3159, %v3156
      %v3214 = vpack.c.b16 %v3163, %v3160
      %v3215 = vpack.c.b16 %v3164, %v3161
      %v3216 = vpack.c.b16 %v3165, %v3162
      %v3217 = vpack.c.b16 %v3169, %v3166
      %v3218 = vpack.c.b16 %v3170, %v3167
      %v3219 = vpack.c.b16 %v3171, %v3168
      %v3316 = vunpack.c.l.b16 %v2964
      %v3317 = vunpack.c.l.b16 %v2965
      %v3318 = vunpack.c.l.b16 %v2966
      %v3319 = vunpack.c.l.b16 %v2967
      %v3320 = vunpack.c.l.b16 %v2968
      %v3321 = vunpack.c.l.b16 %v2969
      %v3322 = vunpack.c.l.b16 %v2970
      %v3323 = vunpack.c.l.b16 %v2971
      %v3324 = vunpack.c.l.b16 %v2972
      %v3325 = vunpack.c.l.b16 %v2973
      %v3326 = vunpack.c.l.b16 %v2974
      %v3327 = vunpack.c.l.b16 %v2975
      %v3328 = vunpack.c.l.b16 %v2976
      %v3329 = vunpack.c.l.b16 %v2977
      %v3330 = vunpack.c.l.b16 %v2978
      %v3331 = vunpack.c.l.b16 %v2979
      %v3332 = vunpack.c.l.b16 %v2980
      %v3333 = vunpack.c.l.b16 %v2981
      %v3334 = vunpack.c.l.b16 %v2982
      %v3335 = vunpack.c.l.b16 %v2983
      %v3336 = vunpack.c.l.b16 %v2984
      %v3337 = vunpack.c.l.b16 %v2985
      %v3338 = vunpack.c.l.b16 %v2986
      %v3339 = vunpack.c.l.b16 %v2987
      %v3340 = vunpack.c.l.b16 %v2988
      %v3341 = vunpack.c.l.b16 %v2989
      %v3342 = vunpack.c.l.b16 %v2990
      %v3343 = vunpack.c.l.b16 %v2991
      %v3344 = vunpack.c.l.b16 %v2992
      %v3345 = vunpack.c.l.b16 %v2993
      %v3346 = vunpack.c.l.b16 %v2994
      %v3347 = vunpack.c.l.b16 %v2995
      %v3348 = vunpack.c.l.b16 %v2996
      %v3349 = vunpack.c.l.b16 %v2997
      %v3350 = vunpack.c.l.b16 %v2998
      %v3351 = vunpack.c.l.b16 %v2999
      %v3352 = vunpack.c.l.b16 %v3000
      %v3353 = vunpack.c.l.b16 %v3001
      %v3354 = vunpack.c.l.b16 %v3002
      %v3355 = vunpack.c.l.b16 %v3003
      %v3356 = vunpack.c.l.b16 %v3004
      %v3357 = vunpack.c.l.b16 %v3005
      %v3358 = vunpack.c.l.b16 %v3006
      %v3359 = vunpack.c.l.b16 %v3007
      %v3360 = vunpack.c.l.b16 %v3008
      %v3361 = vunpack.c.l.b16 %v3009
      %v3362 = vunpack.c.l.b16 %v3010
      %v3363 = vunpack.c.l.b16 %v3011
      %v3364 = vpack.c.b16 %v3317, %v3316
      %v3365 = vpack.c.b16 %v3319, %v3318
      %v3366 = vpack.c.b16 %v3321, %v3320
      %v3367 = vpack.c.b16 %v3323, %v3322
      %v3368 = vpack.c.b16 %v3325, %v3324
      %v3369 = vpack.c.b16 %v3327, %v3326
      %v3370 = vpack.c.b16 %v3329, %v3328
      %v3371 = vpack.c.b16 %v3331, %v3330
      %v3372 = vpack.c.b16 %v3333, %v3332
      %v3373 = vpack.c.b16 %v3335, %v3334
      %v3374 = vpack.c.b16 %v3337, %v3336
      %v3375 = vpack.c.b16 %v3339, %v3338
      %v3376 = vpack.c.b16 %v3341, %v3340
      %v3377 = vpack.c.b16 %v3343, %v3342
      %v3378 = vpack.c.b16 %v3345, %v3344
      %v3379 = vpack.c.b16 %v3347, %v3346
      %v3380 = vpack.c.b16 %v3349, %v3348
      %v3381 = vpack.c.b16 %v3351, %v3350
      %v3382 = vpack.c.b16 %v3353, %v3352
      %v3383 = vpack.c.b16 %v3355, %v3354
      %v3384 = vpack.c.b16 %v3357, %v3356
      %v3385 = vpack.c.b16 %v3359, %v3358
      %v3386 = vpack.c.b16 %v3361, %v3360
      %v3387 = vpack.c.b16 %v3363, %v3362
      %3412 = vmatpush.bf16.msra.mxu0 %v3371
      %3413 = vmatpush.bf16.msra.mxu0 %v3370
      %3414 = vmatpush.bf16.msra.mxu0 %v3369
      %3415 = vmatpush.bf16.msra.mxu0 %v3368
      %3416 = vmatpush.bf16.msra.mxu0 %v3367
      %3417 = vmatpush.bf16.msra.mxu0 %v3366
      %3418 = vmatpush.bf16.msra.mxu0 %v3365
      %3419 = vmatpush.bf16.msra.mxu0 %v3364
      %3420 = vmatmul.bf16.gmra.mxu0 %v3172
      %v3421 = vpop.f32.mrf.mxu0
      %v3422 = vadd.f32 0.0, %v3421
      %v3423 = vpop.f32.mrf.mxu0
      %v3424 = vadd.f32 0.0, %v3423
      %3425 = vmatmul.bf16.gmra.mxu0 %v3175
      %v3426 = vpop.f32.mrf.mxu0
      %v3427 = vadd.f32 0.0, %v3426
      %v3428 = vpop.f32.mrf.mxu0
      %v3429 = vadd.f32 0.0, %v3428
      %3430 = vmatmul.bf16.gmra.mxu0 %v3178
      %v3431 = vpop.f32.mrf.mxu0
      %v3432 = vadd.f32 0.0, %v3431
      %v3433 = vpop.f32.mrf.mxu0
      %v3434 = vadd.f32 0.0, %v3433
      %3435 = vmatmul.bf16.gmra.mxu0 %v3181
      %v3436 = vpop.f32.mrf.mxu0
      %v3437 = vadd.f32 0.0, %v3436
      %v3438 = vpop.f32.mrf.mxu0
      %v3439 = vadd.f32 0.0, %v3438
      %3440 = vmatmul.bf16.gmra.mxu0 %v3184
      %v3441 = vpop.f32.mrf.mxu0
      %v3442 = vadd.f32 0.0, %v3441
      %v3443 = vpop.f32.mrf.mxu0
      %v3444 = vadd.f32 0.0, %v3443
      %3445 = vmatmul.bf16.gmra.mxu0 %v3187
      %v3446 = vpop.f32.mrf.mxu0
      %v3447 = vadd.f32 0.0, %v3446
      %v3448 = vpop.f32.mrf.mxu0
      %v3449 = vadd.f32 0.0, %v3448
      %3450 = vmatmul.bf16.gmra.mxu0 %v3190
      %v3451 = vpop.f32.mrf.mxu0
      %v3452 = vadd.f32 0.0, %v3451
      %v3453 = vpop.f32.mrf.mxu0
      %v3454 = vadd.f32 0.0, %v3453
      %3455 = vmatmul.bf16.gmra.mxu0 %v3193
      %v3456 = vpop.f32.mrf.mxu0
      %v3457 = vadd.f32 0.0, %v3456
      %v3458 = vpop.f32.mrf.mxu0
      %v3459 = vadd.f32 0.0, %v3458
      %3460 = vmatmul.bf16.gmra.mxu0 %v3196
      %v3461 = vpop.f32.mrf.mxu0
      %v3462 = vadd.f32 0.0, %v3461
      %v3463 = vpop.f32.mrf.mxu0
      %v3464 = vadd.f32 0.0, %v3463
      %3465 = vmatmul.bf16.gmra.mxu0 %v3199
      %v3466 = vpop.f32.mrf.mxu0
      %v3467 = vadd.f32 0.0, %v3466
      %v3468 = vpop.f32.mrf.mxu0
      %v3469 = vadd.f32 0.0, %v3468
      %3470 = vmatmul.bf16.gmra.mxu0 %v3202
      %v3471 = vpop.f32.mrf.mxu0
      %v3472 = vadd.f32 0.0, %v3471
      %v3473 = vpop.f32.mrf.mxu0
      %v3474 = vadd.f32 0.0, %v3473
      %3475 = vmatmul.bf16.gmra.mxu0 %v3205
      %v3476 = vpop.f32.mrf.mxu0
      %v3477 = vadd.f32 0.0, %v3476
      %v3478 = vpop.f32.mrf.mxu0
      %v3479 = vadd.f32 0.0, %v3478
      %3480 = vmatmul.bf16.gmra.mxu0 %v3208
      %v3481 = vpop.f32.mrf.mxu0
      %v3482 = vadd.f32 0.0, %v3481
      %v3483 = vpop.f32.mrf.mxu0
      %v3484 = vadd.f32 0.0, %v3483
      %3485 = vmatmul.bf16.gmra.mxu0 %v3211
      %v3486 = vpop.f32.mrf.mxu0
      %v3487 = vadd.f32 0.0, %v3486
      %v3488 = vpop.f32.mrf.mxu0
      %v3489 = vadd.f32 0.0, %v3488
      %3490 = vmatmul.bf16.gmra.mxu0 %v3214
      %v3491 = vpop.f32.mrf.mxu0
      %v3492 = vadd.f32 0.0, %v3491
      %v3493 = vpop.f32.mrf.mxu0
      %v3494 = vadd.f32 0.0, %v3493
      %3495 = vmatmul.bf16.gmra.mxu0 %v3217
      %v3496 = vpop.f32.mrf.mxu0
      %v3497 = vadd.f32 0.0, %v3496
      %v3498 = vpop.f32.mrf.mxu0
      %v3499 = vadd.f32 0.0, %v3498
      %3500 = vdwg.mxu0
      %3501 = vmatpush.bf16.msra.mxu0 %v3379
      %3502 = vmatpush.bf16.msra.mxu0 %v3378
      %3503 = vmatpush.bf16.msra.mxu0 %v3377
      %3504 = vmatpush.bf16.msra.mxu0 %v3376
      %3505 = vmatpush.bf16.msra.mxu0 %v3375
      %3506 = vmatpush.bf16.msra.mxu0 %v3374
      %3507 = vmatpush.bf16.msra.mxu0 %v3373
      %3508 = vmatpush.bf16.msra.mxu0 %v3372
      %3509 = vmatmul.bf16.gmra.mxu0 %v3173
      %v3510 = vpop.f32.mrf.mxu0
      %v3511 = vadd.f32 %v3422, %v3510
      %v3512 = vpop.f32.mrf.mxu0
      %v3513 = vadd.f32 %v3424, %v3512
      %3514 = vmatmul.bf16.gmra.mxu0 %v3176
      %v3515 = vpop.f32.mrf.mxu0
      %v3516 = vadd.f32 %v3427, %v3515
      %v3517 = vpop.f32.mrf.mxu0
      %v3518 = vadd.f32 %v3429, %v3517
      %3519 = vmatmul.bf16.gmra.mxu0 %v3179
      %v3520 = vpop.f32.mrf.mxu0
      %v3521 = vadd.f32 %v3432, %v3520
      %v3522 = vpop.f32.mrf.mxu0
      %v3523 = vadd.f32 %v3434, %v3522
      %3524 = vmatmul.bf16.gmra.mxu0 %v3182
      %v3525 = vpop.f32.mrf.mxu0
      %v3526 = vadd.f32 %v3437, %v3525
      %v3527 = vpop.f32.mrf.mxu0
      %v3528 = vadd.f32 %v3439, %v3527
      %3529 = vmatmul.bf16.gmra.mxu0 %v3185
      %v3530 = vpop.f32.mrf.mxu0
      %v3531 = vadd.f32 %v3442, %v3530
      %v3532 = vpop.f32.mrf.mxu0
      %v3533 = vadd.f32 %v3444, %v3532
      %3534 = vmatmul.bf16.gmra.mxu0 %v3188
      %v3535 = vpop.f32.mrf.mxu0
      %v3536 = vadd.f32 %v3447, %v3535
      %v3537 = vpop.f32.mrf.mxu0
      %v3538 = vadd.f32 %v3449, %v3537
      %3539 = vmatmul.bf16.gmra.mxu0 %v3191
      %v3540 = vpop.f32.mrf.mxu0
      %v3541 = vadd.f32 %v3452, %v3540
      %v3542 = vpop.f32.mrf.mxu0
      %v3543 = vadd.f32 %v3454, %v3542
      %3544 = vmatmul.bf16.gmra.mxu0 %v3194
      %v3545 = vpop.f32.mrf.mxu0
      %v3546 = vadd.f32 %v3457, %v3545
      %v3547 = vpop.f32.mrf.mxu0
      %v3548 = vadd.f32 %v3459, %v3547
      %3549 = vmatmul.bf16.gmra.mxu0 %v3197
      %v3550 = vpop.f32.mrf.mxu0
      %v3551 = vadd.f32 %v3462, %v3550
      %v3552 = vpop.f32.mrf.mxu0
      %v3553 = vadd.f32 %v3464, %v3552
      %3554 = vmatmul.bf16.gmra.mxu0 %v3200
      %v3555 = vpop.f32.mrf.mxu0
      %v3556 = vadd.f32 %v3467, %v3555
      %v3557 = vpop.f32.mrf.mxu0
      %v3558 = vadd.f32 %v3469, %v3557
      %3559 = vmatmul.bf16.gmra.mxu0 %v3203
      %v3560 = vpop.f32.mrf.mxu0
      %v3561 = vadd.f32 %v3472, %v3560
      %v3562 = vpop.f32.mrf.mxu0
      %v3563 = vadd.f32 %v3474, %v3562
      %3564 = vmatmul.bf16.gmra.mxu0 %v3206
      %v3565 = vpop.f32.mrf.mxu0
      %v3566 = vadd.f32 %v3477, %v3565
      %v3567 = vpop.f32.mrf.mxu0
      %v3568 = vadd.f32 %v3479, %v3567
      %3569 = vmatmul.bf16.gmra.mxu0 %v3209
      %v3570 = vpop.f32.mrf.mxu0
      %v3571 = vadd.f32 %v3482, %v3570
      %v3572 = vpop.f32.mrf.mxu0
      %v3573 = vadd.f32 %v3484, %v3572
      %3574 = vmatmul.bf16.gmra.mxu0 %v3212
      %v3575 = vpop.f32.mrf.mxu0
      %v3576 = vadd.f32 %v3487, %v3575
      %v3577 = vpop.f32.mrf.mxu0
      %v3578 = vadd.f32 %v3489, %v3577
      %3579 = vmatmul.bf16.gmra.mxu0 %v3215
      %v3580 = vpop.f32.mrf.mxu0
      %v3581 = vadd.f32 %v3492, %v3580
      %v3582 = vpop.f32.mrf.mxu0
      %v3583 = vadd.f32 %v3494, %v3582
      %3584 = vmatmul.bf16.gmra.mxu0 %v3218
      %v3585 = vpop.f32.mrf.mxu0
      %v3586 = vadd.f32 %v3497, %v3585
      %v3587 = vpop.f32.mrf.mxu0
      %v3588 = vadd.f32 %v3499, %v3587
      %3589 = vdwg.mxu0
      %3590 = vmatpush.bf16.msra.mxu0 %v3387
      %3591 = vmatpush.bf16.msra.mxu0 %v3386
      %3592 = vmatpush.bf16.msra.mxu0 %v3385
      %3593 = vmatpush.bf16.msra.mxu0 %v3384
      %3594 = vmatpush.bf16.msra.mxu0 %v3383
      %3595 = vmatpush.bf16.msra.mxu0 %v3382
      %3596 = vmatpush.bf16.msra.mxu0 %v3381
      %3597 = vmatpush.bf16.msra.mxu0 %v3380
      %3598 = vmatmul.bf16.gmra.mxu0 %v3174
      %v3599 = vpop.f32.mrf.mxu0
      %v3600 = vadd.f32 %v3511, %v3599
      %v3601 = vpop.f32.mrf.mxu0
      %v3602 = vadd.f32 %v3513, %v3601
      %3603 = vmatmul.bf16.gmra.mxu0 %v3177
      %v3604 = vpop.f32.mrf.mxu0
      %v3605 = vadd.f32 %v3516, %v3604
      %v3606 = vpop.f32.mrf.mxu0
      %v3607 = vadd.f32 %v3518, %v3606
      %3608 = vmatmul.bf16.gmra.mxu0 %v3180
      %v3609 = vpop.f32.mrf.mxu0
      %v3610 = vadd.f32 %v3521, %v3609
      %v3611 = vpop.f32.mrf.mxu0
      %v3612 = vadd.f32 %v3523, %v3611
      %3613 = vmatmul.bf16.gmra.mxu0 %v3183
      %v3614 = vpop.f32.mrf.mxu0
      %v3615 = vadd.f32 %v3526, %v3614
      %v3616 = vpop.f32.mrf.mxu0
      %v3617 = vadd.f32 %v3528, %v3616
      %3618 = vmatmul.bf16.gmra.mxu0 %v3186
      %v3619 = vpop.f32.mrf.mxu0
      %v3620 = vadd.f32 %v3531, %v3619
      %v3621 = vpop.f32.mrf.mxu0
      %v3622 = vadd.f32 %v3533, %v3621
      %3623 = vmatmul.bf16.gmra.mxu0 %v3189
      %v3624 = vpop.f32.mrf.mxu0
      %v3625 = vadd.f32 %v3536, %v3624
      %v3626 = vpop.f32.mrf.mxu0
      %v3627 = vadd.f32 %v3538, %v3626
      %3628 = vmatmul.bf16.gmra.mxu0 %v3192
      %v3629 = vpop.f32.mrf.mxu0
      %v3630 = vadd.f32 %v3541, %v3629
      %v3631 = vpop.f32.mrf.mxu0
      %v3632 = vadd.f32 %v3543, %v3631
      %3633 = vmatmul.bf16.gmra.mxu0 %v3195
      %v3634 = vpop.f32.mrf.mxu0
      %v3635 = vadd.f32 %v3546, %v3634
      %v3636 = vpop.f32.mrf.mxu0
      %v3637 = vadd.f32 %v3548, %v3636
      %3638 = vmatmul.bf16.gmra.mxu0 %v3198
      %v3639 = vpop.f32.mrf.mxu0
      %v3640 = vadd.f32 %v3551, %v3639
      %v3641 = vpop.f32.mrf.mxu0
      %v3642 = vadd.f32 %v3553, %v3641
      %3643 = vmatmul.bf16.gmra.mxu0 %v3201
      %v3644 = vpop.f32.mrf.mxu0
      %v3645 = vadd.f32 %v3556, %v3644
      %v3646 = vpop.f32.mrf.mxu0
      %v3647 = vadd.f32 %v3558, %v3646
      %3648 = vmatmul.bf16.gmra.mxu0 %v3204
      %v3649 = vpop.f32.mrf.mxu0
      %v3650 = vadd.f32 %v3561, %v3649
      %v3651 = vpop.f32.mrf.mxu0
      %v3652 = vadd.f32 %v3563, %v3651
      %3653 = vmatmul.bf16.gmra.mxu0 %v3207
      %v3654 = vpop.f32.mrf.mxu0
      %v3655 = vadd.f32 %v3566, %v3654
      %v3656 = vpop.f32.mrf.mxu0
      %v3657 = vadd.f32 %v3568, %v3656
      %3658 = vmatmul.bf16.gmra.mxu0 %v3210
      %v3659 = vpop.f32.mrf.mxu0
      %v3660 = vadd.f32 %v3571, %v3659
      %v3661 = vpop.f32.mrf.mxu0
      %v3662 = vadd.f32 %v3573, %v3661
      %3663 = vmatmul.bf16.gmra.mxu0 %v3213
      %v3664 = vpop.f32.mrf.mxu0
      %v3665 = vadd.f32 %v3576, %v3664
      %v3666 = vpop.f32.mrf.mxu0
      %v3667 = vadd.f32 %v3578, %v3666
      %3668 = vmatmul.bf16.gmra.mxu0 %v3216
      %v3669 = vpop.f32.mrf.mxu0
      %v3670 = vadd.f32 %v3581, %v3669
      %v3671 = vpop.f32.mrf.mxu0
      %v3672 = vadd.f32 %v3583, %v3671
      %3673 = vmatmul.bf16.gmra.mxu0 %v3219
      %v3674 = vpop.f32.mrf.mxu0
      %v3675 = vadd.f32 %v3586, %v3674
      %v3676 = vpop.f32.mrf.mxu0
      %v3677 = vadd.f32 %v3588, %v3676
      %3678 = vdwg.mxu0
      %v3679 = vadd.f32 %v2819, %v3600
      %v3680 = vadd.f32 %v2821, %v3602
      %v3681 = vadd.f32 %v2824, %v3605
      %v3682 = vadd.f32 %v2826, %v3607
      %v3683 = vadd.f32 %v2829, %v3610
      %v3684 = vadd.f32 %v2831, %v3612
      %v3685 = vadd.f32 %v2834, %v3615
      %v3686 = vadd.f32 %v2836, %v3617
      %v3687 = vadd.f32 %v2839, %v3620
      %v3688 = vadd.f32 %v2841, %v3622
      %v3689 = vadd.f32 %v2844, %v3625
      %v3690 = vadd.f32 %v2846, %v3627
      %v3691 = vadd.f32 %v2849, %v3630
      %v3692 = vadd.f32 %v2851, %v3632
      %v3693 = vadd.f32 %v2854, %v3635
      %v3694 = vadd.f32 %v2856, %v3637
      %v3695 = vadd.f32 %v2859, %v3640
      %v3696 = vadd.f32 %v2861, %v3642
      %v3697 = vadd.f32 %v2864, %v3645
      %v3698 = vadd.f32 %v2866, %v3647
      %v3699 = vadd.f32 %v2869, %v3650
      %v3700 = vadd.f32 %v2871, %v3652
      %v3701 = vadd.f32 %v2874, %v3655
      %v3702 = vadd.f32 %v2876, %v3657
      %v3703 = vadd.f32 %v2879, %v3660
      %v3704 = vadd.f32 %v2881, %v3662
      %v3705 = vadd.f32 %v2884, %v3665
      %v3706 = vadd.f32 %v2886, %v3667
      %v3707 = vadd.f32 %v2889, %v3670
      %v3708 = vadd.f32 %v2891, %v3672
      %v3709 = vadd.f32 %v2894, %v3675
      %v3710 = vadd.f32 %v2896, %v3677
      %v3711 = vadd.f32 %v3679, %v3680
      %v3712 = vadd.f32 %v3711, %v3681
      %v3713 = vadd.f32 %v3712, %v3682
      %v3714 = vadd.f32 %v3713, %v3683
      %v3715 = vadd.f32 %v3714, %v3684
      %v3716 = vadd.f32 %v3715, %v3685
      %v3717 = vadd.f32 %v3716, %v3686
      %v3718 = vadd.f32 %v3717, %v3687
      %v3719 = vadd.f32 %v3718, %v3688
      %v3720 = vadd.f32 %v3719, %v3689
      %v3721 = vadd.f32 %v3720, %v3690
      %v3722 = vadd.f32 %v3721, %v3691
      %v3723 = vadd.f32 %v3722, %v3692
      %v3724 = vadd.f32 %v3723, %v3693
      %v3725 = vadd.f32 %v3724, %v3694
      %v3726 = vadd.f32 %v3725, %v3695
      %v3727 = vadd.f32 %v3726, %v3696
      %v3728 = vadd.f32 %v3727, %v3697
      %v3729 = vadd.f32 %v3728, %v3698
      %v3730 = vadd.f32 %v3729, %v3699
      %v3731 = vadd.f32 %v3730, %v3700
      %v3732 = vadd.f32 %v3731, %v3701
      %v3733 = vadd.f32 %v3732, %v3702
      %v3734 = vadd.f32 %v3733, %v3703
      %v3735 = vadd.f32 %v3734, %v3704
      %v3736 = vadd.f32 %v3735, %v3705
      %v3737 = vadd.f32 %v3736, %v3706
      %v3738 = vadd.f32 %v3737, %v3707
      %v3739 = vadd.f32 %v3738, %v3708
      %v3740 = vadd.f32 %v3739, %v3709
      %v3741 = vadd.f32 %v3740, %v3710
      %v3742 = vrot.slane %v3741, 4
      %v3743 = vadd.f32 %v3741, %v3742
      %v3744 = vrot.slane %v3743, 2
      %v3745 = vadd.f32 %v3743, %v3744
      %v3746 = vrot.slane %v3745, 1
      %v3747 = vadd.f32 %v3745, %v3746
      %3748 = vst [vmem:[%s211] sm:$0x1] %v3747
      %v3749 = vmul.f32 %v3679, %v3679
      %v3750 = vmul.f32 %v3680, %v3680
      %v3751 = vmul.f32 %v3681, %v3681
      %v3752 = vmul.f32 %v3682, %v3682
      %v3753 = vmul.f32 %v3683, %v3683
      %v3754 = vmul.f32 %v3684, %v3684
      %v3755 = vmul.f32 %v3685, %v3685
      %v3756 = vmul.f32 %v3686, %v3686
      %v3757 = vmul.f32 %v3687, %v3687
      %v3758 = vmul.f32 %v3688, %v3688
      %v3759 = vmul.f32 %v3689, %v3689
      %v3760 = vmul.f32 %v3690, %v3690
      %v3761 = vmul.f32 %v3691, %v3691
      %v3762 = vmul.f32 %v3692, %v3692
      %v3763 = vmul.f32 %v3693, %v3693
      %v3764 = vmul.f32 %v3694, %v3694
      %v3765 = vmul.f32 %v3695, %v3695
      %v3766 = vmul.f32 %v3696, %v3696
      %v3767 = vmul.f32 %v3697, %v3697
      %v3768 = vmul.f32 %v3698, %v3698
      %v3769 = vmul.f32 %v3699, %v3699
      %v3770 = vmul.f32 %v3700, %v3700
      %v3771 = vmul.f32 %v3701, %v3701
      %v3772 = vmul.f32 %v3702, %v3702
      %v3773 = vmul.f32 %v3703, %v3703
      %v3774 = vmul.f32 %v3704, %v3704
      %v3775 = vmul.f32 %v3705, %v3705
      %v3776 = vmul.f32 %v3706, %v3706
      %v3777 = vmul.f32 %v3707, %v3707
      %v3778 = vmul.f32 %v3708, %v3708
      %v3779 = vmul.f32 %v3709, %v3709
      %v3780 = vmul.f32 %v3710, %v3710
      %v3781 = vadd.f32 %v3749, %v3750
      %v3782 = vadd.f32 %v3781, %v3751
      %v3783 = vadd.f32 %v3782, %v3752
      %v3784 = vadd.f32 %v3783, %v3753
      %v3785 = vadd.f32 %v3784, %v3754
      %v3786 = vadd.f32 %v3785, %v3755
      %v3787 = vadd.f32 %v3786, %v3756
      %v3788 = vadd.f32 %v3787, %v3757
      %v3789 = vadd.f32 %v3788, %v3758
      %v3790 = vadd.f32 %v3789, %v3759
      %v3791 = vadd.f32 %v3790, %v3760
      %v3792 = vadd.f32 %v3791, %v3761
      %v3793 = vadd.f32 %v3792, %v3762
      %v3794 = vadd.f32 %v3793, %v3763
      %v3795 = vadd.f32 %v3794, %v3764
      %v3796 = vadd.f32 %v3795, %v3765
      %v3797 = vadd.f32 %v3796, %v3766
      %v3798 = vadd.f32 %v3797, %v3767
      %v3799 = vadd.f32 %v3798, %v3768
      %v3800 = vadd.f32 %v3799, %v3769
      %v3801 = vadd.f32 %v3800, %v3770
      %v3802 = vadd.f32 %v3801, %v3771
      %v3803 = vadd.f32 %v3802, %v3772
      %v3804 = vadd.f32 %v3803, %v3773
      %v3805 = vadd.f32 %v3804, %v3774
      %v3806 = vadd.f32 %v3805, %v3775
      %v3807 = vadd.f32 %v3806, %v3776
      %v3808 = vadd.f32 %v3807, %v3777
      %v3809 = vadd.f32 %v3808, %v3778
      %v3810 = vadd.f32 %v3809, %v3779
      %v3811 = vadd.f32 %v3810, %v3780
      %v3812 = vrot.slane %v3811, 4
      %v3813 = vadd.f32 %v3811, %v3812
      %v3814 = vrot.slane %v3813, 2
      %v3815 = vadd.f32 %v3813, %v3814
      %v3816 = vrot.slane %v3815, 1
      %v3817 = vadd.f32 %v3815, %v3816
      %3818 = vst [vmem:[%s214] sm:$0x1] %v3817
      %v3819 = vpack.c.bf16 %v3679, %v3679
      %v3820 = vpack.c.bf16 %v3680, %v3680
      %v3821 = vpack.c.bf16 %v3681, %v3681
      %v3822 = vpack.c.bf16 %v3682, %v3682
      %v3823 = vpack.c.bf16 %v3683, %v3683
      %v3824 = vpack.c.bf16 %v3684, %v3684
      %v3825 = vpack.c.bf16 %v3685, %v3685
      %v3826 = vpack.c.bf16 %v3686, %v3686
      %v3827 = vpack.c.bf16 %v3687, %v3687
      %v3828 = vpack.c.bf16 %v3688, %v3688
      %v3829 = vpack.c.bf16 %v3689, %v3689
      %v3830 = vpack.c.bf16 %v3690, %v3690
      %v3831 = vpack.c.bf16 %v3691, %v3691
      %v3832 = vpack.c.bf16 %v3692, %v3692
      %v3833 = vpack.c.bf16 %v3693, %v3693
      %v3834 = vpack.c.bf16 %v3694, %v3694
      %v3835 = vpack.c.bf16 %v3695, %v3695
      %v3836 = vpack.c.bf16 %v3696, %v3696
      %v3837 = vpack.c.bf16 %v3697, %v3697
      %v3838 = vpack.c.bf16 %v3698, %v3698
      %v3839 = vpack.c.bf16 %v3699, %v3699
      %v3840 = vpack.c.bf16 %v3700, %v3700
      %v3841 = vpack.c.bf16 %v3701, %v3701
      %v3842 = vpack.c.bf16 %v3702, %v3702
      %v3843 = vpack.c.bf16 %v3703, %v3703
      %v3844 = vpack.c.bf16 %v3704, %v3704
      %v3845 = vpack.c.bf16 %v3705, %v3705
      %v3846 = vpack.c.bf16 %v3706, %v3706
      %v3847 = vpack.c.bf16 %v3707, %v3707
      %v3848 = vpack.c.bf16 %v3708, %v3708
      %v3849 = vpack.c.bf16 %v3709, %v3709
      %v3850 = vpack.c.bf16 %v3710, %v3710
      %3851 = vst [vmem:[%s208] sm:$0xf] %v3819
      %3852 = vst [vmem:[%s208 + $0x4] sm:$0xf] %v3820
      %3853 = vst [vmem:[%s208 + $0x8] sm:$0xf] %v3821
      %3854 = vst [vmem:[%s208 + $0xc] sm:$0xf] %v3822
      %3855 = vst [vmem:[%s208 + $0x10] sm:$0xf] %v3823
      %3856 = vst [vmem:[%s208 + $0x14] sm:$0xf] %v3824
      %3857 = vst [vmem:[%s208 + $0x18] sm:$0xf] %v3825
      %3858 = vst [vmem:[%s208 + $0x1c] sm:$0xf] %v3826
      %3859 = vst [vmem:[%s208 + $0x20] sm:$0xf] %v3827
      %3860 = vst [vmem:[%s208 + $0x24] sm:$0xf] %v3828
      %3861 = vst [vmem:[%s208 + $0x28] sm:$0xf] %v3829
      %3862 = vst [vmem:[%s208 + $0x2c] sm:$0xf] %v3830
      %3863 = vst [vmem:[%s208 + $0x30] sm:$0xf] %v3831
      %3864 = vst [vmem:[%s208 + $0x34] sm:$0xf] %v3832
      %3865 = vst [vmem:[%s208 + $0x38] sm:$0xf] %v3833
      %3866 = vst [vmem:[%s208 + $0x3c] sm:$0xf] %v3834
      %3867 = vst [vmem:[%s208 + $0x40] sm:$0xf] %v3835
      %3868 = vst [vmem:[%s208 + $0x44] sm:$0xf] %v3836
      %3869 = vst [vmem:[%s208 + $0x48] sm:$0xf] %v3837
      %3870 = vst [vmem:[%s208 + $0x4c] sm:$0xf] %v3838
      %3871 = vst [vmem:[%s208 + $0x50] sm:$0xf] %v3839
      %3872 = vst [vmem:[%s208 + $0x54] sm:$0xf] %v3840
      %3873 = vst [vmem:[%s208 + $0x58] sm:$0xf] %v3841
      %3874 = vst [vmem:[%s208 + $0x5c] sm:$0xf] %v3842
      %3875 = vst [vmem:[%s208 + $0x60] sm:$0xf] %v3843
      %3876 = vst [vmem:[%s208 + $0x64] sm:$0xf] %v3844
      %3877 = vst [vmem:[%s208 + $0x68] sm:$0xf] %v3845
      %3878 = vst [vmem:[%s208 + $0x6c] sm:$0xf] %v3846
      %3879 = vst [vmem:[%s208 + $0x70] sm:$0xf] %v3847
      %3880 = vst [vmem:[%s208 + $0x74] sm:$0xf] %v3848
      %3881 = vst [vmem:[%s208 + $0x78] sm:$0xf] %v3849
      %3882 = vst [vmem:[%s208 + $0x7c] sm:$0xf] %v3850
      %p3883 = scmp.lt.s32.totalorder %s16, 1
      %s3884 = scalar_select %p3883, %s16, 1
      %s3885 = smul.addr %s3884, 32
      %s3886 = smul.addr %s3885, 4
      %s3887 = scalar_lea.vmem %s2, %s3886
      %p3888 = scmp.lt.s32.totalorder %s16, 1
      %s3889 = scalar_select %p3888, %s16, 1
      %s3890 = scalar_lea.vmem %s3, %s3889
      %p3891 = scmp.lt.s32.totalorder %s16, 1
      %s3892 = scalar_select %p3891, %s16, 1
      %s3893 = scalar_lea.vmem %s4, %s3892
      // Predicated region
      $region29: #{resblock_forward.5} parent=27 // pred_check
        %p3894 = pneg %p81
      $region30: #{resblock_forward.5} parent=27 // pred_check_branch
        %3896 = sbr.rel (%p3894) target = $region32
      $region31: #{resblock_forward.5} parent=27 // pred_region
        _
      $region32: #{resblock_forward.5} parent=27 // pred_fallthru
        _
      // Predicated region
      $region33: #{resblock_forward.5} parent=27 // pred_check
        %p3897 = pneg %p107
      $region34: #{resblock_forward.5} parent=27 // pred_check_branch
        %3899 = sbr.rel (%p3897) target = $region36
      $region35: #{resblock_forward.5} parent=27 // pred_region
        _
      $region36: #{resblock_forward.5} parent=27 // pred_fallthru
        _
      // Predicated region
      $region37: #{resblock_forward.5} parent=27 // pred_check
        %p3900 = pneg %p133
      $region38: #{resblock_forward.5} parent=27 // pred_check_branch
        %3902 = sbr.rel (%p3900) target = $region40
      $region39: #{resblock_forward.5} parent=27 // pred_region
        _
      $region40: #{resblock_forward.5} parent=27 // pred_fallthru
        _
    $region28: #{resblock_forward.5} parent=5 // pred_fallthru
      _
    %p3903 = scmp.le.s32.totalorder 2, %s11
    // Predicated region
    $region41: #{resblock_forward.5} parent=5 // pred_check
      %p3904 = pneg %p3903
    $region42: #{resblock_forward.5} parent=5 // pred_check_branch
      %3906 = sbr.rel (%p3904) target = $region44
    $region43: #{resblock_forward.5} parent=5 // pred_region
      %s3907 = ssub.s32 %s11, 2
      // Predicated region
      $region45: #{resblock_forward.5} parent=43 // pred_check
        %p3908 = pneg %p87
      $region46: #{resblock_forward.5} parent=43 // pred_check_branch
        %3910 = sbr.rel (%p3908) target = $region48
      $region47: #{resblock_forward.5} parent=43 // pred_region
        %p3911 = scmp.lt.s32.totalorder %s17, 1
        %s3912 = scalar_select %p3911, %s17, 1
        %s3913 = smul.addr %s3912, 32
        %s3914 = smul.addr %s3913, 4
        %s3915 = scalar_lea.vmem %s2, %s3914
      $region48: #{resblock_forward.5} parent=43 // pred_fallthru
        _
      // Predicated region
      $region49: #{resblock_forward.5} parent=43 // pred_check
        %p3916 = pneg %p113
      $region50: #{resblock_forward.5} parent=43 // pred_check_branch
        %3918 = sbr.rel (%p3916) target = $region52
      $region51: #{resblock_forward.5} parent=43 // pred_region
        %p3919 = scmp.lt.s32.totalorder %s17, 1
        %s3920 = scalar_select %p3919, %s17, 1
        %s3921 = scalar_lea.vmem %s3, %s3920
      $region52: #{resblock_forward.5} parent=43 // pred_fallthru
        _
      // Predicated region
      $region53: #{resblock_forward.5} parent=43 // pred_check
        %p3922 = pneg %p139
      $region54: #{resblock_forward.5} parent=43 // pred_check_branch
        %3924 = sbr.rel (%p3922) target = $region56
      $region55: #{resblock_forward.5} parent=43 // pred_region
        %p3925 = scmp.lt.s32.totalorder %s17, 1
        %s3926 = scalar_select %p3925, %s17, 1
        %s3927 = scalar_lea.vmem %s4, %s3926
      $region56: #{resblock_forward.5} parent=43 // pred_fallthru
        _
    $region44: #{resblock_forward.5} parent=5 // pred_fallthru
      _
  $region6: #{resblock_forward.5} parent=0 // loop_footer
    %s15 = sadd.s32 1, %s11
  $region7: #{resblock_forward.5} parent=0 // loop_footer_branch
    %10 = sbr.rel target = $region3
  $region8: #{resblock_forward.5} parent=0 // loop_exit
    _

</llo_original>
